<compile_context>
chip_gen: v5e
topology: v5e:2x2
jax: 0.10.0
libtpu: 0.0.40
codegen_flags: <defaults>
</compile_context>

<pallas_src>
import functools

import jax
import jax.numpy as jnp
import numpy as np
from jax.experimental import pallas as pl
from jax.experimental.pallas import tpu as pltpu


def _round_up(a, m):
    return (a + m - 1) // m * m


def _resblock_kernel(x_ref, w1_ref, b1_ref, w2_ref, b2_ref, *rest,
                     H, W, He, We, Cp, has_downsample):
    if has_downsample:
        wd_ref, bd_ref, o_ref = rest
    else:
        (o_ref,) = rest

    xp = x_ref[0]                                    # (He+2, We+2, Cp) f32, zero-padded
    xp_bf = xp.astype(jnp.bfloat16)                  # single cast, reused by all 9 taps
    relu_xp_bf = jnp.maximum(xp_bf, 0.0)             # relu(pad(x)) == pad(relu(x))

    def conv3x3(src_bf, h0, w0, oh, ow, w_flat_ref, b_ref):
        """3x3 conv as a single MXU matmul via im2col.

        src_bf: (SH, SW, Cp) bf16; output grid is (oh, ow), taps start at (h0, w0).
        w_flat_ref: (9*Cp, Cp) bf16, rows ordered (ky, kx, cin). Returns (oh*ow, Cp) f32.
        """
        taps = [
            src_bf[h0 + ky:h0 + ky + oh, w0 + kx:w0 + kx + ow, :].reshape(oh * ow, Cp)
            for ky in range(3) for kx in range(3)
        ]
        patches = jnp.concatenate(taps, axis=1)            # (oh*ow, 9*Cp) bf16, lane-aligned
        acc = jnp.dot(patches, w_flat_ref[...],
                      preferred_element_type=jnp.float32)  # one MXU pass, K = 9*Cp
        return acc + b_ref[...]                            # (1, Cp) f32 bias broadcast

    # conv1 evaluated over the extended (He, We) grid: this directly produces the
    # (H+2, W+2) zero-halo'd relu(r1) that conv2 needs (after masking the ring),
    # so no padded VMEM scratch / store+reload is required.
    r1 = conv3x3(relu_xp_bf, 0, 0, He, We, w1_ref, b1_ref)  # (He*We, Cp) f32
    r1 = jnp.maximum(r1, 0.0).reshape(He, We, Cp)
    ri = jax.lax.broadcasted_iota(jnp.int32, (He, We, 1), 0)
    ci = jax.lax.broadcasted_iota(jnp.int32, (He, We, 1), 1)
    interior = (ri >= 1) & (ri <= H) & (ci >= 1) & (ci <= W)
    # zero halo + alignment pad, cast once to bf16 for conv2's taps
    r1p_bf = jnp.where(interior, r1, 0.0).astype(jnp.bfloat16)

    # conv2 on the zero-padded relu(r1)
    r2 = conv3x3(r1p_bf, 0, 0, H, W, w2_ref, b2_ref)        # (H*W, Cp) f32

    # residual branch
    if has_downsample:
        xd = conv3x3(xp_bf, 1, 1, H, W, wd_ref, bd_ref)     # 3x3 projection of raw x
    else:
        xd = xp[2:2 + H, 2:2 + W, :].reshape(H * W, Cp)     # identity (f32, exact)

    o_ref[...] = (xd + r2).reshape(1, H, W, Cp).astype(o_ref.dtype)


def resblock_forward(x_nchw, params, has_downsample):
    """x_nchw: (N, Cin, H, W) float32. Returns (N, Cout, H, W)."""
    N, Cin, H, W = x_nchw.shape
    Cout = params["w1"].shape[-1]
    if not has_downsample:
        assert Cin == Cout, "identity residual requires indim == outdim"

    Cp = 128                       # pad channels to a full lane width -> lane-dense
    He = H + 2                     # conv2 needs the (H+2, W+2) zero halo of relu(r1)
    We = _round_up(W + 2, 8)       # keep the sublane (W) dim 8-aligned for free reshapes

    # NHWC + zero pad: 2-deep spatial halo (+ W alignment) and channels -> Cp.
    x_nhwc = jnp.transpose(x_nchw, (0, 2, 3, 1)).astype(jnp.float32)
    xp = jnp.pad(x_nhwc, ((0, 0), (2, He - H), (2, We - W), (0, Cp - Cin)))

    def prep_w(w):                 # (3,3,cin,Cout) HWIO -> (9*Cp, Cp) bf16
        ci = w.shape[2]
        wp = jnp.pad(w, ((0, 0), (0, 0), (0, Cp - ci), (0, Cp - Cout)))
        return wp.reshape(9 * Cp, Cp).astype(jnp.bfloat16)

    def prep_b(b):                 # (Cout,) -> (1, Cp) f32
        return jnp.pad(b, (0, Cp - Cout)).reshape(1, Cp).astype(jnp.float32)

    args = [xp,
            prep_w(params["w1"]), prep_b(params["b1"]),
            prep_w(params["w2"]), prep_b(params["b2"])]
    w_spec = pl.BlockSpec((9 * Cp, Cp), lambda b: (0, 0))
    b_spec = pl.BlockSpec((1, Cp), lambda b: (0, 0))
    in_specs = [pl.BlockSpec((1, He + 2, We + 2, Cp), lambda b: (b, 0, 0, 0)),
                w_spec, b_spec, w_spec, b_spec]
    if has_downsample:             # only DMA the projection weights when they exist
        args += [prep_w(params["wd"]), prep_b(params["bd"])]
        in_specs += [w_spec, b_spec]

    kernel = functools.partial(_resblock_kernel, H=H, W=W, He=He, We=We, Cp=Cp,
                               has_downsample=has_downsample)

    out = pl.pallas_call(
        kernel,
        out_shape=jax.ShapeDtypeStruct((N, H, W, Cp), jnp.float32),
        grid_spec=pltpu.PrefetchScalarGridSpec(
            num_scalar_prefetch=0,
            grid=(N,),
            in_specs=in_specs,
            out_specs=pl.BlockSpec((1, H, W, Cp), lambda b: (b, 0, 0, 0)),
        ),
        compiler_params=pltpu.CompilerParams(
            dimension_semantics=("parallel",),        # N>=2 -> both TCs busy on v7x
            vmem_limit_bytes=32 * 1024 * 1024),
    )(*args)

    out = out[..., :Cout]                             # drop channel padding
    return jnp.transpose(out, (0, 3, 1, 2)).astype(x_nchw.dtype)


def _ref_resblock(x, params, has_downsample):
    """Pure-JAX f32 reference matching the PyTorch ResBlock (NCHW)."""
    def conv(inp, w_hwio, b):
        w_oihw = jnp.transpose(w_hwio, (3, 2, 0, 1))
        out = jax.lax.conv_general_dilated(
            inp, w_oihw, window_strides=(1, 1), padding="SAME",
            dimension_numbers=("NCHW", "OIHW", "NCHW"))
        return out + b[None, :, None, None]

    r = conv(jax.nn.relu(x), params["w1"], params["b1"])
    r = conv(jax.nn.relu(r), params["w2"], params["b2"])
    xd = conv(x, params["wd"], params["bd"]) if has_downsample else x
    return xd + r


def _init_params(key, indim, outdim):
    ks = jax.random.split(key, 6)
    scale = 0.1
    return {
        "w1": scale * jax.random.normal(ks[0], (3, 3, indim, outdim), jnp.float32),
        "b1": scale * jax.random.normal(ks[1], (outdim,), jnp.float32),
        "w2": scale * jax.random.normal(ks[2], (3, 3, outdim, outdim), jnp.float32),
        "b2": scale * jax.random.normal(ks[3], (outdim,), jnp.float32),
        "wd": scale * jax.random.normal(ks[4], (3, 3, indim, outdim), jnp.float32),
        "bd": scale * jax.random.normal(ks[5], (outdim,), jnp.float32),
    }


if __name__ == "__main__":
    key = jax.random.PRNGKey(0)
    kx, kp = jax.random.split(key)

    N, indim, H, W = 2, 4, 16, 16
    outdim = 8                      # indim != outdim -> downsample branch active
    x = jax.random.normal(kx, (N, indim, H, W), jnp.float32)

    # tolerance is set for bf16 MXU operands (f32 accumulation); real bugs are O(0.1+).
    TOL = 5e-2

    # 1) downsample (projection) path
    params = _init_params(kp, indim, outdim)
    out = jax.block_until_ready(resblock_forward(x, params, True))
    ref = jax.block_until_ready(_ref_resblock(x, params, True))
    np.testing.assert_allclose(np.asarray(out), np.asarray(ref), rtol=TOL, atol=TOL)

    # 2) identity-residual path (indim == outdim, no downsample conv passed/DMA'd)
    params_id = _init_params(jax.random.PRNGKey(1), indim, indim)
    out_id = jax.block_until_ready(resblock_forward(x, params_id, False))
    ref_id = jax.block_until_ready(_ref_resblock(x, params_id, False))
    np.testing.assert_allclose(np.asarray(out_id), np.asarray(ref_id), rtol=TOL, atol=TOL)

    print("KERNEL_OK")
</pallas_src>

<mosaic_0001>
module attributes {stable_mosaic.version = 11 : i64} {
  func.func @_resblock_kernel(%arg0: i32, %arg1: memref<1x20x26x128xf32, #tpu.memory_space<vmem>>, %arg2: memref<1152x128xbf16, #tpu.memory_space<vmem>>, %arg3: memref<1x128xf32, #tpu.memory_space<vmem>>, %arg4: memref<1152x128xbf16, #tpu.memory_space<vmem>>, %arg5: memref<1x128xf32, #tpu.memory_space<vmem>>, %arg6: memref<1152x128xbf16, #tpu.memory_space<vmem>>, %arg7: memref<1x128xf32, #tpu.memory_space<vmem>>, %arg8: memref<1x16x16x128xf32, #tpu.memory_space<vmem>>) attributes {dimension_semantics = [#tpu.dimension_semantics<parallel>], iteration_bounds = array<i64: 2>, scalar_prefetch = 0 : i64, scratch_operands = 0 : i64, tpu.core_type = #tpu.core_type<tc>, window_params = [{transform_indices = @transform_0, window_bounds = array<i64: 1, 20, 26, 128>}, {pipeline_mode = #tpu.pipeline_mode<synchronous>, transform_indices = @transform_1, window_bounds = array<i64: 1152, 128>}, {pipeline_mode = #tpu.pipeline_mode<synchronous>, transform_indices = @transform_2, window_bounds = array<i64: 1, 128>}, {pipeline_mode = #tpu.pipeline_mode<synchronous>, transform_indices = @transform_3, window_bounds = array<i64: 1152, 128>}, {pipeline_mode = #tpu.pipeline_mode<synchronous>, transform_indices = @transform_4, window_bounds = array<i64: 1, 128>}, {pipeline_mode = #tpu.pipeline_mode<synchronous>, transform_indices = @transform_5, window_bounds = array<i64: 1152, 128>}, {pipeline_mode = #tpu.pipeline_mode<synchronous>, transform_indices = @transform_6, window_bounds = array<i64: 1, 128>}, {transform_indices = @transform_7, window_bounds = array<i64: 1, 16, 16, 128>}]} {
    %c0 = arith.constant 0 : index
    %c0_0 = arith.constant 0 : index
    %c0_1 = arith.constant 0 : index
    %c0_2 = arith.constant 0 : index
    %0 = vector.load %arg1[%c0, %c0_0, %c0_1, %c0_2] : memref<1x20x26x128xf32, #tpu.memory_space<vmem>>, vector<1x20x26x128xf32>
    %1 = vector.shape_cast %0 : vector<1x20x26x128xf32> to vector<20x26x128xf32>
    %2 = arith.truncf %1 : vector<20x26x128xf32> to vector<20x26x128xbf16>
    %cst = arith.constant 0.000000e+00 : bf16
    %3 = vector.broadcast %cst : bf16 to vector<20x26x128xbf16>
    %4 = arith.maximumf %2, %3 : vector<20x26x128xbf16>
    %5 = vector.extract_strided_slice %4 {offsets = [0, 0, 0], sizes = [18, 24, 128], strides = [1, 1, 1]} : vector<20x26x128xbf16> to vector<18x24x128xbf16>
    %6 = vector.shape_cast %5 : vector<18x24x128xbf16> to vector<432x128xbf16>
    %7 = vector.extract_strided_slice %4 {offsets = [0, 1, 0], sizes = [18, 24, 128], strides = [1, 1, 1]} : vector<20x26x128xbf16> to vector<18x24x128xbf16>
    %8 = vector.shape_cast %7 : vector<18x24x128xbf16> to vector<432x128xbf16>
    %9 = vector.extract_strided_slice %4 {offsets = [0, 2, 0], sizes = [18, 24, 128], strides = [1, 1, 1]} : vector<20x26x128xbf16> to vector<18x24x128xbf16>
    %10 = vector.shape_cast %9 : vector<18x24x128xbf16> to vector<432x128xbf16>
    %11 = vector.extract_strided_slice %4 {offsets = [1, 0, 0], sizes = [18, 24, 128], strides = [1, 1, 1]} : vector<20x26x128xbf16> to vector<18x24x128xbf16>
    %12 = vector.shape_cast %11 : vector<18x24x128xbf16> to vector<432x128xbf16>
    %13 = vector.extract_strided_slice %4 {offsets = [1, 1, 0], sizes = [18, 24, 128], strides = [1, 1, 1]} : vector<20x26x128xbf16> to vector<18x24x128xbf16>
    %14 = vector.shape_cast %13 : vector<18x24x128xbf16> to vector<432x128xbf16>
    %15 = vector.extract_strided_slice %4 {offsets = [1, 2, 0], sizes = [18, 24, 128], strides = [1, 1, 1]} : vector<20x26x128xbf16> to vector<18x24x128xbf16>
    %16 = vector.shape_cast %15 : vector<18x24x128xbf16> to vector<432x128xbf16>
    %17 = vector.extract_strided_slice %4 {offsets = [2, 0, 0], sizes = [18, 24, 128], strides = [1, 1, 1]} : vector<20x26x128xbf16> to vector<18x24x128xbf16>
    %18 = vector.shape_cast %17 : vector<18x24x128xbf16> to vector<432x128xbf16>
    %19 = vector.extract_strided_slice %4 {offsets = [2, 1, 0], sizes = [18, 24, 128], strides = [1, 1, 1]} : vector<20x26x128xbf16> to vector<18x24x128xbf16>
    %20 = vector.shape_cast %19 : vector<18x24x128xbf16> to vector<432x128xbf16>
    %21 = vector.extract_strided_slice %4 {offsets = [2, 2, 0], sizes = [18, 24, 128], strides = [1, 1, 1]} : vector<20x26x128xbf16> to vector<18x24x128xbf16>
    %22 = vector.shape_cast %21 : vector<18x24x128xbf16> to vector<432x128xbf16>
    %23 = tpu.concatenate %6, %8, %10, %12, %14, %16, %18, %20, %22 in 1 : vector<432x128xbf16>, vector<432x128xbf16>, vector<432x128xbf16>, vector<432x128xbf16>, vector<432x128xbf16>, vector<432x128xbf16>, vector<432x128xbf16>, vector<432x128xbf16>, vector<432x128xbf16> -> vector<432x1152xbf16>
    %c0_3 = arith.constant 0 : index
    %c0_4 = arith.constant 0 : index
    %24 = vector.load %arg2[%c0_3, %c0_4] : memref<1152x128xbf16, #tpu.memory_space<vmem>>, vector<1152x128xbf16>
    %cst_5 = arith.constant dense<0.000000e+00> : vector<432x128xf32>
    %25 = tpu.matmul %23, %24, %cst_5 {dimension_numbers = #tpu.dot_dimension_numbers<[1], [0], [0], [1], [0, 0, 1, 1], [], []>} : vector<432x1152xbf16>, vector<1152x128xbf16>, vector<432x128xf32> -> vector<432x128xf32>
    %c0_6 = arith.constant 0 : index
    %c0_7 = arith.constant 0 : index
    %26 = vector.load %arg3[%c0_6, %c0_7] : memref<1x128xf32, #tpu.memory_space<vmem>>, vector<1x128xf32>
    %27 = vector.broadcast %26 : vector<1x128xf32> to vector<432x128xf32>
    %28 = arith.addf %25, %27 : vector<432x128xf32>
    %cst_8 = arith.constant 0.000000e+00 : f32
    %29 = vector.broadcast %cst_8 : f32 to vector<432x128xf32>
    %30 = arith.maximumf %28, %29 : vector<432x128xf32>
    %31 = vector.shape_cast %30 : vector<432x128xf32> to vector<18x24x128xf32>
    %32 = tpu.iota {dimensions = array<i32: 0>} : vector<18x24x1xi32>
    %33 = tpu.iota {dimensions = array<i32: 1>} : vector<18x24x1xi32>
    %c1_i32 = arith.constant 1 : i32
    %34 = vector.broadcast %c1_i32 : i32 to vector<18x24x1xi32>
    %35 = arith.cmpi sge, %32, %34 : vector<18x24x1xi32>
    %c16_i32 = arith.constant 16 : i32
    %36 = vector.broadcast %c16_i32 : i32 to vector<18x24x1xi32>
    %37 = arith.cmpi sle, %32, %36 : vector<18x24x1xi32>
    %38 = arith.andi %35, %37 : vector<18x24x1xi1>
    %c1_i32_9 = arith.constant 1 : i32
    %39 = vector.broadcast %c1_i32_9 : i32 to vector<18x24x1xi32>
    %40 = arith.cmpi sge, %33, %39 : vector<18x24x1xi32>
    %41 = arith.andi %38, %40 : vector<18x24x1xi1>
    %c16_i32_10 = arith.constant 16 : i32
    %42 = vector.broadcast %c16_i32_10 : i32 to vector<18x24x1xi32>
    %43 = arith.cmpi sle, %33, %42 : vector<18x24x1xi32>
    %44 = arith.andi %41, %43 : vector<18x24x1xi1>
    %cst_11 = arith.constant 0.000000e+00 : f32
    %45 = vector.shape_cast %44 : vector<18x24x1xi1> to vector<18x24x1xi1>
    %46 = vector.broadcast %45 : vector<18x24x1xi1> to vector<18x24x128xi1>
    %47 = vector.broadcast %cst_11 : f32 to vector<18x24x128xf32>
    %48 = arith.select %46, %31, %47 : vector<18x24x128xi1>, vector<18x24x128xf32>
    %49 = arith.truncf %48 : vector<18x24x128xf32> to vector<18x24x128xbf16>
    %50 = vector.extract_strided_slice %49 {offsets = [0, 0, 0], sizes = [16, 16, 128], strides = [1, 1, 1]} : vector<18x24x128xbf16> to vector<16x16x128xbf16>
    %51 = vector.shape_cast %50 : vector<16x16x128xbf16> to vector<256x128xbf16>
    %52 = vector.extract_strided_slice %49 {offsets = [0, 1, 0], sizes = [16, 16, 128], strides = [1, 1, 1]} : vector<18x24x128xbf16> to vector<16x16x128xbf16>
    %53 = vector.shape_cast %52 : vector<16x16x128xbf16> to vector<256x128xbf16>
    %54 = vector.extract_strided_slice %49 {offsets = [0, 2, 0], sizes = [16, 16, 128], strides = [1, 1, 1]} : vector<18x24x128xbf16> to vector<16x16x128xbf16>
    %55 = vector.shape_cast %54 : vector<16x16x128xbf16> to vector<256x128xbf16>
    %56 = vector.extract_strided_slice %49 {offsets = [1, 0, 0], sizes = [16, 16, 128], strides = [1, 1, 1]} : vector<18x24x128xbf16> to vector<16x16x128xbf16>
    %57 = vector.shape_cast %56 : vector<16x16x128xbf16> to vector<256x128xbf16>
    %58 = vector.extract_strided_slice %49 {offsets = [1, 1, 0], sizes = [16, 16, 128], strides = [1, 1, 1]} : vector<18x24x128xbf16> to vector<16x16x128xbf16>
    %59 = vector.shape_cast %58 : vector<16x16x128xbf16> to vector<256x128xbf16>
    %60 = vector.extract_strided_slice %49 {offsets = [1, 2, 0], sizes = [16, 16, 128], strides = [1, 1, 1]} : vector<18x24x128xbf16> to vector<16x16x128xbf16>
    %61 = vector.shape_cast %60 : vector<16x16x128xbf16> to vector<256x128xbf16>
    %62 = vector.extract_strided_slice %49 {offsets = [2, 0, 0], sizes = [16, 16, 128], strides = [1, 1, 1]} : vector<18x24x128xbf16> to vector<16x16x128xbf16>
    %63 = vector.shape_cast %62 : vector<16x16x128xbf16> to vector<256x128xbf16>
    %64 = vector.extract_strided_slice %49 {offsets = [2, 1, 0], sizes = [16, 16, 128], strides = [1, 1, 1]} : vector<18x24x128xbf16> to vector<16x16x128xbf16>
    %65 = vector.shape_cast %64 : vector<16x16x128xbf16> to vector<256x128xbf16>
    %66 = vector.extract_strided_slice %49 {offsets = [2, 2, 0], sizes = [16, 16, 128], strides = [1, 1, 1]} : vector<18x24x128xbf16> to vector<16x16x128xbf16>
    %67 = vector.shape_cast %66 : vector<16x16x128xbf16> to vector<256x128xbf16>
    %68 = tpu.concatenate %51, %53, %55, %57, %59, %61, %63, %65, %67 in 1 : vector<256x128xbf16>, vector<256x128xbf16>, vector<256x128xbf16>, vector<256x128xbf16>, vector<256x128xbf16>, vector<256x128xbf16>, vector<256x128xbf16>, vector<256x128xbf16>, vector<256x128xbf16> -> vector<256x1152xbf16>
    %c0_12 = arith.constant 0 : index
    %c0_13 = arith.constant 0 : index
    %69 = vector.load %arg4[%c0_12, %c0_13] : memref<1152x128xbf16, #tpu.memory_space<vmem>>, vector<1152x128xbf16>
    %cst_14 = arith.constant dense<0.000000e+00> : vector<256x128xf32>
    %70 = tpu.matmul %68, %69, %cst_14 {dimension_numbers = #tpu.dot_dimension_numbers<[1], [0], [0], [1], [0, 0, 1, 1], [], []>} : vector<256x1152xbf16>, vector<1152x128xbf16>, vector<256x128xf32> -> vector<256x128xf32>
    %c0_15 = arith.constant 0 : index
    %c0_16 = arith.constant 0 : index
    %71 = vector.load %arg5[%c0_15, %c0_16] : memref<1x128xf32, #tpu.memory_space<vmem>>, vector<1x128xf32>
    %72 = vector.broadcast %71 : vector<1x128xf32> to vector<256x128xf32>
    %73 = arith.addf %70, %72 : vector<256x128xf32>
    %74 = vector.extract_strided_slice %2 {offsets = [1, 1, 0], sizes = [16, 16, 128], strides = [1, 1, 1]} : vector<20x26x128xbf16> to vector<16x16x128xbf16>
    %75 = vector.shape_cast %74 : vector<16x16x128xbf16> to vector<256x128xbf16>
    %76 = vector.extract_strided_slice %2 {offsets = [1, 2, 0], sizes = [16, 16, 128], strides = [1, 1, 1]} : vector<20x26x128xbf16> to vector<16x16x128xbf16>
    %77 = vector.shape_cast %76 : vector<16x16x128xbf16> to vector<256x128xbf16>
    %78 = vector.extract_strided_slice %2 {offsets = [1, 3, 0], sizes = [16, 16, 128], strides = [1, 1, 1]} : vector<20x26x128xbf16> to vector<16x16x128xbf16>
    %79 = vector.shape_cast %78 : vector<16x16x128xbf16> to vector<256x128xbf16>
    %80 = vector.extract_strided_slice %2 {offsets = [2, 1, 0], sizes = [16, 16, 128], strides = [1, 1, 1]} : vector<20x26x128xbf16> to vector<16x16x128xbf16>
    %81 = vector.shape_cast %80 : vector<16x16x128xbf16> to vector<256x128xbf16>
    %82 = vector.extract_strided_slice %2 {offsets = [2, 2, 0], sizes = [16, 16, 128], strides = [1, 1, 1]} : vector<20x26x128xbf16> to vector<16x16x128xbf16>
    %83 = vector.shape_cast %82 : vector<16x16x128xbf16> to vector<256x128xbf16>
    %84 = vector.extract_strided_slice %2 {offsets = [2, 3, 0], sizes = [16, 16, 128], strides = [1, 1, 1]} : vector<20x26x128xbf16> to vector<16x16x128xbf16>
    %85 = vector.shape_cast %84 : vector<16x16x128xbf16> to vector<256x128xbf16>
    %86 = vector.extract_strided_slice %2 {offsets = [3, 1, 0], sizes = [16, 16, 128], strides = [1, 1, 1]} : vector<20x26x128xbf16> to vector<16x16x128xbf16>
    %87 = vector.shape_cast %86 : vector<16x16x128xbf16> to vector<256x128xbf16>
    %88 = vector.extract_strided_slice %2 {offsets = [3, 2, 0], sizes = [16, 16, 128], strides = [1, 1, 1]} : vector<20x26x128xbf16> to vector<16x16x128xbf16>
    %89 = vector.shape_cast %88 : vector<16x16x128xbf16> to vector<256x128xbf16>
    %90 = vector.extract_strided_slice %2 {offsets = [3, 3, 0], sizes = [16, 16, 128], strides = [1, 1, 1]} : vector<20x26x128xbf16> to vector<16x16x128xbf16>
    %91 = vector.shape_cast %90 : vector<16x16x128xbf16> to vector<256x128xbf16>
    %92 = tpu.concatenate %75, %77, %79, %81, %83, %85, %87, %89, %91 in 1 : vector<256x128xbf16>, vector<256x128xbf16>, vector<256x128xbf16>, vector<256x128xbf16>, vector<256x128xbf16>, vector<256x128xbf16>, vector<256x128xbf16>, vector<256x128xbf16>, vector<256x128xbf16> -> vector<256x1152xbf16>
    %c0_17 = arith.constant 0 : index
    %c0_18 = arith.constant 0 : index
    %93 = vector.load %arg6[%c0_17, %c0_18] : memref<1152x128xbf16, #tpu.memory_space<vmem>>, vector<1152x128xbf16>
    %cst_19 = arith.constant dense<0.000000e+00> : vector<256x128xf32>
    %94 = tpu.matmul %92, %93, %cst_19 {dimension_numbers = #tpu.dot_dimension_numbers<[1], [0], [0], [1], [0, 0, 1, 1], [], []>} : vector<256x1152xbf16>, vector<1152x128xbf16>, vector<256x128xf32> -> vector<256x128xf32>
    %c0_20 = arith.constant 0 : index
    %c0_21 = arith.constant 0 : index
    %95 = vector.load %arg7[%c0_20, %c0_21] : memref<1x128xf32, #tpu.memory_space<vmem>>, vector<1x128xf32>
    %96 = vector.broadcast %95 : vector<1x128xf32> to vector<256x128xf32>
    %97 = arith.addf %94, %96 : vector<256x128xf32>
    %98 = arith.addf %97, %73 : vector<256x128xf32>
    %99 = vector.shape_cast %98 : vector<256x128xf32> to vector<1x16x16x128xf32>
    %c0_22 = arith.constant 0 : index
    %c0_23 = arith.constant 0 : index
    %c0_24 = arith.constant 0 : index
    %c0_25 = arith.constant 0 : index
    %100 = vector.load %arg8[%c0_22, %c0_23, %c0_24, %c0_25] : memref<1x16x16x128xf32, #tpu.memory_space<vmem>>, vector<1x16x16x128xf32>
    tpu.vector_store %arg8[%c0_22, %c0_23, %c0_24, %c0_25], %99 {strides = array<i32>} : memref<1x16x16x128xf32, #tpu.memory_space<vmem>>, vector<1x16x16x128xf32>,
    return
  }
  func.func @transform_0(%arg0: i32) -> (i32, i32, i32, i32) {
    %c0_i32 = arith.constant 0 : i32
    %c0_i32_0 = arith.constant 0 : i32
    %c0_i32_1 = arith.constant 0 : i32
    %c0_i32_2 = arith.constant 0 : i32
    return %arg0, %c0_i32, %c0_i32_0, %c0_i32_1 : i32, i32, i32, i32
  }
  func.func @transform_1(%arg0: i32) -> (i32, i32) {
    %c0_i32 = arith.constant 0 : i32
    %c0_i32_0 = arith.constant 0 : i32
    %c0_i32_1 = arith.constant 0 : i32
    return %c0_i32, %c0_i32_0 : i32, i32
  }
  func.func @transform_2(%arg0: i32) -> (i32, i32) {
    %c0_i32 = arith.constant 0 : i32
    %c0_i32_0 = arith.constant 0 : i32
    %c0_i32_1 = arith.constant 0 : i32
    return %c0_i32, %c0_i32_0 : i32, i32
  }
  func.func @transform_3(%arg0: i32) -> (i32, i32) {
    %c0_i32 = arith.constant 0 : i32
    %c0_i32_0 = arith.constant 0 : i32
    %c0_i32_1 = arith.constant 0 : i32
    return %c0_i32, %c0_i32_0 : i32, i32
  }
  func.func @transform_4(%arg0: i32) -> (i32, i32) {
    %c0_i32 = arith.constant 0 : i32
    %c0_i32_0 = arith.constant 0 : i32
    %c0_i32_1 = arith.constant 0 : i32
    return %c0_i32, %c0_i32_0 : i32, i32
  }
  func.func @transform_5(%arg0: i32) -> (i32, i32) {
    %c0_i32 = arith.constant 0 : i32
    %c0_i32_0 = arith.constant 0 : i32
    %c0_i32_1 = arith.constant 0 : i32
    return %c0_i32, %c0_i32_0 : i32, i32
  }
  func.func @transform_6(%arg0: i32) -> (i32, i32) {
    %c0_i32 = arith.constant 0 : i32
    %c0_i32_0 = arith.constant 0 : i32
    %c0_i32_1 = arith.constant 0 : i32
    return %c0_i32, %c0_i32_0 : i32, i32
  }
  func.func @transform_7(%arg0: i32) -> (i32, i32, i32, i32) {
    %c0_i32 = arith.constant 0 : i32
    %c0_i32_0 = arith.constant 0 : i32
    %c0_i32_1 = arith.constant 0 : i32
    %c0_i32_2 = arith.constant 0 : i32
    return %arg0, %c0_i32, %c0_i32_0, %c0_i32_1 : i32, i32, i32, i32
  }
}

</mosaic_0001>

<llo_original>
// kernel: tpu_custom_call.1
$region0: #{tpu_custom_call.1}
  #allocation0 [shape = 'u32[]', space=smem, size = 0x4, offset = 0x4, fixed_abs, tag = 'smem constant byte address 0x4 - core index']
  #allocation1 [shape = 'u32[72,128]{1,0:T(1,128)}', space=vmem, size = 0x9000, scoped, tag = 'internal scratch']
  %s0 = inlined_call_operand.vmem [shape: f32[2,20,26,128], index: 0, kind: input, shape index: {}]
  %s1 = inlined_call_operand.vmem [shape: bf16[1152,128], index: 1, kind: input, shape index: {}]
  %s2 = inlined_call_operand.vmem [shape: f32[1,128], index: 2, kind: input, shape index: {}]
  %s3 = inlined_call_operand.vmem [shape: bf16[1152,128], index: 3, kind: input, shape index: {}]
  %s4 = inlined_call_operand.vmem [shape: f32[1,128], index: 4, kind: input, shape index: {}]
  %s5 = inlined_call_operand.vmem [shape: bf16[1152,128], index: 5, kind: input, shape index: {}]
  %s6 = inlined_call_operand.vmem [shape: f32[1,128], index: 6, kind: input, shape index: {}]
  %s7 = inlined_call_operand.hbm [shape: f32[2,16,16,128], index: 7, kind: output, shape index: {}]
  %s8 = sld [smem:[#allocation0]]
  $region61: #{tpu_custom_call.1} parent=0
    _
  %s10 = ssub.s32 1, %s8
  %s11 = scalar_select 0, %s10, %s8
  $region1: #{tpu_custom_call.1} parent=0
    #allocation2 [shape = 'u8[262144]{0}', space=vmem, size = 0x40000, scoped, tag = 'output window, operand 0']
    #allocation3 [shape = 's32[2]{0}', space=sflag, size = 0x8, scoped, tag = 'scoped memory for tpu_custom_call.1']
    %12 = vsyncpa [#allocation3], 0
    %s13 = scalar_lea.sflag [#allocation3], 1
    %14 = vsyncpa %s13, 0
    loop: start=0, step=1, limit=4
    $region2: #{tpu_custom_call.1} parent=1 // loop_pre_header
      _
    $region3: #{tpu_custom_call.1} parent=1 // loop_header
      %s16 = sphi 0, %s20
      %p17 = scmp.ge.s32.totalorder %s16, 4
      %s26 = sphi 0, %s28
      %s29 = sphi 0, %s26
      %s30 = sphi 0, %s29
      %s46 = sphi 0, %s30
      %s50 = sphi 0, %s50
      %s52 = sphi 0, %s50
      %s53 = sphi 0, %s52
      %s67 = sphi 0, %s53
      %s71 = sphi 0, %s71
      %s73 = sphi 0, %s71
      %s74 = sphi 0, %s73
      %s88 = sphi 0, %s74
      %s92 = sphi 0, %s92
      %s94 = sphi 0, %s92
      %s95 = sphi 0, %s94
      %s109 = sphi 0, %s95
      %s113 = sphi 0, %s113
      %s115 = sphi 0, %s113
      %s116 = sphi 0, %s115
      %s130 = sphi 0, %s116
      %s134 = sphi 0, %s134
      %s136 = sphi 0, %s134
      %s137 = sphi 0, %s136
      %s151 = sphi 0, %s137
      %s155 = sphi 0, %s155
      %s157 = sphi 0, %s155
      %s158 = sphi 0, %s157
      %s172 = sphi 0, %s158
      %s178 = sphi 0, %s180
      %s181 = sphi 0, %s178
      %s182 = sphi 0, %s181
      %s198 = sphi 0, %s182
    $region4: #{tpu_custom_call.1} parent=1 // loop_header_branch
      %19 = sbr.rel (%p17) target = $region8
    $region5: #{tpu_custom_call.1} parent=1 // loop_body
      %s21 = ssub.s32 %s16, 1
      %s22 = ssub.s32 %s16, 2
      %s23 = sadd.s32 %s16, 1
      %s24 = ssub.s32 %s16, %s23
      %p25 = scmp.eq.s32.totalorder %s24, 0
      %s27 = sadd.s32 %s26, 1
      %s28 = scalar_select %p25, %s26, %s27
      %p31 = pneg %p25
      %p32 = scmp.eq.s32.totalorder %s16, 1
      %p33 = por %p31, %p32
      %p34 = scmp.ne.s32.totalorder %s26, %s29
      %p35 = scmp.eq.s32.totalorder %s16, 0
      %p36 = por %p34, %p35
      %p37 = scmp.ne.s32.totalorder %s26, %s29
      %p38 = scmp.eq.s32.totalorder %s21, 1
      %p39 = por %p37, %p38
      %p40 = scmp.ne.s32.totalorder %s29, %s30
      %p41 = scmp.eq.s32.totalorder %s21, 0
      %p42 = por %p40, %p41
      %p43 = scmp.ne.s32.totalorder %s29, %s30
      %p44 = scmp.eq.s32.totalorder %s22, 1
      %p45 = por %p43, %p44
      %p47 = scmp.ne.s32.totalorder %s30, %s46
      %p48 = scmp.eq.s32.totalorder %s22, 0
      %p49 = por %p47, %p48
      %s51 = sadd.s32 %s50, 1
      %p54 = scmp.eq.s32.totalorder %s16, 1
      %p55 = scmp.ne.s32.totalorder %s50, %s52
      %p56 = scmp.eq.s32.totalorder %s16, 0
      %p57 = por %p55, %p56
      %p58 = scmp.ne.s32.totalorder %s50, %s52
      %p59 = scmp.eq.s32.totalorder %s21, 1
      %p60 = por %p58, %p59
      %p61 = scmp.ne.s32.totalorder %s52, %s53
      %p62 = scmp.eq.s32.totalorder %s21, 0
      %p63 = por %p61, %p62
      %p64 = scmp.ne.s32.totalorder %s52, %s53
      %p65 = scmp.eq.s32.totalorder %s22, 1
      %p66 = por %p64, %p65
      %p68 = scmp.ne.s32.totalorder %s53, %s67
      %p69 = scmp.eq.s32.totalorder %s22, 0
      %p70 = por %p68, %p69
      %s72 = sadd.s32 %s71, 1
      %p75 = scmp.eq.s32.totalorder %s16, 1
      %p76 = scmp.ne.s32.totalorder %s71, %s73
      %p77 = scmp.eq.s32.totalorder %s16, 0
      %p78 = por %p76, %p77
      %p79 = scmp.ne.s32.totalorder %s71, %s73
      %p80 = scmp.eq.s32.totalorder %s21, 1
      %p81 = por %p79, %p80
      %p82 = scmp.ne.s32.totalorder %s73, %s74
      %p83 = scmp.eq.s32.totalorder %s21, 0
      %p84 = por %p82, %p83
      %p85 = scmp.ne.s32.totalorder %s73, %s74
      %p86 = scmp.eq.s32.totalorder %s22, 1
      %p87 = por %p85, %p86
      %p89 = scmp.ne.s32.totalorder %s74, %s88
      %p90 = scmp.eq.s32.totalorder %s22, 0
      %p91 = por %p89, %p90
      %s93 = sadd.s32 %s92, 1
      %p96 = scmp.eq.s32.totalorder %s16, 1
      %p97 = scmp.ne.s32.totalorder %s92, %s94
      %p98 = scmp.eq.s32.totalorder %s16, 0
      %p99 = por %p97, %p98
      %p100 = scmp.ne.s32.totalorder %s92, %s94
      %p101 = scmp.eq.s32.totalorder %s21, 1
      %p102 = por %p100, %p101
      %p103 = scmp.ne.s32.totalorder %s94, %s95
      %p104 = scmp.eq.s32.totalorder %s21, 0
      %p105 = por %p103, %p104
      %p106 = scmp.ne.s32.totalorder %s94, %s95
      %p107 = scmp.eq.s32.totalorder %s22, 1
      %p108 = por %p106, %p107
      %p110 = scmp.ne.s32.totalorder %s95, %s109
      %p111 = scmp.eq.s32.totalorder %s22, 0
      %p112 = por %p110, %p111
      %s114 = sadd.s32 %s113, 1
      %p117 = scmp.eq.s32.totalorder %s16, 1
      %p118 = scmp.ne.s32.totalorder %s113, %s115
      %p119 = scmp.eq.s32.totalorder %s16, 0
      %p120 = por %p118, %p119
      %p121 = scmp.ne.s32.totalorder %s113, %s115
      %p122 = scmp.eq.s32.totalorder %s21, 1
      %p123 = por %p121, %p122
      %p124 = scmp.ne.s32.totalorder %s115, %s116
      %p125 = scmp.eq.s32.totalorder %s21, 0
      %p126 = por %p124, %p125
      %p127 = scmp.ne.s32.totalorder %s115, %s116
      %p128 = scmp.eq.s32.totalorder %s22, 1
      %p129 = por %p127, %p128
      %p131 = scmp.ne.s32.totalorder %s116, %s130
      %p132 = scmp.eq.s32.totalorder %s22, 0
      %p133 = por %p131, %p132
      %s135 = sadd.s32 %s134, 1
      %p138 = scmp.eq.s32.totalorder %s16, 1
      %p139 = scmp.ne.s32.totalorder %s134, %s136
      %p140 = scmp.eq.s32.totalorder %s16, 0
      %p141 = por %p139, %p140
      %p142 = scmp.ne.s32.totalorder %s134, %s136
      %p143 = scmp.eq.s32.totalorder %s21, 1
      %p144 = por %p142, %p143
      %p145 = scmp.ne.s32.totalorder %s136, %s137
      %p146 = scmp.eq.s32.totalorder %s21, 0
      %p147 = por %p145, %p146
      %p148 = scmp.ne.s32.totalorder %s136, %s137
      %p149 = scmp.eq.s32.totalorder %s22, 1
      %p150 = por %p148, %p149
      %p152 = scmp.ne.s32.totalorder %s137, %s151
      %p153 = scmp.eq.s32.totalorder %s22, 0
      %p154 = por %p152, %p153
      %s156 = sadd.s32 %s155, 1
      %p159 = scmp.eq.s32.totalorder %s16, 1
      %p160 = scmp.ne.s32.totalorder %s155, %s157
      %p161 = scmp.eq.s32.totalorder %s16, 0
      %p162 = por %p160, %p161
      %p163 = scmp.ne.s32.totalorder %s155, %s157
      %p164 = scmp.eq.s32.totalorder %s21, 1
      %p165 = por %p163, %p164
      %p166 = scmp.ne.s32.totalorder %s157, %s158
      %p167 = scmp.eq.s32.totalorder %s21, 0
      %p168 = por %p166, %p167
      %p169 = scmp.ne.s32.totalorder %s157, %s158
      %p170 = scmp.eq.s32.totalorder %s22, 1
      %p171 = por %p169, %p170
      %p173 = scmp.ne.s32.totalorder %s158, %s172
      %p174 = scmp.eq.s32.totalorder %s22, 0
      %p175 = por %p173, %p174
      %s176 = ssub.s32 %s16, %s23
      %p177 = scmp.eq.s32.totalorder %s176, 0
      %s179 = sadd.s32 %s178, 1
      %s180 = scalar_select %p177, %s178, %s179
      %p183 = pneg %p177
      %p184 = scmp.eq.s32.totalorder %s16, 1
      %p185 = por %p183, %p184
      %p186 = scmp.ne.s32.totalorder %s178, %s181
      %p187 = scmp.eq.s32.totalorder %s16, 0
      %p188 = por %p186, %p187
      %p189 = scmp.ne.s32.totalorder %s178, %s181
      %p190 = scmp.eq.s32.totalorder %s21, 1
      %p191 = por %p189, %p190
      %p192 = scmp.ne.s32.totalorder %s181, %s182
      %p193 = scmp.eq.s32.totalorder %s21, 0
      %p194 = por %p192, %p193
      %p195 = scmp.ne.s32.totalorder %s181, %s182
      %p196 = scmp.eq.s32.totalorder %s22, 1
      %p197 = por %p195, %p196
      %p199 = scmp.ne.s32.totalorder %s182, %s198
      %p200 = scmp.eq.s32.totalorder %s22, 0
      %p201 = por %p199, %p200
      %p202 = scmp.le.s32.totalorder 1, %s16
      %p203 = scmp.lt.s32.totalorder %s16, 3
      %p204 = pnand %p202, %p203
      %p205 = pneg %p204
      // Predicated region
      $region9: #{tpu_custom_call.1} parent=5 // pred_check
        _
      $region10: #{tpu_custom_call.1} parent=5 // pred_check_branch
        %207 = sbr.rel (%p204) target = $region12
      $region11: #{tpu_custom_call.1} parent=5 // pred_region
        %s208 = ssub.s32 %s16, 1
        // Predicated region
        $region13: #{tpu_custom_call.1} parent=11 // pred_check
          %p209 = pneg %p63
        $region14: #{tpu_custom_call.1} parent=11 // pred_check_branch
          %211 = sbr.rel (%p209) target = $region16
        $region15: #{tpu_custom_call.1} parent=11 // pred_region
          _
        $region16: #{tpu_custom_call.1} parent=11 // pred_fallthru
          _
        // Predicated region
        $region17: #{tpu_custom_call.1} parent=11 // pred_check
          %p212 = pneg %p84
        $region18: #{tpu_custom_call.1} parent=11 // pred_check_branch
          %214 = sbr.rel (%p212) target = $region20
        $region19: #{tpu_custom_call.1} parent=11 // pred_region
          _
        $region20: #{tpu_custom_call.1} parent=11 // pred_fallthru
          _
        // Predicated region
        $region21: #{tpu_custom_call.1} parent=11 // pred_check
          %p215 = pneg %p105
        $region22: #{tpu_custom_call.1} parent=11 // pred_check_branch
          %217 = sbr.rel (%p215) target = $region24
        $region23: #{tpu_custom_call.1} parent=11 // pred_region
          _
        $region24: #{tpu_custom_call.1} parent=11 // pred_fallthru
          _
        // Predicated region
        $region25: #{tpu_custom_call.1} parent=11 // pred_check
          %p218 = pneg %p126
        $region26: #{tpu_custom_call.1} parent=11 // pred_check_branch
          %220 = sbr.rel (%p218) target = $region28
        $region27: #{tpu_custom_call.1} parent=11 // pred_region
          _
        $region28: #{tpu_custom_call.1} parent=11 // pred_fallthru
          _
        // Predicated region
        $region29: #{tpu_custom_call.1} parent=11 // pred_check
          %p221 = pneg %p147
        $region30: #{tpu_custom_call.1} parent=11 // pred_check_branch
          %223 = sbr.rel (%p221) target = $region32
        $region31: #{tpu_custom_call.1} parent=11 // pred_region
          _
        $region32: #{tpu_custom_call.1} parent=11 // pred_fallthru
          _
        // Predicated region
        $region33: #{tpu_custom_call.1} parent=11 // pred_check
          %p224 = pneg %p168
        $region34: #{tpu_custom_call.1} parent=11 // pred_check_branch
          %226 = sbr.rel (%p224) target = $region36
        $region35: #{tpu_custom_call.1} parent=11 // pred_region
          _
        $region36: #{tpu_custom_call.1} parent=11 // pred_fallthru
          _
      $region12: #{tpu_custom_call.1} parent=5 // pred_fallthru
        _
      %p227 = scmp.lt.s32.totalorder %s16, 2
      // Predicated region
      $region37: #{tpu_custom_call.1} parent=5 // pred_check
        %p228 = pneg %p227
      $region38: #{tpu_custom_call.1} parent=5 // pred_check_branch
        %230 = sbr.rel (%p228) target = $region40
      $region39: #{tpu_custom_call.1} parent=5 // pred_region
        // Predicated region
        $region41: #{tpu_custom_call.1} parent=39 // pred_check
          %p231 = pneg %p36
        $region42: #{tpu_custom_call.1} parent=39 // pred_check_branch
          %233 = sbr.rel (%p231) target = $region44
        $region43: #{tpu_custom_call.1} parent=39 // pred_region
          %p234 = scmp.lt.s32.totalorder %s16, 1
          %s235 = scalar_select %p234, %s16, 1
          %s236 = smul.addr %s235, 80
          %s237 = smul.addr %s236, 8
          %s238 = scalar_lea.vmem %s0, %s237
        $region44: #{tpu_custom_call.1} parent=39 // pred_fallthru
          _
      $region40: #{tpu_custom_call.1} parent=5 // pred_fallthru
        _
      %p239 = scmp.le.s32.totalorder 1, %s16
      %p240 = scmp.lt.s32.totalorder %s16, 3
      %p241 = pnand %p239, %p240
      %p242 = pneg %p241
      // Predicated region
      $region45: #{tpu_custom_call.1} parent=5 // pred_check
        _
      $region46: #{tpu_custom_call.1} parent=5 // pred_check_branch
        %244 = sbr.rel (%p241) target = $region48
      $region47: #{tpu_custom_call.1} parent=5 // pred_region
        %s245 = ssub.s32 %s16, 1
        %p246 = scmp.lt.s32.totalorder %s21, 1
        %s247 = scalar_select %p246, %s21, 1
        %s248 = smul.addr %s247, 80
        %s249 = smul.addr %s248, 8
        %s250 = scalar_lea.vmem %s0, %s249
        %p251 = pneg %p42
        %p252 = pneg %p39
        %p253 = pneg %p63
        %p254 = pneg %p60
        %p255 = pneg %p84
        %p256 = pneg %p81
        %p257 = pneg %p105
        %p258 = pneg %p102
        %p259 = pneg %p126
        %p260 = pneg %p123
        %p261 = pneg %p147
        %p262 = pneg %p144
        %p263 = pneg %p168
        %p264 = pneg %p165
        %p265 = pneg %p194
        %p266 = pneg %p191
        %s267 = sand.u32 %s181, 1
        %s268 = scalar_lea.sflag [#allocation3], %s267
        %s269 = sand.u32 %s181, 1
        %s270 = smul.addr %s269, 256
        %s271 = scalar_lea.vmem [#allocation2], %s270
        %p272 = scmp.lt.s32.totalorder %s21, 1
        %s273 = scalar_select %p272, %s21, 1
        %s274 = smul.addr %s273, 80
        %s275 = smul.addr %s274, 8
        %s276 = scalar_lea.vmem %s0, %s275
        %v277 = vld [vmem:[%s276] sm:$0xff]
        %v278 = vld [vmem:[%s276 + $0x8] sm:$0xff]
        %v279 = vld [vmem:[%s276 + $0x10] sm:$0xff]
        %v280 = vld [vmem:[%s276 + $0x18] sm:$0x3]
        %v281 = vld [vmem:[%s276 + $0x20] sm:$0xff]
        %v282 = vld [vmem:[%s276 + $0x28] sm:$0xff]
        %v283 = vld [vmem:[%s276 + $0x30] sm:$0xff]
        %v284 = vld [vmem:[%s276 + $0x38] sm:$0x3]
        %v285 = vld [vmem:[%s276 + $0x40] sm:$0xff]
        %v286 = vld [vmem:[%s276 + $0x48] sm:$0xff]
        %v287 = vld [vmem:[%s276 + $0x50] sm:$0xff]
        %v288 = vld [vmem:[%s276 + $0x58] sm:$0x3]
        %v289 = vld [vmem:[%s276 + $0x60] sm:$0xff]
        %v290 = vld [vmem:[%s276 + $0x68] sm:$0xff]
        %v291 = vld [vmem:[%s276 + $0x70] sm:$0xff]
        %v292 = vld [vmem:[%s276 + $0x78] sm:$0x3]
        %v293 = vld [vmem:[%s276 + $0x80] sm:$0xff]
        %v294 = vld [vmem:[%s276 + $0x88] sm:$0xff]
        %v295 = vld [vmem:[%s276 + $0x90] sm:$0xff]
        %v296 = vld [vmem:[%s276 + $0x98] sm:$0x3]
        %v297 = vld [vmem:[%s276 + $0xa0] sm:$0xff]
        %v298 = vld [vmem:[%s276 + $0xa8] sm:$0xff]
        %v299 = vld [vmem:[%s276 + $0xb0] sm:$0xff]
        %v300 = vld [vmem:[%s276 + $0xb8] sm:$0x3]
        %v301 = vld [vmem:[%s276 + $0xc0] sm:$0xff]
        %v302 = vld [vmem:[%s276 + $0xc8] sm:$0xff]
        %v303 = vld [vmem:[%s276 + $0xd0] sm:$0xff]
        %v304 = vld [vmem:[%s276 + $0xd8] sm:$0x3]
        %v305 = vld [vmem:[%s276 + $0xe0] sm:$0xff]
        %v306 = vld [vmem:[%s276 + $0xe8] sm:$0xff]
        %v307 = vld [vmem:[%s276 + $0xf0] sm:$0xff]
        %v308 = vld [vmem:[%s276 + $0xf8] sm:$0x3]
        %v309 = vld [vmem:[%s276 + $0x100] sm:$0xff]
        %v310 = vld [vmem:[%s276 + $0x108] sm:$0xff]
        %v311 = vld [vmem:[%s276 + $0x110] sm:$0xff]
        %v312 = vld [vmem:[%s276 + $0x118] sm:$0x3]
        %v313 = vld [vmem:[%s276 + $0x120] sm:$0xff]
        %v314 = vld [vmem:[%s276 + $0x128] sm:$0xff]
        %v315 = vld [vmem:[%s276 + $0x130] sm:$0xff]
        %v316 = vld [vmem:[%s276 + $0x138] sm:$0x3]
        %v317 = vld [vmem:[%s276 + $0x140] sm:$0xff]
        %v318 = vld [vmem:[%s276 + $0x148] sm:$0xff]
        %v319 = vld [vmem:[%s276 + $0x150] sm:$0xff]
        %v320 = vld [vmem:[%s276 + $0x158] sm:$0x3]
        %v321 = vld [vmem:[%s276 + $0x160] sm:$0xff]
        %v322 = vld [vmem:[%s276 + $0x168] sm:$0xff]
        %v323 = vld [vmem:[%s276 + $0x170] sm:$0xff]
        %v324 = vld [vmem:[%s276 + $0x178] sm:$0x3]
        %v325 = vld [vmem:[%s276 + $0x180] sm:$0xff]
        %v326 = vld [vmem:[%s276 + $0x188] sm:$0xff]
        %v327 = vld [vmem:[%s276 + $0x190] sm:$0xff]
        %v328 = vld [vmem:[%s276 + $0x198] sm:$0x3]
        %v329 = vld [vmem:[%s276 + $0x1a0] sm:$0xff]
        %v330 = vld [vmem:[%s276 + $0x1a8] sm:$0xff]
        %v331 = vld [vmem:[%s276 + $0x1b0] sm:$0xff]
        %v332 = vld [vmem:[%s276 + $0x1b8] sm:$0x3]
        %v333 = vld [vmem:[%s276 + $0x1c0] sm:$0xff]
        %v334 = vld [vmem:[%s276 + $0x1c8] sm:$0xff]
        %v335 = vld [vmem:[%s276 + $0x1d0] sm:$0xff]
        %v336 = vld [vmem:[%s276 + $0x1d8] sm:$0x3]
        %v337 = vld [vmem:[%s276 + $0x1e0] sm:$0xff]
        %v338 = vld [vmem:[%s276 + $0x1e8] sm:$0xff]
        %v339 = vld [vmem:[%s276 + $0x1f0] sm:$0xff]
        %v340 = vld [vmem:[%s276 + $0x1f8] sm:$0x3]
        %v341 = vld [vmem:[%s276 + $0x200] sm:$0xff]
        %v342 = vld [vmem:[%s276 + $0x208] sm:$0xff]
        %v343 = vld [vmem:[%s276 + $0x210] sm:$0xff]
        %v344 = vld [vmem:[%s276 + $0x218] sm:$0x3]
        %v345 = vld [vmem:[%s276 + $0x220] sm:$0xff]
        %v346 = vld [vmem:[%s276 + $0x228] sm:$0xff]
        %v347 = vld [vmem:[%s276 + $0x230] sm:$0xff]
        %v348 = vld [vmem:[%s276 + $0x238] sm:$0x3]
        %v349 = vld [vmem:[%s276 + $0x240] sm:$0xff]
        %v350 = vld [vmem:[%s276 + $0x248] sm:$0xff]
        %v351 = vld [vmem:[%s276 + $0x250] sm:$0xff]
        %v352 = vld [vmem:[%s276 + $0x258] sm:$0x3]
        %v353 = vld [vmem:[%s276 + $0x260] sm:$0xff]
        %v354 = vld [vmem:[%s276 + $0x268] sm:$0xff]
        %v355 = vld [vmem:[%s276 + $0x270] sm:$0xff]
        %v356 = vld [vmem:[%s276 + $0x278] sm:$0x3]
        %v357 = vpack.c.bf16 %v277, %v277
        %v358 = vpack.c.bf16 %v278, %v278
        %v359 = vpack.c.bf16 %v279, %v279
        %v360 = vpack.c.bf16 %v280, %v280
        %v361 = vpack.c.bf16 %v281, %v281
        %v362 = vpack.c.bf16 %v282, %v282
        %v363 = vpack.c.bf16 %v283, %v283
        %v364 = vpack.c.bf16 %v284, %v284
        %v365 = vpack.c.bf16 %v285, %v285
        %v366 = vpack.c.bf16 %v286, %v286
        %v367 = vpack.c.bf16 %v287, %v287
        %v368 = vpack.c.bf16 %v288, %v288
        %v369 = vpack.c.bf16 %v289, %v289
        %v370 = vpack.c.bf16 %v290, %v290
        %v371 = vpack.c.bf16 %v291, %v291
        %v372 = vpack.c.bf16 %v292, %v292
        %v373 = vpack.c.bf16 %v293, %v293
        %v374 = vpack.c.bf16 %v294, %v294
        %v375 = vpack.c.bf16 %v295, %v295
        %v376 = vpack.c.bf16 %v296, %v296
        %v377 = vpack.c.bf16 %v297, %v297
        %v378 = vpack.c.bf16 %v298, %v298
        %v379 = vpack.c.bf16 %v299, %v299
        %v380 = vpack.c.bf16 %v300, %v300
        %v381 = vpack.c.bf16 %v301, %v301
        %v382 = vpack.c.bf16 %v302, %v302
        %v383 = vpack.c.bf16 %v303, %v303
        %v384 = vpack.c.bf16 %v304, %v304
        %v385 = vpack.c.bf16 %v305, %v305
        %v386 = vpack.c.bf16 %v306, %v306
        %v387 = vpack.c.bf16 %v307, %v307
        %v388 = vpack.c.bf16 %v308, %v308
        %v389 = vpack.c.bf16 %v309, %v309
        %v390 = vpack.c.bf16 %v310, %v310
        %v391 = vpack.c.bf16 %v311, %v311
        %v392 = vpack.c.bf16 %v312, %v312
        %v393 = vpack.c.bf16 %v313, %v313
        %v394 = vpack.c.bf16 %v314, %v314
        %v395 = vpack.c.bf16 %v315, %v315
        %v396 = vpack.c.bf16 %v316, %v316
        %v397 = vpack.c.bf16 %v317, %v317
        %v398 = vpack.c.bf16 %v318, %v318
        %v399 = vpack.c.bf16 %v319, %v319
        %v400 = vpack.c.bf16 %v320, %v320
        %v401 = vpack.c.bf16 %v321, %v321
        %v402 = vpack.c.bf16 %v322, %v322
        %v403 = vpack.c.bf16 %v323, %v323
        %v404 = vpack.c.bf16 %v324, %v324
        %v405 = vpack.c.bf16 %v325, %v325
        %v406 = vpack.c.bf16 %v326, %v326
        %v407 = vpack.c.bf16 %v327, %v327
        %v408 = vpack.c.bf16 %v328, %v328
        %v409 = vpack.c.bf16 %v329, %v329
        %v410 = vpack.c.bf16 %v330, %v330
        %v411 = vpack.c.bf16 %v331, %v331
        %v412 = vpack.c.bf16 %v332, %v332
        %v413 = vpack.c.bf16 %v333, %v333
        %v414 = vpack.c.bf16 %v334, %v334
        %v415 = vpack.c.bf16 %v335, %v335
        %v416 = vpack.c.bf16 %v336, %v336
        %v417 = vpack.c.bf16 %v337, %v337
        %v418 = vpack.c.bf16 %v338, %v338
        %v419 = vpack.c.bf16 %v339, %v339
        %v420 = vpack.c.bf16 %v340, %v340
        %v421 = vpack.c.bf16 %v341, %v341
        %v422 = vpack.c.bf16 %v342, %v342
        %v423 = vpack.c.bf16 %v343, %v343
        %v424 = vpack.c.bf16 %v344, %v344
        %v425 = vpack.c.bf16 %v345, %v345
        %v426 = vpack.c.bf16 %v346, %v346
        %v427 = vpack.c.bf16 %v347, %v347
        %v428 = vpack.c.bf16 %v348, %v348
        %v429 = vpack.c.bf16 %v349, %v349
        %v430 = vpack.c.bf16 %v350, %v350
        %v431 = vpack.c.bf16 %v351, %v351
        %v432 = vpack.c.bf16 %v352, %v352
        %v433 = vpack.c.bf16 %v353, %v353
        %v434 = vpack.c.bf16 %v354, %v354
        %v435 = vpack.c.bf16 %v355, %v355
        %v436 = vpack.c.bf16 %v356, %v356
        %v437 = vunpack.c.l.bf16 %v357
        %v438 = vunpack.c.l.bf16 %v358
        %v439 = vunpack.c.l.bf16 %v359
        %v440 = vunpack.c.l.bf16 %v360
        %v441 = vunpack.c.l.bf16 %v361
        %v442 = vunpack.c.l.bf16 %v362
        %v443 = vunpack.c.l.bf16 %v363
        %v444 = vunpack.c.l.bf16 %v364
        %v445 = vunpack.c.l.bf16 %v365
        %v446 = vunpack.c.l.bf16 %v366
        %v447 = vunpack.c.l.bf16 %v367
        %v448 = vunpack.c.l.bf16 %v368
        %v449 = vunpack.c.l.bf16 %v369
        %v450 = vunpack.c.l.bf16 %v370
        %v451 = vunpack.c.l.bf16 %v371
        %v452 = vunpack.c.l.bf16 %v372
        %v453 = vunpack.c.l.bf16 %v373
        %v454 = vunpack.c.l.bf16 %v374
        %v455 = vunpack.c.l.bf16 %v375
        %v456 = vunpack.c.l.bf16 %v376
        %v457 = vunpack.c.l.bf16 %v377
        %v458 = vunpack.c.l.bf16 %v378
        %v459 = vunpack.c.l.bf16 %v379
        %v460 = vunpack.c.l.bf16 %v380
        %v461 = vunpack.c.l.bf16 %v381
        %v462 = vunpack.c.l.bf16 %v382
        %v463 = vunpack.c.l.bf16 %v383
        %v464 = vunpack.c.l.bf16 %v384
        %v465 = vunpack.c.l.bf16 %v385
        %v466 = vunpack.c.l.bf16 %v386
        %v467 = vunpack.c.l.bf16 %v387
        %v468 = vunpack.c.l.bf16 %v388
        %v469 = vunpack.c.l.bf16 %v389
        %v470 = vunpack.c.l.bf16 %v390
        %v471 = vunpack.c.l.bf16 %v391
        %v472 = vunpack.c.l.bf16 %v392
        %v473 = vunpack.c.l.bf16 %v393
        %v474 = vunpack.c.l.bf16 %v394
        %v475 = vunpack.c.l.bf16 %v395
        %v476 = vunpack.c.l.bf16 %v396
        %v477 = vunpack.c.l.bf16 %v397
        %v478 = vunpack.c.l.bf16 %v398
        %v479 = vunpack.c.l.bf16 %v399
        %v480 = vunpack.c.l.bf16 %v400
        %v481 = vunpack.c.l.bf16 %v401
        %v482 = vunpack.c.l.bf16 %v402
        %v483 = vunpack.c.l.bf16 %v403
        %v484 = vunpack.c.l.bf16 %v404
        %v485 = vunpack.c.l.bf16 %v405
        %v486 = vunpack.c.l.bf16 %v406
        %v487 = vunpack.c.l.bf16 %v407
        %v488 = vunpack.c.l.bf16 %v408
        %v489 = vunpack.c.l.bf16 %v409
        %v490 = vunpack.c.l.bf16 %v410
        %v491 = vunpack.c.l.bf16 %v411
        %v492 = vunpack.c.l.bf16 %v412
        %v493 = vunpack.c.l.bf16 %v413
        %v494 = vunpack.c.l.bf16 %v414
        %v495 = vunpack.c.l.bf16 %v415
        %v496 = vunpack.c.l.bf16 %v416
        %v497 = vunpack.c.l.bf16 %v417
        %v498 = vunpack.c.l.bf16 %v418
        %v499 = vunpack.c.l.bf16 %v419
        %v500 = vunpack.c.l.bf16 %v420
        %v501 = vunpack.c.l.bf16 %v421
        %v502 = vunpack.c.l.bf16 %v422
        %v503 = vunpack.c.l.bf16 %v423
        %v504 = vunpack.c.l.bf16 %v424
        %v505 = vunpack.c.l.bf16 %v425
        %v506 = vunpack.c.l.bf16 %v426
        %v507 = vunpack.c.l.bf16 %v427
        %v508 = vunpack.c.l.bf16 %v428
        %v509 = vunpack.c.l.bf16 %v429
        %v510 = vunpack.c.l.bf16 %v430
        %v511 = vunpack.c.l.bf16 %v431
        %v512 = vunpack.c.l.bf16 %v432
        %v513 = vunpack.c.l.bf16 %v433
        %v514 = vunpack.c.l.bf16 %v434
        %v515 = vunpack.c.l.bf16 %v435
        %v516 = vunpack.c.l.bf16 %v436
        %v517 = vmax.f32 %v437, 0.0
        %v518 = vmax.f32 %v438, 0.0
        %v519 = vmax.f32 %v439, 0.0
        %v520 = vmax.f32 %v440, 0.0
        %v521 = vmax.f32 %v441, 0.0
        %v522 = vmax.f32 %v442, 0.0
        %v523 = vmax.f32 %v443, 0.0
        %v524 = vmax.f32 %v444, 0.0
        %v525 = vmax.f32 %v445, 0.0
        %v526 = vmax.f32 %v446, 0.0
        %v527 = vmax.f32 %v447, 0.0
        %v528 = vmax.f32 %v448, 0.0
        %v529 = vmax.f32 %v449, 0.0
        %v530 = vmax.f32 %v450, 0.0
        %v531 = vmax.f32 %v451, 0.0
        %v532 = vmax.f32 %v452, 0.0
        %v533 = vmax.f32 %v453, 0.0
        %v534 = vmax.f32 %v454, 0.0
        %v535 = vmax.f32 %v455, 0.0
        %v536 = vmax.f32 %v456, 0.0
        %v537 = vmax.f32 %v457, 0.0
        %v538 = vmax.f32 %v458, 0.0
        %v539 = vmax.f32 %v459, 0.0
        %v540 = vmax.f32 %v460, 0.0
        %v541 = vmax.f32 %v461, 0.0
        %v542 = vmax.f32 %v462, 0.0
        %v543 = vmax.f32 %v463, 0.0
        %v544 = vmax.f32 %v464, 0.0
        %v545 = vmax.f32 %v465, 0.0
        %v546 = vmax.f32 %v466, 0.0
        %v547 = vmax.f32 %v467, 0.0
        %v548 = vmax.f32 %v468, 0.0
        %v549 = vmax.f32 %v469, 0.0
        %v550 = vmax.f32 %v470, 0.0
        %v551 = vmax.f32 %v471, 0.0
        %v552 = vmax.f32 %v472, 0.0
        %v553 = vmax.f32 %v473, 0.0
        %v554 = vmax.f32 %v474, 0.0
        %v555 = vmax.f32 %v475, 0.0
        %v556 = vmax.f32 %v476, 0.0
        %v557 = vmax.f32 %v477, 0.0
        %v558 = vmax.f32 %v478, 0.0
        %v559 = vmax.f32 %v479, 0.0
        %v560 = vmax.f32 %v480, 0.0
        %v561 = vmax.f32 %v481, 0.0
        %v562 = vmax.f32 %v482, 0.0
        %v563 = vmax.f32 %v483, 0.0
        %v564 = vmax.f32 %v484, 0.0
        %v565 = vmax.f32 %v485, 0.0
        %v566 = vmax.f32 %v486, 0.0
        %v567 = vmax.f32 %v487, 0.0
        %v568 = vmax.f32 %v488, 0.0
        %v569 = vmax.f32 %v489, 0.0
        %v570 = vmax.f32 %v490, 0.0
        %v571 = vmax.f32 %v491, 0.0
        %v572 = vmax.f32 %v492, 0.0
        %v573 = vmax.f32 %v493, 0.0
        %v574 = vmax.f32 %v494, 0.0
        %v575 = vmax.f32 %v495, 0.0
        %v576 = vmax.f32 %v496, 0.0
        %v577 = vmax.f32 %v497, 0.0
        %v578 = vmax.f32 %v498, 0.0
        %v579 = vmax.f32 %v499, 0.0
        %v580 = vmax.f32 %v500, 0.0
        %v581 = vmax.f32 %v501, 0.0
        %v582 = vmax.f32 %v502, 0.0
        %v583 = vmax.f32 %v503, 0.0
        %v584 = vmax.f32 %v504, 0.0
        %v585 = vmax.f32 %v505, 0.0
        %v586 = vmax.f32 %v506, 0.0
        %v587 = vmax.f32 %v507, 0.0
        %v588 = vmax.f32 %v508, 0.0
        %v589 = vmax.f32 %v509, 0.0
        %v590 = vmax.f32 %v510, 0.0
        %v591 = vmax.f32 %v511, 0.0
        %v592 = vmax.f32 %v512, 0.0
        %v593 = vmax.f32 %v513, 0.0
        %v594 = vmax.f32 %v514, 0.0
        %v595 = vmax.f32 %v515, 0.0
        %v596 = vmax.f32 %v516, 0.0
        %v597 = vpack.c.bf16 %v517, %v517
        %v598 = vpack.c.bf16 %v518, %v518
        %v599 = vpack.c.bf16 %v519, %v519
        %v600 = vpack.c.bf16 %v520, %v520
        %v601 = vpack.c.bf16 %v521, %v521
        %v602 = vpack.c.bf16 %v522, %v522
        %v603 = vpack.c.bf16 %v523, %v523
        %v604 = vpack.c.bf16 %v524, %v524
        %v605 = vpack.c.bf16 %v525, %v525
        %v606 = vpack.c.bf16 %v526, %v526
        %v607 = vpack.c.bf16 %v527, %v527
        %v608 = vpack.c.bf16 %v528, %v528
        %v609 = vpack.c.bf16 %v529, %v529
        %v610 = vpack.c.bf16 %v530, %v530
        %v611 = vpack.c.bf16 %v531, %v531
        %v612 = vpack.c.bf16 %v532, %v532
        %v613 = vpack.c.bf16 %v533, %v533
        %v614 = vpack.c.bf16 %v534, %v534
        %v615 = vpack.c.bf16 %v535, %v535
        %v616 = vpack.c.bf16 %v536, %v536
        %v617 = vpack.c.bf16 %v537, %v537
        %v618 = vpack.c.bf16 %v538, %v538
        %v619 = vpack.c.bf16 %v539, %v539
        %v620 = vpack.c.bf16 %v540, %v540
        %v621 = vpack.c.bf16 %v541, %v541
        %v622 = vpack.c.bf16 %v542, %v542
        %v623 = vpack.c.bf16 %v543, %v543
        %v624 = vpack.c.bf16 %v544, %v544
        %v625 = vpack.c.bf16 %v545, %v545
        %v626 = vpack.c.bf16 %v546, %v546
        %v627 = vpack.c.bf16 %v547, %v547
        %v628 = vpack.c.bf16 %v548, %v548
        %v629 = vpack.c.bf16 %v549, %v549
        %v630 = vpack.c.bf16 %v550, %v550
        %v631 = vpack.c.bf16 %v551, %v551
        %v632 = vpack.c.bf16 %v552, %v552
        %v633 = vpack.c.bf16 %v553, %v553
        %v634 = vpack.c.bf16 %v554, %v554
        %v635 = vpack.c.bf16 %v555, %v555
        %v636 = vpack.c.bf16 %v556, %v556
        %v637 = vpack.c.bf16 %v557, %v557
        %v638 = vpack.c.bf16 %v558, %v558
        %v639 = vpack.c.bf16 %v559, %v559
        %v640 = vpack.c.bf16 %v560, %v560
        %v641 = vpack.c.bf16 %v561, %v561
        %v642 = vpack.c.bf16 %v562, %v562
        %v643 = vpack.c.bf16 %v563, %v563
        %v644 = vpack.c.bf16 %v564, %v564
        %v645 = vpack.c.bf16 %v565, %v565
        %v646 = vpack.c.bf16 %v566, %v566
        %v647 = vpack.c.bf16 %v567, %v567
        %v648 = vpack.c.bf16 %v568, %v568
        %v649 = vpack.c.bf16 %v569, %v569
        %v650 = vpack.c.bf16 %v570, %v570
        %v651 = vpack.c.bf16 %v571, %v571
        %v652 = vpack.c.bf16 %v572, %v572
        %v653 = vpack.c.bf16 %v573, %v573
        %v654 = vpack.c.bf16 %v574, %v574
        %v655 = vpack.c.bf16 %v575, %v575
        %v656 = vpack.c.bf16 %v576, %v576
        %v657 = vpack.c.bf16 %v577, %v577
        %v658 = vpack.c.bf16 %v578, %v578
        %v659 = vpack.c.bf16 %v579, %v579
        %v660 = vpack.c.bf16 %v580, %v580
        %v661 = vpack.c.bf16 %v581, %v581
        %v662 = vpack.c.bf16 %v582, %v582
        %v663 = vpack.c.bf16 %v583, %v583
        %v664 = vpack.c.bf16 %v584, %v584
        %v665 = vpack.c.bf16 %v585, %v585
        %v666 = vpack.c.bf16 %v586, %v586
        %v667 = vpack.c.bf16 %v587, %v587
        %v668 = vpack.c.bf16 %v588, %v588
        %v669 = vpack.c.bf16 %v589, %v589
        %v670 = vpack.c.bf16 %v590, %v590
        %v671 = vpack.c.bf16 %v591, %v591
        %v672 = vpack.c.bf16 %v592, %v592
        %v673 = vpack.c.bf16 %v593, %v593
        %v674 = vpack.c.bf16 %v594, %v594
        %v675 = vpack.c.bf16 %v595, %v595
        %v676 = vpack.c.bf16 %v596, %v596
        %vm677 = vsmask.f32 3328
        %vm678 = vsmask.f32 7440
        %vm679 = vmor %vm677, %vm678
        %v681 = vshrl.u32 %v597, 16
        %v683 = vrot.slane %v681, 4
        %v684 = vshll.u32 %v597, 16
        %v686 = vrot.slane %v684, 5
        %v687 = vor.u32 %v683, %v686
        %v688 = vrot.slane %v687, 4
        %v690 = vshll.u32 %v598, 16
        %v692 = vrot.slane %v690, 5
        %v693 = vsel %vm679, %v688, %v692
        %v694 = vshrl.u32 %v598, 16
        %v696 = vrot.slane %v694, 4
        %v697 = vor.u32 %v696, %v692
        %v698 = vrot.slane %v697, 4
        %v700 = vshll.u32 %v599, 16
        %v702 = vrot.slane %v700, 5
        %v703 = vsel %vm679, %v698, %v702
        %v704 = vshrl.u32 %v599, 16
        %v706 = vrot.slane %v704, 4
        %v707 = vor.u32 %v706, %v702
        %v708 = vrot.slane %v707, 4
        %v710 = vshll.u32 %v600, 16
        %v712 = vrot.slane %v710, 5
        %v713 = vsel %vm679, %v708, %v712
        %v715 = vshrl.u32 %v601, 16
        %v717 = vrot.slane %v715, 4
        %v718 = vshll.u32 %v601, 16
        %v720 = vrot.slane %v718, 5
        %v721 = vor.u32 %v717, %v720
        %v722 = vrot.slane %v721, 4
        %v724 = vshll.u32 %v602, 16
        %v726 = vrot.slane %v724, 5
        %v727 = vsel %vm679, %v722, %v726
        %v728 = vshrl.u32 %v602, 16
        %v730 = vrot.slane %v728, 4
        %v731 = vor.u32 %v730, %v726
        %v732 = vrot.slane %v731, 4
        %v734 = vshll.u32 %v603, 16
        %v736 = vrot.slane %v734, 5
        %v737 = vsel %vm679, %v732, %v736
        %v738 = vshrl.u32 %v603, 16
        %v740 = vrot.slane %v738, 4
        %v741 = vor.u32 %v740, %v736
        %v742 = vrot.slane %v741, 4
        %v744 = vshll.u32 %v604, 16
        %v746 = vrot.slane %v744, 5
        %v747 = vsel %vm679, %v742, %v746
        %v749 = vshrl.u32 %v605, 16
        %v751 = vrot.slane %v749, 4
        %v752 = vshll.u32 %v605, 16
        %v754 = vrot.slane %v752, 5
        %v755 = vor.u32 %v751, %v754
        %v756 = vrot.slane %v755, 4
        %v758 = vshll.u32 %v606, 16
        %v760 = vrot.slane %v758, 5
        %v761 = vsel %vm679, %v756, %v760
        %v762 = vshrl.u32 %v606, 16
        %v764 = vrot.slane %v762, 4
        %v765 = vor.u32 %v764, %v760
        %v766 = vrot.slane %v765, 4
        %v768 = vshll.u32 %v607, 16
        %v770 = vrot.slane %v768, 5
        %v771 = vsel %vm679, %v766, %v770
        %v772 = vshrl.u32 %v607, 16
        %v774 = vrot.slane %v772, 4
        %v775 = vor.u32 %v774, %v770
        %v776 = vrot.slane %v775, 4
        %v778 = vshll.u32 %v608, 16
        %v780 = vrot.slane %v778, 5
        %v781 = vsel %vm679, %v776, %v780
        %v783 = vshrl.u32 %v609, 16
        %v785 = vrot.slane %v783, 4
        %v786 = vshll.u32 %v609, 16
        %v788 = vrot.slane %v786, 5
        %v789 = vor.u32 %v785, %v788
        %v790 = vrot.slane %v789, 4
        %v792 = vshll.u32 %v610, 16
        %v794 = vrot.slane %v792, 5
        %v795 = vsel %vm679, %v790, %v794
        %v796 = vshrl.u32 %v610, 16
        %v798 = vrot.slane %v796, 4
        %v799 = vor.u32 %v798, %v794
        %v800 = vrot.slane %v799, 4
        %v802 = vshll.u32 %v611, 16
        %v804 = vrot.slane %v802, 5
        %v805 = vsel %vm679, %v800, %v804
        %v806 = vshrl.u32 %v611, 16
        %v808 = vrot.slane %v806, 4
        %v809 = vor.u32 %v808, %v804
        %v810 = vrot.slane %v809, 4
        %v812 = vshll.u32 %v612, 16
        %v814 = vrot.slane %v812, 5
        %v815 = vsel %vm679, %v810, %v814
        %v817 = vshrl.u32 %v613, 16
        %v819 = vrot.slane %v817, 4
        %v820 = vshll.u32 %v613, 16
        %v822 = vrot.slane %v820, 5
        %v823 = vor.u32 %v819, %v822
        %v824 = vrot.slane %v823, 4
        %v826 = vshll.u32 %v614, 16
        %v828 = vrot.slane %v826, 5
        %v829 = vsel %vm679, %v824, %v828
        %v830 = vshrl.u32 %v614, 16
        %v832 = vrot.slane %v830, 4
        %v833 = vor.u32 %v832, %v828
        %v834 = vrot.slane %v833, 4
        %v836 = vshll.u32 %v615, 16
        %v838 = vrot.slane %v836, 5
        %v839 = vsel %vm679, %v834, %v838
        %v840 = vshrl.u32 %v615, 16
        %v842 = vrot.slane %v840, 4
        %v843 = vor.u32 %v842, %v838
        %v844 = vrot.slane %v843, 4
        %v846 = vshll.u32 %v616, 16
        %v848 = vrot.slane %v846, 5
        %v849 = vsel %vm679, %v844, %v848
        %v851 = vshrl.u32 %v617, 16
        %v853 = vrot.slane %v851, 4
        %v854 = vshll.u32 %v617, 16
        %v856 = vrot.slane %v854, 5
        %v857 = vor.u32 %v853, %v856
        %v858 = vrot.slane %v857, 4
        %v860 = vshll.u32 %v618, 16
        %v862 = vrot.slane %v860, 5
        %v863 = vsel %vm679, %v858, %v862
        %v864 = vshrl.u32 %v618, 16
        %v866 = vrot.slane %v864, 4
        %v867 = vor.u32 %v866, %v862
        %v868 = vrot.slane %v867, 4
        %v870 = vshll.u32 %v619, 16
        %v872 = vrot.slane %v870, 5
        %v873 = vsel %vm679, %v868, %v872
        %v874 = vshrl.u32 %v619, 16
        %v876 = vrot.slane %v874, 4
        %v877 = vor.u32 %v876, %v872
        %v878 = vrot.slane %v877, 4
        %v880 = vshll.u32 %v620, 16
        %v882 = vrot.slane %v880, 5
        %v883 = vsel %vm679, %v878, %v882
        %v885 = vshrl.u32 %v621, 16
        %v887 = vrot.slane %v885, 4
        %v888 = vshll.u32 %v621, 16
        %v890 = vrot.slane %v888, 5
        %v891 = vor.u32 %v887, %v890
        %v892 = vrot.slane %v891, 4
        %v894 = vshll.u32 %v622, 16
        %v896 = vrot.slane %v894, 5
        %v897 = vsel %vm679, %v892, %v896
        %v898 = vshrl.u32 %v622, 16
        %v900 = vrot.slane %v898, 4
        %v901 = vor.u32 %v900, %v896
        %v902 = vrot.slane %v901, 4
        %v904 = vshll.u32 %v623, 16
        %v906 = vrot.slane %v904, 5
        %v907 = vsel %vm679, %v902, %v906
        %v908 = vshrl.u32 %v623, 16
        %v910 = vrot.slane %v908, 4
        %v911 = vor.u32 %v910, %v906
        %v912 = vrot.slane %v911, 4
        %v914 = vshll.u32 %v624, 16
        %v916 = vrot.slane %v914, 5
        %v917 = vsel %vm679, %v912, %v916
        %v919 = vshrl.u32 %v625, 16
        %v921 = vrot.slane %v919, 4
        %v922 = vshll.u32 %v625, 16
        %v924 = vrot.slane %v922, 5
        %v925 = vor.u32 %v921, %v924
        %v926 = vrot.slane %v925, 4
        %v928 = vshll.u32 %v626, 16
        %v930 = vrot.slane %v928, 5
        %v931 = vsel %vm679, %v926, %v930
        %v932 = vshrl.u32 %v626, 16
        %v934 = vrot.slane %v932, 4
        %v935 = vor.u32 %v934, %v930
        %v936 = vrot.slane %v935, 4
        %v938 = vshll.u32 %v627, 16
        %v940 = vrot.slane %v938, 5
        %v941 = vsel %vm679, %v936, %v940
        %v942 = vshrl.u32 %v627, 16
        %v944 = vrot.slane %v942, 4
        %v945 = vor.u32 %v944, %v940
        %v946 = vrot.slane %v945, 4
        %v948 = vshll.u32 %v628, 16
        %v950 = vrot.slane %v948, 5
        %v951 = vsel %vm679, %v946, %v950
        %v953 = vshrl.u32 %v629, 16
        %v955 = vrot.slane %v953, 4
        %v956 = vshll.u32 %v629, 16
        %v958 = vrot.slane %v956, 5
        %v959 = vor.u32 %v955, %v958
        %v960 = vrot.slane %v959, 4
        %v962 = vshll.u32 %v630, 16
        %v964 = vrot.slane %v962, 5
        %v965 = vsel %vm679, %v960, %v964
        %v966 = vshrl.u32 %v630, 16
        %v968 = vrot.slane %v966, 4
        %v969 = vor.u32 %v968, %v964
        %v970 = vrot.slane %v969, 4
        %v972 = vshll.u32 %v631, 16
        %v974 = vrot.slane %v972, 5
        %v975 = vsel %vm679, %v970, %v974
        %v976 = vshrl.u32 %v631, 16
        %v978 = vrot.slane %v976, 4
        %v979 = vor.u32 %v978, %v974
        %v980 = vrot.slane %v979, 4
        %v982 = vshll.u32 %v632, 16
        %v984 = vrot.slane %v982, 5
        %v985 = vsel %vm679, %v980, %v984
        %v987 = vshrl.u32 %v633, 16
        %v989 = vrot.slane %v987, 4
        %v990 = vshll.u32 %v633, 16
        %v992 = vrot.slane %v990, 5
        %v993 = vor.u32 %v989, %v992
        %v994 = vrot.slane %v993, 4
        %v996 = vshll.u32 %v634, 16
        %v998 = vrot.slane %v996, 5
        %v999 = vsel %vm679, %v994, %v998
        %v1000 = vshrl.u32 %v634, 16
        %v1002 = vrot.slane %v1000, 4
        %v1003 = vor.u32 %v1002, %v998
        %v1004 = vrot.slane %v1003, 4
        %v1006 = vshll.u32 %v635, 16
        %v1008 = vrot.slane %v1006, 5
        %v1009 = vsel %vm679, %v1004, %v1008
        %v1010 = vshrl.u32 %v635, 16
        %v1012 = vrot.slane %v1010, 4
        %v1013 = vor.u32 %v1012, %v1008
        %v1014 = vrot.slane %v1013, 4
        %v1016 = vshll.u32 %v636, 16
        %v1018 = vrot.slane %v1016, 5
        %v1019 = vsel %vm679, %v1014, %v1018
        %v1021 = vshrl.u32 %v637, 16
        %v1023 = vrot.slane %v1021, 4
        %v1024 = vshll.u32 %v637, 16
        %v1026 = vrot.slane %v1024, 5
        %v1027 = vor.u32 %v1023, %v1026
        %v1028 = vrot.slane %v1027, 4
        %v1030 = vshll.u32 %v638, 16
        %v1032 = vrot.slane %v1030, 5
        %v1033 = vsel %vm679, %v1028, %v1032
        %v1034 = vshrl.u32 %v638, 16
        %v1036 = vrot.slane %v1034, 4
        %v1037 = vor.u32 %v1036, %v1032
        %v1038 = vrot.slane %v1037, 4
        %v1040 = vshll.u32 %v639, 16
        %v1042 = vrot.slane %v1040, 5
        %v1043 = vsel %vm679, %v1038, %v1042
        %v1044 = vshrl.u32 %v639, 16
        %v1046 = vrot.slane %v1044, 4
        %v1047 = vor.u32 %v1046, %v1042
        %v1048 = vrot.slane %v1047, 4
        %v1050 = vshll.u32 %v640, 16
        %v1052 = vrot.slane %v1050, 5
        %v1053 = vsel %vm679, %v1048, %v1052
        %v1055 = vshrl.u32 %v641, 16
        %v1057 = vrot.slane %v1055, 4
        %v1058 = vshll.u32 %v641, 16
        %v1060 = vrot.slane %v1058, 5
        %v1061 = vor.u32 %v1057, %v1060
        %v1062 = vrot.slane %v1061, 4
        %v1064 = vshll.u32 %v642, 16
        %v1066 = vrot.slane %v1064, 5
        %v1067 = vsel %vm679, %v1062, %v1066
        %v1068 = vshrl.u32 %v642, 16
        %v1070 = vrot.slane %v1068, 4
        %v1071 = vor.u32 %v1070, %v1066
        %v1072 = vrot.slane %v1071, 4
        %v1074 = vshll.u32 %v643, 16
        %v1076 = vrot.slane %v1074, 5
        %v1077 = vsel %vm679, %v1072, %v1076
        %v1078 = vshrl.u32 %v643, 16
        %v1080 = vrot.slane %v1078, 4
        %v1081 = vor.u32 %v1080, %v1076
        %v1082 = vrot.slane %v1081, 4
        %v1084 = vshll.u32 %v644, 16
        %v1086 = vrot.slane %v1084, 5
        %v1087 = vsel %vm679, %v1082, %v1086
        %v1089 = vshrl.u32 %v645, 16
        %v1091 = vrot.slane %v1089, 4
        %v1092 = vshll.u32 %v645, 16
        %v1094 = vrot.slane %v1092, 5
        %v1095 = vor.u32 %v1091, %v1094
        %v1096 = vrot.slane %v1095, 4
        %v1098 = vshll.u32 %v646, 16
        %v1100 = vrot.slane %v1098, 5
        %v1101 = vsel %vm679, %v1096, %v1100
        %v1102 = vshrl.u32 %v646, 16
        %v1104 = vrot.slane %v1102, 4
        %v1105 = vor.u32 %v1104, %v1100
        %v1106 = vrot.slane %v1105, 4
        %v1108 = vshll.u32 %v647, 16
        %v1110 = vrot.slane %v1108, 5
        %v1111 = vsel %vm679, %v1106, %v1110
        %v1112 = vshrl.u32 %v647, 16
        %v1114 = vrot.slane %v1112, 4
        %v1115 = vor.u32 %v1114, %v1110
        %v1116 = vrot.slane %v1115, 4
        %v1118 = vshll.u32 %v648, 16
        %v1120 = vrot.slane %v1118, 5
        %v1121 = vsel %vm679, %v1116, %v1120
        %v1123 = vshrl.u32 %v649, 16
        %v1125 = vrot.slane %v1123, 4
        %v1126 = vshll.u32 %v649, 16
        %v1128 = vrot.slane %v1126, 5
        %v1129 = vor.u32 %v1125, %v1128
        %v1130 = vrot.slane %v1129, 4
        %v1132 = vshll.u32 %v650, 16
        %v1134 = vrot.slane %v1132, 5
        %v1135 = vsel %vm679, %v1130, %v1134
        %v1136 = vshrl.u32 %v650, 16
        %v1138 = vrot.slane %v1136, 4
        %v1139 = vor.u32 %v1138, %v1134
        %v1140 = vrot.slane %v1139, 4
        %v1142 = vshll.u32 %v651, 16
        %v1144 = vrot.slane %v1142, 5
        %v1145 = vsel %vm679, %v1140, %v1144
        %v1146 = vshrl.u32 %v651, 16
        %v1148 = vrot.slane %v1146, 4
        %v1149 = vor.u32 %v1148, %v1144
        %v1150 = vrot.slane %v1149, 4
        %v1152 = vshll.u32 %v652, 16
        %v1154 = vrot.slane %v1152, 5
        %v1155 = vsel %vm679, %v1150, %v1154
        %v1157 = vshrl.u32 %v653, 16
        %v1159 = vrot.slane %v1157, 4
        %v1160 = vshll.u32 %v653, 16
        %v1162 = vrot.slane %v1160, 5
        %v1163 = vor.u32 %v1159, %v1162
        %v1164 = vrot.slane %v1163, 4
        %v1166 = vshll.u32 %v654, 16
        %v1168 = vrot.slane %v1166, 5
        %v1169 = vsel %vm679, %v1164, %v1168
        %v1170 = vshrl.u32 %v654, 16
        %v1172 = vrot.slane %v1170, 4
        %v1173 = vor.u32 %v1172, %v1168
        %v1174 = vrot.slane %v1173, 4
        %v1176 = vshll.u32 %v655, 16
        %v1178 = vrot.slane %v1176, 5
        %v1179 = vsel %vm679, %v1174, %v1178
        %v1180 = vshrl.u32 %v655, 16
        %v1182 = vrot.slane %v1180, 4
        %v1183 = vor.u32 %v1182, %v1178
        %v1184 = vrot.slane %v1183, 4
        %v1186 = vshll.u32 %v656, 16
        %v1188 = vrot.slane %v1186, 5
        %v1189 = vsel %vm679, %v1184, %v1188
        %v1191 = vshrl.u32 %v657, 16
        %v1193 = vrot.slane %v1191, 4
        %v1194 = vshll.u32 %v657, 16
        %v1196 = vrot.slane %v1194, 5
        %v1197 = vor.u32 %v1193, %v1196
        %v1198 = vrot.slane %v1197, 4
        %v1200 = vshll.u32 %v658, 16
        %v1202 = vrot.slane %v1200, 5
        %v1203 = vsel %vm679, %v1198, %v1202
        %v1204 = vshrl.u32 %v658, 16
        %v1206 = vrot.slane %v1204, 4
        %v1207 = vor.u32 %v1206, %v1202
        %v1208 = vrot.slane %v1207, 4
        %v1210 = vshll.u32 %v659, 16
        %v1212 = vrot.slane %v1210, 5
        %v1213 = vsel %vm679, %v1208, %v1212
        %v1214 = vshrl.u32 %v659, 16
        %v1216 = vrot.slane %v1214, 4
        %v1217 = vor.u32 %v1216, %v1212
        %v1218 = vrot.slane %v1217, 4
        %v1220 = vshll.u32 %v660, 16
        %v1222 = vrot.slane %v1220, 5
        %v1223 = vsel %vm679, %v1218, %v1222
        %v1225 = vshrl.u32 %v661, 16
        %v1227 = vrot.slane %v1225, 4
        %v1228 = vshll.u32 %v661, 16
        %v1230 = vrot.slane %v1228, 5
        %v1231 = vor.u32 %v1227, %v1230
        %v1232 = vrot.slane %v1231, 4
        %v1234 = vshll.u32 %v662, 16
        %v1236 = vrot.slane %v1234, 5
        %v1237 = vsel %vm679, %v1232, %v1236
        %v1238 = vshrl.u32 %v662, 16
        %v1240 = vrot.slane %v1238, 4
        %v1241 = vor.u32 %v1240, %v1236
        %v1242 = vrot.slane %v1241, 4
        %v1244 = vshll.u32 %v663, 16
        %v1246 = vrot.slane %v1244, 5
        %v1247 = vsel %vm679, %v1242, %v1246
        %v1248 = vshrl.u32 %v663, 16
        %v1250 = vrot.slane %v1248, 4
        %v1251 = vor.u32 %v1250, %v1246
        %v1252 = vrot.slane %v1251, 4
        %v1254 = vshll.u32 %v664, 16
        %v1256 = vrot.slane %v1254, 5
        %v1257 = vsel %vm679, %v1252, %v1256
        %v1259 = vshrl.u32 %v665, 16
        %v1261 = vrot.slane %v1259, 4
        %v1262 = vshll.u32 %v665, 16
        %v1264 = vrot.slane %v1262, 5
        %v1265 = vor.u32 %v1261, %v1264
        %v1266 = vrot.slane %v1265, 4
        %v1268 = vshll.u32 %v666, 16
        %v1270 = vrot.slane %v1268, 5
        %v1271 = vsel %vm679, %v1266, %v1270
        %v1272 = vshrl.u32 %v666, 16
        %v1274 = vrot.slane %v1272, 4
        %v1275 = vor.u32 %v1274, %v1270
        %v1276 = vrot.slane %v1275, 4
        %v1278 = vshll.u32 %v667, 16
        %v1280 = vrot.slane %v1278, 5
        %v1281 = vsel %vm679, %v1276, %v1280
        %v1282 = vshrl.u32 %v667, 16
        %v1284 = vrot.slane %v1282, 4
        %v1285 = vor.u32 %v1284, %v1280
        %v1286 = vrot.slane %v1285, 4
        %v1288 = vshll.u32 %v668, 16
        %v1290 = vrot.slane %v1288, 5
        %v1291 = vsel %vm679, %v1286, %v1290
        %vm1364 = vcmask 1042432
        %vm1365 = vcmask 1046532
        %vm1366 = vmor %vm1364, %vm1365
        %v1367 = vrot.slane %v597, 5
        %v1368 = vrot.slane %v1367, 4
        %v1369 = vrot.slane %v598, 5
        %v1370 = vsel %vm1366, %v1368, %v1369
        %v1371 = vrot.slane %v1369, 4
        %v1372 = vrot.slane %v599, 5
        %v1373 = vsel %vm1366, %v1371, %v1372
        %v1374 = vrot.slane %v1372, 4
        %v1375 = vrot.slane %v600, 5
        %v1376 = vsel %vm1366, %v1374, %v1375
        %v1377 = vrot.slane %v601, 5
        %v1378 = vrot.slane %v1377, 4
        %v1379 = vrot.slane %v602, 5
        %v1380 = vsel %vm1366, %v1378, %v1379
        %v1381 = vrot.slane %v1379, 4
        %v1382 = vrot.slane %v603, 5
        %v1383 = vsel %vm1366, %v1381, %v1382
        %v1384 = vrot.slane %v1382, 4
        %v1385 = vrot.slane %v604, 5
        %v1386 = vsel %vm1366, %v1384, %v1385
        %v1387 = vrot.slane %v605, 5
        %v1388 = vrot.slane %v1387, 4
        %v1389 = vrot.slane %v606, 5
        %v1390 = vsel %vm1366, %v1388, %v1389
        %v1391 = vrot.slane %v1389, 4
        %v1392 = vrot.slane %v607, 5
        %v1393 = vsel %vm1366, %v1391, %v1392
        %v1394 = vrot.slane %v1392, 4
        %v1395 = vrot.slane %v608, 5
        %v1396 = vsel %vm1366, %v1394, %v1395
        %v1397 = vrot.slane %v609, 5
        %v1398 = vrot.slane %v1397, 4
        %v1399 = vrot.slane %v610, 5
        %v1400 = vsel %vm1366, %v1398, %v1399
        %v1401 = vrot.slane %v1399, 4
        %v1402 = vrot.slane %v611, 5
        %v1403 = vsel %vm1366, %v1401, %v1402
        %v1404 = vrot.slane %v1402, 4
        %v1405 = vrot.slane %v612, 5
        %v1406 = vsel %vm1366, %v1404, %v1405
        %v1407 = vrot.slane %v613, 5
        %v1408 = vrot.slane %v1407, 4
        %v1409 = vrot.slane %v614, 5
        %v1410 = vsel %vm1366, %v1408, %v1409
        %v1411 = vrot.slane %v1409, 4
        %v1412 = vrot.slane %v615, 5
        %v1413 = vsel %vm1366, %v1411, %v1412
        %v1414 = vrot.slane %v1412, 4
        %v1415 = vrot.slane %v616, 5
        %v1416 = vsel %vm1366, %v1414, %v1415
        %v1417 = vrot.slane %v617, 5
        %v1418 = vrot.slane %v1417, 4
        %v1419 = vrot.slane %v618, 5
        %v1420 = vsel %vm1366, %v1418, %v1419
        %v1421 = vrot.slane %v1419, 4
        %v1422 = vrot.slane %v619, 5
        %v1423 = vsel %vm1366, %v1421, %v1422
        %v1424 = vrot.slane %v1422, 4
        %v1425 = vrot.slane %v620, 5
        %v1426 = vsel %vm1366, %v1424, %v1425
        %v1427 = vrot.slane %v621, 5
        %v1428 = vrot.slane %v1427, 4
        %v1429 = vrot.slane %v622, 5
        %v1430 = vsel %vm1366, %v1428, %v1429
        %v1431 = vrot.slane %v1429, 4
        %v1432 = vrot.slane %v623, 5
        %v1433 = vsel %vm1366, %v1431, %v1432
        %v1434 = vrot.slane %v1432, 4
        %v1435 = vrot.slane %v624, 5
        %v1436 = vsel %vm1366, %v1434, %v1435
        %v1437 = vrot.slane %v625, 5
        %v1438 = vrot.slane %v1437, 4
        %v1439 = vrot.slane %v626, 5
        %v1440 = vsel %vm1366, %v1438, %v1439
        %v1441 = vrot.slane %v1439, 4
        %v1442 = vrot.slane %v627, 5
        %v1443 = vsel %vm1366, %v1441, %v1442
        %v1444 = vrot.slane %v1442, 4
        %v1445 = vrot.slane %v628, 5
        %v1446 = vsel %vm1366, %v1444, %v1445
        %v1447 = vrot.slane %v629, 5
        %v1448 = vrot.slane %v1447, 4
        %v1449 = vrot.slane %v630, 5
        %v1450 = vsel %vm1366, %v1448, %v1449
        %v1451 = vrot.slane %v1449, 4
        %v1452 = vrot.slane %v631, 5
        %v1453 = vsel %vm1366, %v1451, %v1452
        %v1454 = vrot.slane %v1452, 4
        %v1455 = vrot.slane %v632, 5
        %v1456 = vsel %vm1366, %v1454, %v1455
        %v1457 = vrot.slane %v633, 5
        %v1458 = vrot.slane %v1457, 4
        %v1459 = vrot.slane %v634, 5
        %v1460 = vsel %vm1366, %v1458, %v1459
        %v1461 = vrot.slane %v1459, 4
        %v1462 = vrot.slane %v635, 5
        %v1463 = vsel %vm1366, %v1461, %v1462
        %v1464 = vrot.slane %v1462, 4
        %v1465 = vrot.slane %v636, 5
        %v1466 = vsel %vm1366, %v1464, %v1465
        %v1467 = vrot.slane %v637, 5
        %v1468 = vrot.slane %v1467, 4
        %v1469 = vrot.slane %v638, 5
        %v1470 = vsel %vm1366, %v1468, %v1469
        %v1471 = vrot.slane %v1469, 4
        %v1472 = vrot.slane %v639, 5
        %v1473 = vsel %vm1366, %v1471, %v1472
        %v1474 = vrot.slane %v1472, 4
        %v1475 = vrot.slane %v640, 5
        %v1476 = vsel %vm1366, %v1474, %v1475
        %v1477 = vrot.slane %v641, 5
        %v1478 = vrot.slane %v1477, 4
        %v1479 = vrot.slane %v642, 5
        %v1480 = vsel %vm1366, %v1478, %v1479
        %v1481 = vrot.slane %v1479, 4
        %v1482 = vrot.slane %v643, 5
        %v1483 = vsel %vm1366, %v1481, %v1482
        %v1484 = vrot.slane %v1482, 4
        %v1485 = vrot.slane %v644, 5
        %v1486 = vsel %vm1366, %v1484, %v1485
        %v1487 = vrot.slane %v645, 5
        %v1488 = vrot.slane %v1487, 4
        %v1489 = vrot.slane %v646, 5
        %v1490 = vsel %vm1366, %v1488, %v1489
        %v1491 = vrot.slane %v1489, 4
        %v1492 = vrot.slane %v647, 5
        %v1493 = vsel %vm1366, %v1491, %v1492
        %v1494 = vrot.slane %v1492, 4
        %v1495 = vrot.slane %v648, 5
        %v1496 = vsel %vm1366, %v1494, %v1495
        %v1497 = vrot.slane %v649, 5
        %v1498 = vrot.slane %v1497, 4
        %v1499 = vrot.slane %v650, 5
        %v1500 = vsel %vm1366, %v1498, %v1499
        %v1501 = vrot.slane %v1499, 4
        %v1502 = vrot.slane %v651, 5
        %v1503 = vsel %vm1366, %v1501, %v1502
        %v1504 = vrot.slane %v1502, 4
        %v1505 = vrot.slane %v652, 5
        %v1506 = vsel %vm1366, %v1504, %v1505
        %v1507 = vrot.slane %v653, 5
        %v1508 = vrot.slane %v1507, 4
        %v1509 = vrot.slane %v654, 5
        %v1510 = vsel %vm1366, %v1508, %v1509
        %v1511 = vrot.slane %v1509, 4
        %v1512 = vrot.slane %v655, 5
        %v1513 = vsel %vm1366, %v1511, %v1512
        %v1514 = vrot.slane %v1512, 4
        %v1515 = vrot.slane %v656, 5
        %v1516 = vsel %vm1366, %v1514, %v1515
        %v1517 = vrot.slane %v657, 5
        %v1518 = vrot.slane %v1517, 4
        %v1519 = vrot.slane %v658, 5
        %v1520 = vsel %vm1366, %v1518, %v1519
        %v1521 = vrot.slane %v1519, 4
        %v1522 = vrot.slane %v659, 5
        %v1523 = vsel %vm1366, %v1521, %v1522
        %v1524 = vrot.slane %v1522, 4
        %v1525 = vrot.slane %v660, 5
        %v1526 = vsel %vm1366, %v1524, %v1525
        %v1527 = vrot.slane %v661, 5
        %v1528 = vrot.slane %v1527, 4
        %v1529 = vrot.slane %v662, 5
        %v1530 = vsel %vm1366, %v1528, %v1529
        %v1531 = vrot.slane %v1529, 4
        %v1532 = vrot.slane %v663, 5
        %v1533 = vsel %vm1366, %v1531, %v1532
        %v1534 = vrot.slane %v1532, 4
        %v1535 = vrot.slane %v664, 5
        %v1536 = vsel %vm1366, %v1534, %v1535
        %v1537 = vrot.slane %v665, 5
        %v1538 = vrot.slane %v1537, 4
        %v1539 = vrot.slane %v666, 5
        %v1540 = vsel %vm1366, %v1538, %v1539
        %v1541 = vrot.slane %v1539, 4
        %v1542 = vrot.slane %v667, 5
        %v1543 = vsel %vm1366, %v1541, %v1542
        %v1544 = vrot.slane %v1542, 4
        %v1545 = vrot.slane %v668, 5
        %v1546 = vsel %vm1366, %v1544, %v1545
        %v1548 = vshrl.u32 %v669, 16
        %v1550 = vrot.slane %v1548, 4
        %v1551 = vshll.u32 %v669, 16
        %v1553 = vrot.slane %v1551, 5
        %v1554 = vor.u32 %v1550, %v1553
        %v1555 = vrot.slane %v1554, 4
        %v1557 = vshll.u32 %v670, 16
        %v1559 = vrot.slane %v1557, 5
        %v1560 = vsel %vm679, %v1555, %v1559
        %v1561 = vshrl.u32 %v670, 16
        %v1563 = vrot.slane %v1561, 4
        %v1564 = vor.u32 %v1563, %v1559
        %v1565 = vrot.slane %v1564, 4
        %v1567 = vshll.u32 %v671, 16
        %v1569 = vrot.slane %v1567, 5
        %v1570 = vsel %vm679, %v1565, %v1569
        %v1571 = vshrl.u32 %v671, 16
        %v1573 = vrot.slane %v1571, 4
        %v1574 = vor.u32 %v1573, %v1569
        %v1575 = vrot.slane %v1574, 4
        %v1577 = vshll.u32 %v672, 16
        %v1579 = vrot.slane %v1577, 5
        %v1580 = vsel %vm679, %v1575, %v1579
        %v1585 = vrot.slane %v669, 5
        %v1586 = vrot.slane %v1585, 4
        %v1587 = vrot.slane %v670, 5
        %v1588 = vsel %vm1366, %v1586, %v1587
        %v1589 = vrot.slane %v1587, 4
        %v1590 = vrot.slane %v671, 5
        %v1591 = vsel %vm1366, %v1589, %v1590
        %v1592 = vrot.slane %v1590, 4
        %v1593 = vrot.slane %v672, 5
        %v1594 = vsel %vm1366, %v1592, %v1593
        %v1596 = vshrl.u32 %v673, 16
        %v1598 = vrot.slane %v1596, 4
        %v1599 = vshll.u32 %v673, 16
        %v1601 = vrot.slane %v1599, 5
        %v1602 = vor.u32 %v1598, %v1601
        %v1603 = vrot.slane %v1602, 4
        %v1605 = vshll.u32 %v674, 16
        %v1607 = vrot.slane %v1605, 5
        %v1608 = vsel %vm679, %v1603, %v1607
        %v1609 = vshrl.u32 %v674, 16
        %v1611 = vrot.slane %v1609, 4
        %v1612 = vor.u32 %v1611, %v1607
        %v1613 = vrot.slane %v1612, 4
        %v1615 = vshll.u32 %v675, 16
        %v1617 = vrot.slane %v1615, 5
        %v1618 = vsel %vm679, %v1613, %v1617
        %v1619 = vshrl.u32 %v675, 16
        %v1621 = vrot.slane %v1619, 4
        %v1622 = vor.u32 %v1621, %v1617
        %v1623 = vrot.slane %v1622, 4
        %v1625 = vshll.u32 %v676, 16
        %v1627 = vrot.slane %v1625, 5
        %v1628 = vsel %vm679, %v1623, %v1627
        %v1633 = vrot.slane %v673, 5
        %v1634 = vrot.slane %v1633, 4
        %v1635 = vrot.slane %v674, 5
        %v1636 = vsel %vm1366, %v1634, %v1635
        %v1637 = vrot.slane %v1635, 4
        %v1638 = vrot.slane %v675, 5
        %v1639 = vsel %vm1366, %v1637, %v1638
        %v1640 = vrot.slane %v1638, 4
        %v1641 = vrot.slane %v676, 5
        %v1642 = vsel %vm1366, %v1640, %v1641
        %v1643 = vunpack.c.l.b16 %v597
        %v1644 = vunpack.c.l.b16 %v598
        %v1645 = vunpack.c.l.b16 %v599
        %v1646 = vunpack.c.l.b16 %v601
        %v1647 = vunpack.c.l.b16 %v602
        %v1648 = vunpack.c.l.b16 %v603
        %v1649 = vunpack.c.l.b16 %v605
        %v1650 = vunpack.c.l.b16 %v606
        %v1651 = vunpack.c.l.b16 %v607
        %v1652 = vunpack.c.l.b16 %v609
        %v1653 = vunpack.c.l.b16 %v610
        %v1654 = vunpack.c.l.b16 %v611
        %v1655 = vunpack.c.l.b16 %v613
        %v1656 = vunpack.c.l.b16 %v614
        %v1657 = vunpack.c.l.b16 %v615
        %v1658 = vunpack.c.l.b16 %v617
        %v1659 = vunpack.c.l.b16 %v618
        %v1660 = vunpack.c.l.b16 %v619
        %v1661 = vunpack.c.l.b16 %v621
        %v1662 = vunpack.c.l.b16 %v622
        %v1663 = vunpack.c.l.b16 %v623
        %v1664 = vunpack.c.l.b16 %v625
        %v1665 = vunpack.c.l.b16 %v626
        %v1666 = vunpack.c.l.b16 %v627
        %v1667 = vunpack.c.l.b16 %v629
        %v1668 = vunpack.c.l.b16 %v630
        %v1669 = vunpack.c.l.b16 %v631
        %v1670 = vunpack.c.l.b16 %v633
        %v1671 = vunpack.c.l.b16 %v634
        %v1672 = vunpack.c.l.b16 %v635
        %v1673 = vunpack.c.l.b16 %v637
        %v1674 = vunpack.c.l.b16 %v638
        %v1675 = vunpack.c.l.b16 %v639
        %v1676 = vunpack.c.l.b16 %v641
        %v1677 = vunpack.c.l.b16 %v642
        %v1678 = vunpack.c.l.b16 %v643
        %v1679 = vunpack.c.l.b16 %v645
        %v1680 = vunpack.c.l.b16 %v646
        %v1681 = vunpack.c.l.b16 %v647
        %v1682 = vunpack.c.l.b16 %v649
        %v1683 = vunpack.c.l.b16 %v650
        %v1684 = vunpack.c.l.b16 %v651
        %v1685 = vunpack.c.l.b16 %v653
        %v1686 = vunpack.c.l.b16 %v654
        %v1687 = vunpack.c.l.b16 %v655
        %v1688 = vunpack.c.l.b16 %v657
        %v1689 = vunpack.c.l.b16 %v658
        %v1690 = vunpack.c.l.b16 %v659
        %v1691 = vunpack.c.l.b16 %v661
        %v1692 = vunpack.c.l.b16 %v662
        %v1693 = vunpack.c.l.b16 %v663
        %v1694 = vunpack.c.l.b16 %v665
        %v1695 = vunpack.c.l.b16 %v666
        %v1696 = vunpack.c.l.b16 %v667
        %v1697 = vpack.c.b16 %v1644, %v1643
        %v1698 = vpack.c.b16 %v1646, %v1645
        %v1699 = vpack.c.b16 %v1648, %v1647
        %v1700 = vpack.c.b16 %v1650, %v1649
        %v1701 = vpack.c.b16 %v1652, %v1651
        %v1702 = vpack.c.b16 %v1654, %v1653
        %v1703 = vpack.c.b16 %v1656, %v1655
        %v1704 = vpack.c.b16 %v1658, %v1657
        %v1705 = vpack.c.b16 %v1660, %v1659
        %v1706 = vpack.c.b16 %v1662, %v1661
        %v1707 = vpack.c.b16 %v1664, %v1663
        %v1708 = vpack.c.b16 %v1666, %v1665
        %v1709 = vpack.c.b16 %v1668, %v1667
        %v1710 = vpack.c.b16 %v1670, %v1669
        %v1711 = vpack.c.b16 %v1672, %v1671
        %v1712 = vpack.c.b16 %v1674, %v1673
        %v1713 = vpack.c.b16 %v1676, %v1675
        %v1714 = vpack.c.b16 %v1678, %v1677
        %v1715 = vpack.c.b16 %v1680, %v1679
        %v1716 = vpack.c.b16 %v1682, %v1681
        %v1717 = vpack.c.b16 %v1684, %v1683
        %v1718 = vpack.c.b16 %v1686, %v1685
        %v1719 = vpack.c.b16 %v1688, %v1687
        %v1720 = vpack.c.b16 %v1690, %v1689
        %v1721 = vpack.c.b16 %v1692, %v1691
        %v1722 = vpack.c.b16 %v1694, %v1693
        %v1723 = vpack.c.b16 %v1696, %v1695
        %v1751 = vunpack.c.l.b16 %v693
        %v1752 = vunpack.c.l.b16 %v703
        %v1753 = vunpack.c.l.b16 %v713
        %v1754 = vunpack.c.l.b16 %v727
        %v1755 = vunpack.c.l.b16 %v737
        %v1756 = vunpack.c.l.b16 %v747
        %v1757 = vunpack.c.l.b16 %v761
        %v1758 = vunpack.c.l.b16 %v771
        %v1759 = vunpack.c.l.b16 %v781
        %v1760 = vunpack.c.l.b16 %v795
        %v1761 = vunpack.c.l.b16 %v805
        %v1762 = vunpack.c.l.b16 %v815
        %v1763 = vunpack.c.l.b16 %v829
        %v1764 = vunpack.c.l.b16 %v839
        %v1765 = vunpack.c.l.b16 %v849
        %v1766 = vunpack.c.l.b16 %v863
        %v1767 = vunpack.c.l.b16 %v873
        %v1768 = vunpack.c.l.b16 %v883
        %v1769 = vunpack.c.l.b16 %v897
        %v1770 = vunpack.c.l.b16 %v907
        %v1771 = vunpack.c.l.b16 %v917
        %v1772 = vunpack.c.l.b16 %v931
        %v1773 = vunpack.c.l.b16 %v941
        %v1774 = vunpack.c.l.b16 %v951
        %v1775 = vunpack.c.l.b16 %v965
        %v1776 = vunpack.c.l.b16 %v975
        %v1777 = vunpack.c.l.b16 %v985
        %v1778 = vunpack.c.l.b16 %v999
        %v1779 = vunpack.c.l.b16 %v1009
        %v1780 = vunpack.c.l.b16 %v1019
        %v1781 = vunpack.c.l.b16 %v1033
        %v1782 = vunpack.c.l.b16 %v1043
        %v1783 = vunpack.c.l.b16 %v1053
        %v1784 = vunpack.c.l.b16 %v1067
        %v1785 = vunpack.c.l.b16 %v1077
        %v1786 = vunpack.c.l.b16 %v1087
        %v1787 = vunpack.c.l.b16 %v1101
        %v1788 = vunpack.c.l.b16 %v1111
        %v1789 = vunpack.c.l.b16 %v1121
        %v1790 = vunpack.c.l.b16 %v1135
        %v1791 = vunpack.c.l.b16 %v1145
        %v1792 = vunpack.c.l.b16 %v1155
        %v1793 = vunpack.c.l.b16 %v1169
        %v1794 = vunpack.c.l.b16 %v1179
        %v1795 = vunpack.c.l.b16 %v1189
        %v1796 = vunpack.c.l.b16 %v1203
        %v1797 = vunpack.c.l.b16 %v1213
        %v1798 = vunpack.c.l.b16 %v1223
        %v1799 = vunpack.c.l.b16 %v1237
        %v1800 = vunpack.c.l.b16 %v1247
        %v1801 = vunpack.c.l.b16 %v1257
        %v1802 = vunpack.c.l.b16 %v1271
        %v1803 = vunpack.c.l.b16 %v1281
        %v1804 = vunpack.c.l.b16 %v1291
        %v1805 = vpack.c.b16 %v1752, %v1751
        %v1806 = vpack.c.b16 %v1754, %v1753
        %v1807 = vpack.c.b16 %v1756, %v1755
        %v1808 = vpack.c.b16 %v1758, %v1757
        %v1809 = vpack.c.b16 %v1760, %v1759
        %v1810 = vpack.c.b16 %v1762, %v1761
        %v1811 = vpack.c.b16 %v1764, %v1763
        %v1812 = vpack.c.b16 %v1766, %v1765
        %v1813 = vpack.c.b16 %v1768, %v1767
        %v1814 = vpack.c.b16 %v1770, %v1769
        %v1815 = vpack.c.b16 %v1772, %v1771
        %v1816 = vpack.c.b16 %v1774, %v1773
        %v1817 = vpack.c.b16 %v1776, %v1775
        %v1818 = vpack.c.b16 %v1778, %v1777
        %v1819 = vpack.c.b16 %v1780, %v1779
        %v1820 = vpack.c.b16 %v1782, %v1781
        %v1821 = vpack.c.b16 %v1784, %v1783
        %v1822 = vpack.c.b16 %v1786, %v1785
        %v1823 = vpack.c.b16 %v1788, %v1787
        %v1824 = vpack.c.b16 %v1790, %v1789
        %v1825 = vpack.c.b16 %v1792, %v1791
        %v1826 = vpack.c.b16 %v1794, %v1793
        %v1827 = vpack.c.b16 %v1796, %v1795
        %v1828 = vpack.c.b16 %v1798, %v1797
        %v1829 = vpack.c.b16 %v1800, %v1799
        %v1830 = vpack.c.b16 %v1802, %v1801
        %v1831 = vpack.c.b16 %v1804, %v1803
        %v1859 = vunpack.c.l.b16 %v1370
        %v1860 = vunpack.c.l.b16 %v1373
        %v1861 = vunpack.c.l.b16 %v1376
        %v1862 = vunpack.c.l.b16 %v1380
        %v1863 = vunpack.c.l.b16 %v1383
        %v1864 = vunpack.c.l.b16 %v1386
        %v1865 = vunpack.c.l.b16 %v1390
        %v1866 = vunpack.c.l.b16 %v1393
        %v1867 = vunpack.c.l.b16 %v1396
        %v1868 = vunpack.c.l.b16 %v1400
        %v1869 = vunpack.c.l.b16 %v1403
        %v1870 = vunpack.c.l.b16 %v1406
        %v1871 = vunpack.c.l.b16 %v1410
        %v1872 = vunpack.c.l.b16 %v1413
        %v1873 = vunpack.c.l.b16 %v1416
        %v1874 = vunpack.c.l.b16 %v1420
        %v1875 = vunpack.c.l.b16 %v1423
        %v1876 = vunpack.c.l.b16 %v1426
        %v1877 = vunpack.c.l.b16 %v1430
        %v1878 = vunpack.c.l.b16 %v1433
        %v1879 = vunpack.c.l.b16 %v1436
        %v1880 = vunpack.c.l.b16 %v1440
        %v1881 = vunpack.c.l.b16 %v1443
        %v1882 = vunpack.c.l.b16 %v1446
        %v1883 = vunpack.c.l.b16 %v1450
        %v1884 = vunpack.c.l.b16 %v1453
        %v1885 = vunpack.c.l.b16 %v1456
        %v1886 = vunpack.c.l.b16 %v1460
        %v1887 = vunpack.c.l.b16 %v1463
        %v1888 = vunpack.c.l.b16 %v1466
        %v1889 = vunpack.c.l.b16 %v1470
        %v1890 = vunpack.c.l.b16 %v1473
        %v1891 = vunpack.c.l.b16 %v1476
        %v1892 = vunpack.c.l.b16 %v1480
        %v1893 = vunpack.c.l.b16 %v1483
        %v1894 = vunpack.c.l.b16 %v1486
        %v1895 = vunpack.c.l.b16 %v1490
        %v1896 = vunpack.c.l.b16 %v1493
        %v1897 = vunpack.c.l.b16 %v1496
        %v1898 = vunpack.c.l.b16 %v1500
        %v1899 = vunpack.c.l.b16 %v1503
        %v1900 = vunpack.c.l.b16 %v1506
        %v1901 = vunpack.c.l.b16 %v1510
        %v1902 = vunpack.c.l.b16 %v1513
        %v1903 = vunpack.c.l.b16 %v1516
        %v1904 = vunpack.c.l.b16 %v1520
        %v1905 = vunpack.c.l.b16 %v1523
        %v1906 = vunpack.c.l.b16 %v1526
        %v1907 = vunpack.c.l.b16 %v1530
        %v1908 = vunpack.c.l.b16 %v1533
        %v1909 = vunpack.c.l.b16 %v1536
        %v1910 = vunpack.c.l.b16 %v1540
        %v1911 = vunpack.c.l.b16 %v1543
        %v1912 = vunpack.c.l.b16 %v1546
        %v1913 = vpack.c.b16 %v1860, %v1859
        %v1914 = vpack.c.b16 %v1862, %v1861
        %v1915 = vpack.c.b16 %v1864, %v1863
        %v1916 = vpack.c.b16 %v1866, %v1865
        %v1917 = vpack.c.b16 %v1868, %v1867
        %v1918 = vpack.c.b16 %v1870, %v1869
        %v1919 = vpack.c.b16 %v1872, %v1871
        %v1920 = vpack.c.b16 %v1874, %v1873
        %v1921 = vpack.c.b16 %v1876, %v1875
        %v1922 = vpack.c.b16 %v1878, %v1877
        %v1923 = vpack.c.b16 %v1880, %v1879
        %v1924 = vpack.c.b16 %v1882, %v1881
        %v1925 = vpack.c.b16 %v1884, %v1883
        %v1926 = vpack.c.b16 %v1886, %v1885
        %v1927 = vpack.c.b16 %v1888, %v1887
        %v1928 = vpack.c.b16 %v1890, %v1889
        %v1929 = vpack.c.b16 %v1892, %v1891
        %v1930 = vpack.c.b16 %v1894, %v1893
        %v1931 = vpack.c.b16 %v1896, %v1895
        %v1932 = vpack.c.b16 %v1898, %v1897
        %v1933 = vpack.c.b16 %v1900, %v1899
        %v1934 = vpack.c.b16 %v1902, %v1901
        %v1935 = vpack.c.b16 %v1904, %v1903
        %v1936 = vpack.c.b16 %v1906, %v1905
        %v1937 = vpack.c.b16 %v1908, %v1907
        %v1938 = vpack.c.b16 %v1910, %v1909
        %v1939 = vpack.c.b16 %v1912, %v1911
        %v1967 = vunpack.c.l.b16 %v669
        %v1968 = vunpack.c.l.b16 %v670
        %v1969 = vunpack.c.l.b16 %v671
        %v1970 = vpack.c.b16 %v1647, %v1646
        %v1971 = vpack.c.b16 %v1649, %v1648
        %v1972 = vpack.c.b16 %v1651, %v1650
        %v1973 = vpack.c.b16 %v1653, %v1652
        %v1974 = vpack.c.b16 %v1655, %v1654
        %v1975 = vpack.c.b16 %v1657, %v1656
        %v1976 = vpack.c.b16 %v1659, %v1658
        %v1977 = vpack.c.b16 %v1661, %v1660
        %v1978 = vpack.c.b16 %v1663, %v1662
        %v1979 = vpack.c.b16 %v1665, %v1664
        %v1980 = vpack.c.b16 %v1667, %v1666
        %v1981 = vpack.c.b16 %v1669, %v1668
        %v1982 = vpack.c.b16 %v1671, %v1670
        %v1983 = vpack.c.b16 %v1673, %v1672
        %v1984 = vpack.c.b16 %v1675, %v1674
        %v1985 = vpack.c.b16 %v1677, %v1676
        %v1986 = vpack.c.b16 %v1679, %v1678
        %v1987 = vpack.c.b16 %v1681, %v1680
        %v1988 = vpack.c.b16 %v1683, %v1682
        %v1989 = vpack.c.b16 %v1685, %v1684
        %v1990 = vpack.c.b16 %v1687, %v1686
        %v1991 = vpack.c.b16 %v1689, %v1688
        %v1992 = vpack.c.b16 %v1691, %v1690
        %v1993 = vpack.c.b16 %v1693, %v1692
        %v1994 = vpack.c.b16 %v1695, %v1694
        %v1995 = vpack.c.b16 %v1967, %v1696
        %v1996 = vpack.c.b16 %v1969, %v1968
        %v2024 = vunpack.c.l.b16 %v1560
        %v2025 = vunpack.c.l.b16 %v1570
        %v2026 = vunpack.c.l.b16 %v1580
        %v2027 = vpack.c.b16 %v1755, %v1754
        %v2028 = vpack.c.b16 %v1757, %v1756
        %v2029 = vpack.c.b16 %v1759, %v1758
        %v2030 = vpack.c.b16 %v1761, %v1760
        %v2031 = vpack.c.b16 %v1763, %v1762
        %v2032 = vpack.c.b16 %v1765, %v1764
        %v2033 = vpack.c.b16 %v1767, %v1766
        %v2034 = vpack.c.b16 %v1769, %v1768
        %v2035 = vpack.c.b16 %v1771, %v1770
        %v2036 = vpack.c.b16 %v1773, %v1772
        %v2037 = vpack.c.b16 %v1775, %v1774
        %v2038 = vpack.c.b16 %v1777, %v1776
        %v2039 = vpack.c.b16 %v1779, %v1778
        %v2040 = vpack.c.b16 %v1781, %v1780
        %v2041 = vpack.c.b16 %v1783, %v1782
        %v2042 = vpack.c.b16 %v1785, %v1784
        %v2043 = vpack.c.b16 %v1787, %v1786
        %v2044 = vpack.c.b16 %v1789, %v1788
        %v2045 = vpack.c.b16 %v1791, %v1790
        %v2046 = vpack.c.b16 %v1793, %v1792
        %v2047 = vpack.c.b16 %v1795, %v1794
        %v2048 = vpack.c.b16 %v1797, %v1796
        %v2049 = vpack.c.b16 %v1799, %v1798
        %v2050 = vpack.c.b16 %v1801, %v1800
        %v2051 = vpack.c.b16 %v1803, %v1802
        %v2052 = vpack.c.b16 %v2024, %v1804
        %v2053 = vpack.c.b16 %v2026, %v2025
        %v2081 = vunpack.c.l.b16 %v1588
        %v2082 = vunpack.c.l.b16 %v1591
        %v2083 = vunpack.c.l.b16 %v1594
        %v2084 = vpack.c.b16 %v1863, %v1862
        %v2085 = vpack.c.b16 %v1865, %v1864
        %v2086 = vpack.c.b16 %v1867, %v1866
        %v2087 = vpack.c.b16 %v1869, %v1868
        %v2088 = vpack.c.b16 %v1871, %v1870
        %v2089 = vpack.c.b16 %v1873, %v1872
        %v2090 = vpack.c.b16 %v1875, %v1874
        %v2091 = vpack.c.b16 %v1877, %v1876
        %v2092 = vpack.c.b16 %v1879, %v1878
        %v2093 = vpack.c.b16 %v1881, %v1880
        %v2094 = vpack.c.b16 %v1883, %v1882
        %v2095 = vpack.c.b16 %v1885, %v1884
        %v2096 = vpack.c.b16 %v1887, %v1886
        %v2097 = vpack.c.b16 %v1889, %v1888
        %v2098 = vpack.c.b16 %v1891, %v1890
        %v2099 = vpack.c.b16 %v1893, %v1892
        %v2100 = vpack.c.b16 %v1895, %v1894
        %v2101 = vpack.c.b16 %v1897, %v1896
        %v2102 = vpack.c.b16 %v1899, %v1898
        %v2103 = vpack.c.b16 %v1901, %v1900
        %v2104 = vpack.c.b16 %v1903, %v1902
        %v2105 = vpack.c.b16 %v1905, %v1904
        %v2106 = vpack.c.b16 %v1907, %v1906
        %v2107 = vpack.c.b16 %v1909, %v1908
        %v2108 = vpack.c.b16 %v1911, %v1910
        %v2109 = vpack.c.b16 %v2081, %v1912
        %v2110 = vpack.c.b16 %v2083, %v2082
        %v2138 = vunpack.c.l.b16 %v673
        %v2139 = vunpack.c.l.b16 %v674
        %v2140 = vunpack.c.l.b16 %v675
        %v2141 = vpack.c.b16 %v1968, %v1967
        %v2142 = vpack.c.b16 %v2138, %v1969
        %v2143 = vpack.c.b16 %v2140, %v2139
        %v2147 = vunpack.c.l.b16 %v1608
        %v2148 = vunpack.c.l.b16 %v1618
        %v2149 = vunpack.c.l.b16 %v1628
        %v2150 = vpack.c.b16 %v2025, %v2024
        %v2151 = vpack.c.b16 %v2147, %v2026
        %v2152 = vpack.c.b16 %v2149, %v2148
        %v2156 = vunpack.c.l.b16 %v1636
        %v2157 = vunpack.c.l.b16 %v1639
        %v2158 = vunpack.c.l.b16 %v1642
        %v2159 = vpack.c.b16 %v2082, %v2081
        %v2160 = vpack.c.b16 %v2156, %v2083
        %v2161 = vpack.c.b16 %v2158, %v2157
        %v2165 = vld [vmem:[%s1] sm:$0xf]
        %v2166 = vld [vmem:[%s1 + $0x4] sm:$0xf]
        %v2167 = vld [vmem:[%s1 + $0x8] sm:$0xf]
        %v2168 = vld [vmem:[%s1 + $0xc] sm:$0xf]
        %v2169 = vld [vmem:[%s1 + $0x10] sm:$0xf]
        %v2170 = vld [vmem:[%s1 + $0x14] sm:$0xf]
        %v2171 = vld [vmem:[%s1 + $0x18] sm:$0xf]
        %v2172 = vld [vmem:[%s1 + $0x1c] sm:$0xf]
        %v2173 = vld [vmem:[%s1 + $0x20] sm:$0xf]
        %v2174 = vld [vmem:[%s1 + $0x24] sm:$0xf]
        %v2175 = vld [vmem:[%s1 + $0x28] sm:$0xf]
        %v2176 = vld [vmem:[%s1 + $0x2c] sm:$0xf]
        %v2177 = vld [vmem:[%s1 + $0x30] sm:$0xf]
        %v2178 = vld [vmem:[%s1 + $0x34] sm:$0xf]
        %v2179 = vld [vmem:[%s1 + $0x38] sm:$0xf]
        %v2180 = vld [vmem:[%s1 + $0x3c] sm:$0xf]
        %v2181 = vld [vmem:[%s1 + $0x40] sm:$0xf]
        %v2182 = vld [vmem:[%s1 + $0x44] sm:$0xf]
        %v2183 = vld [vmem:[%s1 + $0x48] sm:$0xf]
        %v2184 = vld [vmem:[%s1 + $0x4c] sm:$0xf]
        %v2185 = vld [vmem:[%s1 + $0x50] sm:$0xf]
        %v2186 = vld [vmem:[%s1 + $0x54] sm:$0xf]
        %v2187 = vld [vmem:[%s1 + $0x58] sm:$0xf]
        %v2188 = vld [vmem:[%s1 + $0x5c] sm:$0xf]
        %v2189 = vld [vmem:[%s1 + $0x60] sm:$0xf]
        %v2190 = vld [vmem:[%s1 + $0x64] sm:$0xf]
        %v2191 = vld [vmem:[%s1 + $0x68] sm:$0xf]
        %v2192 = vld [vmem:[%s1 + $0x6c] sm:$0xf]
        %v2193 = vld [vmem:[%s1 + $0x70] sm:$0xf]
        %v2194 = vld [vmem:[%s1 + $0x74] sm:$0xf]
        %v2195 = vld [vmem:[%s1 + $0x78] sm:$0xf]
        %v2196 = vld [vmem:[%s1 + $0x7c] sm:$0xf]
        %v2197 = vld [vmem:[%s1 + $0x80] sm:$0xf]
        %v2198 = vld [vmem:[%s1 + $0x84] sm:$0xf]
        %v2199 = vld [vmem:[%s1 + $0x88] sm:$0xf]
        %v2200 = vld [vmem:[%s1 + $0x8c] sm:$0xf]
        %v2201 = vld [vmem:[%s1 + $0x90] sm:$0xf]
        %v2202 = vld [vmem:[%s1 + $0x94] sm:$0xf]
        %v2203 = vld [vmem:[%s1 + $0x98] sm:$0xf]
        %v2204 = vld [vmem:[%s1 + $0x9c] sm:$0xf]
        %v2205 = vld [vmem:[%s1 + $0xa0] sm:$0xf]
        %v2206 = vld [vmem:[%s1 + $0xa4] sm:$0xf]
        %v2207 = vld [vmem:[%s1 + $0xa8] sm:$0xf]
        %v2208 = vld [vmem:[%s1 + $0xac] sm:$0xf]
        %v2209 = vld [vmem:[%s1 + $0xb0] sm:$0xf]
        %v2210 = vld [vmem:[%s1 + $0xb4] sm:$0xf]
        %v2211 = vld [vmem:[%s1 + $0xb8] sm:$0xf]
        %v2212 = vld [vmem:[%s1 + $0xbc] sm:$0xf]
        %v2213 = vld [vmem:[%s1 + $0xc0] sm:$0xf]
        %v2214 = vld [vmem:[%s1 + $0xc4] sm:$0xf]
        %v2215 = vld [vmem:[%s1 + $0xc8] sm:$0xf]
        %v2216 = vld [vmem:[%s1 + $0xcc] sm:$0xf]
        %v2217 = vld [vmem:[%s1 + $0xd0] sm:$0xf]
        %v2218 = vld [vmem:[%s1 + $0xd4] sm:$0xf]
        %v2219 = vld [vmem:[%s1 + $0xd8] sm:$0xf]
        %v2220 = vld [vmem:[%s1 + $0xdc] sm:$0xf]
        %v2221 = vld [vmem:[%s1 + $0xe0] sm:$0xf]
        %v2222 = vld [vmem:[%s1 + $0xe4] sm:$0xf]
        %v2223 = vld [vmem:[%s1 + $0xe8] sm:$0xf]
        %v2224 = vld [vmem:[%s1 + $0xec] sm:$0xf]
        %v2225 = vld [vmem:[%s1 + $0xf0] sm:$0xf]
        %v2226 = vld [vmem:[%s1 + $0xf4] sm:$0xf]
        %v2227 = vld [vmem:[%s1 + $0xf8] sm:$0xf]
        %v2228 = vld [vmem:[%s1 + $0xfc] sm:$0xf]
        %v2229 = vld [vmem:[%s1 + $0x100] sm:$0xf]
        %v2230 = vld [vmem:[%s1 + $0x104] sm:$0xf]
        %v2231 = vld [vmem:[%s1 + $0x108] sm:$0xf]
        %v2232 = vld [vmem:[%s1 + $0x10c] sm:$0xf]
        %v2233 = vld [vmem:[%s1 + $0x110] sm:$0xf]
        %v2234 = vld [vmem:[%s1 + $0x114] sm:$0xf]
        %v2235 = vld [vmem:[%s1 + $0x118] sm:$0xf]
        %v2236 = vld [vmem:[%s1 + $0x11c] sm:$0xf]
        %v2237 = vld [vmem:[%s1 + $0x120] sm:$0xf]
        %v2238 = vld [vmem:[%s1 + $0x124] sm:$0xf]
        %v2239 = vld [vmem:[%s1 + $0x128] sm:$0xf]
        %v2240 = vld [vmem:[%s1 + $0x12c] sm:$0xf]
        %v2241 = vld [vmem:[%s1 + $0x130] sm:$0xf]
        %v2242 = vld [vmem:[%s1 + $0x134] sm:$0xf]
        %v2243 = vld [vmem:[%s1 + $0x138] sm:$0xf]
        %v2244 = vld [vmem:[%s1 + $0x13c] sm:$0xf]
        %v2245 = vld [vmem:[%s1 + $0x140] sm:$0xf]
        %v2246 = vld [vmem:[%s1 + $0x144] sm:$0xf]
        %v2247 = vld [vmem:[%s1 + $0x148] sm:$0xf]
        %v2248 = vld [vmem:[%s1 + $0x14c] sm:$0xf]
        %v2249 = vld [vmem:[%s1 + $0x150] sm:$0xf]
        %v2250 = vld [vmem:[%s1 + $0x154] sm:$0xf]
        %v2251 = vld [vmem:[%s1 + $0x158] sm:$0xf]
        %v2252 = vld [vmem:[%s1 + $0x15c] sm:$0xf]
        %v2253 = vld [vmem:[%s1 + $0x160] sm:$0xf]
        %v2254 = vld [vmem:[%s1 + $0x164] sm:$0xf]
        %v2255 = vld [vmem:[%s1 + $0x168] sm:$0xf]
        %v2256 = vld [vmem:[%s1 + $0x16c] sm:$0xf]
        %v2257 = vld [vmem:[%s1 + $0x170] sm:$0xf]
        %v2258 = vld [vmem:[%s1 + $0x174] sm:$0xf]
        %v2259 = vld [vmem:[%s1 + $0x178] sm:$0xf]
        %v2260 = vld [vmem:[%s1 + $0x17c] sm:$0xf]
        %v2261 = vld [vmem:[%s1 + $0x180] sm:$0xf]
        %v2262 = vld [vmem:[%s1 + $0x184] sm:$0xf]
        %v2263 = vld [vmem:[%s1 + $0x188] sm:$0xf]
        %v2264 = vld [vmem:[%s1 + $0x18c] sm:$0xf]
        %v2265 = vld [vmem:[%s1 + $0x190] sm:$0xf]
        %v2266 = vld [vmem:[%s1 + $0x194] sm:$0xf]
        %v2267 = vld [vmem:[%s1 + $0x198] sm:$0xf]
        %v2268 = vld [vmem:[%s1 + $0x19c] sm:$0xf]
        %v2269 = vld [vmem:[%s1 + $0x1a0] sm:$0xf]
        %v2270 = vld [vmem:[%s1 + $0x1a4] sm:$0xf]
        %v2271 = vld [vmem:[%s1 + $0x1a8] sm:$0xf]
        %v2272 = vld [vmem:[%s1 + $0x1ac] sm:$0xf]
        %v2273 = vld [vmem:[%s1 + $0x1b0] sm:$0xf]
        %v2274 = vld [vmem:[%s1 + $0x1b4] sm:$0xf]
        %v2275 = vld [vmem:[%s1 + $0x1b8] sm:$0xf]
        %v2276 = vld [vmem:[%s1 + $0x1bc] sm:$0xf]
        %v2277 = vld [vmem:[%s1 + $0x1c0] sm:$0xf]
        %v2278 = vld [vmem:[%s1 + $0x1c4] sm:$0xf]
        %v2279 = vld [vmem:[%s1 + $0x1c8] sm:$0xf]
        %v2280 = vld [vmem:[%s1 + $0x1cc] sm:$0xf]
        %v2281 = vld [vmem:[%s1 + $0x1d0] sm:$0xf]
        %v2282 = vld [vmem:[%s1 + $0x1d4] sm:$0xf]
        %v2283 = vld [vmem:[%s1 + $0x1d8] sm:$0xf]
        %v2284 = vld [vmem:[%s1 + $0x1dc] sm:$0xf]
        %v2285 = vld [vmem:[%s1 + $0x1e0] sm:$0xf]
        %v2286 = vld [vmem:[%s1 + $0x1e4] sm:$0xf]
        %v2287 = vld [vmem:[%s1 + $0x1e8] sm:$0xf]
        %v2288 = vld [vmem:[%s1 + $0x1ec] sm:$0xf]
        %v2289 = vld [vmem:[%s1 + $0x1f0] sm:$0xf]
        %v2290 = vld [vmem:[%s1 + $0x1f4] sm:$0xf]
        %v2291 = vld [vmem:[%s1 + $0x1f8] sm:$0xf]
        %v2292 = vld [vmem:[%s1 + $0x1fc] sm:$0xf]
        %v2293 = vld [vmem:[%s1 + $0x200] sm:$0xf]
        %v2294 = vld [vmem:[%s1 + $0x204] sm:$0xf]
        %v2295 = vld [vmem:[%s1 + $0x208] sm:$0xf]
        %v2296 = vld [vmem:[%s1 + $0x20c] sm:$0xf]
        %v2297 = vld [vmem:[%s1 + $0x210] sm:$0xf]
        %v2298 = vld [vmem:[%s1 + $0x214] sm:$0xf]
        %v2299 = vld [vmem:[%s1 + $0x218] sm:$0xf]
        %v2300 = vld [vmem:[%s1 + $0x21c] sm:$0xf]
        %v2301 = vld [vmem:[%s1 + $0x220] sm:$0xf]
        %v2302 = vld [vmem:[%s1 + $0x224] sm:$0xf]
        %v2303 = vld [vmem:[%s1 + $0x228] sm:$0xf]
        %v2304 = vld [vmem:[%s1 + $0x22c] sm:$0xf]
        %v2305 = vld [vmem:[%s1 + $0x230] sm:$0xf]
        %v2306 = vld [vmem:[%s1 + $0x234] sm:$0xf]
        %v2307 = vld [vmem:[%s1 + $0x238] sm:$0xf]
        %v2308 = vld [vmem:[%s1 + $0x23c] sm:$0xf]
        %v2309 = vld [vmem:[%s2] sm:$0x1]
        %v2311 = vperm.slane %v2309, 0
        %v2457 = vunpack.c.l.b16 %v2165
        %v2458 = vunpack.c.l.b16 %v2166
        %v2459 = vunpack.c.l.b16 %v2167
        %v2460 = vunpack.c.l.b16 %v2168
        %v2461 = vunpack.c.l.b16 %v2169
        %v2462 = vunpack.c.l.b16 %v2170
        %v2463 = vunpack.c.l.b16 %v2171
        %v2464 = vunpack.c.l.b16 %v2172
        %v2465 = vunpack.c.l.b16 %v2173
        %v2466 = vunpack.c.l.b16 %v2174
        %v2467 = vunpack.c.l.b16 %v2175
        %v2468 = vunpack.c.l.b16 %v2176
        %v2469 = vunpack.c.l.b16 %v2177
        %v2470 = vunpack.c.l.b16 %v2178
        %v2471 = vunpack.c.l.b16 %v2179
        %v2472 = vunpack.c.l.b16 %v2180
        %v2473 = vunpack.c.l.b16 %v2181
        %v2474 = vunpack.c.l.b16 %v2182
        %v2475 = vunpack.c.l.b16 %v2183
        %v2476 = vunpack.c.l.b16 %v2184
        %v2477 = vunpack.c.l.b16 %v2185
        %v2478 = vunpack.c.l.b16 %v2186
        %v2479 = vunpack.c.l.b16 %v2187
        %v2480 = vunpack.c.l.b16 %v2188
        %v2481 = vunpack.c.l.b16 %v2189
        %v2482 = vunpack.c.l.b16 %v2190
        %v2483 = vunpack.c.l.b16 %v2191
        %v2484 = vunpack.c.l.b16 %v2192
        %v2485 = vunpack.c.l.b16 %v2193
        %v2486 = vunpack.c.l.b16 %v2194
        %v2487 = vunpack.c.l.b16 %v2195
        %v2488 = vunpack.c.l.b16 %v2196
        %v2489 = vunpack.c.l.b16 %v2197
        %v2490 = vunpack.c.l.b16 %v2198
        %v2491 = vunpack.c.l.b16 %v2199
        %v2492 = vunpack.c.l.b16 %v2200
        %v2493 = vunpack.c.l.b16 %v2201
        %v2494 = vunpack.c.l.b16 %v2202
        %v2495 = vunpack.c.l.b16 %v2203
        %v2496 = vunpack.c.l.b16 %v2204
        %v2497 = vunpack.c.l.b16 %v2205
        %v2498 = vunpack.c.l.b16 %v2206
        %v2499 = vunpack.c.l.b16 %v2207
        %v2500 = vunpack.c.l.b16 %v2208
        %v2501 = vunpack.c.l.b16 %v2209
        %v2502 = vunpack.c.l.b16 %v2210
        %v2503 = vunpack.c.l.b16 %v2211
        %v2504 = vunpack.c.l.b16 %v2212
        %v2505 = vunpack.c.l.b16 %v2213
        %v2506 = vunpack.c.l.b16 %v2214
        %v2507 = vunpack.c.l.b16 %v2215
        %v2508 = vunpack.c.l.b16 %v2216
        %v2509 = vunpack.c.l.b16 %v2217
        %v2510 = vunpack.c.l.b16 %v2218
        %v2511 = vunpack.c.l.b16 %v2219
        %v2512 = vunpack.c.l.b16 %v2220
        %v2513 = vunpack.c.l.b16 %v2221
        %v2514 = vunpack.c.l.b16 %v2222
        %v2515 = vunpack.c.l.b16 %v2223
        %v2516 = vunpack.c.l.b16 %v2224
        %v2517 = vunpack.c.l.b16 %v2225
        %v2518 = vunpack.c.l.b16 %v2226
        %v2519 = vunpack.c.l.b16 %v2227
        %v2520 = vunpack.c.l.b16 %v2228
        %v2521 = vunpack.c.l.b16 %v2229
        %v2522 = vunpack.c.l.b16 %v2230
        %v2523 = vunpack.c.l.b16 %v2231
        %v2524 = vunpack.c.l.b16 %v2232
        %v2525 = vunpack.c.l.b16 %v2233
        %v2526 = vunpack.c.l.b16 %v2234
        %v2527 = vunpack.c.l.b16 %v2235
        %v2528 = vunpack.c.l.b16 %v2236
        %v2529 = vunpack.c.l.b16 %v2237
        %v2530 = vunpack.c.l.b16 %v2238
        %v2531 = vunpack.c.l.b16 %v2239
        %v2532 = vunpack.c.l.b16 %v2240
        %v2533 = vunpack.c.l.b16 %v2241
        %v2534 = vunpack.c.l.b16 %v2242
        %v2535 = vunpack.c.l.b16 %v2243
        %v2536 = vunpack.c.l.b16 %v2244
        %v2537 = vunpack.c.l.b16 %v2245
        %v2538 = vunpack.c.l.b16 %v2246
        %v2539 = vunpack.c.l.b16 %v2247
        %v2540 = vunpack.c.l.b16 %v2248
        %v2541 = vunpack.c.l.b16 %v2249
        %v2542 = vunpack.c.l.b16 %v2250
        %v2543 = vunpack.c.l.b16 %v2251
        %v2544 = vunpack.c.l.b16 %v2252
        %v2545 = vunpack.c.l.b16 %v2253
        %v2546 = vunpack.c.l.b16 %v2254
        %v2547 = vunpack.c.l.b16 %v2255
        %v2548 = vunpack.c.l.b16 %v2256
        %v2549 = vunpack.c.l.b16 %v2257
        %v2550 = vunpack.c.l.b16 %v2258
        %v2551 = vunpack.c.l.b16 %v2259
        %v2552 = vunpack.c.l.b16 %v2260
        %v2553 = vunpack.c.l.b16 %v2261
        %v2554 = vunpack.c.l.b16 %v2262
        %v2555 = vunpack.c.l.b16 %v2263
        %v2556 = vunpack.c.l.b16 %v2264
        %v2557 = vunpack.c.l.b16 %v2265
        %v2558 = vunpack.c.l.b16 %v2266
        %v2559 = vunpack.c.l.b16 %v2267
        %v2560 = vunpack.c.l.b16 %v2268
        %v2561 = vunpack.c.l.b16 %v2269
        %v2562 = vunpack.c.l.b16 %v2270
        %v2563 = vunpack.c.l.b16 %v2271
        %v2564 = vunpack.c.l.b16 %v2272
        %v2565 = vunpack.c.l.b16 %v2273
        %v2566 = vunpack.c.l.b16 %v2274
        %v2567 = vunpack.c.l.b16 %v2275
        %v2568 = vunpack.c.l.b16 %v2276
        %v2569 = vunpack.c.l.b16 %v2277
        %v2570 = vunpack.c.l.b16 %v2278
        %v2571 = vunpack.c.l.b16 %v2279
        %v2572 = vunpack.c.l.b16 %v2280
        %v2573 = vunpack.c.l.b16 %v2281
        %v2574 = vunpack.c.l.b16 %v2282
        %v2575 = vunpack.c.l.b16 %v2283
        %v2576 = vunpack.c.l.b16 %v2284
        %v2577 = vunpack.c.l.b16 %v2285
        %v2578 = vunpack.c.l.b16 %v2286
        %v2579 = vunpack.c.l.b16 %v2287
        %v2580 = vunpack.c.l.b16 %v2288
        %v2581 = vunpack.c.l.b16 %v2289
        %v2582 = vunpack.c.l.b16 %v2290
        %v2583 = vunpack.c.l.b16 %v2291
        %v2584 = vunpack.c.l.b16 %v2292
        %v2585 = vunpack.c.l.b16 %v2293
        %v2586 = vunpack.c.l.b16 %v2294
        %v2587 = vunpack.c.l.b16 %v2295
        %v2588 = vunpack.c.l.b16 %v2296
        %v2589 = vunpack.c.l.b16 %v2297
        %v2590 = vunpack.c.l.b16 %v2298
        %v2591 = vunpack.c.l.b16 %v2299
        %v2592 = vunpack.c.l.b16 %v2300
        %v2593 = vunpack.c.l.b16 %v2301
        %v2594 = vunpack.c.l.b16 %v2302
        %v2595 = vunpack.c.l.b16 %v2303
        %v2596 = vunpack.c.l.b16 %v2304
        %v2597 = vunpack.c.l.b16 %v2305
        %v2598 = vunpack.c.l.b16 %v2306
        %v2599 = vunpack.c.l.b16 %v2307
        %v2600 = vunpack.c.l.b16 %v2308
        %v2601 = vpack.c.b16 %v2458, %v2457
        %v2602 = vpack.c.b16 %v2460, %v2459
        %v2603 = vpack.c.b16 %v2462, %v2461
        %v2604 = vpack.c.b16 %v2464, %v2463
        %v2605 = vpack.c.b16 %v2466, %v2465
        %v2606 = vpack.c.b16 %v2468, %v2467
        %v2607 = vpack.c.b16 %v2470, %v2469
        %v2608 = vpack.c.b16 %v2472, %v2471
        %v2609 = vpack.c.b16 %v2474, %v2473
        %v2610 = vpack.c.b16 %v2476, %v2475
        %v2611 = vpack.c.b16 %v2478, %v2477
        %v2612 = vpack.c.b16 %v2480, %v2479
        %v2613 = vpack.c.b16 %v2482, %v2481
        %v2614 = vpack.c.b16 %v2484, %v2483
        %v2615 = vpack.c.b16 %v2486, %v2485
        %v2616 = vpack.c.b16 %v2488, %v2487
        %v2617 = vpack.c.b16 %v2490, %v2489
        %v2618 = vpack.c.b16 %v2492, %v2491
        %v2619 = vpack.c.b16 %v2494, %v2493
        %v2620 = vpack.c.b16 %v2496, %v2495
        %v2621 = vpack.c.b16 %v2498, %v2497
        %v2622 = vpack.c.b16 %v2500, %v2499
        %v2623 = vpack.c.b16 %v2502, %v2501
        %v2624 = vpack.c.b16 %v2504, %v2503
        %v2625 = vpack.c.b16 %v2506, %v2505
        %v2626 = vpack.c.b16 %v2508, %v2507
        %v2627 = vpack.c.b16 %v2510, %v2509
        %v2628 = vpack.c.b16 %v2512, %v2511
        %v2629 = vpack.c.b16 %v2514, %v2513
        %v2630 = vpack.c.b16 %v2516, %v2515
        %v2631 = vpack.c.b16 %v2518, %v2517
        %v2632 = vpack.c.b16 %v2520, %v2519
        %v2633 = vpack.c.b16 %v2522, %v2521
        %v2634 = vpack.c.b16 %v2524, %v2523
        %v2635 = vpack.c.b16 %v2526, %v2525
        %v2636 = vpack.c.b16 %v2528, %v2527
        %v2637 = vpack.c.b16 %v2530, %v2529
        %v2638 = vpack.c.b16 %v2532, %v2531
        %v2639 = vpack.c.b16 %v2534, %v2533
        %v2640 = vpack.c.b16 %v2536, %v2535
        %v2641 = vpack.c.b16 %v2538, %v2537
        %v2642 = vpack.c.b16 %v2540, %v2539
        %v2643 = vpack.c.b16 %v2542, %v2541
        %v2644 = vpack.c.b16 %v2544, %v2543
        %v2645 = vpack.c.b16 %v2546, %v2545
        %v2646 = vpack.c.b16 %v2548, %v2547
        %v2647 = vpack.c.b16 %v2550, %v2549
        %v2648 = vpack.c.b16 %v2552, %v2551
        %v2649 = vpack.c.b16 %v2554, %v2553
        %v2650 = vpack.c.b16 %v2556, %v2555
        %v2651 = vpack.c.b16 %v2558, %v2557
        %v2652 = vpack.c.b16 %v2560, %v2559
        %v2653 = vpack.c.b16 %v2562, %v2561
        %v2654 = vpack.c.b16 %v2564, %v2563
        %v2655 = vpack.c.b16 %v2566, %v2565
        %v2656 = vpack.c.b16 %v2568, %v2567
        %v2657 = vpack.c.b16 %v2570, %v2569
        %v2658 = vpack.c.b16 %v2572, %v2571
        %v2659 = vpack.c.b16 %v2574, %v2573
        %v2660 = vpack.c.b16 %v2576, %v2575
        %v2661 = vpack.c.b16 %v2578, %v2577
        %v2662 = vpack.c.b16 %v2580, %v2579
        %v2663 = vpack.c.b16 %v2582, %v2581
        %v2664 = vpack.c.b16 %v2584, %v2583
        %v2665 = vpack.c.b16 %v2586, %v2585
        %v2666 = vpack.c.b16 %v2588, %v2587
        %v2667 = vpack.c.b16 %v2590, %v2589
        %v2668 = vpack.c.b16 %v2592, %v2591
        %v2669 = vpack.c.b16 %v2594, %v2593
        %v2670 = vpack.c.b16 %v2596, %v2595
        %v2671 = vpack.c.b16 %v2598, %v2597
        %v2672 = vpack.c.b16 %v2600, %v2599
        %2745 = vmatpush.bf16.msra.mxu0 %v2608
        %2746 = vmatpush.bf16.msra.mxu0 %v2607
        %2747 = vmatpush.bf16.msra.mxu0 %v2606
        %2748 = vmatpush.bf16.msra.mxu0 %v2605
        %2749 = vmatpush.bf16.msra.mxu0 %v2604
        %2750 = vmatpush.bf16.msra.mxu0 %v2603
        %2751 = vmatpush.bf16.msra.mxu0 %v2602
        %2752 = vmatpush.bf16.msra.mxu0 %v2601
        %2753 = vmatmul.bf16.gmra.mxu0 %v1697
        %v2754 = vpop.f32.mrf.mxu0
        %v2755 = vadd.f32 %v2311, %v2754
        %v2756 = vpop.f32.mrf.mxu0
        %v2757 = vadd.f32 %v2311, %v2756
        %2758 = vmatmul.bf16.gmra.mxu0 %v1698
        %v2759 = vpop.f32.mrf.mxu0
        %v2760 = vadd.f32 %v2311, %v2759
        %v2761 = vpop.f32.mrf.mxu0
        %v2762 = vadd.f32 %v2311, %v2761
        %2763 = vmatmul.bf16.gmra.mxu0 %v1699
        %v2764 = vpop.f32.mrf.mxu0
        %v2765 = vadd.f32 %v2311, %v2764
        %v2766 = vpop.f32.mrf.mxu0
        %v2767 = vadd.f32 %v2311, %v2766
        %2768 = vmatmul.bf16.gmra.mxu0 %v1700
        %v2769 = vpop.f32.mrf.mxu0
        %v2770 = vadd.f32 %v2311, %v2769
        %v2771 = vpop.f32.mrf.mxu0
        %v2772 = vadd.f32 %v2311, %v2771
        %2773 = vmatmul.bf16.gmra.mxu0 %v1701
        %v2774 = vpop.f32.mrf.mxu0
        %v2775 = vadd.f32 %v2311, %v2774
        %v2776 = vpop.f32.mrf.mxu0
        %v2777 = vadd.f32 %v2311, %v2776
        %2778 = vmatmul.bf16.gmra.mxu0 %v1702
        %v2779 = vpop.f32.mrf.mxu0
        %v2780 = vadd.f32 %v2311, %v2779
        %v2781 = vpop.f32.mrf.mxu0
        %v2782 = vadd.f32 %v2311, %v2781
        %2783 = vmatmul.bf16.gmra.mxu0 %v1703
        %v2784 = vpop.f32.mrf.mxu0
        %v2785 = vadd.f32 %v2311, %v2784
        %v2786 = vpop.f32.mrf.mxu0
        %v2787 = vadd.f32 %v2311, %v2786
        %2788 = vmatmul.bf16.gmra.mxu0 %v1704
        %v2789 = vpop.f32.mrf.mxu0
        %v2790 = vadd.f32 %v2311, %v2789
        %v2791 = vpop.f32.mrf.mxu0
        %v2792 = vadd.f32 %v2311, %v2791
        %2793 = vmatmul.bf16.gmra.mxu0 %v1705
        %v2794 = vpop.f32.mrf.mxu0
        %v2795 = vadd.f32 %v2311, %v2794
        %v2796 = vpop.f32.mrf.mxu0
        %v2797 = vadd.f32 %v2311, %v2796
        %2798 = vmatmul.bf16.gmra.mxu0 %v1706
        %v2799 = vpop.f32.mrf.mxu0
        %v2800 = vadd.f32 %v2311, %v2799
        %v2801 = vpop.f32.mrf.mxu0
        %v2802 = vadd.f32 %v2311, %v2801
        %2803 = vmatmul.bf16.gmra.mxu0 %v1707
        %v2804 = vpop.f32.mrf.mxu0
        %v2805 = vadd.f32 %v2311, %v2804
        %v2806 = vpop.f32.mrf.mxu0
        %v2807 = vadd.f32 %v2311, %v2806
        %2808 = vmatmul.bf16.gmra.mxu0 %v1708
        %v2809 = vpop.f32.mrf.mxu0
        %v2810 = vadd.f32 %v2311, %v2809
        %v2811 = vpop.f32.mrf.mxu0
        %v2812 = vadd.f32 %v2311, %v2811
        %2813 = vmatmul.bf16.gmra.mxu0 %v1709
        %v2814 = vpop.f32.mrf.mxu0
        %v2815 = vadd.f32 %v2311, %v2814
        %v2816 = vpop.f32.mrf.mxu0
        %v2817 = vadd.f32 %v2311, %v2816
        %2818 = vmatmul.bf16.gmra.mxu0 %v1710
        %v2819 = vpop.f32.mrf.mxu0
        %v2820 = vadd.f32 %v2311, %v2819
        %v2821 = vpop.f32.mrf.mxu0
        %v2822 = vadd.f32 %v2311, %v2821
        %2823 = vmatmul.bf16.gmra.mxu0 %v1711
        %v2824 = vpop.f32.mrf.mxu0
        %v2825 = vadd.f32 %v2311, %v2824
        %v2826 = vpop.f32.mrf.mxu0
        %v2827 = vadd.f32 %v2311, %v2826
        %2828 = vmatmul.bf16.gmra.mxu0 %v1712
        %v2829 = vpop.f32.mrf.mxu0
        %v2830 = vadd.f32 %v2311, %v2829
        %v2831 = vpop.f32.mrf.mxu0
        %v2832 = vadd.f32 %v2311, %v2831
        %2833 = vmatmul.bf16.gmra.mxu0 %v1713
        %v2834 = vpop.f32.mrf.mxu0
        %v2835 = vadd.f32 %v2311, %v2834
        %v2836 = vpop.f32.mrf.mxu0
        %v2837 = vadd.f32 %v2311, %v2836
        %2838 = vmatmul.bf16.gmra.mxu0 %v1714
        %v2839 = vpop.f32.mrf.mxu0
        %v2840 = vadd.f32 %v2311, %v2839
        %v2841 = vpop.f32.mrf.mxu0
        %v2842 = vadd.f32 %v2311, %v2841
        %2843 = vmatmul.bf16.gmra.mxu0 %v1715
        %v2844 = vpop.f32.mrf.mxu0
        %v2845 = vadd.f32 %v2311, %v2844
        %v2846 = vpop.f32.mrf.mxu0
        %v2847 = vadd.f32 %v2311, %v2846
        %2848 = vmatmul.bf16.gmra.mxu0 %v1716
        %v2849 = vpop.f32.mrf.mxu0
        %v2850 = vadd.f32 %v2311, %v2849
        %v2851 = vpop.f32.mrf.mxu0
        %v2852 = vadd.f32 %v2311, %v2851
        %2853 = vmatmul.bf16.gmra.mxu0 %v1717
        %v2854 = vpop.f32.mrf.mxu0
        %v2855 = vadd.f32 %v2311, %v2854
        %v2856 = vpop.f32.mrf.mxu0
        %v2857 = vadd.f32 %v2311, %v2856
        %2858 = vmatmul.bf16.gmra.mxu0 %v1718
        %v2859 = vpop.f32.mrf.mxu0
        %v2860 = vadd.f32 %v2311, %v2859
        %v2861 = vpop.f32.mrf.mxu0
        %v2862 = vadd.f32 %v2311, %v2861
        %2863 = vmatmul.bf16.gmra.mxu0 %v1719
        %v2864 = vpop.f32.mrf.mxu0
        %v2865 = vadd.f32 %v2311, %v2864
        %v2866 = vpop.f32.mrf.mxu0
        %v2867 = vadd.f32 %v2311, %v2866
        %2868 = vmatmul.bf16.gmra.mxu0 %v1720
        %v2869 = vpop.f32.mrf.mxu0
        %v2870 = vadd.f32 %v2311, %v2869
        %v2871 = vpop.f32.mrf.mxu0
        %v2872 = vadd.f32 %v2311, %v2871
        %2873 = vmatmul.bf16.gmra.mxu0 %v1721
        %v2874 = vpop.f32.mrf.mxu0
        %v2875 = vadd.f32 %v2311, %v2874
        %v2876 = vpop.f32.mrf.mxu0
        %v2877 = vadd.f32 %v2311, %v2876
        %2878 = vmatmul.bf16.gmra.mxu0 %v1722
        %v2879 = vpop.f32.mrf.mxu0
        %v2880 = vadd.f32 %v2311, %v2879
        %v2881 = vpop.f32.mrf.mxu0
        %v2882 = vadd.f32 %v2311, %v2881
        %2883 = vmatmul.bf16.gmra.mxu0 %v1723
        %v2884 = vpop.f32.mrf.mxu0
        %v2885 = vadd.f32 %v2311, %v2884
        %v2886 = vpop.f32.mrf.mxu0
        %v2887 = vadd.f32 %v2311, %v2886
        %2888 = vdwg.mxu0
        %2889 = vmatpush.bf16.msra.mxu0 %v2616
        %2890 = vmatpush.bf16.msra.mxu0 %v2615
        %2891 = vmatpush.bf16.msra.mxu0 %v2614
        %2892 = vmatpush.bf16.msra.mxu0 %v2613
        %2893 = vmatpush.bf16.msra.mxu0 %v2612
        %2894 = vmatpush.bf16.msra.mxu0 %v2611
        %2895 = vmatpush.bf16.msra.mxu0 %v2610
        %2896 = vmatpush.bf16.msra.mxu0 %v2609
        %2897 = vmatmul.bf16.gmra.mxu0 %v1805
        %v2898 = vpop.f32.mrf.mxu0
        %v2899 = vadd.f32 %v2755, %v2898
        %v2900 = vpop.f32.mrf.mxu0
        %v2901 = vadd.f32 %v2757, %v2900
        %2902 = vmatmul.bf16.gmra.mxu0 %v1806
        %v2903 = vpop.f32.mrf.mxu0
        %v2904 = vadd.f32 %v2760, %v2903
        %v2905 = vpop.f32.mrf.mxu0
        %v2906 = vadd.f32 %v2762, %v2905
        %2907 = vmatmul.bf16.gmra.mxu0 %v1807
        %v2908 = vpop.f32.mrf.mxu0
        %v2909 = vadd.f32 %v2765, %v2908
        %v2910 = vpop.f32.mrf.mxu0
        %v2911 = vadd.f32 %v2767, %v2910
        %2912 = vmatmul.bf16.gmra.mxu0 %v1808
        %v2913 = vpop.f32.mrf.mxu0
        %v2914 = vadd.f32 %v2770, %v2913
        %v2915 = vpop.f32.mrf.mxu0
        %v2916 = vadd.f32 %v2772, %v2915
        %2917 = vmatmul.bf16.gmra.mxu0 %v1809
        %v2918 = vpop.f32.mrf.mxu0
        %v2919 = vadd.f32 %v2775, %v2918
        %v2920 = vpop.f32.mrf.mxu0
        %v2921 = vadd.f32 %v2777, %v2920
        %2922 = vmatmul.bf16.gmra.mxu0 %v1810
        %v2923 = vpop.f32.mrf.mxu0
        %v2924 = vadd.f32 %v2780, %v2923
        %v2925 = vpop.f32.mrf.mxu0
        %v2926 = vadd.f32 %v2782, %v2925
        %2927 = vmatmul.bf16.gmra.mxu0 %v1811
        %v2928 = vpop.f32.mrf.mxu0
        %v2929 = vadd.f32 %v2785, %v2928
        %v2930 = vpop.f32.mrf.mxu0
        %v2931 = vadd.f32 %v2787, %v2930
        %2932 = vmatmul.bf16.gmra.mxu0 %v1812
        %v2933 = vpop.f32.mrf.mxu0
        %v2934 = vadd.f32 %v2790, %v2933
        %v2935 = vpop.f32.mrf.mxu0
        %v2936 = vadd.f32 %v2792, %v2935
        %2937 = vmatmul.bf16.gmra.mxu0 %v1813
        %v2938 = vpop.f32.mrf.mxu0
        %v2939 = vadd.f32 %v2795, %v2938
        %v2940 = vpop.f32.mrf.mxu0
        %v2941 = vadd.f32 %v2797, %v2940
        %2942 = vmatmul.bf16.gmra.mxu0 %v1814
        %v2943 = vpop.f32.mrf.mxu0
        %v2944 = vadd.f32 %v2800, %v2943
        %v2945 = vpop.f32.mrf.mxu0
        %v2946 = vadd.f32 %v2802, %v2945
        %2947 = vmatmul.bf16.gmra.mxu0 %v1815
        %v2948 = vpop.f32.mrf.mxu0
        %v2949 = vadd.f32 %v2805, %v2948
        %v2950 = vpop.f32.mrf.mxu0
        %v2951 = vadd.f32 %v2807, %v2950
        %2952 = vmatmul.bf16.gmra.mxu0 %v1816
        %v2953 = vpop.f32.mrf.mxu0
        %v2954 = vadd.f32 %v2810, %v2953
        %v2955 = vpop.f32.mrf.mxu0
        %v2956 = vadd.f32 %v2812, %v2955
        %2957 = vmatmul.bf16.gmra.mxu0 %v1817
        %v2958 = vpop.f32.mrf.mxu0
        %v2959 = vadd.f32 %v2815, %v2958
        %v2960 = vpop.f32.mrf.mxu0
        %v2961 = vadd.f32 %v2817, %v2960
        %2962 = vmatmul.bf16.gmra.mxu0 %v1818
        %v2963 = vpop.f32.mrf.mxu0
        %v2964 = vadd.f32 %v2820, %v2963
        %v2965 = vpop.f32.mrf.mxu0
        %v2966 = vadd.f32 %v2822, %v2965
        %2967 = vmatmul.bf16.gmra.mxu0 %v1819
        %v2968 = vpop.f32.mrf.mxu0
        %v2969 = vadd.f32 %v2825, %v2968
        %v2970 = vpop.f32.mrf.mxu0
        %v2971 = vadd.f32 %v2827, %v2970
        %2972 = vmatmul.bf16.gmra.mxu0 %v1820
        %v2973 = vpop.f32.mrf.mxu0
        %v2974 = vadd.f32 %v2830, %v2973
        %v2975 = vpop.f32.mrf.mxu0
        %v2976 = vadd.f32 %v2832, %v2975
        %2977 = vmatmul.bf16.gmra.mxu0 %v1821
        %v2978 = vpop.f32.mrf.mxu0
        %v2979 = vadd.f32 %v2835, %v2978
        %v2980 = vpop.f32.mrf.mxu0
        %v2981 = vadd.f32 %v2837, %v2980
        %2982 = vmatmul.bf16.gmra.mxu0 %v1822
        %v2983 = vpop.f32.mrf.mxu0
        %v2984 = vadd.f32 %v2840, %v2983
        %v2985 = vpop.f32.mrf.mxu0
        %v2986 = vadd.f32 %v2842, %v2985
        %2987 = vmatmul.bf16.gmra.mxu0 %v1823
        %v2988 = vpop.f32.mrf.mxu0
        %v2989 = vadd.f32 %v2845, %v2988
        %v2990 = vpop.f32.mrf.mxu0
        %v2991 = vadd.f32 %v2847, %v2990
        %2992 = vmatmul.bf16.gmra.mxu0 %v1824
        %v2993 = vpop.f32.mrf.mxu0
        %v2994 = vadd.f32 %v2850, %v2993
        %v2995 = vpop.f32.mrf.mxu0
        %v2996 = vadd.f32 %v2852, %v2995
        %2997 = vmatmul.bf16.gmra.mxu0 %v1825
        %v2998 = vpop.f32.mrf.mxu0
        %v2999 = vadd.f32 %v2855, %v2998
        %v3000 = vpop.f32.mrf.mxu0
        %v3001 = vadd.f32 %v2857, %v3000
        %3002 = vmatmul.bf16.gmra.mxu0 %v1826
        %v3003 = vpop.f32.mrf.mxu0
        %v3004 = vadd.f32 %v2860, %v3003
        %v3005 = vpop.f32.mrf.mxu0
        %v3006 = vadd.f32 %v2862, %v3005
        %3007 = vmatmul.bf16.gmra.mxu0 %v1827
        %v3008 = vpop.f32.mrf.mxu0
        %v3009 = vadd.f32 %v2865, %v3008
        %v3010 = vpop.f32.mrf.mxu0
        %v3011 = vadd.f32 %v2867, %v3010
        %3012 = vmatmul.bf16.gmra.mxu0 %v1828
        %v3013 = vpop.f32.mrf.mxu0
        %v3014 = vadd.f32 %v2870, %v3013
        %v3015 = vpop.f32.mrf.mxu0
        %v3016 = vadd.f32 %v2872, %v3015
        %3017 = vmatmul.bf16.gmra.mxu0 %v1829
        %v3018 = vpop.f32.mrf.mxu0
        %v3019 = vadd.f32 %v2875, %v3018
        %v3020 = vpop.f32.mrf.mxu0
        %v3021 = vadd.f32 %v2877, %v3020
        %3022 = vmatmul.bf16.gmra.mxu0 %v1830
        %v3023 = vpop.f32.mrf.mxu0
        %v3024 = vadd.f32 %v2880, %v3023
        %v3025 = vpop.f32.mrf.mxu0
        %v3026 = vadd.f32 %v2882, %v3025
        %3027 = vmatmul.bf16.gmra.mxu0 %v1831
        %v3028 = vpop.f32.mrf.mxu0
        %v3029 = vadd.f32 %v2885, %v3028
        %v3030 = vpop.f32.mrf.mxu0
        %v3031 = vadd.f32 %v2887, %v3030
        %3032 = vdwg.mxu0
        %3033 = vmatpush.bf16.msra.mxu0 %v2624
        %3034 = vmatpush.bf16.msra.mxu0 %v2623
        %3035 = vmatpush.bf16.msra.mxu0 %v2622
        %3036 = vmatpush.bf16.msra.mxu0 %v2621
        %3037 = vmatpush.bf16.msra.mxu0 %v2620
        %3038 = vmatpush.bf16.msra.mxu0 %v2619
        %3039 = vmatpush.bf16.msra.mxu0 %v2618
        %3040 = vmatpush.bf16.msra.mxu0 %v2617
        %3041 = vmatmul.bf16.gmra.mxu0 %v1913
        %v3042 = vpop.f32.mrf.mxu0
        %v3043 = vadd.f32 %v2899, %v3042
        %v3044 = vpop.f32.mrf.mxu0
        %v3045 = vadd.f32 %v2901, %v3044
        %3046 = vmatmul.bf16.gmra.mxu0 %v1914
        %v3047 = vpop.f32.mrf.mxu0
        %v3048 = vadd.f32 %v2904, %v3047
        %v3049 = vpop.f32.mrf.mxu0
        %v3050 = vadd.f32 %v2906, %v3049
        %3051 = vmatmul.bf16.gmra.mxu0 %v1915
        %v3052 = vpop.f32.mrf.mxu0
        %v3053 = vadd.f32 %v2909, %v3052
        %v3054 = vpop.f32.mrf.mxu0
        %v3055 = vadd.f32 %v2911, %v3054
        %3056 = vmatmul.bf16.gmra.mxu0 %v1916
        %v3057 = vpop.f32.mrf.mxu0
        %v3058 = vadd.f32 %v2914, %v3057
        %v3059 = vpop.f32.mrf.mxu0
        %v3060 = vadd.f32 %v2916, %v3059
        %3061 = vmatmul.bf16.gmra.mxu0 %v1917
        %v3062 = vpop.f32.mrf.mxu0
        %v3063 = vadd.f32 %v2919, %v3062
        %v3064 = vpop.f32.mrf.mxu0
        %v3065 = vadd.f32 %v2921, %v3064
        %3066 = vmatmul.bf16.gmra.mxu0 %v1918
        %v3067 = vpop.f32.mrf.mxu0
        %v3068 = vadd.f32 %v2924, %v3067
        %v3069 = vpop.f32.mrf.mxu0
        %v3070 = vadd.f32 %v2926, %v3069
        %3071 = vmatmul.bf16.gmra.mxu0 %v1919
        %v3072 = vpop.f32.mrf.mxu0
        %v3073 = vadd.f32 %v2929, %v3072
        %v3074 = vpop.f32.mrf.mxu0
        %v3075 = vadd.f32 %v2931, %v3074
        %3076 = vmatmul.bf16.gmra.mxu0 %v1920
        %v3077 = vpop.f32.mrf.mxu0
        %v3078 = vadd.f32 %v2934, %v3077
        %v3079 = vpop.f32.mrf.mxu0
        %v3080 = vadd.f32 %v2936, %v3079
        %3081 = vmatmul.bf16.gmra.mxu0 %v1921
        %v3082 = vpop.f32.mrf.mxu0
        %v3083 = vadd.f32 %v2939, %v3082
        %v3084 = vpop.f32.mrf.mxu0
        %v3085 = vadd.f32 %v2941, %v3084
        %3086 = vmatmul.bf16.gmra.mxu0 %v1922
        %v3087 = vpop.f32.mrf.mxu0
        %v3088 = vadd.f32 %v2944, %v3087
        %v3089 = vpop.f32.mrf.mxu0
        %v3090 = vadd.f32 %v2946, %v3089
        %3091 = vmatmul.bf16.gmra.mxu0 %v1923
        %v3092 = vpop.f32.mrf.mxu0
        %v3093 = vadd.f32 %v2949, %v3092
        %v3094 = vpop.f32.mrf.mxu0
        %v3095 = vadd.f32 %v2951, %v3094
        %3096 = vmatmul.bf16.gmra.mxu0 %v1924
        %v3097 = vpop.f32.mrf.mxu0
        %v3098 = vadd.f32 %v2954, %v3097
        %v3099 = vpop.f32.mrf.mxu0
        %v3100 = vadd.f32 %v2956, %v3099
        %3101 = vmatmul.bf16.gmra.mxu0 %v1925
        %v3102 = vpop.f32.mrf.mxu0
        %v3103 = vadd.f32 %v2959, %v3102
        %v3104 = vpop.f32.mrf.mxu0
        %v3105 = vadd.f32 %v2961, %v3104
        %3106 = vmatmul.bf16.gmra.mxu0 %v1926
        %v3107 = vpop.f32.mrf.mxu0
        %v3108 = vadd.f32 %v2964, %v3107
        %v3109 = vpop.f32.mrf.mxu0
        %v3110 = vadd.f32 %v2966, %v3109
        %3111 = vmatmul.bf16.gmra.mxu0 %v1927
        %v3112 = vpop.f32.mrf.mxu0
        %v3113 = vadd.f32 %v2969, %v3112
        %v3114 = vpop.f32.mrf.mxu0
        %v3115 = vadd.f32 %v2971, %v3114
        %3116 = vmatmul.bf16.gmra.mxu0 %v1928
        %v3117 = vpop.f32.mrf.mxu0
        %v3118 = vadd.f32 %v2974, %v3117
        %v3119 = vpop.f32.mrf.mxu0
        %v3120 = vadd.f32 %v2976, %v3119
        %3121 = vmatmul.bf16.gmra.mxu0 %v1929
        %v3122 = vpop.f32.mrf.mxu0
        %v3123 = vadd.f32 %v2979, %v3122
        %v3124 = vpop.f32.mrf.mxu0
        %v3125 = vadd.f32 %v2981, %v3124
        %3126 = vmatmul.bf16.gmra.mxu0 %v1930
        %v3127 = vpop.f32.mrf.mxu0
        %v3128 = vadd.f32 %v2984, %v3127
        %v3129 = vpop.f32.mrf.mxu0
        %v3130 = vadd.f32 %v2986, %v3129
        %3131 = vmatmul.bf16.gmra.mxu0 %v1931
        %v3132 = vpop.f32.mrf.mxu0
        %v3133 = vadd.f32 %v2989, %v3132
        %v3134 = vpop.f32.mrf.mxu0
        %v3135 = vadd.f32 %v2991, %v3134
        %3136 = vmatmul.bf16.gmra.mxu0 %v1932
        %v3137 = vpop.f32.mrf.mxu0
        %v3138 = vadd.f32 %v2994, %v3137
        %v3139 = vpop.f32.mrf.mxu0
        %v3140 = vadd.f32 %v2996, %v3139
        %3141 = vmatmul.bf16.gmra.mxu0 %v1933
        %v3142 = vpop.f32.mrf.mxu0
        %v3143 = vadd.f32 %v2999, %v3142
        %v3144 = vpop.f32.mrf.mxu0
        %v3145 = vadd.f32 %v3001, %v3144
        %3146 = vmatmul.bf16.gmra.mxu0 %v1934
        %v3147 = vpop.f32.mrf.mxu0
        %v3148 = vadd.f32 %v3004, %v3147
        %v3149 = vpop.f32.mrf.mxu0
        %v3150 = vadd.f32 %v3006, %v3149
        %3151 = vmatmul.bf16.gmra.mxu0 %v1935
        %v3152 = vpop.f32.mrf.mxu0
        %v3153 = vadd.f32 %v3009, %v3152
        %v3154 = vpop.f32.mrf.mxu0
        %v3155 = vadd.f32 %v3011, %v3154
        %3156 = vmatmul.bf16.gmra.mxu0 %v1936
        %v3157 = vpop.f32.mrf.mxu0
        %v3158 = vadd.f32 %v3014, %v3157
        %v3159 = vpop.f32.mrf.mxu0
        %v3160 = vadd.f32 %v3016, %v3159
        %3161 = vmatmul.bf16.gmra.mxu0 %v1937
        %v3162 = vpop.f32.mrf.mxu0
        %v3163 = vadd.f32 %v3019, %v3162
        %v3164 = vpop.f32.mrf.mxu0
        %v3165 = vadd.f32 %v3021, %v3164
        %3166 = vmatmul.bf16.gmra.mxu0 %v1938
        %v3167 = vpop.f32.mrf.mxu0
        %v3168 = vadd.f32 %v3024, %v3167
        %v3169 = vpop.f32.mrf.mxu0
        %v3170 = vadd.f32 %v3026, %v3169
        %3171 = vmatmul.bf16.gmra.mxu0 %v1939
        %v3172 = vpop.f32.mrf.mxu0
        %v3173 = vadd.f32 %v3029, %v3172
        %v3174 = vpop.f32.mrf.mxu0
        %v3175 = vadd.f32 %v3031, %v3174
        %3176 = vdwg.mxu0
        %3177 = vmatpush.bf16.msra.mxu0 %v2632
        %3178 = vmatpush.bf16.msra.mxu0 %v2631
        %3179 = vmatpush.bf16.msra.mxu0 %v2630
        %3180 = vmatpush.bf16.msra.mxu0 %v2629
        %3181 = vmatpush.bf16.msra.mxu0 %v2628
        %3182 = vmatpush.bf16.msra.mxu0 %v2627
        %3183 = vmatpush.bf16.msra.mxu0 %v2626
        %3184 = vmatpush.bf16.msra.mxu0 %v2625
        %3185 = vmatmul.bf16.gmra.mxu0 %v1970
        %v3186 = vpop.f32.mrf.mxu0
        %v3187 = vadd.f32 %v3043, %v3186
        %v3188 = vpop.f32.mrf.mxu0
        %v3189 = vadd.f32 %v3045, %v3188
        %3190 = vmatmul.bf16.gmra.mxu0 %v1971
        %v3191 = vpop.f32.mrf.mxu0
        %v3192 = vadd.f32 %v3048, %v3191
        %v3193 = vpop.f32.mrf.mxu0
        %v3194 = vadd.f32 %v3050, %v3193
        %3195 = vmatmul.bf16.gmra.mxu0 %v1972
        %v3196 = vpop.f32.mrf.mxu0
        %v3197 = vadd.f32 %v3053, %v3196
        %v3198 = vpop.f32.mrf.mxu0
        %v3199 = vadd.f32 %v3055, %v3198
        %3200 = vmatmul.bf16.gmra.mxu0 %v1973
        %v3201 = vpop.f32.mrf.mxu0
        %v3202 = vadd.f32 %v3058, %v3201
        %v3203 = vpop.f32.mrf.mxu0
        %v3204 = vadd.f32 %v3060, %v3203
        %3205 = vmatmul.bf16.gmra.mxu0 %v1974
        %v3206 = vpop.f32.mrf.mxu0
        %v3207 = vadd.f32 %v3063, %v3206
        %v3208 = vpop.f32.mrf.mxu0
        %v3209 = vadd.f32 %v3065, %v3208
        %3210 = vmatmul.bf16.gmra.mxu0 %v1975
        %v3211 = vpop.f32.mrf.mxu0
        %v3212 = vadd.f32 %v3068, %v3211
        %v3213 = vpop.f32.mrf.mxu0
        %v3214 = vadd.f32 %v3070, %v3213
        %3215 = vmatmul.bf16.gmra.mxu0 %v1976
        %v3216 = vpop.f32.mrf.mxu0
        %v3217 = vadd.f32 %v3073, %v3216
        %v3218 = vpop.f32.mrf.mxu0
        %v3219 = vadd.f32 %v3075, %v3218
        %3220 = vmatmul.bf16.gmra.mxu0 %v1977
        %v3221 = vpop.f32.mrf.mxu0
        %v3222 = vadd.f32 %v3078, %v3221
        %v3223 = vpop.f32.mrf.mxu0
        %v3224 = vadd.f32 %v3080, %v3223
        %3225 = vmatmul.bf16.gmra.mxu0 %v1978
        %v3226 = vpop.f32.mrf.mxu0
        %v3227 = vadd.f32 %v3083, %v3226
        %v3228 = vpop.f32.mrf.mxu0
        %v3229 = vadd.f32 %v3085, %v3228
        %3230 = vmatmul.bf16.gmra.mxu0 %v1979
        %v3231 = vpop.f32.mrf.mxu0
        %v3232 = vadd.f32 %v3088, %v3231
        %v3233 = vpop.f32.mrf.mxu0
        %v3234 = vadd.f32 %v3090, %v3233
        %3235 = vmatmul.bf16.gmra.mxu0 %v1980
        %v3236 = vpop.f32.mrf.mxu0
        %v3237 = vadd.f32 %v3093, %v3236
        %v3238 = vpop.f32.mrf.mxu0
        %v3239 = vadd.f32 %v3095, %v3238
        %3240 = vmatmul.bf16.gmra.mxu0 %v1981
        %v3241 = vpop.f32.mrf.mxu0
        %v3242 = vadd.f32 %v3098, %v3241
        %v3243 = vpop.f32.mrf.mxu0
        %v3244 = vadd.f32 %v3100, %v3243
        %3245 = vmatmul.bf16.gmra.mxu0 %v1982
        %v3246 = vpop.f32.mrf.mxu0
        %v3247 = vadd.f32 %v3103, %v3246
        %v3248 = vpop.f32.mrf.mxu0
        %v3249 = vadd.f32 %v3105, %v3248
        %3250 = vmatmul.bf16.gmra.mxu0 %v1983
        %v3251 = vpop.f32.mrf.mxu0
        %v3252 = vadd.f32 %v3108, %v3251
        %v3253 = vpop.f32.mrf.mxu0
        %v3254 = vadd.f32 %v3110, %v3253
        %3255 = vmatmul.bf16.gmra.mxu0 %v1984
        %v3256 = vpop.f32.mrf.mxu0
        %v3257 = vadd.f32 %v3113, %v3256
        %v3258 = vpop.f32.mrf.mxu0
        %v3259 = vadd.f32 %v3115, %v3258
        %3260 = vmatmul.bf16.gmra.mxu0 %v1985
        %v3261 = vpop.f32.mrf.mxu0
        %v3262 = vadd.f32 %v3118, %v3261
        %v3263 = vpop.f32.mrf.mxu0
        %v3264 = vadd.f32 %v3120, %v3263
        %3265 = vmatmul.bf16.gmra.mxu0 %v1986
        %v3266 = vpop.f32.mrf.mxu0
        %v3267 = vadd.f32 %v3123, %v3266
        %v3268 = vpop.f32.mrf.mxu0
        %v3269 = vadd.f32 %v3125, %v3268
        %3270 = vmatmul.bf16.gmra.mxu0 %v1987
        %v3271 = vpop.f32.mrf.mxu0
        %v3272 = vadd.f32 %v3128, %v3271
        %v3273 = vpop.f32.mrf.mxu0
        %v3274 = vadd.f32 %v3130, %v3273
        %3275 = vmatmul.bf16.gmra.mxu0 %v1988
        %v3276 = vpop.f32.mrf.mxu0
        %v3277 = vadd.f32 %v3133, %v3276
        %v3278 = vpop.f32.mrf.mxu0
        %v3279 = vadd.f32 %v3135, %v3278
        %3280 = vmatmul.bf16.gmra.mxu0 %v1989
        %v3281 = vpop.f32.mrf.mxu0
        %v3282 = vadd.f32 %v3138, %v3281
        %v3283 = vpop.f32.mrf.mxu0
        %v3284 = vadd.f32 %v3140, %v3283
        %3285 = vmatmul.bf16.gmra.mxu0 %v1990
        %v3286 = vpop.f32.mrf.mxu0
        %v3287 = vadd.f32 %v3143, %v3286
        %v3288 = vpop.f32.mrf.mxu0
        %v3289 = vadd.f32 %v3145, %v3288
        %3290 = vmatmul.bf16.gmra.mxu0 %v1991
        %v3291 = vpop.f32.mrf.mxu0
        %v3292 = vadd.f32 %v3148, %v3291
        %v3293 = vpop.f32.mrf.mxu0
        %v3294 = vadd.f32 %v3150, %v3293
        %3295 = vmatmul.bf16.gmra.mxu0 %v1992
        %v3296 = vpop.f32.mrf.mxu0
        %v3297 = vadd.f32 %v3153, %v3296
        %v3298 = vpop.f32.mrf.mxu0
        %v3299 = vadd.f32 %v3155, %v3298
        %3300 = vmatmul.bf16.gmra.mxu0 %v1993
        %v3301 = vpop.f32.mrf.mxu0
        %v3302 = vadd.f32 %v3158, %v3301
        %v3303 = vpop.f32.mrf.mxu0
        %v3304 = vadd.f32 %v3160, %v3303
        %3305 = vmatmul.bf16.gmra.mxu0 %v1994
        %v3306 = vpop.f32.mrf.mxu0
        %v3307 = vadd.f32 %v3163, %v3306
        %v3308 = vpop.f32.mrf.mxu0
        %v3309 = vadd.f32 %v3165, %v3308
        %3310 = vmatmul.bf16.gmra.mxu0 %v1995
        %v3311 = vpop.f32.mrf.mxu0
        %v3312 = vadd.f32 %v3168, %v3311
        %v3313 = vpop.f32.mrf.mxu0
        %v3314 = vadd.f32 %v3170, %v3313
        %3315 = vmatmul.bf16.gmra.mxu0 %v1996
        %v3316 = vpop.f32.mrf.mxu0
        %v3317 = vadd.f32 %v3173, %v3316
        %v3318 = vpop.f32.mrf.mxu0
        %v3319 = vadd.f32 %v3175, %v3318
        %3320 = vdwg.mxu0
        %3321 = vmatpush.bf16.msra.mxu0 %v2640
        %3322 = vmatpush.bf16.msra.mxu0 %v2639
        %3323 = vmatpush.bf16.msra.mxu0 %v2638
        %3324 = vmatpush.bf16.msra.mxu0 %v2637
        %3325 = vmatpush.bf16.msra.mxu0 %v2636
        %3326 = vmatpush.bf16.msra.mxu0 %v2635
        %3327 = vmatpush.bf16.msra.mxu0 %v2634
        %3328 = vmatpush.bf16.msra.mxu0 %v2633
        %3329 = vmatmul.bf16.gmra.mxu0 %v2027
        %v3330 = vpop.f32.mrf.mxu0
        %v3331 = vadd.f32 %v3187, %v3330
        %v3332 = vpop.f32.mrf.mxu0
        %v3333 = vadd.f32 %v3189, %v3332
        %3334 = vmatmul.bf16.gmra.mxu0 %v2028
        %v3335 = vpop.f32.mrf.mxu0
        %v3336 = vadd.f32 %v3192, %v3335
        %v3337 = vpop.f32.mrf.mxu0
        %v3338 = vadd.f32 %v3194, %v3337
        %3339 = vmatmul.bf16.gmra.mxu0 %v2029
        %v3340 = vpop.f32.mrf.mxu0
        %v3341 = vadd.f32 %v3197, %v3340
        %v3342 = vpop.f32.mrf.mxu0
        %v3343 = vadd.f32 %v3199, %v3342
        %3344 = vmatmul.bf16.gmra.mxu0 %v2030
        %v3345 = vpop.f32.mrf.mxu0
        %v3346 = vadd.f32 %v3202, %v3345
        %v3347 = vpop.f32.mrf.mxu0
        %v3348 = vadd.f32 %v3204, %v3347
        %3349 = vmatmul.bf16.gmra.mxu0 %v2031
        %v3350 = vpop.f32.mrf.mxu0
        %v3351 = vadd.f32 %v3207, %v3350
        %v3352 = vpop.f32.mrf.mxu0
        %v3353 = vadd.f32 %v3209, %v3352
        %3354 = vmatmul.bf16.gmra.mxu0 %v2032
        %v3355 = vpop.f32.mrf.mxu0
        %v3356 = vadd.f32 %v3212, %v3355
        %v3357 = vpop.f32.mrf.mxu0
        %v3358 = vadd.f32 %v3214, %v3357
        %3359 = vmatmul.bf16.gmra.mxu0 %v2033
        %v3360 = vpop.f32.mrf.mxu0
        %v3361 = vadd.f32 %v3217, %v3360
        %v3362 = vpop.f32.mrf.mxu0
        %v3363 = vadd.f32 %v3219, %v3362
        %3364 = vmatmul.bf16.gmra.mxu0 %v2034
        %v3365 = vpop.f32.mrf.mxu0
        %v3366 = vadd.f32 %v3222, %v3365
        %v3367 = vpop.f32.mrf.mxu0
        %v3368 = vadd.f32 %v3224, %v3367
        %3369 = vmatmul.bf16.gmra.mxu0 %v2035
        %v3370 = vpop.f32.mrf.mxu0
        %v3371 = vadd.f32 %v3227, %v3370
        %v3372 = vpop.f32.mrf.mxu0
        %v3373 = vadd.f32 %v3229, %v3372
        %3374 = vmatmul.bf16.gmra.mxu0 %v2036
        %v3375 = vpop.f32.mrf.mxu0
        %v3376 = vadd.f32 %v3232, %v3375
        %v3377 = vpop.f32.mrf.mxu0
        %v3378 = vadd.f32 %v3234, %v3377
        %3379 = vmatmul.bf16.gmra.mxu0 %v2037
        %v3380 = vpop.f32.mrf.mxu0
        %v3381 = vadd.f32 %v3237, %v3380
        %v3382 = vpop.f32.mrf.mxu0
        %v3383 = vadd.f32 %v3239, %v3382
        %3384 = vmatmul.bf16.gmra.mxu0 %v2038
        %v3385 = vpop.f32.mrf.mxu0
        %v3386 = vadd.f32 %v3242, %v3385
        %v3387 = vpop.f32.mrf.mxu0
        %v3388 = vadd.f32 %v3244, %v3387
        %3389 = vmatmul.bf16.gmra.mxu0 %v2039
        %v3390 = vpop.f32.mrf.mxu0
        %v3391 = vadd.f32 %v3247, %v3390
        %v3392 = vpop.f32.mrf.mxu0
        %v3393 = vadd.f32 %v3249, %v3392
        %3394 = vmatmul.bf16.gmra.mxu0 %v2040
        %v3395 = vpop.f32.mrf.mxu0
        %v3396 = vadd.f32 %v3252, %v3395
        %v3397 = vpop.f32.mrf.mxu0
        %v3398 = vadd.f32 %v3254, %v3397
        %3399 = vmatmul.bf16.gmra.mxu0 %v2041
        %v3400 = vpop.f32.mrf.mxu0
        %v3401 = vadd.f32 %v3257, %v3400
        %v3402 = vpop.f32.mrf.mxu0
        %v3403 = vadd.f32 %v3259, %v3402
        %3404 = vmatmul.bf16.gmra.mxu0 %v2042
        %v3405 = vpop.f32.mrf.mxu0
        %v3406 = vadd.f32 %v3262, %v3405
        %v3407 = vpop.f32.mrf.mxu0
        %v3408 = vadd.f32 %v3264, %v3407
        %3409 = vmatmul.bf16.gmra.mxu0 %v2043
        %v3410 = vpop.f32.mrf.mxu0
        %v3411 = vadd.f32 %v3267, %v3410
        %v3412 = vpop.f32.mrf.mxu0
        %v3413 = vadd.f32 %v3269, %v3412
        %3414 = vmatmul.bf16.gmra.mxu0 %v2044
        %v3415 = vpop.f32.mrf.mxu0
        %v3416 = vadd.f32 %v3272, %v3415
        %v3417 = vpop.f32.mrf.mxu0
        %v3418 = vadd.f32 %v3274, %v3417
        %3419 = vmatmul.bf16.gmra.mxu0 %v2045
        %v3420 = vpop.f32.mrf.mxu0
        %v3421 = vadd.f32 %v3277, %v3420
        %v3422 = vpop.f32.mrf.mxu0
        %v3423 = vadd.f32 %v3279, %v3422
        %3424 = vmatmul.bf16.gmra.mxu0 %v2046
        %v3425 = vpop.f32.mrf.mxu0
        %v3426 = vadd.f32 %v3282, %v3425
        %v3427 = vpop.f32.mrf.mxu0
        %v3428 = vadd.f32 %v3284, %v3427
        %3429 = vmatmul.bf16.gmra.mxu0 %v2047
        %v3430 = vpop.f32.mrf.mxu0
        %v3431 = vadd.f32 %v3287, %v3430
        %v3432 = vpop.f32.mrf.mxu0
        %v3433 = vadd.f32 %v3289, %v3432
        %3434 = vmatmul.bf16.gmra.mxu0 %v2048
        %v3435 = vpop.f32.mrf.mxu0
        %v3436 = vadd.f32 %v3292, %v3435
        %v3437 = vpop.f32.mrf.mxu0
        %v3438 = vadd.f32 %v3294, %v3437
        %3439 = vmatmul.bf16.gmra.mxu0 %v2049
        %v3440 = vpop.f32.mrf.mxu0
        %v3441 = vadd.f32 %v3297, %v3440
        %v3442 = vpop.f32.mrf.mxu0
        %v3443 = vadd.f32 %v3299, %v3442
        %3444 = vmatmul.bf16.gmra.mxu0 %v2050
        %v3445 = vpop.f32.mrf.mxu0
        %v3446 = vadd.f32 %v3302, %v3445
        %v3447 = vpop.f32.mrf.mxu0
        %v3448 = vadd.f32 %v3304, %v3447
        %3449 = vmatmul.bf16.gmra.mxu0 %v2051
        %v3450 = vpop.f32.mrf.mxu0
        %v3451 = vadd.f32 %v3307, %v3450
        %v3452 = vpop.f32.mrf.mxu0
        %v3453 = vadd.f32 %v3309, %v3452
        %3454 = vmatmul.bf16.gmra.mxu0 %v2052
        %v3455 = vpop.f32.mrf.mxu0
        %v3456 = vadd.f32 %v3312, %v3455
        %v3457 = vpop.f32.mrf.mxu0
        %v3458 = vadd.f32 %v3314, %v3457
        %3459 = vmatmul.bf16.gmra.mxu0 %v2053
        %v3460 = vpop.f32.mrf.mxu0
        %v3461 = vadd.f32 %v3317, %v3460
        %v3462 = vpop.f32.mrf.mxu0
        %v3463 = vadd.f32 %v3319, %v3462
        %3464 = vdwg.mxu0
        %3465 = vmatpush.bf16.msra.mxu0 %v2648
        %3466 = vmatpush.bf16.msra.mxu0 %v2647
        %3467 = vmatpush.bf16.msra.mxu0 %v2646
        %3468 = vmatpush.bf16.msra.mxu0 %v2645
        %3469 = vmatpush.bf16.msra.mxu0 %v2644
        %3470 = vmatpush.bf16.msra.mxu0 %v2643
        %3471 = vmatpush.bf16.msra.mxu0 %v2642
        %3472 = vmatpush.bf16.msra.mxu0 %v2641
        %3473 = vmatmul.bf16.gmra.mxu0 %v2084
        %v3474 = vpop.f32.mrf.mxu0
        %v3475 = vadd.f32 %v3331, %v3474
        %v3476 = vpop.f32.mrf.mxu0
        %v3477 = vadd.f32 %v3333, %v3476
        %3478 = vmatmul.bf16.gmra.mxu0 %v2085
        %v3479 = vpop.f32.mrf.mxu0
        %v3480 = vadd.f32 %v3336, %v3479
        %v3481 = vpop.f32.mrf.mxu0
        %v3482 = vadd.f32 %v3338, %v3481
        %3483 = vmatmul.bf16.gmra.mxu0 %v2086
        %v3484 = vpop.f32.mrf.mxu0
        %v3485 = vadd.f32 %v3341, %v3484
        %v3486 = vpop.f32.mrf.mxu0
        %v3487 = vadd.f32 %v3343, %v3486
        %3488 = vmatmul.bf16.gmra.mxu0 %v2087
        %v3489 = vpop.f32.mrf.mxu0
        %v3490 = vadd.f32 %v3346, %v3489
        %v3491 = vpop.f32.mrf.mxu0
        %v3492 = vadd.f32 %v3348, %v3491
        %3493 = vmatmul.bf16.gmra.mxu0 %v2088
        %v3494 = vpop.f32.mrf.mxu0
        %v3495 = vadd.f32 %v3351, %v3494
        %v3496 = vpop.f32.mrf.mxu0
        %v3497 = vadd.f32 %v3353, %v3496
        %3498 = vmatmul.bf16.gmra.mxu0 %v2089
        %v3499 = vpop.f32.mrf.mxu0
        %v3500 = vadd.f32 %v3356, %v3499
        %v3501 = vpop.f32.mrf.mxu0
        %v3502 = vadd.f32 %v3358, %v3501
        %3503 = vmatmul.bf16.gmra.mxu0 %v2090
        %v3504 = vpop.f32.mrf.mxu0
        %v3505 = vadd.f32 %v3361, %v3504
        %v3506 = vpop.f32.mrf.mxu0
        %v3507 = vadd.f32 %v3363, %v3506
        %3508 = vmatmul.bf16.gmra.mxu0 %v2091
        %v3509 = vpop.f32.mrf.mxu0
        %v3510 = vadd.f32 %v3366, %v3509
        %v3511 = vpop.f32.mrf.mxu0
        %v3512 = vadd.f32 %v3368, %v3511
        %3513 = vmatmul.bf16.gmra.mxu0 %v2092
        %v3514 = vpop.f32.mrf.mxu0
        %v3515 = vadd.f32 %v3371, %v3514
        %v3516 = vpop.f32.mrf.mxu0
        %v3517 = vadd.f32 %v3373, %v3516
        %3518 = vmatmul.bf16.gmra.mxu0 %v2093
        %v3519 = vpop.f32.mrf.mxu0
        %v3520 = vadd.f32 %v3376, %v3519
        %v3521 = vpop.f32.mrf.mxu0
        %v3522 = vadd.f32 %v3378, %v3521
        %3523 = vmatmul.bf16.gmra.mxu0 %v2094
        %v3524 = vpop.f32.mrf.mxu0
        %v3525 = vadd.f32 %v3381, %v3524
        %v3526 = vpop.f32.mrf.mxu0
        %v3527 = vadd.f32 %v3383, %v3526
        %3528 = vmatmul.bf16.gmra.mxu0 %v2095
        %v3529 = vpop.f32.mrf.mxu0
        %v3530 = vadd.f32 %v3386, %v3529
        %v3531 = vpop.f32.mrf.mxu0
        %v3532 = vadd.f32 %v3388, %v3531
        %3533 = vmatmul.bf16.gmra.mxu0 %v2096
        %v3534 = vpop.f32.mrf.mxu0
        %v3535 = vadd.f32 %v3391, %v3534
        %v3536 = vpop.f32.mrf.mxu0
        %v3537 = vadd.f32 %v3393, %v3536
        %3538 = vmatmul.bf16.gmra.mxu0 %v2097
        %v3539 = vpop.f32.mrf.mxu0
        %v3540 = vadd.f32 %v3396, %v3539
        %v3541 = vpop.f32.mrf.mxu0
        %v3542 = vadd.f32 %v3398, %v3541
        %3543 = vmatmul.bf16.gmra.mxu0 %v2098
        %v3544 = vpop.f32.mrf.mxu0
        %v3545 = vadd.f32 %v3401, %v3544
        %v3546 = vpop.f32.mrf.mxu0
        %v3547 = vadd.f32 %v3403, %v3546
        %3548 = vmatmul.bf16.gmra.mxu0 %v2099
        %v3549 = vpop.f32.mrf.mxu0
        %v3550 = vadd.f32 %v3406, %v3549
        %v3551 = vpop.f32.mrf.mxu0
        %v3552 = vadd.f32 %v3408, %v3551
        %3553 = vmatmul.bf16.gmra.mxu0 %v2100
        %v3554 = vpop.f32.mrf.mxu0
        %v3555 = vadd.f32 %v3411, %v3554
        %v3556 = vpop.f32.mrf.mxu0
        %v3557 = vadd.f32 %v3413, %v3556
        %3558 = vmatmul.bf16.gmra.mxu0 %v2101
        %v3559 = vpop.f32.mrf.mxu0
        %v3560 = vadd.f32 %v3416, %v3559
        %v3561 = vpop.f32.mrf.mxu0
        %v3562 = vadd.f32 %v3418, %v3561
        %3563 = vmatmul.bf16.gmra.mxu0 %v2102
        %v3564 = vpop.f32.mrf.mxu0
        %v3565 = vadd.f32 %v3421, %v3564
        %v3566 = vpop.f32.mrf.mxu0
        %v3567 = vadd.f32 %v3423, %v3566
        %3568 = vmatmul.bf16.gmra.mxu0 %v2103
        %v3569 = vpop.f32.mrf.mxu0
        %v3570 = vadd.f32 %v3426, %v3569
        %v3571 = vpop.f32.mrf.mxu0
        %v3572 = vadd.f32 %v3428, %v3571
        %3573 = vmatmul.bf16.gmra.mxu0 %v2104
        %v3574 = vpop.f32.mrf.mxu0
        %v3575 = vadd.f32 %v3431, %v3574
        %v3576 = vpop.f32.mrf.mxu0
        %v3577 = vadd.f32 %v3433, %v3576
        %3578 = vmatmul.bf16.gmra.mxu0 %v2105
        %v3579 = vpop.f32.mrf.mxu0
        %v3580 = vadd.f32 %v3436, %v3579
        %v3581 = vpop.f32.mrf.mxu0
        %v3582 = vadd.f32 %v3438, %v3581
        %3583 = vmatmul.bf16.gmra.mxu0 %v2106
        %v3584 = vpop.f32.mrf.mxu0
        %v3585 = vadd.f32 %v3441, %v3584
        %v3586 = vpop.f32.mrf.mxu0
        %v3587 = vadd.f32 %v3443, %v3586
        %3588 = vmatmul.bf16.gmra.mxu0 %v2107
        %v3589 = vpop.f32.mrf.mxu0
        %v3590 = vadd.f32 %v3446, %v3589
        %v3591 = vpop.f32.mrf.mxu0
        %v3592 = vadd.f32 %v3448, %v3591
        %3593 = vmatmul.bf16.gmra.mxu0 %v2108
        %v3594 = vpop.f32.mrf.mxu0
        %v3595 = vadd.f32 %v3451, %v3594
        %v3596 = vpop.f32.mrf.mxu0
        %v3597 = vadd.f32 %v3453, %v3596
        %3598 = vmatmul.bf16.gmra.mxu0 %v2109
        %v3599 = vpop.f32.mrf.mxu0
        %v3600 = vadd.f32 %v3456, %v3599
        %v3601 = vpop.f32.mrf.mxu0
        %v3602 = vadd.f32 %v3458, %v3601
        %3603 = vmatmul.bf16.gmra.mxu0 %v2110
        %v3604 = vpop.f32.mrf.mxu0
        %v3605 = vadd.f32 %v3461, %v3604
        %v3606 = vpop.f32.mrf.mxu0
        %v3607 = vadd.f32 %v3463, %v3606
        %3608 = vdwg.mxu0
        %3609 = vmatpush.bf16.msra.mxu0 %v2656
        %3610 = vmatpush.bf16.msra.mxu0 %v2655
        %3611 = vmatpush.bf16.msra.mxu0 %v2654
        %3612 = vmatpush.bf16.msra.mxu0 %v2653
        %3613 = vmatpush.bf16.msra.mxu0 %v2652
        %3614 = vmatpush.bf16.msra.mxu0 %v2651
        %3615 = vmatpush.bf16.msra.mxu0 %v2650
        %3616 = vmatpush.bf16.msra.mxu0 %v2649
        %3617 = vmatmul.bf16.gmra.mxu0 %v1700
        %v3618 = vpop.f32.mrf.mxu0
        %v3619 = vadd.f32 %v3475, %v3618
        %v3620 = vpop.f32.mrf.mxu0
        %v3621 = vadd.f32 %v3477, %v3620
        %3622 = vmatmul.bf16.gmra.mxu0 %v1701
        %v3623 = vpop.f32.mrf.mxu0
        %v3624 = vadd.f32 %v3480, %v3623
        %v3625 = vpop.f32.mrf.mxu0
        %v3626 = vadd.f32 %v3482, %v3625
        %3627 = vmatmul.bf16.gmra.mxu0 %v1702
        %v3628 = vpop.f32.mrf.mxu0
        %v3629 = vadd.f32 %v3485, %v3628
        %v3630 = vpop.f32.mrf.mxu0
        %v3631 = vadd.f32 %v3487, %v3630
        %3632 = vmatmul.bf16.gmra.mxu0 %v1703
        %v3633 = vpop.f32.mrf.mxu0
        %v3634 = vadd.f32 %v3490, %v3633
        %v3635 = vpop.f32.mrf.mxu0
        %v3636 = vadd.f32 %v3492, %v3635
        %3637 = vmatmul.bf16.gmra.mxu0 %v1704
        %v3638 = vpop.f32.mrf.mxu0
        %v3639 = vadd.f32 %v3495, %v3638
        %v3640 = vpop.f32.mrf.mxu0
        %v3641 = vadd.f32 %v3497, %v3640
        %3642 = vmatmul.bf16.gmra.mxu0 %v1705
        %v3643 = vpop.f32.mrf.mxu0
        %v3644 = vadd.f32 %v3500, %v3643
        %v3645 = vpop.f32.mrf.mxu0
        %v3646 = vadd.f32 %v3502, %v3645
        %3647 = vmatmul.bf16.gmra.mxu0 %v1706
        %v3648 = vpop.f32.mrf.mxu0
        %v3649 = vadd.f32 %v3505, %v3648
        %v3650 = vpop.f32.mrf.mxu0
        %v3651 = vadd.f32 %v3507, %v3650
        %3652 = vmatmul.bf16.gmra.mxu0 %v1707
        %v3653 = vpop.f32.mrf.mxu0
        %v3654 = vadd.f32 %v3510, %v3653
        %v3655 = vpop.f32.mrf.mxu0
        %v3656 = vadd.f32 %v3512, %v3655
        %3657 = vmatmul.bf16.gmra.mxu0 %v1708
        %v3658 = vpop.f32.mrf.mxu0
        %v3659 = vadd.f32 %v3515, %v3658
        %v3660 = vpop.f32.mrf.mxu0
        %v3661 = vadd.f32 %v3517, %v3660
        %3662 = vmatmul.bf16.gmra.mxu0 %v1709
        %v3663 = vpop.f32.mrf.mxu0
        %v3664 = vadd.f32 %v3520, %v3663
        %v3665 = vpop.f32.mrf.mxu0
        %v3666 = vadd.f32 %v3522, %v3665
        %3667 = vmatmul.bf16.gmra.mxu0 %v1710
        %v3668 = vpop.f32.mrf.mxu0
        %v3669 = vadd.f32 %v3525, %v3668
        %v3670 = vpop.f32.mrf.mxu0
        %v3671 = vadd.f32 %v3527, %v3670
        %3672 = vmatmul.bf16.gmra.mxu0 %v1711
        %v3673 = vpop.f32.mrf.mxu0
        %v3674 = vadd.f32 %v3530, %v3673
        %v3675 = vpop.f32.mrf.mxu0
        %v3676 = vadd.f32 %v3532, %v3675
        %3677 = vmatmul.bf16.gmra.mxu0 %v1712
        %v3678 = vpop.f32.mrf.mxu0
        %v3679 = vadd.f32 %v3535, %v3678
        %v3680 = vpop.f32.mrf.mxu0
        %v3681 = vadd.f32 %v3537, %v3680
        %3682 = vmatmul.bf16.gmra.mxu0 %v1713
        %v3683 = vpop.f32.mrf.mxu0
        %v3684 = vadd.f32 %v3540, %v3683
        %v3685 = vpop.f32.mrf.mxu0
        %v3686 = vadd.f32 %v3542, %v3685
        %3687 = vmatmul.bf16.gmra.mxu0 %v1714
        %v3688 = vpop.f32.mrf.mxu0
        %v3689 = vadd.f32 %v3545, %v3688
        %v3690 = vpop.f32.mrf.mxu0
        %v3691 = vadd.f32 %v3547, %v3690
        %3692 = vmatmul.bf16.gmra.mxu0 %v1715
        %v3693 = vpop.f32.mrf.mxu0
        %v3694 = vadd.f32 %v3550, %v3693
        %v3695 = vpop.f32.mrf.mxu0
        %v3696 = vadd.f32 %v3552, %v3695
        %3697 = vmatmul.bf16.gmra.mxu0 %v1716
        %v3698 = vpop.f32.mrf.mxu0
        %v3699 = vadd.f32 %v3555, %v3698
        %v3700 = vpop.f32.mrf.mxu0
        %v3701 = vadd.f32 %v3557, %v3700
        %3702 = vmatmul.bf16.gmra.mxu0 %v1717
        %v3703 = vpop.f32.mrf.mxu0
        %v3704 = vadd.f32 %v3560, %v3703
        %v3705 = vpop.f32.mrf.mxu0
        %v3706 = vadd.f32 %v3562, %v3705
        %3707 = vmatmul.bf16.gmra.mxu0 %v1718
        %v3708 = vpop.f32.mrf.mxu0
        %v3709 = vadd.f32 %v3565, %v3708
        %v3710 = vpop.f32.mrf.mxu0
        %v3711 = vadd.f32 %v3567, %v3710
        %3712 = vmatmul.bf16.gmra.mxu0 %v1719
        %v3713 = vpop.f32.mrf.mxu0
        %v3714 = vadd.f32 %v3570, %v3713
        %v3715 = vpop.f32.mrf.mxu0
        %v3716 = vadd.f32 %v3572, %v3715
        %3717 = vmatmul.bf16.gmra.mxu0 %v1720
        %v3718 = vpop.f32.mrf.mxu0
        %v3719 = vadd.f32 %v3575, %v3718
        %v3720 = vpop.f32.mrf.mxu0
        %v3721 = vadd.f32 %v3577, %v3720
        %3722 = vmatmul.bf16.gmra.mxu0 %v1721
        %v3723 = vpop.f32.mrf.mxu0
        %v3724 = vadd.f32 %v3580, %v3723
        %v3725 = vpop.f32.mrf.mxu0
        %v3726 = vadd.f32 %v3582, %v3725
        %3727 = vmatmul.bf16.gmra.mxu0 %v1722
        %v3728 = vpop.f32.mrf.mxu0
        %v3729 = vadd.f32 %v3585, %v3728
        %v3730 = vpop.f32.mrf.mxu0
        %v3731 = vadd.f32 %v3587, %v3730
        %3732 = vmatmul.bf16.gmra.mxu0 %v1723
        %v3733 = vpop.f32.mrf.mxu0
        %v3734 = vadd.f32 %v3590, %v3733
        %v3735 = vpop.f32.mrf.mxu0
        %v3736 = vadd.f32 %v3592, %v3735
        %3737 = vmatmul.bf16.gmra.mxu0 %v2141
        %v3738 = vpop.f32.mrf.mxu0
        %v3739 = vadd.f32 %v3595, %v3738
        %v3740 = vpop.f32.mrf.mxu0
        %v3741 = vadd.f32 %v3597, %v3740
        %3742 = vmatmul.bf16.gmra.mxu0 %v2142
        %v3743 = vpop.f32.mrf.mxu0
        %v3744 = vadd.f32 %v3600, %v3743
        %v3745 = vpop.f32.mrf.mxu0
        %v3746 = vadd.f32 %v3602, %v3745
        %3747 = vmatmul.bf16.gmra.mxu0 %v2143
        %v3748 = vpop.f32.mrf.mxu0
        %v3749 = vadd.f32 %v3605, %v3748
        %v3750 = vpop.f32.mrf.mxu0
        %v3751 = vadd.f32 %v3607, %v3750
        %3752 = vdwg.mxu0
        %3753 = vmatpush.bf16.msra.mxu0 %v2664
        %3754 = vmatpush.bf16.msra.mxu0 %v2663
        %3755 = vmatpush.bf16.msra.mxu0 %v2662
        %3756 = vmatpush.bf16.msra.mxu0 %v2661
        %3757 = vmatpush.bf16.msra.mxu0 %v2660
        %3758 = vmatpush.bf16.msra.mxu0 %v2659
        %3759 = vmatpush.bf16.msra.mxu0 %v2658
        %3760 = vmatpush.bf16.msra.mxu0 %v2657
        %3761 = vmatmul.bf16.gmra.mxu0 %v1808
        %v3762 = vpop.f32.mrf.mxu0
        %v3763 = vadd.f32 %v3619, %v3762
        %v3764 = vpop.f32.mrf.mxu0
        %v3765 = vadd.f32 %v3621, %v3764
        %3766 = vmatmul.bf16.gmra.mxu0 %v1809
        %v3767 = vpop.f32.mrf.mxu0
        %v3768 = vadd.f32 %v3624, %v3767
        %v3769 = vpop.f32.mrf.mxu0
        %v3770 = vadd.f32 %v3626, %v3769
        %3771 = vmatmul.bf16.gmra.mxu0 %v1810
        %v3772 = vpop.f32.mrf.mxu0
        %v3773 = vadd.f32 %v3629, %v3772
        %v3774 = vpop.f32.mrf.mxu0
        %v3775 = vadd.f32 %v3631, %v3774
        %3776 = vmatmul.bf16.gmra.mxu0 %v1811
        %v3777 = vpop.f32.mrf.mxu0
        %v3778 = vadd.f32 %v3634, %v3777
        %v3779 = vpop.f32.mrf.mxu0
        %v3780 = vadd.f32 %v3636, %v3779
        %3781 = vmatmul.bf16.gmra.mxu0 %v1812
        %v3782 = vpop.f32.mrf.mxu0
        %v3783 = vadd.f32 %v3639, %v3782
        %v3784 = vpop.f32.mrf.mxu0
        %v3785 = vadd.f32 %v3641, %v3784
        %3786 = vmatmul.bf16.gmra.mxu0 %v1813
        %v3787 = vpop.f32.mrf.mxu0
        %v3788 = vadd.f32 %v3644, %v3787
        %v3789 = vpop.f32.mrf.mxu0
        %v3790 = vadd.f32 %v3646, %v3789
        %3791 = vmatmul.bf16.gmra.mxu0 %v1814
        %v3792 = vpop.f32.mrf.mxu0
        %v3793 = vadd.f32 %v3649, %v3792
        %v3794 = vpop.f32.mrf.mxu0
        %v3795 = vadd.f32 %v3651, %v3794
        %3796 = vmatmul.bf16.gmra.mxu0 %v1815
        %v3797 = vpop.f32.mrf.mxu0
        %v3798 = vadd.f32 %v3654, %v3797
        %v3799 = vpop.f32.mrf.mxu0
        %v3800 = vadd.f32 %v3656, %v3799
        %3801 = vmatmul.bf16.gmra.mxu0 %v1816
        %v3802 = vpop.f32.mrf.mxu0
        %v3803 = vadd.f32 %v3659, %v3802
        %v3804 = vpop.f32.mrf.mxu0
        %v3805 = vadd.f32 %v3661, %v3804
        %3806 = vmatmul.bf16.gmra.mxu0 %v1817
        %v3807 = vpop.f32.mrf.mxu0
        %v3808 = vadd.f32 %v3664, %v3807
        %v3809 = vpop.f32.mrf.mxu0
        %v3810 = vadd.f32 %v3666, %v3809
        %3811 = vmatmul.bf16.gmra.mxu0 %v1818
        %v3812 = vpop.f32.mrf.mxu0
        %v3813 = vadd.f32 %v3669, %v3812
        %v3814 = vpop.f32.mrf.mxu0
        %v3815 = vadd.f32 %v3671, %v3814
        %3816 = vmatmul.bf16.gmra.mxu0 %v1819
        %v3817 = vpop.f32.mrf.mxu0
        %v3818 = vadd.f32 %v3674, %v3817
        %v3819 = vpop.f32.mrf.mxu0
        %v3820 = vadd.f32 %v3676, %v3819
        %3821 = vmatmul.bf16.gmra.mxu0 %v1820
        %v3822 = vpop.f32.mrf.mxu0
        %v3823 = vadd.f32 %v3679, %v3822
        %v3824 = vpop.f32.mrf.mxu0
        %v3825 = vadd.f32 %v3681, %v3824
        %3826 = vmatmul.bf16.gmra.mxu0 %v1821
        %v3827 = vpop.f32.mrf.mxu0
        %v3828 = vadd.f32 %v3684, %v3827
        %v3829 = vpop.f32.mrf.mxu0
        %v3830 = vadd.f32 %v3686, %v3829
        %3831 = vmatmul.bf16.gmra.mxu0 %v1822
        %v3832 = vpop.f32.mrf.mxu0
        %v3833 = vadd.f32 %v3689, %v3832
        %v3834 = vpop.f32.mrf.mxu0
        %v3835 = vadd.f32 %v3691, %v3834
        %3836 = vmatmul.bf16.gmra.mxu0 %v1823
        %v3837 = vpop.f32.mrf.mxu0
        %v3838 = vadd.f32 %v3694, %v3837
        %v3839 = vpop.f32.mrf.mxu0
        %v3840 = vadd.f32 %v3696, %v3839
        %3841 = vmatmul.bf16.gmra.mxu0 %v1824
        %v3842 = vpop.f32.mrf.mxu0
        %v3843 = vadd.f32 %v3699, %v3842
        %v3844 = vpop.f32.mrf.mxu0
        %v3845 = vadd.f32 %v3701, %v3844
        %3846 = vmatmul.bf16.gmra.mxu0 %v1825
        %v3847 = vpop.f32.mrf.mxu0
        %v3848 = vadd.f32 %v3704, %v3847
        %v3849 = vpop.f32.mrf.mxu0
        %v3850 = vadd.f32 %v3706, %v3849
        %3851 = vmatmul.bf16.gmra.mxu0 %v1826
        %v3852 = vpop.f32.mrf.mxu0
        %v3853 = vadd.f32 %v3709, %v3852
        %v3854 = vpop.f32.mrf.mxu0
        %v3855 = vadd.f32 %v3711, %v3854
        %3856 = vmatmul.bf16.gmra.mxu0 %v1827
        %v3857 = vpop.f32.mrf.mxu0
        %v3858 = vadd.f32 %v3714, %v3857
        %v3859 = vpop.f32.mrf.mxu0
        %v3860 = vadd.f32 %v3716, %v3859
        %3861 = vmatmul.bf16.gmra.mxu0 %v1828
        %v3862 = vpop.f32.mrf.mxu0
        %v3863 = vadd.f32 %v3719, %v3862
        %v3864 = vpop.f32.mrf.mxu0
        %v3865 = vadd.f32 %v3721, %v3864
        %3866 = vmatmul.bf16.gmra.mxu0 %v1829
        %v3867 = vpop.f32.mrf.mxu0
        %v3868 = vadd.f32 %v3724, %v3867
        %v3869 = vpop.f32.mrf.mxu0
        %v3870 = vadd.f32 %v3726, %v3869
        %3871 = vmatmul.bf16.gmra.mxu0 %v1830
        %v3872 = vpop.f32.mrf.mxu0
        %v3873 = vadd.f32 %v3729, %v3872
        %v3874 = vpop.f32.mrf.mxu0
        %v3875 = vadd.f32 %v3731, %v3874
        %3876 = vmatmul.bf16.gmra.mxu0 %v1831
        %v3877 = vpop.f32.mrf.mxu0
        %v3878 = vadd.f32 %v3734, %v3877
        %v3879 = vpop.f32.mrf.mxu0
        %v3880 = vadd.f32 %v3736, %v3879
        %3881 = vmatmul.bf16.gmra.mxu0 %v2150
        %v3882 = vpop.f32.mrf.mxu0
        %v3883 = vadd.f32 %v3739, %v3882
        %v3884 = vpop.f32.mrf.mxu0
        %v3885 = vadd.f32 %v3741, %v3884
        %3886 = vmatmul.bf16.gmra.mxu0 %v2151
        %v3887 = vpop.f32.mrf.mxu0
        %v3888 = vadd.f32 %v3744, %v3887
        %v3889 = vpop.f32.mrf.mxu0
        %v3890 = vadd.f32 %v3746, %v3889
        %3891 = vmatmul.bf16.gmra.mxu0 %v2152
        %v3892 = vpop.f32.mrf.mxu0
        %v3893 = vadd.f32 %v3749, %v3892
        %v3894 = vpop.f32.mrf.mxu0
        %v3895 = vadd.f32 %v3751, %v3894
        %3896 = vdwg.mxu0
        %3897 = vmatpush.bf16.msra.mxu0 %v2672
        %3898 = vmatpush.bf16.msra.mxu0 %v2671
        %3899 = vmatpush.bf16.msra.mxu0 %v2670
        %3900 = vmatpush.bf16.msra.mxu0 %v2669
        %3901 = vmatpush.bf16.msra.mxu0 %v2668
        %3902 = vmatpush.bf16.msra.mxu0 %v2667
        %3903 = vmatpush.bf16.msra.mxu0 %v2666
        %3904 = vmatpush.bf16.msra.mxu0 %v2665
        %3905 = vmatmul.bf16.gmra.mxu0 %v1916
        %v3906 = vpop.f32.mrf.mxu0
        %v3907 = vadd.f32 %v3763, %v3906
        %v3908 = vpop.f32.mrf.mxu0
        %v3909 = vadd.f32 %v3765, %v3908
        %3910 = vmatmul.bf16.gmra.mxu0 %v1917
        %v3911 = vpop.f32.mrf.mxu0
        %v3912 = vadd.f32 %v3768, %v3911
        %v3913 = vpop.f32.mrf.mxu0
        %v3914 = vadd.f32 %v3770, %v3913
        %3915 = vmatmul.bf16.gmra.mxu0 %v1918
        %v3916 = vpop.f32.mrf.mxu0
        %v3917 = vadd.f32 %v3773, %v3916
        %v3918 = vpop.f32.mrf.mxu0
        %v3919 = vadd.f32 %v3775, %v3918
        %3920 = vmatmul.bf16.gmra.mxu0 %v1919
        %v3921 = vpop.f32.mrf.mxu0
        %v3922 = vadd.f32 %v3778, %v3921
        %v3923 = vpop.f32.mrf.mxu0
        %v3924 = vadd.f32 %v3780, %v3923
        %3925 = vmatmul.bf16.gmra.mxu0 %v1920
        %v3926 = vpop.f32.mrf.mxu0
        %v3927 = vadd.f32 %v3783, %v3926
        %v3928 = vpop.f32.mrf.mxu0
        %v3929 = vadd.f32 %v3785, %v3928
        %3930 = vmatmul.bf16.gmra.mxu0 %v1921
        %v3931 = vpop.f32.mrf.mxu0
        %v3932 = vadd.f32 %v3788, %v3931
        %v3933 = vpop.f32.mrf.mxu0
        %v3934 = vadd.f32 %v3790, %v3933
        %3935 = vmatmul.bf16.gmra.mxu0 %v1922
        %v3936 = vpop.f32.mrf.mxu0
        %v3937 = vadd.f32 %v3793, %v3936
        %v3938 = vpop.f32.mrf.mxu0
        %v3939 = vadd.f32 %v3795, %v3938
        %3940 = vmatmul.bf16.gmra.mxu0 %v1923
        %v3941 = vpop.f32.mrf.mxu0
        %v3942 = vadd.f32 %v3798, %v3941
        %v3943 = vpop.f32.mrf.mxu0
        %v3944 = vadd.f32 %v3800, %v3943
        %3945 = vmatmul.bf16.gmra.mxu0 %v1924
        %v3946 = vpop.f32.mrf.mxu0
        %v3947 = vadd.f32 %v3803, %v3946
        %v3948 = vpop.f32.mrf.mxu0
        %v3949 = vadd.f32 %v3805, %v3948
        %3950 = vmatmul.bf16.gmra.mxu0 %v1925
        %v3951 = vpop.f32.mrf.mxu0
        %v3952 = vadd.f32 %v3808, %v3951
        %v3953 = vpop.f32.mrf.mxu0
        %v3954 = vadd.f32 %v3810, %v3953
        %3955 = vmatmul.bf16.gmra.mxu0 %v1926
        %v3956 = vpop.f32.mrf.mxu0
        %v3957 = vadd.f32 %v3813, %v3956
        %v3958 = vpop.f32.mrf.mxu0
        %v3959 = vadd.f32 %v3815, %v3958
        %3960 = vmatmul.bf16.gmra.mxu0 %v1927
        %v3961 = vpop.f32.mrf.mxu0
        %v3962 = vadd.f32 %v3818, %v3961
        %v3963 = vpop.f32.mrf.mxu0
        %v3964 = vadd.f32 %v3820, %v3963
        %3965 = vmatmul.bf16.gmra.mxu0 %v1928
        %v3966 = vpop.f32.mrf.mxu0
        %v3967 = vadd.f32 %v3823, %v3966
        %v3968 = vpop.f32.mrf.mxu0
        %v3969 = vadd.f32 %v3825, %v3968
        %3970 = vmatmul.bf16.gmra.mxu0 %v1929
        %v3971 = vpop.f32.mrf.mxu0
        %v3972 = vadd.f32 %v3828, %v3971
        %v3973 = vpop.f32.mrf.mxu0
        %v3974 = vadd.f32 %v3830, %v3973
        %3975 = vmatmul.bf16.gmra.mxu0 %v1930
        %v3976 = vpop.f32.mrf.mxu0
        %v3977 = vadd.f32 %v3833, %v3976
        %v3978 = vpop.f32.mrf.mxu0
        %v3979 = vadd.f32 %v3835, %v3978
        %3980 = vmatmul.bf16.gmra.mxu0 %v1931
        %v3981 = vpop.f32.mrf.mxu0
        %v3982 = vadd.f32 %v3838, %v3981
        %v3983 = vpop.f32.mrf.mxu0
        %v3984 = vadd.f32 %v3840, %v3983
        %3985 = vmatmul.bf16.gmra.mxu0 %v1932
        %v3986 = vpop.f32.mrf.mxu0
        %v3987 = vadd.f32 %v3843, %v3986
        %v3988 = vpop.f32.mrf.mxu0
        %v3989 = vadd.f32 %v3845, %v3988
        %3990 = vmatmul.bf16.gmra.mxu0 %v1933
        %v3991 = vpop.f32.mrf.mxu0
        %v3992 = vadd.f32 %v3848, %v3991
        %v3993 = vpop.f32.mrf.mxu0
        %v3994 = vadd.f32 %v3850, %v3993
        %3995 = vmatmul.bf16.gmra.mxu0 %v1934
        %v3996 = vpop.f32.mrf.mxu0
        %v3997 = vadd.f32 %v3853, %v3996
        %v3998 = vpop.f32.mrf.mxu0
        %v3999 = vadd.f32 %v3855, %v3998
        %4000 = vmatmul.bf16.gmra.mxu0 %v1935
        %v4001 = vpop.f32.mrf.mxu0
        %v4002 = vadd.f32 %v3858, %v4001
        %v4003 = vpop.f32.mrf.mxu0
        %v4004 = vadd.f32 %v3860, %v4003
        %4005 = vmatmul.bf16.gmra.mxu0 %v1936
        %v4006 = vpop.f32.mrf.mxu0
        %v4007 = vadd.f32 %v3863, %v4006
        %v4008 = vpop.f32.mrf.mxu0
        %v4009 = vadd.f32 %v3865, %v4008
        %4010 = vmatmul.bf16.gmra.mxu0 %v1937
        %v4011 = vpop.f32.mrf.mxu0
        %v4012 = vadd.f32 %v3868, %v4011
        %v4013 = vpop.f32.mrf.mxu0
        %v4014 = vadd.f32 %v3870, %v4013
        %4015 = vmatmul.bf16.gmra.mxu0 %v1938
        %v4016 = vpop.f32.mrf.mxu0
        %v4017 = vadd.f32 %v3873, %v4016
        %v4018 = vpop.f32.mrf.mxu0
        %v4019 = vadd.f32 %v3875, %v4018
        %4020 = vmatmul.bf16.gmra.mxu0 %v1939
        %v4021 = vpop.f32.mrf.mxu0
        %v4022 = vadd.f32 %v3878, %v4021
        %v4023 = vpop.f32.mrf.mxu0
        %v4024 = vadd.f32 %v3880, %v4023
        %4025 = vmatmul.bf16.gmra.mxu0 %v2159
        %v4026 = vpop.f32.mrf.mxu0
        %v4027 = vadd.f32 %v3883, %v4026
        %v4028 = vpop.f32.mrf.mxu0
        %v4029 = vadd.f32 %v3885, %v4028
        %4030 = vmatmul.bf16.gmra.mxu0 %v2160
        %v4031 = vpop.f32.mrf.mxu0
        %v4032 = vadd.f32 %v3888, %v4031
        %v4033 = vpop.f32.mrf.mxu0
        %v4034 = vadd.f32 %v3890, %v4033
        %4035 = vmatmul.bf16.gmra.mxu0 %v2161
        %v4036 = vpop.f32.mrf.mxu0
        %v4037 = vadd.f32 %v3893, %v4036
        %v4038 = vpop.f32.mrf.mxu0
        %v4039 = vadd.f32 %v3895, %v4038
        %4040 = vdwg.mxu0
        %v4041 = vmax.f32 %v3907, 0.0
        %v4042 = vmax.f32 %v3909, 0.0
        %v4043 = vmax.f32 %v3912, 0.0
        %v4044 = vmax.f32 %v3914, 0.0
        %v4045 = vmax.f32 %v3917, 0.0
        %v4046 = vmax.f32 %v3919, 0.0
        %v4047 = vmax.f32 %v3922, 0.0
        %v4048 = vmax.f32 %v3924, 0.0
        %v4049 = vmax.f32 %v3927, 0.0
        %v4050 = vmax.f32 %v3929, 0.0
        %v4051 = vmax.f32 %v3932, 0.0
        %v4052 = vmax.f32 %v3934, 0.0
        %v4053 = vmax.f32 %v3937, 0.0
        %v4054 = vmax.f32 %v3939, 0.0
        %v4055 = vmax.f32 %v3942, 0.0
        %v4056 = vmax.f32 %v3944, 0.0
        %v4057 = vmax.f32 %v3947, 0.0
        %v4058 = vmax.f32 %v3949, 0.0
        %v4059 = vmax.f32 %v3952, 0.0
        %v4060 = vmax.f32 %v3954, 0.0
        %v4061 = vmax.f32 %v3957, 0.0
        %v4062 = vmax.f32 %v3959, 0.0
        %v4063 = vmax.f32 %v3962, 0.0
        %v4064 = vmax.f32 %v3964, 0.0
        %v4065 = vmax.f32 %v3967, 0.0
        %v4066 = vmax.f32 %v3969, 0.0
        %v4067 = vmax.f32 %v3972, 0.0
        %v4068 = vmax.f32 %v3974, 0.0
        %v4069 = vmax.f32 %v3977, 0.0
        %v4070 = vmax.f32 %v3979, 0.0
        %v4071 = vmax.f32 %v3982, 0.0
        %v4072 = vmax.f32 %v3984, 0.0
        %v4073 = vmax.f32 %v3987, 0.0
        %v4074 = vmax.f32 %v3989, 0.0
        %v4075 = vmax.f32 %v3992, 0.0
        %v4076 = vmax.f32 %v3994, 0.0
        %v4077 = vmax.f32 %v3997, 0.0
        %v4078 = vmax.f32 %v3999, 0.0
        %v4079 = vmax.f32 %v4002, 0.0
        %v4080 = vmax.f32 %v4004, 0.0
        %v4081 = vmax.f32 %v4007, 0.0
        %v4082 = vmax.f32 %v4009, 0.0
        %v4083 = vmax.f32 %v4012, 0.0
        %v4084 = vmax.f32 %v4014, 0.0
        %v4085 = vmax.f32 %v4017, 0.0
        %v4086 = vmax.f32 %v4019, 0.0
        %v4087 = vmax.f32 %v4022, 0.0
        %v4088 = vmax.f32 %v4024, 0.0
        %v4089 = vmax.f32 %v4027, 0.0
        %v4090 = vmax.f32 %v4029, 0.0
        %v4091 = vmax.f32 %v4032, 0.0
        %v4092 = vmax.f32 %v4034, 0.0
        %v4093 = vmax.f32 %v4037, 0.0
        %v4094 = vmax.f32 %v4039, 0.0
        %v4095 = vlaneseq
        %v4096 = vshrl.u32 %v4095, 7
        %v4097 = vadd.s32 %v4096, 8
        %v4098 = vadd.s32 %v4096, 16
        %vm4099 = vcmp.ge.s32.totalorder %v4096, 1
        %vm4100 = vcmp.ge.s32.totalorder %v4097, 1
        %vm4101 = vcmp.ge.s32.totalorder %v4098, 1
        %vm4102 = vmand 0, %vm4099
        %vm4103 = vmand 0, %vm4100
        %vm4104 = vmand 0, %vm4101
        %vm4105 = vmand 1, %vm4099
        %vm4106 = vmand 1, %vm4100
        %vm4107 = vmand 1, %vm4101
        %vm4108 = vcmp.le.s32.totalorder %v4096, 16
        %vm4109 = vcmp.le.s32.totalorder %v4097, 16
        %vm4110 = vcmp.le.s32.totalorder %v4098, 16
        %vm4111 = vmand %vm4102, %vm4108
        %vm4112 = vmand %vm4103, %vm4109
        %vm4113 = vmand %vm4104, %vm4110
        %vm4114 = vmand %vm4105, %vm4108
        %vm4115 = vmand %vm4106, %vm4109
        %vm4116 = vmand %vm4107, %vm4110
        %v4117 = vsel %vm4111, 1, 0
        %v4118 = vsel %vm4112, 1, 0
        %v4119 = vsel %vm4113, 1, 0
        %v4120 = vsel %vm4114, 1, 0
        %v4121 = vsel %vm4115, 1, 0
        %v4122 = vsel %vm4116, 1, 0
        %vm4123 = vcmp.eq.s32.totalorder %v4117, 1
        %vm4124 = vcmp.eq.s32.totalorder %v4118, 1
        %vm4125 = vcmp.eq.s32.totalorder %v4119, 1
        %vm4126 = vcmp.eq.s32.totalorder %v4120, 1
        %vm4127 = vcmp.eq.s32.totalorder %v4121, 1
        %vm4128 = vcmp.eq.s32.totalorder %v4122, 1
        %v4129 = vsel %vm4123, %v4041, 0.0
        %v4130 = vsel %vm4124, %v4042, 0.0
        %v4131 = vsel %vm4125, %v4043, 0.0
        %v4132 = vsel %vm4126, %v4044, 0.0
        %v4133 = vsel %vm4127, %v4045, 0.0
        %v4134 = vsel %vm4128, %v4046, 0.0
        %v4135 = vsel %vm4126, %v4047, 0.0
        %v4136 = vsel %vm4127, %v4048, 0.0
        %v4137 = vsel %vm4128, %v4049, 0.0
        %v4138 = vsel %vm4126, %v4050, 0.0
        %v4139 = vsel %vm4127, %v4051, 0.0
        %v4140 = vsel %vm4128, %v4052, 0.0
        %v4141 = vsel %vm4126, %v4053, 0.0
        %v4142 = vsel %vm4127, %v4054, 0.0
        %v4143 = vsel %vm4128, %v4055, 0.0
        %v4144 = vsel %vm4126, %v4056, 0.0
        %v4145 = vsel %vm4127, %v4057, 0.0
        %v4146 = vsel %vm4128, %v4058, 0.0
        %v4147 = vsel %vm4126, %v4059, 0.0
        %v4148 = vsel %vm4127, %v4060, 0.0
        %v4149 = vsel %vm4128, %v4061, 0.0
        %v4150 = vsel %vm4126, %v4062, 0.0
        %v4151 = vsel %vm4127, %v4063, 0.0
        %v4152 = vsel %vm4128, %v4064, 0.0
        %v4153 = vsel %vm4126, %v4065, 0.0
        %v4154 = vsel %vm4127, %v4066, 0.0
        %v4155 = vsel %vm4128, %v4067, 0.0
        %v4156 = vsel %vm4126, %v4068, 0.0
        %v4157 = vsel %vm4127, %v4069, 0.0
        %v4158 = vsel %vm4128, %v4070, 0.0
        %v4159 = vsel %vm4126, %v4071, 0.0
        %v4160 = vsel %vm4127, %v4072, 0.0
        %v4161 = vsel %vm4128, %v4073, 0.0
        %v4162 = vsel %vm4126, %v4074, 0.0
        %v4163 = vsel %vm4127, %v4075, 0.0
        %v4164 = vsel %vm4128, %v4076, 0.0
        %v4165 = vsel %vm4126, %v4077, 0.0
        %v4166 = vsel %vm4127, %v4078, 0.0
        %v4167 = vsel %vm4128, %v4079, 0.0
        %v4168 = vsel %vm4126, %v4080, 0.0
        %v4169 = vsel %vm4127, %v4081, 0.0
        %v4170 = vsel %vm4128, %v4082, 0.0
        %v4171 = vsel %vm4126, %v4083, 0.0
        %v4172 = vsel %vm4127, %v4084, 0.0
        %v4173 = vsel %vm4128, %v4085, 0.0
        %v4174 = vsel %vm4126, %v4086, 0.0
        %v4175 = vsel %vm4127, %v4087, 0.0
        %v4176 = vsel %vm4128, %v4088, 0.0
        %v4177 = vsel %vm4126, %v4089, 0.0
        %v4178 = vsel %vm4127, %v4090, 0.0
        %v4179 = vsel %vm4128, %v4091, 0.0
        %v4180 = vsel %vm4123, %v4092, 0.0
        %v4181 = vsel %vm4124, %v4093, 0.0
        %v4182 = vsel %vm4125, %v4094, 0.0
        %v4183 = vpack.c.bf16 %v4129, %v4129
        %v4184 = vpack.c.bf16 %v4130, %v4130
        %v4185 = vpack.c.bf16 %v4131, %v4131
        %v4186 = vpack.c.bf16 %v4132, %v4132
        %v4187 = vpack.c.bf16 %v4133, %v4133
        %v4188 = vpack.c.bf16 %v4134, %v4134
        %v4189 = vpack.c.bf16 %v4135, %v4135
        %v4190 = vpack.c.bf16 %v4136, %v4136
        %v4191 = vpack.c.bf16 %v4137, %v4137
        %v4192 = vpack.c.bf16 %v4138, %v4138
        %v4193 = vpack.c.bf16 %v4139, %v4139
        %v4194 = vpack.c.bf16 %v4140, %v4140
        %v4195 = vpack.c.bf16 %v4141, %v4141
        %v4196 = vpack.c.bf16 %v4142, %v4142
        %v4197 = vpack.c.bf16 %v4143, %v4143
        %v4198 = vpack.c.bf16 %v4144, %v4144
        %v4199 = vpack.c.bf16 %v4145, %v4145
        %v4200 = vpack.c.bf16 %v4146, %v4146
        %v4201 = vpack.c.bf16 %v4147, %v4147
        %v4202 = vpack.c.bf16 %v4148, %v4148
        %v4203 = vpack.c.bf16 %v4149, %v4149
        %v4204 = vpack.c.bf16 %v4150, %v4150
        %v4205 = vpack.c.bf16 %v4151, %v4151
        %v4206 = vpack.c.bf16 %v4152, %v4152
        %v4207 = vpack.c.bf16 %v4153, %v4153
        %v4208 = vpack.c.bf16 %v4154, %v4154
        %v4209 = vpack.c.bf16 %v4155, %v4155
        %v4210 = vpack.c.bf16 %v4156, %v4156
        %v4211 = vpack.c.bf16 %v4157, %v4157
        %v4212 = vpack.c.bf16 %v4158, %v4158
        %v4213 = vpack.c.bf16 %v4159, %v4159
        %v4214 = vpack.c.bf16 %v4160, %v4160
        %v4215 = vpack.c.bf16 %v4161, %v4161
        %v4216 = vpack.c.bf16 %v4162, %v4162
        %v4217 = vpack.c.bf16 %v4163, %v4163
        %v4218 = vpack.c.bf16 %v4164, %v4164
        %v4219 = vpack.c.bf16 %v4165, %v4165
        %v4220 = vpack.c.bf16 %v4166, %v4166
        %v4221 = vpack.c.bf16 %v4167, %v4167
        %v4222 = vpack.c.bf16 %v4168, %v4168
        %v4223 = vpack.c.bf16 %v4169, %v4169
        %v4224 = vpack.c.bf16 %v4170, %v4170
        %v4225 = vpack.c.bf16 %v4171, %v4171
        %v4226 = vpack.c.bf16 %v4172, %v4172
        %v4227 = vpack.c.bf16 %v4173, %v4173
        %v4228 = vpack.c.bf16 %v4174, %v4174
        %v4229 = vpack.c.bf16 %v4175, %v4175
        %v4230 = vpack.c.bf16 %v4176, %v4176
        %v4231 = vpack.c.bf16 %v4177, %v4177
        %v4232 = vpack.c.bf16 %v4178, %v4178
        %v4233 = vpack.c.bf16 %v4179, %v4179
        %v4234 = vpack.c.bf16 %v4180, %v4180
        %v4235 = vpack.c.bf16 %v4181, %v4181
        %v4236 = vpack.c.bf16 %v4182, %v4182
        %v4238 = vshrl.u32 %v4183, 16
        %v4240 = vrot.slane %v4238, 4
        %v4241 = vshll.u32 %v4183, 16
        %v4243 = vrot.slane %v4241, 5
        %v4244 = vor.u32 %v4240, %v4243
        %v4245 = vrot.slane %v4244, 4
        %v4247 = vshll.u32 %v4184, 16
        %v4249 = vrot.slane %v4247, 5
        %v4250 = vsel %vm679, %v4245, %v4249
        %v4251 = vshrl.u32 %v4184, 16
        %v4253 = vrot.slane %v4251, 4
        %v4254 = vor.u32 %v4253, %v4249
        %v4255 = vrot.slane %v4254, 4
        %v4257 = vshll.u32 %v4185, 16
        %v4259 = vrot.slane %v4257, 5
        %v4260 = vsel %vm679, %v4255, %v4259
        %v4262 = vshrl.u32 %v4186, 16
        %v4264 = vrot.slane %v4262, 4
        %v4265 = vshll.u32 %v4186, 16
        %v4267 = vrot.slane %v4265, 5
        %v4268 = vor.u32 %v4264, %v4267
        %v4269 = vrot.slane %v4268, 4
        %v4271 = vshll.u32 %v4187, 16
        %v4273 = vrot.slane %v4271, 5
        %v4274 = vsel %vm679, %v4269, %v4273
        %v4275 = vshrl.u32 %v4187, 16
        %v4277 = vrot.slane %v4275, 4
        %v4278 = vor.u32 %v4277, %v4273
        %v4279 = vrot.slane %v4278, 4
        %v4281 = vshll.u32 %v4188, 16
        %v4283 = vrot.slane %v4281, 5
        %v4284 = vsel %vm679, %v4279, %v4283
        %v4286 = vshrl.u32 %v4189, 16
        %v4288 = vrot.slane %v4286, 4
        %v4289 = vshll.u32 %v4189, 16
        %v4291 = vrot.slane %v4289, 5
        %v4292 = vor.u32 %v4288, %v4291
        %v4293 = vrot.slane %v4292, 4
        %v4295 = vshll.u32 %v4190, 16
        %v4297 = vrot.slane %v4295, 5
        %v4298 = vsel %vm679, %v4293, %v4297
        %v4299 = vshrl.u32 %v4190, 16
        %v4301 = vrot.slane %v4299, 4
        %v4302 = vor.u32 %v4301, %v4297
        %v4303 = vrot.slane %v4302, 4
        %v4305 = vshll.u32 %v4191, 16
        %v4307 = vrot.slane %v4305, 5
        %v4308 = vsel %vm679, %v4303, %v4307
        %v4310 = vshrl.u32 %v4192, 16
        %v4312 = vrot.slane %v4310, 4
        %v4313 = vshll.u32 %v4192, 16
        %v4315 = vrot.slane %v4313, 5
        %v4316 = vor.u32 %v4312, %v4315
        %v4317 = vrot.slane %v4316, 4
        %v4319 = vshll.u32 %v4193, 16
        %v4321 = vrot.slane %v4319, 5
        %v4322 = vsel %vm679, %v4317, %v4321
        %v4323 = vshrl.u32 %v4193, 16
        %v4325 = vrot.slane %v4323, 4
        %v4326 = vor.u32 %v4325, %v4321
        %v4327 = vrot.slane %v4326, 4
        %v4329 = vshll.u32 %v4194, 16
        %v4331 = vrot.slane %v4329, 5
        %v4332 = vsel %vm679, %v4327, %v4331
        %v4334 = vshrl.u32 %v4195, 16
        %v4336 = vrot.slane %v4334, 4
        %v4337 = vshll.u32 %v4195, 16
        %v4339 = vrot.slane %v4337, 5
        %v4340 = vor.u32 %v4336, %v4339
        %v4341 = vrot.slane %v4340, 4
        %v4343 = vshll.u32 %v4196, 16
        %v4345 = vrot.slane %v4343, 5
        %v4346 = vsel %vm679, %v4341, %v4345
        %v4347 = vshrl.u32 %v4196, 16
        %v4349 = vrot.slane %v4347, 4
        %v4350 = vor.u32 %v4349, %v4345
        %v4351 = vrot.slane %v4350, 4
        %v4353 = vshll.u32 %v4197, 16
        %v4355 = vrot.slane %v4353, 5
        %v4356 = vsel %vm679, %v4351, %v4355
        %v4358 = vshrl.u32 %v4198, 16
        %v4360 = vrot.slane %v4358, 4
        %v4361 = vshll.u32 %v4198, 16
        %v4363 = vrot.slane %v4361, 5
        %v4364 = vor.u32 %v4360, %v4363
        %v4365 = vrot.slane %v4364, 4
        %v4367 = vshll.u32 %v4199, 16
        %v4369 = vrot.slane %v4367, 5
        %v4370 = vsel %vm679, %v4365, %v4369
        %v4371 = vshrl.u32 %v4199, 16
        %v4373 = vrot.slane %v4371, 4
        %v4374 = vor.u32 %v4373, %v4369
        %v4375 = vrot.slane %v4374, 4
        %v4377 = vshll.u32 %v4200, 16
        %v4379 = vrot.slane %v4377, 5
        %v4380 = vsel %vm679, %v4375, %v4379
        %v4382 = vshrl.u32 %v4201, 16
        %v4384 = vrot.slane %v4382, 4
        %v4385 = vshll.u32 %v4201, 16
        %v4387 = vrot.slane %v4385, 5
        %v4388 = vor.u32 %v4384, %v4387
        %v4389 = vrot.slane %v4388, 4
        %v4391 = vshll.u32 %v4202, 16
        %v4393 = vrot.slane %v4391, 5
        %v4394 = vsel %vm679, %v4389, %v4393
        %v4395 = vshrl.u32 %v4202, 16
        %v4397 = vrot.slane %v4395, 4
        %v4398 = vor.u32 %v4397, %v4393
        %v4399 = vrot.slane %v4398, 4
        %v4401 = vshll.u32 %v4203, 16
        %v4403 = vrot.slane %v4401, 5
        %v4404 = vsel %vm679, %v4399, %v4403
        %v4406 = vshrl.u32 %v4204, 16
        %v4408 = vrot.slane %v4406, 4
        %v4409 = vshll.u32 %v4204, 16
        %v4411 = vrot.slane %v4409, 5
        %v4412 = vor.u32 %v4408, %v4411
        %v4413 = vrot.slane %v4412, 4
        %v4415 = vshll.u32 %v4205, 16
        %v4417 = vrot.slane %v4415, 5
        %v4418 = vsel %vm679, %v4413, %v4417
        %v4419 = vshrl.u32 %v4205, 16
        %v4421 = vrot.slane %v4419, 4
        %v4422 = vor.u32 %v4421, %v4417
        %v4423 = vrot.slane %v4422, 4
        %v4425 = vshll.u32 %v4206, 16
        %v4427 = vrot.slane %v4425, 5
        %v4428 = vsel %vm679, %v4423, %v4427
        %v4430 = vshrl.u32 %v4207, 16
        %v4432 = vrot.slane %v4430, 4
        %v4433 = vshll.u32 %v4207, 16
        %v4435 = vrot.slane %v4433, 5
        %v4436 = vor.u32 %v4432, %v4435
        %v4437 = vrot.slane %v4436, 4
        %v4439 = vshll.u32 %v4208, 16
        %v4441 = vrot.slane %v4439, 5
        %v4442 = vsel %vm679, %v4437, %v4441
        %v4443 = vshrl.u32 %v4208, 16
        %v4445 = vrot.slane %v4443, 4
        %v4446 = vor.u32 %v4445, %v4441
        %v4447 = vrot.slane %v4446, 4
        %v4449 = vshll.u32 %v4209, 16
        %v4451 = vrot.slane %v4449, 5
        %v4452 = vsel %vm679, %v4447, %v4451
        %v4454 = vshrl.u32 %v4210, 16
        %v4456 = vrot.slane %v4454, 4
        %v4457 = vshll.u32 %v4210, 16
        %v4459 = vrot.slane %v4457, 5
        %v4460 = vor.u32 %v4456, %v4459
        %v4461 = vrot.slane %v4460, 4
        %v4463 = vshll.u32 %v4211, 16
        %v4465 = vrot.slane %v4463, 5
        %v4466 = vsel %vm679, %v4461, %v4465
        %v4467 = vshrl.u32 %v4211, 16
        %v4469 = vrot.slane %v4467, 4
        %v4470 = vor.u32 %v4469, %v4465
        %v4471 = vrot.slane %v4470, 4
        %v4473 = vshll.u32 %v4212, 16
        %v4475 = vrot.slane %v4473, 5
        %v4476 = vsel %vm679, %v4471, %v4475
        %v4478 = vshrl.u32 %v4213, 16
        %v4480 = vrot.slane %v4478, 4
        %v4481 = vshll.u32 %v4213, 16
        %v4483 = vrot.slane %v4481, 5
        %v4484 = vor.u32 %v4480, %v4483
        %v4485 = vrot.slane %v4484, 4
        %v4487 = vshll.u32 %v4214, 16
        %v4489 = vrot.slane %v4487, 5
        %v4490 = vsel %vm679, %v4485, %v4489
        %v4491 = vshrl.u32 %v4214, 16
        %v4493 = vrot.slane %v4491, 4
        %v4494 = vor.u32 %v4493, %v4489
        %v4495 = vrot.slane %v4494, 4
        %v4497 = vshll.u32 %v4215, 16
        %v4499 = vrot.slane %v4497, 5
        %v4500 = vsel %vm679, %v4495, %v4499
        %v4502 = vshrl.u32 %v4216, 16
        %v4504 = vrot.slane %v4502, 4
        %v4505 = vshll.u32 %v4216, 16
        %v4507 = vrot.slane %v4505, 5
        %v4508 = vor.u32 %v4504, %v4507
        %v4509 = vrot.slane %v4508, 4
        %v4511 = vshll.u32 %v4217, 16
        %v4513 = vrot.slane %v4511, 5
        %v4514 = vsel %vm679, %v4509, %v4513
        %v4515 = vshrl.u32 %v4217, 16
        %v4517 = vrot.slane %v4515, 4
        %v4518 = vor.u32 %v4517, %v4513
        %v4519 = vrot.slane %v4518, 4
        %v4521 = vshll.u32 %v4218, 16
        %v4523 = vrot.slane %v4521, 5
        %v4524 = vsel %vm679, %v4519, %v4523
        %v4526 = vshrl.u32 %v4219, 16
        %v4528 = vrot.slane %v4526, 4
        %v4529 = vshll.u32 %v4219, 16
        %v4531 = vrot.slane %v4529, 5
        %v4532 = vor.u32 %v4528, %v4531
        %v4533 = vrot.slane %v4532, 4
        %v4535 = vshll.u32 %v4220, 16
        %v4537 = vrot.slane %v4535, 5
        %v4538 = vsel %vm679, %v4533, %v4537
        %v4539 = vshrl.u32 %v4220, 16
        %v4541 = vrot.slane %v4539, 4
        %v4542 = vor.u32 %v4541, %v4537
        %v4543 = vrot.slane %v4542, 4
        %v4545 = vshll.u32 %v4221, 16
        %v4547 = vrot.slane %v4545, 5
        %v4548 = vsel %vm679, %v4543, %v4547
        %v4550 = vshrl.u32 %v4222, 16
        %v4552 = vrot.slane %v4550, 4
        %v4553 = vshll.u32 %v4222, 16
        %v4555 = vrot.slane %v4553, 5
        %v4556 = vor.u32 %v4552, %v4555
        %v4557 = vrot.slane %v4556, 4
        %v4559 = vshll.u32 %v4223, 16
        %v4561 = vrot.slane %v4559, 5
        %v4562 = vsel %vm679, %v4557, %v4561
        %v4563 = vshrl.u32 %v4223, 16
        %v4565 = vrot.slane %v4563, 4
        %v4566 = vor.u32 %v4565, %v4561
        %v4567 = vrot.slane %v4566, 4
        %v4569 = vshll.u32 %v4224, 16
        %v4571 = vrot.slane %v4569, 5
        %v4572 = vsel %vm679, %v4567, %v4571
        %v4574 = vshrl.u32 %v4225, 16
        %v4576 = vrot.slane %v4574, 4
        %v4577 = vshll.u32 %v4225, 16
        %v4579 = vrot.slane %v4577, 5
        %v4580 = vor.u32 %v4576, %v4579
        %v4581 = vrot.slane %v4580, 4
        %v4583 = vshll.u32 %v4226, 16
        %v4585 = vrot.slane %v4583, 5
        %v4586 = vsel %vm679, %v4581, %v4585
        %v4587 = vshrl.u32 %v4226, 16
        %v4589 = vrot.slane %v4587, 4
        %v4590 = vor.u32 %v4589, %v4585
        %v4591 = vrot.slane %v4590, 4
        %v4593 = vshll.u32 %v4227, 16
        %v4595 = vrot.slane %v4593, 5
        %v4596 = vsel %vm679, %v4591, %v4595
        %v4598 = vshrl.u32 %v4228, 16
        %v4600 = vrot.slane %v4598, 4
        %v4601 = vshll.u32 %v4228, 16
        %v4603 = vrot.slane %v4601, 5
        %v4604 = vor.u32 %v4600, %v4603
        %v4605 = vrot.slane %v4604, 4
        %v4607 = vshll.u32 %v4229, 16
        %v4609 = vrot.slane %v4607, 5
        %v4610 = vsel %vm679, %v4605, %v4609
        %v4611 = vshrl.u32 %v4229, 16
        %v4613 = vrot.slane %v4611, 4
        %v4614 = vor.u32 %v4613, %v4609
        %v4615 = vrot.slane %v4614, 4
        %v4617 = vshll.u32 %v4230, 16
        %v4619 = vrot.slane %v4617, 5
        %v4620 = vsel %vm679, %v4615, %v4619
        %v4669 = vrot.slane %v4183, 5
        %v4670 = vrot.slane %v4669, 4
        %v4671 = vrot.slane %v4184, 5
        %v4672 = vsel %vm1366, %v4670, %v4671
        %v4673 = vrot.slane %v4671, 4
        %v4674 = vrot.slane %v4185, 5
        %v4675 = vsel %vm1366, %v4673, %v4674
        %v4676 = vrot.slane %v4186, 5
        %v4677 = vrot.slane %v4676, 4
        %v4678 = vrot.slane %v4187, 5
        %v4679 = vsel %vm1366, %v4677, %v4678
        %v4680 = vrot.slane %v4678, 4
        %v4681 = vrot.slane %v4188, 5
        %v4682 = vsel %vm1366, %v4680, %v4681
        %v4683 = vrot.slane %v4189, 5
        %v4684 = vrot.slane %v4683, 4
        %v4685 = vrot.slane %v4190, 5
        %v4686 = vsel %vm1366, %v4684, %v4685
        %v4687 = vrot.slane %v4685, 4
        %v4688 = vrot.slane %v4191, 5
        %v4689 = vsel %vm1366, %v4687, %v4688
        %v4690 = vrot.slane %v4192, 5
        %v4691 = vrot.slane %v4690, 4
        %v4692 = vrot.slane %v4193, 5
        %v4693 = vsel %vm1366, %v4691, %v4692
        %v4694 = vrot.slane %v4692, 4
        %v4695 = vrot.slane %v4194, 5
        %v4696 = vsel %vm1366, %v4694, %v4695
        %v4697 = vrot.slane %v4195, 5
        %v4698 = vrot.slane %v4697, 4
        %v4699 = vrot.slane %v4196, 5
        %v4700 = vsel %vm1366, %v4698, %v4699
        %v4701 = vrot.slane %v4699, 4
        %v4702 = vrot.slane %v4197, 5
        %v4703 = vsel %vm1366, %v4701, %v4702
        %v4704 = vrot.slane %v4198, 5
        %v4705 = vrot.slane %v4704, 4
        %v4706 = vrot.slane %v4199, 5
        %v4707 = vsel %vm1366, %v4705, %v4706
        %v4708 = vrot.slane %v4706, 4
        %v4709 = vrot.slane %v4200, 5
        %v4710 = vsel %vm1366, %v4708, %v4709
        %v4711 = vrot.slane %v4201, 5
        %v4712 = vrot.slane %v4711, 4
        %v4713 = vrot.slane %v4202, 5
        %v4714 = vsel %vm1366, %v4712, %v4713
        %v4715 = vrot.slane %v4713, 4
        %v4716 = vrot.slane %v4203, 5
        %v4717 = vsel %vm1366, %v4715, %v4716
        %v4718 = vrot.slane %v4204, 5
        %v4719 = vrot.slane %v4718, 4
        %v4720 = vrot.slane %v4205, 5
        %v4721 = vsel %vm1366, %v4719, %v4720
        %v4722 = vrot.slane %v4720, 4
        %v4723 = vrot.slane %v4206, 5
        %v4724 = vsel %vm1366, %v4722, %v4723
        %v4725 = vrot.slane %v4207, 5
        %v4726 = vrot.slane %v4725, 4
        %v4727 = vrot.slane %v4208, 5
        %v4728 = vsel %vm1366, %v4726, %v4727
        %v4729 = vrot.slane %v4727, 4
        %v4730 = vrot.slane %v4209, 5
        %v4731 = vsel %vm1366, %v4729, %v4730
        %v4732 = vrot.slane %v4210, 5
        %v4733 = vrot.slane %v4732, 4
        %v4734 = vrot.slane %v4211, 5
        %v4735 = vsel %vm1366, %v4733, %v4734
        %v4736 = vrot.slane %v4734, 4
        %v4737 = vrot.slane %v4212, 5
        %v4738 = vsel %vm1366, %v4736, %v4737
        %v4739 = vrot.slane %v4213, 5
        %v4740 = vrot.slane %v4739, 4
        %v4741 = vrot.slane %v4214, 5
        %v4742 = vsel %vm1366, %v4740, %v4741
        %v4743 = vrot.slane %v4741, 4
        %v4744 = vrot.slane %v4215, 5
        %v4745 = vsel %vm1366, %v4743, %v4744
        %v4746 = vrot.slane %v4216, 5
        %v4747 = vrot.slane %v4746, 4
        %v4748 = vrot.slane %v4217, 5
        %v4749 = vsel %vm1366, %v4747, %v4748
        %v4750 = vrot.slane %v4748, 4
        %v4751 = vrot.slane %v4218, 5
        %v4752 = vsel %vm1366, %v4750, %v4751
        %v4753 = vrot.slane %v4219, 5
        %v4754 = vrot.slane %v4753, 4
        %v4755 = vrot.slane %v4220, 5
        %v4756 = vsel %vm1366, %v4754, %v4755
        %v4757 = vrot.slane %v4755, 4
        %v4758 = vrot.slane %v4221, 5
        %v4759 = vsel %vm1366, %v4757, %v4758
        %v4760 = vrot.slane %v4222, 5
        %v4761 = vrot.slane %v4760, 4
        %v4762 = vrot.slane %v4223, 5
        %v4763 = vsel %vm1366, %v4761, %v4762
        %v4764 = vrot.slane %v4762, 4
        %v4765 = vrot.slane %v4224, 5
        %v4766 = vsel %vm1366, %v4764, %v4765
        %v4767 = vrot.slane %v4225, 5
        %v4768 = vrot.slane %v4767, 4
        %v4769 = vrot.slane %v4226, 5
        %v4770 = vsel %vm1366, %v4768, %v4769
        %v4771 = vrot.slane %v4769, 4
        %v4772 = vrot.slane %v4227, 5
        %v4773 = vsel %vm1366, %v4771, %v4772
        %v4774 = vrot.slane %v4228, 5
        %v4775 = vrot.slane %v4774, 4
        %v4776 = vrot.slane %v4229, 5
        %v4777 = vsel %vm1366, %v4775, %v4776
        %v4778 = vrot.slane %v4776, 4
        %v4779 = vrot.slane %v4230, 5
        %v4780 = vsel %vm1366, %v4778, %v4779
        %v4782 = vshrl.u32 %v4231, 16
        %v4784 = vrot.slane %v4782, 4
        %v4785 = vshll.u32 %v4231, 16
        %v4787 = vrot.slane %v4785, 5
        %v4788 = vor.u32 %v4784, %v4787
        %v4789 = vrot.slane %v4788, 4
        %v4791 = vshll.u32 %v4232, 16
        %v4793 = vrot.slane %v4791, 5
        %v4794 = vsel %vm679, %v4789, %v4793
        %v4795 = vshrl.u32 %v4232, 16
        %v4797 = vrot.slane %v4795, 4
        %v4798 = vor.u32 %v4797, %v4793
        %v4799 = vrot.slane %v4798, 4
        %v4801 = vshll.u32 %v4233, 16
        %v4803 = vrot.slane %v4801, 5
        %v4804 = vsel %vm679, %v4799, %v4803
        %v4808 = vrot.slane %v4231, 5
        %v4809 = vrot.slane %v4808, 4
        %v4810 = vrot.slane %v4232, 5
        %v4811 = vsel %vm1366, %v4809, %v4810
        %v4812 = vrot.slane %v4810, 4
        %v4813 = vrot.slane %v4233, 5
        %v4814 = vsel %vm1366, %v4812, %v4813
        %v4816 = vshrl.u32 %v4234, 16
        %v4818 = vrot.slane %v4816, 4
        %v4819 = vshll.u32 %v4234, 16
        %v4821 = vrot.slane %v4819, 5
        %v4822 = vor.u32 %v4818, %v4821
        %v4823 = vrot.slane %v4822, 4
        %v4825 = vshll.u32 %v4235, 16
        %v4827 = vrot.slane %v4825, 5
        %v4828 = vsel %vm679, %v4823, %v4827
        %v4829 = vshrl.u32 %v4235, 16
        %v4831 = vrot.slane %v4829, 4
        %v4832 = vor.u32 %v4831, %v4827
        %v4833 = vrot.slane %v4832, 4
        %v4835 = vshll.u32 %v4236, 16
        %v4837 = vrot.slane %v4835, 5
        %v4838 = vsel %vm679, %v4833, %v4837
        %v4842 = vrot.slane %v4234, 5
        %v4843 = vrot.slane %v4842, 4
        %v4844 = vrot.slane %v4235, 5
        %v4845 = vsel %vm1366, %v4843, %v4844
        %v4846 = vrot.slane %v4844, 4
        %v4847 = vrot.slane %v4236, 5
        %v4848 = vsel %vm1366, %v4846, %v4847
        %v4849 = vunpack.c.l.b16 %v4183
        %v4850 = vunpack.c.l.b16 %v4184
        %v4851 = vunpack.c.l.b16 %v4186
        %v4852 = vunpack.c.l.b16 %v4187
        %v4853 = vunpack.c.l.b16 %v4189
        %v4854 = vunpack.c.l.b16 %v4190
        %v4855 = vunpack.c.l.b16 %v4192
        %v4856 = vunpack.c.l.b16 %v4193
        %v4857 = vunpack.c.l.b16 %v4195
        %v4858 = vunpack.c.l.b16 %v4196
        %v4859 = vunpack.c.l.b16 %v4198
        %v4860 = vunpack.c.l.b16 %v4199
        %v4861 = vunpack.c.l.b16 %v4201
        %v4862 = vunpack.c.l.b16 %v4202
        %v4863 = vunpack.c.l.b16 %v4204
        %v4864 = vunpack.c.l.b16 %v4205
        %v4865 = vunpack.c.l.b16 %v4207
        %v4866 = vunpack.c.l.b16 %v4208
        %v4867 = vunpack.c.l.b16 %v4210
        %v4868 = vunpack.c.l.b16 %v4211
        %v4869 = vunpack.c.l.b16 %v4213
        %v4870 = vunpack.c.l.b16 %v4214
        %v4871 = vunpack.c.l.b16 %v4216
        %v4872 = vunpack.c.l.b16 %v4217
        %v4873 = vunpack.c.l.b16 %v4219
        %v4874 = vunpack.c.l.b16 %v4220
        %v4875 = vunpack.c.l.b16 %v4222
        %v4876 = vunpack.c.l.b16 %v4223
        %v4877 = vunpack.c.l.b16 %v4225
        %v4878 = vunpack.c.l.b16 %v4226
        %v4879 = vunpack.c.l.b16 %v4228
        %v4880 = vunpack.c.l.b16 %v4229
        %v4881 = vpack.c.b16 %v4850, %v4849
        %v4882 = vpack.c.b16 %v4852, %v4851
        %v4883 = vpack.c.b16 %v4854, %v4853
        %v4884 = vpack.c.b16 %v4856, %v4855
        %v4885 = vpack.c.b16 %v4858, %v4857
        %v4886 = vpack.c.b16 %v4860, %v4859
        %v4887 = vpack.c.b16 %v4862, %v4861
        %v4888 = vpack.c.b16 %v4864, %v4863
        %v4889 = vpack.c.b16 %v4866, %v4865
        %v4890 = vpack.c.b16 %v4868, %v4867
        %v4891 = vpack.c.b16 %v4870, %v4869
        %v4892 = vpack.c.b16 %v4872, %v4871
        %v4893 = vpack.c.b16 %v4874, %v4873
        %v4894 = vpack.c.b16 %v4876, %v4875
        %v4895 = vpack.c.b16 %v4878, %v4877
        %v4896 = vpack.c.b16 %v4880, %v4879
        %v4913 = vunpack.c.l.b16 %v4250
        %v4914 = vunpack.c.l.b16 %v4260
        %v4915 = vunpack.c.l.b16 %v4274
        %v4916 = vunpack.c.l.b16 %v4284
        %v4917 = vunpack.c.l.b16 %v4298
        %v4918 = vunpack.c.l.b16 %v4308
        %v4919 = vunpack.c.l.b16 %v4322
        %v4920 = vunpack.c.l.b16 %v4332
        %v4921 = vunpack.c.l.b16 %v4346
        %v4922 = vunpack.c.l.b16 %v4356
        %v4923 = vunpack.c.l.b16 %v4370
        %v4924 = vunpack.c.l.b16 %v4380
        %v4925 = vunpack.c.l.b16 %v4394
        %v4926 = vunpack.c.l.b16 %v4404
        %v4927 = vunpack.c.l.b16 %v4418
        %v4928 = vunpack.c.l.b16 %v4428
        %v4929 = vunpack.c.l.b16 %v4442
        %v4930 = vunpack.c.l.b16 %v4452
        %v4931 = vunpack.c.l.b16 %v4466
        %v4932 = vunpack.c.l.b16 %v4476
        %v4933 = vunpack.c.l.b16 %v4490
        %v4934 = vunpack.c.l.b16 %v4500
        %v4935 = vunpack.c.l.b16 %v4514
        %v4936 = vunpack.c.l.b16 %v4524
        %v4937 = vunpack.c.l.b16 %v4538
        %v4938 = vunpack.c.l.b16 %v4548
        %v4939 = vunpack.c.l.b16 %v4562
        %v4940 = vunpack.c.l.b16 %v4572
        %v4941 = vunpack.c.l.b16 %v4586
        %v4942 = vunpack.c.l.b16 %v4596
        %v4943 = vunpack.c.l.b16 %v4610
        %v4944 = vunpack.c.l.b16 %v4620
        %v4945 = vpack.c.b16 %v4914, %v4913
        %v4946 = vpack.c.b16 %v4916, %v4915
        %v4947 = vpack.c.b16 %v4918, %v4917
        %v4948 = vpack.c.b16 %v4920, %v4919
        %v4949 = vpack.c.b16 %v4922, %v4921
        %v4950 = vpack.c.b16 %v4924, %v4923
        %v4951 = vpack.c.b16 %v4926, %v4925
        %v4952 = vpack.c.b16 %v4928, %v4927
        %v4953 = vpack.c.b16 %v4930, %v4929
        %v4954 = vpack.c.b16 %v4932, %v4931
        %v4955 = vpack.c.b16 %v4934, %v4933
        %v4956 = vpack.c.b16 %v4936, %v4935
        %v4957 = vpack.c.b16 %v4938, %v4937
        %v4958 = vpack.c.b16 %v4940, %v4939
        %v4959 = vpack.c.b16 %v4942, %v4941
        %v4960 = vpack.c.b16 %v4944, %v4943
        %v4977 = vunpack.c.l.b16 %v4672
        %v4978 = vunpack.c.l.b16 %v4675
        %v4979 = vunpack.c.l.b16 %v4679
        %v4980 = vunpack.c.l.b16 %v4682
        %v4981 = vunpack.c.l.b16 %v4686
        %v4982 = vunpack.c.l.b16 %v4689
        %v4983 = vunpack.c.l.b16 %v4693
        %v4984 = vunpack.c.l.b16 %v4696
        %v4985 = vunpack.c.l.b16 %v4700
        %v4986 = vunpack.c.l.b16 %v4703
        %v4987 = vunpack.c.l.b16 %v4707
        %v4988 = vunpack.c.l.b16 %v4710
        %v4989 = vunpack.c.l.b16 %v4714
        %v4990 = vunpack.c.l.b16 %v4717
        %v4991 = vunpack.c.l.b16 %v4721
        %v4992 = vunpack.c.l.b16 %v4724
        %v4993 = vunpack.c.l.b16 %v4728
        %v4994 = vunpack.c.l.b16 %v4731
        %v4995 = vunpack.c.l.b16 %v4735
        %v4996 = vunpack.c.l.b16 %v4738
        %v4997 = vunpack.c.l.b16 %v4742
        %v4998 = vunpack.c.l.b16 %v4745
        %v4999 = vunpack.c.l.b16 %v4749
        %v5000 = vunpack.c.l.b16 %v4752
        %v5001 = vunpack.c.l.b16 %v4756
        %v5002 = vunpack.c.l.b16 %v4759
        %v5003 = vunpack.c.l.b16 %v4763
        %v5004 = vunpack.c.l.b16 %v4766
        %v5005 = vunpack.c.l.b16 %v4770
        %v5006 = vunpack.c.l.b16 %v4773
        %v5007 = vunpack.c.l.b16 %v4777
        %v5008 = vunpack.c.l.b16 %v4780
        %v5009 = vpack.c.b16 %v4978, %v4977
        %v5010 = vpack.c.b16 %v4980, %v4979
        %v5011 = vpack.c.b16 %v4982, %v4981
        %v5012 = vpack.c.b16 %v4984, %v4983
        %v5013 = vpack.c.b16 %v4986, %v4985
        %v5014 = vpack.c.b16 %v4988, %v4987
        %v5015 = vpack.c.b16 %v4990, %v4989
        %v5016 = vpack.c.b16 %v4992, %v4991
        %v5017 = vpack.c.b16 %v4994, %v4993
        %v5018 = vpack.c.b16 %v4996, %v4995
        %v5019 = vpack.c.b16 %v4998, %v4997
        %v5020 = vpack.c.b16 %v5000, %v4999
        %v5021 = vpack.c.b16 %v5002, %v5001
        %v5022 = vpack.c.b16 %v5004, %v5003
        %v5023 = vpack.c.b16 %v5006, %v5005
        %v5024 = vpack.c.b16 %v5008, %v5007
        %v5041 = vunpack.c.l.b16 %v4231
        %v5042 = vunpack.c.l.b16 %v4232
        %v5043 = vpack.c.b16 %v5042, %v5041
        %v5045 = vunpack.c.l.b16 %v4794
        %v5046 = vunpack.c.l.b16 %v4804
        %v5047 = vpack.c.b16 %v5046, %v5045
        %v5049 = vunpack.c.l.b16 %v4811
        %v5050 = vunpack.c.l.b16 %v4814
        %v5051 = vpack.c.b16 %v5050, %v5049
        %v5053 = vunpack.c.l.b16 %v4234
        %v5054 = vunpack.c.l.b16 %v4235
        %v5055 = vpack.c.b16 %v5054, %v5053
        %v5057 = vunpack.c.l.b16 %v4828
        %v5058 = vunpack.c.l.b16 %v4838
        %v5059 = vpack.c.b16 %v5058, %v5057
        %v5061 = vunpack.c.l.b16 %v4845
        %v5062 = vunpack.c.l.b16 %v4848
        %v5063 = vpack.c.b16 %v5062, %v5061
        %v5065 = vld [vmem:[%s3] sm:$0xf]
        %v5066 = vld [vmem:[%s3 + $0x4] sm:$0xf]
        %v5067 = vld [vmem:[%s3 + $0x8] sm:$0xf]
        %v5068 = vld [vmem:[%s3 + $0xc] sm:$0xf]
        %v5069 = vld [vmem:[%s3 + $0x10] sm:$0xf]
        %v5070 = vld [vmem:[%s3 + $0x14] sm:$0xf]
        %v5071 = vld [vmem:[%s3 + $0x18] sm:$0xf]
        %v5072 = vld [vmem:[%s3 + $0x1c] sm:$0xf]
        %v5073 = vld [vmem:[%s3 + $0x20] sm:$0xf]
        %v5074 = vld [vmem:[%s3 + $0x24] sm:$0xf]
        %v5075 = vld [vmem:[%s3 + $0x28] sm:$0xf]
        %v5076 = vld [vmem:[%s3 + $0x2c] sm:$0xf]
        %v5077 = vld [vmem:[%s3 + $0x30] sm:$0xf]
        %v5078 = vld [vmem:[%s3 + $0x34] sm:$0xf]
        %v5079 = vld [vmem:[%s3 + $0x38] sm:$0xf]
        %v5080 = vld [vmem:[%s3 + $0x3c] sm:$0xf]
        %v5081 = vld [vmem:[%s3 + $0x40] sm:$0xf]
        %v5082 = vld [vmem:[%s3 + $0x44] sm:$0xf]
        %v5083 = vld [vmem:[%s3 + $0x48] sm:$0xf]
        %v5084 = vld [vmem:[%s3 + $0x4c] sm:$0xf]
        %v5085 = vld [vmem:[%s3 + $0x50] sm:$0xf]
        %v5086 = vld [vmem:[%s3 + $0x54] sm:$0xf]
        %v5087 = vld [vmem:[%s3 + $0x58] sm:$0xf]
        %v5088 = vld [vmem:[%s3 + $0x5c] sm:$0xf]
        %v5089 = vld [vmem:[%s3 + $0x60] sm:$0xf]
        %v5090 = vld [vmem:[%s3 + $0x64] sm:$0xf]
        %v5091 = vld [vmem:[%s3 + $0x68] sm:$0xf]
        %v5092 = vld [vmem:[%s3 + $0x6c] sm:$0xf]
        %v5093 = vld [vmem:[%s3 + $0x70] sm:$0xf]
        %v5094 = vld [vmem:[%s3 + $0x74] sm:$0xf]
        %v5095 = vld [vmem:[%s3 + $0x78] sm:$0xf]
        %v5096 = vld [vmem:[%s3 + $0x7c] sm:$0xf]
        %v5097 = vld [vmem:[%s3 + $0x80] sm:$0xf]
        %v5098 = vld [vmem:[%s3 + $0x84] sm:$0xf]
        %v5099 = vld [vmem:[%s3 + $0x88] sm:$0xf]
        %v5100 = vld [vmem:[%s3 + $0x8c] sm:$0xf]
        %v5101 = vld [vmem:[%s3 + $0x90] sm:$0xf]
        %v5102 = vld [vmem:[%s3 + $0x94] sm:$0xf]
        %v5103 = vld [vmem:[%s3 + $0x98] sm:$0xf]
        %v5104 = vld [vmem:[%s3 + $0x9c] sm:$0xf]
        %v5105 = vld [vmem:[%s3 + $0xa0] sm:$0xf]
        %v5106 = vld [vmem:[%s3 + $0xa4] sm:$0xf]
        %v5107 = vld [vmem:[%s3 + $0xa8] sm:$0xf]
        %v5108 = vld [vmem:[%s3 + $0xac] sm:$0xf]
        %v5109 = vld [vmem:[%s3 + $0xb0] sm:$0xf]
        %v5110 = vld [vmem:[%s3 + $0xb4] sm:$0xf]
        %v5111 = vld [vmem:[%s3 + $0xb8] sm:$0xf]
        %v5112 = vld [vmem:[%s3 + $0xbc] sm:$0xf]
        %v5113 = vld [vmem:[%s3 + $0xc0] sm:$0xf]
        %v5114 = vld [vmem:[%s3 + $0xc4] sm:$0xf]
        %v5115 = vld [vmem:[%s3 + $0xc8] sm:$0xf]
        %v5116 = vld [vmem:[%s3 + $0xcc] sm:$0xf]
        %v5117 = vld [vmem:[%s3 + $0xd0] sm:$0xf]
        %v5118 = vld [vmem:[%s3 + $0xd4] sm:$0xf]
        %v5119 = vld [vmem:[%s3 + $0xd8] sm:$0xf]
        %v5120 = vld [vmem:[%s3 + $0xdc] sm:$0xf]
        %v5121 = vld [vmem:[%s3 + $0xe0] sm:$0xf]
        %v5122 = vld [vmem:[%s3 + $0xe4] sm:$0xf]
        %v5123 = vld [vmem:[%s3 + $0xe8] sm:$0xf]
        %v5124 = vld [vmem:[%s3 + $0xec] sm:$0xf]
        %v5125 = vld [vmem:[%s3 + $0xf0] sm:$0xf]
        %v5126 = vld [vmem:[%s3 + $0xf4] sm:$0xf]
        %v5127 = vld [vmem:[%s3 + $0xf8] sm:$0xf]
        %v5128 = vld [vmem:[%s3 + $0xfc] sm:$0xf]
        %v5129 = vld [vmem:[%s3 + $0x100] sm:$0xf]
        %v5130 = vld [vmem:[%s3 + $0x104] sm:$0xf]
        %v5131 = vld [vmem:[%s3 + $0x108] sm:$0xf]
        %v5132 = vld [vmem:[%s3 + $0x10c] sm:$0xf]
        %v5133 = vld [vmem:[%s3 + $0x110] sm:$0xf]
        %v5134 = vld [vmem:[%s3 + $0x114] sm:$0xf]
        %v5135 = vld [vmem:[%s3 + $0x118] sm:$0xf]
        %v5136 = vld [vmem:[%s3 + $0x11c] sm:$0xf]
        %v5137 = vld [vmem:[%s3 + $0x120] sm:$0xf]
        %v5138 = vld [vmem:[%s3 + $0x124] sm:$0xf]
        %v5139 = vld [vmem:[%s3 + $0x128] sm:$0xf]
        %v5140 = vld [vmem:[%s3 + $0x12c] sm:$0xf]
        %v5141 = vld [vmem:[%s3 + $0x130] sm:$0xf]
        %v5142 = vld [vmem:[%s3 + $0x134] sm:$0xf]
        %v5143 = vld [vmem:[%s3 + $0x138] sm:$0xf]
        %v5144 = vld [vmem:[%s3 + $0x13c] sm:$0xf]
        %v5145 = vld [vmem:[%s3 + $0x140] sm:$0xf]
        %v5146 = vld [vmem:[%s3 + $0x144] sm:$0xf]
        %v5147 = vld [vmem:[%s3 + $0x148] sm:$0xf]
        %v5148 = vld [vmem:[%s3 + $0x14c] sm:$0xf]
        %v5149 = vld [vmem:[%s3 + $0x150] sm:$0xf]
        %v5150 = vld [vmem:[%s3 + $0x154] sm:$0xf]
        %v5151 = vld [vmem:[%s3 + $0x158] sm:$0xf]
        %v5152 = vld [vmem:[%s3 + $0x15c] sm:$0xf]
        %v5153 = vld [vmem:[%s3 + $0x160] sm:$0xf]
        %v5154 = vld [vmem:[%s3 + $0x164] sm:$0xf]
        %v5155 = vld [vmem:[%s3 + $0x168] sm:$0xf]
        %v5156 = vld [vmem:[%s3 + $0x16c] sm:$0xf]
        %v5157 = vld [vmem:[%s3 + $0x170] sm:$0xf]
        %v5158 = vld [vmem:[%s3 + $0x174] sm:$0xf]
        %v5159 = vld [vmem:[%s3 + $0x178] sm:$0xf]
        %v5160 = vld [vmem:[%s3 + $0x17c] sm:$0xf]
        %v5161 = vld [vmem:[%s3 + $0x180] sm:$0xf]
        %v5162 = vld [vmem:[%s3 + $0x184] sm:$0xf]
        %v5163 = vld [vmem:[%s3 + $0x188] sm:$0xf]
        %v5164 = vld [vmem:[%s3 + $0x18c] sm:$0xf]
        %v5165 = vld [vmem:[%s3 + $0x190] sm:$0xf]
        %v5166 = vld [vmem:[%s3 + $0x194] sm:$0xf]
        %v5167 = vld [vmem:[%s3 + $0x198] sm:$0xf]
        %v5168 = vld [vmem:[%s3 + $0x19c] sm:$0xf]
        %v5169 = vld [vmem:[%s3 + $0x1a0] sm:$0xf]
        %v5170 = vld [vmem:[%s3 + $0x1a4] sm:$0xf]
        %v5171 = vld [vmem:[%s3 + $0x1a8] sm:$0xf]
        %v5172 = vld [vmem:[%s3 + $0x1ac] sm:$0xf]
        %v5173 = vld [vmem:[%s3 + $0x1b0] sm:$0xf]
        %v5174 = vld [vmem:[%s3 + $0x1b4] sm:$0xf]
        %v5175 = vld [vmem:[%s3 + $0x1b8] sm:$0xf]
        %v5176 = vld [vmem:[%s3 + $0x1bc] sm:$0xf]
        %v5177 = vld [vmem:[%s3 + $0x1c0] sm:$0xf]
        %v5178 = vld [vmem:[%s3 + $0x1c4] sm:$0xf]
        %v5179 = vld [vmem:[%s3 + $0x1c8] sm:$0xf]
        %v5180 = vld [vmem:[%s3 + $0x1cc] sm:$0xf]
        %v5181 = vld [vmem:[%s3 + $0x1d0] sm:$0xf]
        %v5182 = vld [vmem:[%s3 + $0x1d4] sm:$0xf]
        %v5183 = vld [vmem:[%s3 + $0x1d8] sm:$0xf]
        %v5184 = vld [vmem:[%s3 + $0x1dc] sm:$0xf]
        %v5185 = vld [vmem:[%s3 + $0x1e0] sm:$0xf]
        %v5186 = vld [vmem:[%s3 + $0x1e4] sm:$0xf]
        %v5187 = vld [vmem:[%s3 + $0x1e8] sm:$0xf]
        %v5188 = vld [vmem:[%s3 + $0x1ec] sm:$0xf]
        %v5189 = vld [vmem:[%s3 + $0x1f0] sm:$0xf]
        %v5190 = vld [vmem:[%s3 + $0x1f4] sm:$0xf]
        %v5191 = vld [vmem:[%s3 + $0x1f8] sm:$0xf]
        %v5192 = vld [vmem:[%s3 + $0x1fc] sm:$0xf]
        %v5193 = vld [vmem:[%s3 + $0x200] sm:$0xf]
        %v5194 = vld [vmem:[%s3 + $0x204] sm:$0xf]
        %v5195 = vld [vmem:[%s3 + $0x208] sm:$0xf]
        %v5196 = vld [vmem:[%s3 + $0x20c] sm:$0xf]
        %v5197 = vld [vmem:[%s3 + $0x210] sm:$0xf]
        %v5198 = vld [vmem:[%s3 + $0x214] sm:$0xf]
        %v5199 = vld [vmem:[%s3 + $0x218] sm:$0xf]
        %v5200 = vld [vmem:[%s3 + $0x21c] sm:$0xf]
        %v5201 = vld [vmem:[%s3 + $0x220] sm:$0xf]
        %v5202 = vld [vmem:[%s3 + $0x224] sm:$0xf]
        %v5203 = vld [vmem:[%s3 + $0x228] sm:$0xf]
        %v5204 = vld [vmem:[%s3 + $0x22c] sm:$0xf]
        %v5205 = vld [vmem:[%s3 + $0x230] sm:$0xf]
        %v5206 = vld [vmem:[%s3 + $0x234] sm:$0xf]
        %v5207 = vld [vmem:[%s3 + $0x238] sm:$0xf]
        %v5208 = vld [vmem:[%s3 + $0x23c] sm:$0xf]
        %v5209 = vld [vmem:[%s4] sm:$0x1]
        %v5211 = vperm.slane %v5209, 0
        %v5357 = vunpack.c.l.b16 %v5065
        %v5358 = vunpack.c.l.b16 %v5066
        %v5359 = vunpack.c.l.b16 %v5067
        %v5360 = vunpack.c.l.b16 %v5068
        %v5361 = vunpack.c.l.b16 %v5069
        %v5362 = vunpack.c.l.b16 %v5070
        %v5363 = vunpack.c.l.b16 %v5071
        %v5364 = vunpack.c.l.b16 %v5072
        %v5365 = vunpack.c.l.b16 %v5073
        %v5366 = vunpack.c.l.b16 %v5074
        %v5367 = vunpack.c.l.b16 %v5075
        %v5368 = vunpack.c.l.b16 %v5076
        %v5369 = vunpack.c.l.b16 %v5077
        %v5370 = vunpack.c.l.b16 %v5078
        %v5371 = vunpack.c.l.b16 %v5079
        %v5372 = vunpack.c.l.b16 %v5080
        %v5373 = vunpack.c.l.b16 %v5081
        %v5374 = vunpack.c.l.b16 %v5082
        %v5375 = vunpack.c.l.b16 %v5083
        %v5376 = vunpack.c.l.b16 %v5084
        %v5377 = vunpack.c.l.b16 %v5085
        %v5378 = vunpack.c.l.b16 %v5086
        %v5379 = vunpack.c.l.b16 %v5087
        %v5380 = vunpack.c.l.b16 %v5088
        %v5381 = vunpack.c.l.b16 %v5089
        %v5382 = vunpack.c.l.b16 %v5090
        %v5383 = vunpack.c.l.b16 %v5091
        %v5384 = vunpack.c.l.b16 %v5092
        %v5385 = vunpack.c.l.b16 %v5093
        %v5386 = vunpack.c.l.b16 %v5094
        %v5387 = vunpack.c.l.b16 %v5095
        %v5388 = vunpack.c.l.b16 %v5096
        %v5389 = vunpack.c.l.b16 %v5097
        %v5390 = vunpack.c.l.b16 %v5098
        %v5391 = vunpack.c.l.b16 %v5099
        %v5392 = vunpack.c.l.b16 %v5100
        %v5393 = vunpack.c.l.b16 %v5101
        %v5394 = vunpack.c.l.b16 %v5102
        %v5395 = vunpack.c.l.b16 %v5103
        %v5396 = vunpack.c.l.b16 %v5104
        %v5397 = vunpack.c.l.b16 %v5105
        %v5398 = vunpack.c.l.b16 %v5106
        %v5399 = vunpack.c.l.b16 %v5107
        %v5400 = vunpack.c.l.b16 %v5108
        %v5401 = vunpack.c.l.b16 %v5109
        %v5402 = vunpack.c.l.b16 %v5110
        %v5403 = vunpack.c.l.b16 %v5111
        %v5404 = vunpack.c.l.b16 %v5112
        %v5405 = vunpack.c.l.b16 %v5113
        %v5406 = vunpack.c.l.b16 %v5114
        %v5407 = vunpack.c.l.b16 %v5115
        %v5408 = vunpack.c.l.b16 %v5116
        %v5409 = vunpack.c.l.b16 %v5117
        %v5410 = vunpack.c.l.b16 %v5118
        %v5411 = vunpack.c.l.b16 %v5119
        %v5412 = vunpack.c.l.b16 %v5120
        %v5413 = vunpack.c.l.b16 %v5121
        %v5414 = vunpack.c.l.b16 %v5122
        %v5415 = vunpack.c.l.b16 %v5123
        %v5416 = vunpack.c.l.b16 %v5124
        %v5417 = vunpack.c.l.b16 %v5125
        %v5418 = vunpack.c.l.b16 %v5126
        %v5419 = vunpack.c.l.b16 %v5127
        %v5420 = vunpack.c.l.b16 %v5128
        %v5421 = vunpack.c.l.b16 %v5129
        %v5422 = vunpack.c.l.b16 %v5130
        %v5423 = vunpack.c.l.b16 %v5131
        %v5424 = vunpack.c.l.b16 %v5132
        %v5425 = vunpack.c.l.b16 %v5133
        %v5426 = vunpack.c.l.b16 %v5134
        %v5427 = vunpack.c.l.b16 %v5135
        %v5428 = vunpack.c.l.b16 %v5136
        %v5429 = vunpack.c.l.b16 %v5137
        %v5430 = vunpack.c.l.b16 %v5138
        %v5431 = vunpack.c.l.b16 %v5139
        %v5432 = vunpack.c.l.b16 %v5140
        %v5433 = vunpack.c.l.b16 %v5141
        %v5434 = vunpack.c.l.b16 %v5142
        %v5435 = vunpack.c.l.b16 %v5143
        %v5436 = vunpack.c.l.b16 %v5144
        %v5437 = vunpack.c.l.b16 %v5145
        %v5438 = vunpack.c.l.b16 %v5146
        %v5439 = vunpack.c.l.b16 %v5147
        %v5440 = vunpack.c.l.b16 %v5148
        %v5441 = vunpack.c.l.b16 %v5149
        %v5442 = vunpack.c.l.b16 %v5150
        %v5443 = vunpack.c.l.b16 %v5151
        %v5444 = vunpack.c.l.b16 %v5152
        %v5445 = vunpack.c.l.b16 %v5153
        %v5446 = vunpack.c.l.b16 %v5154
        %v5447 = vunpack.c.l.b16 %v5155
        %v5448 = vunpack.c.l.b16 %v5156
        %v5449 = vunpack.c.l.b16 %v5157
        %v5450 = vunpack.c.l.b16 %v5158
        %v5451 = vunpack.c.l.b16 %v5159
        %v5452 = vunpack.c.l.b16 %v5160
        %v5453 = vunpack.c.l.b16 %v5161
        %v5454 = vunpack.c.l.b16 %v5162
        %v5455 = vunpack.c.l.b16 %v5163
        %v5456 = vunpack.c.l.b16 %v5164
        %v5457 = vunpack.c.l.b16 %v5165
        %v5458 = vunpack.c.l.b16 %v5166
        %v5459 = vunpack.c.l.b16 %v5167
        %v5460 = vunpack.c.l.b16 %v5168
        %v5461 = vunpack.c.l.b16 %v5169
        %v5462 = vunpack.c.l.b16 %v5170
        %v5463 = vunpack.c.l.b16 %v5171
        %v5464 = vunpack.c.l.b16 %v5172
        %v5465 = vunpack.c.l.b16 %v5173
        %v5466 = vunpack.c.l.b16 %v5174
        %v5467 = vunpack.c.l.b16 %v5175
        %v5468 = vunpack.c.l.b16 %v5176
        %v5469 = vunpack.c.l.b16 %v5177
        %v5470 = vunpack.c.l.b16 %v5178
        %v5471 = vunpack.c.l.b16 %v5179
        %v5472 = vunpack.c.l.b16 %v5180
        %v5473 = vunpack.c.l.b16 %v5181
        %v5474 = vunpack.c.l.b16 %v5182
        %v5475 = vunpack.c.l.b16 %v5183
        %v5476 = vunpack.c.l.b16 %v5184
        %v5477 = vunpack.c.l.b16 %v5185
        %v5478 = vunpack.c.l.b16 %v5186
        %v5479 = vunpack.c.l.b16 %v5187
        %v5480 = vunpack.c.l.b16 %v5188
        %v5481 = vunpack.c.l.b16 %v5189
        %v5482 = vunpack.c.l.b16 %v5190
        %v5483 = vunpack.c.l.b16 %v5191
        %v5484 = vunpack.c.l.b16 %v5192
        %v5485 = vunpack.c.l.b16 %v5193
        %v5486 = vunpack.c.l.b16 %v5194
        %v5487 = vunpack.c.l.b16 %v5195
        %v5488 = vunpack.c.l.b16 %v5196
        %v5489 = vunpack.c.l.b16 %v5197
        %v5490 = vunpack.c.l.b16 %v5198
        %v5491 = vunpack.c.l.b16 %v5199
        %v5492 = vunpack.c.l.b16 %v5200
        %v5493 = vunpack.c.l.b16 %v5201
        %v5494 = vunpack.c.l.b16 %v5202
        %v5495 = vunpack.c.l.b16 %v5203
        %v5496 = vunpack.c.l.b16 %v5204
        %v5497 = vunpack.c.l.b16 %v5205
        %v5498 = vunpack.c.l.b16 %v5206
        %v5499 = vunpack.c.l.b16 %v5207
        %v5500 = vunpack.c.l.b16 %v5208
        %v5501 = vpack.c.b16 %v5358, %v5357
        %v5502 = vpack.c.b16 %v5360, %v5359
        %v5503 = vpack.c.b16 %v5362, %v5361
        %v5504 = vpack.c.b16 %v5364, %v5363
        %v5505 = vpack.c.b16 %v5366, %v5365
        %v5506 = vpack.c.b16 %v5368, %v5367
        %v5507 = vpack.c.b16 %v5370, %v5369
        %v5508 = vpack.c.b16 %v5372, %v5371
        %v5509 = vpack.c.b16 %v5374, %v5373
        %v5510 = vpack.c.b16 %v5376, %v5375
        %v5511 = vpack.c.b16 %v5378, %v5377
        %v5512 = vpack.c.b16 %v5380, %v5379
        %v5513 = vpack.c.b16 %v5382, %v5381
        %v5514 = vpack.c.b16 %v5384, %v5383
        %v5515 = vpack.c.b16 %v5386, %v5385
        %v5516 = vpack.c.b16 %v5388, %v5387
        %v5517 = vpack.c.b16 %v5390, %v5389
        %v5518 = vpack.c.b16 %v5392, %v5391
        %v5519 = vpack.c.b16 %v5394, %v5393
        %v5520 = vpack.c.b16 %v5396, %v5395
        %v5521 = vpack.c.b16 %v5398, %v5397
        %v5522 = vpack.c.b16 %v5400, %v5399
        %v5523 = vpack.c.b16 %v5402, %v5401
        %v5524 = vpack.c.b16 %v5404, %v5403
        %v5525 = vpack.c.b16 %v5406, %v5405
        %v5526 = vpack.c.b16 %v5408, %v5407
        %v5527 = vpack.c.b16 %v5410, %v5409
        %v5528 = vpack.c.b16 %v5412, %v5411
        %v5529 = vpack.c.b16 %v5414, %v5413
        %v5530 = vpack.c.b16 %v5416, %v5415
        %v5531 = vpack.c.b16 %v5418, %v5417
        %v5532 = vpack.c.b16 %v5420, %v5419
        %v5533 = vpack.c.b16 %v5422, %v5421
        %v5534 = vpack.c.b16 %v5424, %v5423
        %v5535 = vpack.c.b16 %v5426, %v5425
        %v5536 = vpack.c.b16 %v5428, %v5427
        %v5537 = vpack.c.b16 %v5430, %v5429
        %v5538 = vpack.c.b16 %v5432, %v5431
        %v5539 = vpack.c.b16 %v5434, %v5433
        %v5540 = vpack.c.b16 %v5436, %v5435
        %v5541 = vpack.c.b16 %v5438, %v5437
        %v5542 = vpack.c.b16 %v5440, %v5439
        %v5543 = vpack.c.b16 %v5442, %v5441
        %v5544 = vpack.c.b16 %v5444, %v5443
        %v5545 = vpack.c.b16 %v5446, %v5445
        %v5546 = vpack.c.b16 %v5448, %v5447
        %v5547 = vpack.c.b16 %v5450, %v5449
        %v5548 = vpack.c.b16 %v5452, %v5451
        %v5549 = vpack.c.b16 %v5454, %v5453
        %v5550 = vpack.c.b16 %v5456, %v5455
        %v5551 = vpack.c.b16 %v5458, %v5457
        %v5552 = vpack.c.b16 %v5460, %v5459
        %v5553 = vpack.c.b16 %v5462, %v5461
        %v5554 = vpack.c.b16 %v5464, %v5463
        %v5555 = vpack.c.b16 %v5466, %v5465
        %v5556 = vpack.c.b16 %v5468, %v5467
        %v5557 = vpack.c.b16 %v5470, %v5469
        %v5558 = vpack.c.b16 %v5472, %v5471
        %v5559 = vpack.c.b16 %v5474, %v5473
        %v5560 = vpack.c.b16 %v5476, %v5475
        %v5561 = vpack.c.b16 %v5478, %v5477
        %v5562 = vpack.c.b16 %v5480, %v5479
        %v5563 = vpack.c.b16 %v5482, %v5481
        %v5564 = vpack.c.b16 %v5484, %v5483
        %v5565 = vpack.c.b16 %v5486, %v5485
        %v5566 = vpack.c.b16 %v5488, %v5487
        %v5567 = vpack.c.b16 %v5490, %v5489
        %v5568 = vpack.c.b16 %v5492, %v5491
        %v5569 = vpack.c.b16 %v5494, %v5493
        %v5570 = vpack.c.b16 %v5496, %v5495
        %v5571 = vpack.c.b16 %v5498, %v5497
        %v5572 = vpack.c.b16 %v5500, %v5499
        %5645 = vmatpush.bf16.msra.mxu0 %v5508
        %5646 = vmatpush.bf16.msra.mxu0 %v5507
        %5647 = vmatpush.bf16.msra.mxu0 %v5506
        %5648 = vmatpush.bf16.msra.mxu0 %v5505
        %5649 = vmatpush.bf16.msra.mxu0 %v5504
        %5650 = vmatpush.bf16.msra.mxu0 %v5503
        %5651 = vmatpush.bf16.msra.mxu0 %v5502
        %5652 = vmatpush.bf16.msra.mxu0 %v5501
        %5653 = vmatmul.bf16.gmra.mxu0 %v4881
        %v5654 = vpop.f32.mrf.mxu0
        %v5655 = vadd.f32 %v5211, %v5654
        %v5656 = vpop.f32.mrf.mxu0
        %v5657 = vadd.f32 %v5211, %v5656
        %5658 = vmatmul.bf16.gmra.mxu0 %v4882
        %v5659 = vpop.f32.mrf.mxu0
        %v5660 = vadd.f32 %v5211, %v5659
        %v5661 = vpop.f32.mrf.mxu0
        %v5662 = vadd.f32 %v5211, %v5661
        %5663 = vmatmul.bf16.gmra.mxu0 %v4883
        %v5664 = vpop.f32.mrf.mxu0
        %v5665 = vadd.f32 %v5211, %v5664
        %v5666 = vpop.f32.mrf.mxu0
        %v5667 = vadd.f32 %v5211, %v5666
        %5668 = vmatmul.bf16.gmra.mxu0 %v4884
        %v5669 = vpop.f32.mrf.mxu0
        %v5670 = vadd.f32 %v5211, %v5669
        %v5671 = vpop.f32.mrf.mxu0
        %v5672 = vadd.f32 %v5211, %v5671
        %5673 = vmatmul.bf16.gmra.mxu0 %v4885
        %v5674 = vpop.f32.mrf.mxu0
        %v5675 = vadd.f32 %v5211, %v5674
        %v5676 = vpop.f32.mrf.mxu0
        %v5677 = vadd.f32 %v5211, %v5676
        %5678 = vmatmul.bf16.gmra.mxu0 %v4886
        %v5679 = vpop.f32.mrf.mxu0
        %v5680 = vadd.f32 %v5211, %v5679
        %v5681 = vpop.f32.mrf.mxu0
        %v5682 = vadd.f32 %v5211, %v5681
        %5683 = vmatmul.bf16.gmra.mxu0 %v4887
        %v5684 = vpop.f32.mrf.mxu0
        %v5685 = vadd.f32 %v5211, %v5684
        %v5686 = vpop.f32.mrf.mxu0
        %v5687 = vadd.f32 %v5211, %v5686
        %5688 = vmatmul.bf16.gmra.mxu0 %v4888
        %v5689 = vpop.f32.mrf.mxu0
        %v5690 = vadd.f32 %v5211, %v5689
        %v5691 = vpop.f32.mrf.mxu0
        %v5692 = vadd.f32 %v5211, %v5691
        %5693 = vmatmul.bf16.gmra.mxu0 %v4889
        %v5694 = vpop.f32.mrf.mxu0
        %v5695 = vadd.f32 %v5211, %v5694
        %v5696 = vpop.f32.mrf.mxu0
        %v5697 = vadd.f32 %v5211, %v5696
        %5698 = vmatmul.bf16.gmra.mxu0 %v4890
        %v5699 = vpop.f32.mrf.mxu0
        %v5700 = vadd.f32 %v5211, %v5699
        %v5701 = vpop.f32.mrf.mxu0
        %v5702 = vadd.f32 %v5211, %v5701
        %5703 = vmatmul.bf16.gmra.mxu0 %v4891
        %v5704 = vpop.f32.mrf.mxu0
        %v5705 = vadd.f32 %v5211, %v5704
        %v5706 = vpop.f32.mrf.mxu0
        %v5707 = vadd.f32 %v5211, %v5706
        %5708 = vmatmul.bf16.gmra.mxu0 %v4892
        %v5709 = vpop.f32.mrf.mxu0
        %v5710 = vadd.f32 %v5211, %v5709
        %v5711 = vpop.f32.mrf.mxu0
        %v5712 = vadd.f32 %v5211, %v5711
        %5713 = vmatmul.bf16.gmra.mxu0 %v4893
        %v5714 = vpop.f32.mrf.mxu0
        %v5715 = vadd.f32 %v5211, %v5714
        %v5716 = vpop.f32.mrf.mxu0
        %v5717 = vadd.f32 %v5211, %v5716
        %5718 = vmatmul.bf16.gmra.mxu0 %v4894
        %v5719 = vpop.f32.mrf.mxu0
        %v5720 = vadd.f32 %v5211, %v5719
        %v5721 = vpop.f32.mrf.mxu0
        %v5722 = vadd.f32 %v5211, %v5721
        %5723 = vmatmul.bf16.gmra.mxu0 %v4895
        %v5724 = vpop.f32.mrf.mxu0
        %v5725 = vadd.f32 %v5211, %v5724
        %v5726 = vpop.f32.mrf.mxu0
        %v5727 = vadd.f32 %v5211, %v5726
        %5728 = vmatmul.bf16.gmra.mxu0 %v4896
        %v5729 = vpop.f32.mrf.mxu0
        %v5730 = vadd.f32 %v5211, %v5729
        %v5731 = vpop.f32.mrf.mxu0
        %v5732 = vadd.f32 %v5211, %v5731
        %5733 = vdwg.mxu0
        %5734 = vmatpush.bf16.msra.mxu0 %v5516
        %5735 = vmatpush.bf16.msra.mxu0 %v5515
        %5736 = vmatpush.bf16.msra.mxu0 %v5514
        %5737 = vmatpush.bf16.msra.mxu0 %v5513
        %5738 = vmatpush.bf16.msra.mxu0 %v5512
        %5739 = vmatpush.bf16.msra.mxu0 %v5511
        %5740 = vmatpush.bf16.msra.mxu0 %v5510
        %5741 = vmatpush.bf16.msra.mxu0 %v5509
        %5742 = vmatmul.bf16.gmra.mxu0 %v4945
        %v5743 = vpop.f32.mrf.mxu0
        %v5744 = vadd.f32 %v5655, %v5743
        %v5745 = vpop.f32.mrf.mxu0
        %v5746 = vadd.f32 %v5657, %v5745
        %5747 = vmatmul.bf16.gmra.mxu0 %v4946
        %v5748 = vpop.f32.mrf.mxu0
        %v5749 = vadd.f32 %v5660, %v5748
        %v5750 = vpop.f32.mrf.mxu0
        %v5751 = vadd.f32 %v5662, %v5750
        %5752 = vmatmul.bf16.gmra.mxu0 %v4947
        %v5753 = vpop.f32.mrf.mxu0
        %v5754 = vadd.f32 %v5665, %v5753
        %v5755 = vpop.f32.mrf.mxu0
        %v5756 = vadd.f32 %v5667, %v5755
        %5757 = vmatmul.bf16.gmra.mxu0 %v4948
        %v5758 = vpop.f32.mrf.mxu0
        %v5759 = vadd.f32 %v5670, %v5758
        %v5760 = vpop.f32.mrf.mxu0
        %v5761 = vadd.f32 %v5672, %v5760
        %5762 = vmatmul.bf16.gmra.mxu0 %v4949
        %v5763 = vpop.f32.mrf.mxu0
        %v5764 = vadd.f32 %v5675, %v5763
        %v5765 = vpop.f32.mrf.mxu0
        %v5766 = vadd.f32 %v5677, %v5765
        %5767 = vmatmul.bf16.gmra.mxu0 %v4950
        %v5768 = vpop.f32.mrf.mxu0
        %v5769 = vadd.f32 %v5680, %v5768
        %v5770 = vpop.f32.mrf.mxu0
        %v5771 = vadd.f32 %v5682, %v5770
        %5772 = vmatmul.bf16.gmra.mxu0 %v4951
        %v5773 = vpop.f32.mrf.mxu0
        %v5774 = vadd.f32 %v5685, %v5773
        %v5775 = vpop.f32.mrf.mxu0
        %v5776 = vadd.f32 %v5687, %v5775
        %5777 = vmatmul.bf16.gmra.mxu0 %v4952
        %v5778 = vpop.f32.mrf.mxu0
        %v5779 = vadd.f32 %v5690, %v5778
        %v5780 = vpop.f32.mrf.mxu0
        %v5781 = vadd.f32 %v5692, %v5780
        %5782 = vmatmul.bf16.gmra.mxu0 %v4953
        %v5783 = vpop.f32.mrf.mxu0
        %v5784 = vadd.f32 %v5695, %v5783
        %v5785 = vpop.f32.mrf.mxu0
        %v5786 = vadd.f32 %v5697, %v5785
        %5787 = vmatmul.bf16.gmra.mxu0 %v4954
        %v5788 = vpop.f32.mrf.mxu0
        %v5789 = vadd.f32 %v5700, %v5788
        %v5790 = vpop.f32.mrf.mxu0
        %v5791 = vadd.f32 %v5702, %v5790
        %5792 = vmatmul.bf16.gmra.mxu0 %v4955
        %v5793 = vpop.f32.mrf.mxu0
        %v5794 = vadd.f32 %v5705, %v5793
        %v5795 = vpop.f32.mrf.mxu0
        %v5796 = vadd.f32 %v5707, %v5795
        %5797 = vmatmul.bf16.gmra.mxu0 %v4956
        %v5798 = vpop.f32.mrf.mxu0
        %v5799 = vadd.f32 %v5710, %v5798
        %v5800 = vpop.f32.mrf.mxu0
        %v5801 = vadd.f32 %v5712, %v5800
        %5802 = vmatmul.bf16.gmra.mxu0 %v4957
        %v5803 = vpop.f32.mrf.mxu0
        %v5804 = vadd.f32 %v5715, %v5803
        %v5805 = vpop.f32.mrf.mxu0
        %v5806 = vadd.f32 %v5717, %v5805
        %5807 = vmatmul.bf16.gmra.mxu0 %v4958
        %v5808 = vpop.f32.mrf.mxu0
        %v5809 = vadd.f32 %v5720, %v5808
        %v5810 = vpop.f32.mrf.mxu0
        %v5811 = vadd.f32 %v5722, %v5810
        %5812 = vmatmul.bf16.gmra.mxu0 %v4959
        %v5813 = vpop.f32.mrf.mxu0
        %v5814 = vadd.f32 %v5725, %v5813
        %v5815 = vpop.f32.mrf.mxu0
        %v5816 = vadd.f32 %v5727, %v5815
        %5817 = vmatmul.bf16.gmra.mxu0 %v4960
        %v5818 = vpop.f32.mrf.mxu0
        %v5819 = vadd.f32 %v5730, %v5818
        %v5820 = vpop.f32.mrf.mxu0
        %v5821 = vadd.f32 %v5732, %v5820
        %5822 = vdwg.mxu0
        %5823 = vmatpush.bf16.msra.mxu0 %v5524
        %5824 = vmatpush.bf16.msra.mxu0 %v5523
        %5825 = vmatpush.bf16.msra.mxu0 %v5522
        %5826 = vmatpush.bf16.msra.mxu0 %v5521
        %5827 = vmatpush.bf16.msra.mxu0 %v5520
        %5828 = vmatpush.bf16.msra.mxu0 %v5519
        %5829 = vmatpush.bf16.msra.mxu0 %v5518
        %5830 = vmatpush.bf16.msra.mxu0 %v5517
        %5831 = vmatmul.bf16.gmra.mxu0 %v5009
        %v5832 = vpop.f32.mrf.mxu0
        %v5833 = vadd.f32 %v5744, %v5832
        %v5834 = vpop.f32.mrf.mxu0
        %v5835 = vadd.f32 %v5746, %v5834
        %5836 = vmatmul.bf16.gmra.mxu0 %v5010
        %v5837 = vpop.f32.mrf.mxu0
        %v5838 = vadd.f32 %v5749, %v5837
        %v5839 = vpop.f32.mrf.mxu0
        %v5840 = vadd.f32 %v5751, %v5839
        %5841 = vmatmul.bf16.gmra.mxu0 %v5011
        %v5842 = vpop.f32.mrf.mxu0
        %v5843 = vadd.f32 %v5754, %v5842
        %v5844 = vpop.f32.mrf.mxu0
        %v5845 = vadd.f32 %v5756, %v5844
        %5846 = vmatmul.bf16.gmra.mxu0 %v5012
        %v5847 = vpop.f32.mrf.mxu0
        %v5848 = vadd.f32 %v5759, %v5847
        %v5849 = vpop.f32.mrf.mxu0
        %v5850 = vadd.f32 %v5761, %v5849
        %5851 = vmatmul.bf16.gmra.mxu0 %v5013
        %v5852 = vpop.f32.mrf.mxu0
        %v5853 = vadd.f32 %v5764, %v5852
        %v5854 = vpop.f32.mrf.mxu0
        %v5855 = vadd.f32 %v5766, %v5854
        %5856 = vmatmul.bf16.gmra.mxu0 %v5014
        %v5857 = vpop.f32.mrf.mxu0
        %v5858 = vadd.f32 %v5769, %v5857
        %v5859 = vpop.f32.mrf.mxu0
        %v5860 = vadd.f32 %v5771, %v5859
        %5861 = vmatmul.bf16.gmra.mxu0 %v5015
        %v5862 = vpop.f32.mrf.mxu0
        %v5863 = vadd.f32 %v5774, %v5862
        %v5864 = vpop.f32.mrf.mxu0
        %v5865 = vadd.f32 %v5776, %v5864
        %5866 = vmatmul.bf16.gmra.mxu0 %v5016
        %v5867 = vpop.f32.mrf.mxu0
        %v5868 = vadd.f32 %v5779, %v5867
        %v5869 = vpop.f32.mrf.mxu0
        %v5870 = vadd.f32 %v5781, %v5869
        %5871 = vmatmul.bf16.gmra.mxu0 %v5017
        %v5872 = vpop.f32.mrf.mxu0
        %v5873 = vadd.f32 %v5784, %v5872
        %v5874 = vpop.f32.mrf.mxu0
        %v5875 = vadd.f32 %v5786, %v5874
        %5876 = vmatmul.bf16.gmra.mxu0 %v5018
        %v5877 = vpop.f32.mrf.mxu0
        %v5878 = vadd.f32 %v5789, %v5877
        %v5879 = vpop.f32.mrf.mxu0
        %v5880 = vadd.f32 %v5791, %v5879
        %5881 = vmatmul.bf16.gmra.mxu0 %v5019
        %v5882 = vpop.f32.mrf.mxu0
        %v5883 = vadd.f32 %v5794, %v5882
        %v5884 = vpop.f32.mrf.mxu0
        %v5885 = vadd.f32 %v5796, %v5884
        %5886 = vmatmul.bf16.gmra.mxu0 %v5020
        %v5887 = vpop.f32.mrf.mxu0
        %v5888 = vadd.f32 %v5799, %v5887
        %v5889 = vpop.f32.mrf.mxu0
        %v5890 = vadd.f32 %v5801, %v5889
        %5891 = vmatmul.bf16.gmra.mxu0 %v5021
        %v5892 = vpop.f32.mrf.mxu0
        %v5893 = vadd.f32 %v5804, %v5892
        %v5894 = vpop.f32.mrf.mxu0
        %v5895 = vadd.f32 %v5806, %v5894
        %5896 = vmatmul.bf16.gmra.mxu0 %v5022
        %v5897 = vpop.f32.mrf.mxu0
        %v5898 = vadd.f32 %v5809, %v5897
        %v5899 = vpop.f32.mrf.mxu0
        %v5900 = vadd.f32 %v5811, %v5899
        %5901 = vmatmul.bf16.gmra.mxu0 %v5023
        %v5902 = vpop.f32.mrf.mxu0
        %v5903 = vadd.f32 %v5814, %v5902
        %v5904 = vpop.f32.mrf.mxu0
        %v5905 = vadd.f32 %v5816, %v5904
        %5906 = vmatmul.bf16.gmra.mxu0 %v5024
        %v5907 = vpop.f32.mrf.mxu0
        %v5908 = vadd.f32 %v5819, %v5907
        %v5909 = vpop.f32.mrf.mxu0
        %v5910 = vadd.f32 %v5821, %v5909
        %5911 = vdwg.mxu0
        %5912 = vmatpush.bf16.msra.mxu0 %v5532
        %5913 = vmatpush.bf16.msra.mxu0 %v5531
        %5914 = vmatpush.bf16.msra.mxu0 %v5530
        %5915 = vmatpush.bf16.msra.mxu0 %v5529
        %5916 = vmatpush.bf16.msra.mxu0 %v5528
        %5917 = vmatpush.bf16.msra.mxu0 %v5527
        %5918 = vmatpush.bf16.msra.mxu0 %v5526
        %5919 = vmatpush.bf16.msra.mxu0 %v5525
        %5920 = vmatmul.bf16.gmra.mxu0 %v4882
        %v5921 = vpop.f32.mrf.mxu0
        %v5922 = vadd.f32 %v5833, %v5921
        %v5923 = vpop.f32.mrf.mxu0
        %v5924 = vadd.f32 %v5835, %v5923
        %5925 = vmatmul.bf16.gmra.mxu0 %v4883
        %v5926 = vpop.f32.mrf.mxu0
        %v5927 = vadd.f32 %v5838, %v5926
        %v5928 = vpop.f32.mrf.mxu0
        %v5929 = vadd.f32 %v5840, %v5928
        %5930 = vmatmul.bf16.gmra.mxu0 %v4884
        %v5931 = vpop.f32.mrf.mxu0
        %v5932 = vadd.f32 %v5843, %v5931
        %v5933 = vpop.f32.mrf.mxu0
        %v5934 = vadd.f32 %v5845, %v5933
        %5935 = vmatmul.bf16.gmra.mxu0 %v4885
        %v5936 = vpop.f32.mrf.mxu0
        %v5937 = vadd.f32 %v5848, %v5936
        %v5938 = vpop.f32.mrf.mxu0
        %v5939 = vadd.f32 %v5850, %v5938
        %5940 = vmatmul.bf16.gmra.mxu0 %v4886
        %v5941 = vpop.f32.mrf.mxu0
        %v5942 = vadd.f32 %v5853, %v5941
        %v5943 = vpop.f32.mrf.mxu0
        %v5944 = vadd.f32 %v5855, %v5943
        %5945 = vmatmul.bf16.gmra.mxu0 %v4887
        %v5946 = vpop.f32.mrf.mxu0
        %v5947 = vadd.f32 %v5858, %v5946
        %v5948 = vpop.f32.mrf.mxu0
        %v5949 = vadd.f32 %v5860, %v5948
        %5950 = vmatmul.bf16.gmra.mxu0 %v4888
        %v5951 = vpop.f32.mrf.mxu0
        %v5952 = vadd.f32 %v5863, %v5951
        %v5953 = vpop.f32.mrf.mxu0
        %v5954 = vadd.f32 %v5865, %v5953
        %5955 = vmatmul.bf16.gmra.mxu0 %v4889
        %v5956 = vpop.f32.mrf.mxu0
        %v5957 = vadd.f32 %v5868, %v5956
        %v5958 = vpop.f32.mrf.mxu0
        %v5959 = vadd.f32 %v5870, %v5958
        %5960 = vmatmul.bf16.gmra.mxu0 %v4890
        %v5961 = vpop.f32.mrf.mxu0
        %v5962 = vadd.f32 %v5873, %v5961
        %v5963 = vpop.f32.mrf.mxu0
        %v5964 = vadd.f32 %v5875, %v5963
        %5965 = vmatmul.bf16.gmra.mxu0 %v4891
        %v5966 = vpop.f32.mrf.mxu0
        %v5967 = vadd.f32 %v5878, %v5966
        %v5968 = vpop.f32.mrf.mxu0
        %v5969 = vadd.f32 %v5880, %v5968
        %5970 = vmatmul.bf16.gmra.mxu0 %v4892
        %v5971 = vpop.f32.mrf.mxu0
        %v5972 = vadd.f32 %v5883, %v5971
        %v5973 = vpop.f32.mrf.mxu0
        %v5974 = vadd.f32 %v5885, %v5973
        %5975 = vmatmul.bf16.gmra.mxu0 %v4893
        %v5976 = vpop.f32.mrf.mxu0
        %v5977 = vadd.f32 %v5888, %v5976
        %v5978 = vpop.f32.mrf.mxu0
        %v5979 = vadd.f32 %v5890, %v5978
        %5980 = vmatmul.bf16.gmra.mxu0 %v4894
        %v5981 = vpop.f32.mrf.mxu0
        %v5982 = vadd.f32 %v5893, %v5981
        %v5983 = vpop.f32.mrf.mxu0
        %v5984 = vadd.f32 %v5895, %v5983
        %5985 = vmatmul.bf16.gmra.mxu0 %v4895
        %v5986 = vpop.f32.mrf.mxu0
        %v5987 = vadd.f32 %v5898, %v5986
        %v5988 = vpop.f32.mrf.mxu0
        %v5989 = vadd.f32 %v5900, %v5988
        %5990 = vmatmul.bf16.gmra.mxu0 %v4896
        %v5991 = vpop.f32.mrf.mxu0
        %v5992 = vadd.f32 %v5903, %v5991
        %v5993 = vpop.f32.mrf.mxu0
        %v5994 = vadd.f32 %v5905, %v5993
        %5995 = vmatmul.bf16.gmra.mxu0 %v5043
        %v5996 = vpop.f32.mrf.mxu0
        %v5997 = vadd.f32 %v5908, %v5996
        %v5998 = vpop.f32.mrf.mxu0
        %v5999 = vadd.f32 %v5910, %v5998
        %6000 = vdwg.mxu0
        %6001 = vmatpush.bf16.msra.mxu0 %v5540
        %6002 = vmatpush.bf16.msra.mxu0 %v5539
        %6003 = vmatpush.bf16.msra.mxu0 %v5538
        %6004 = vmatpush.bf16.msra.mxu0 %v5537
        %6005 = vmatpush.bf16.msra.mxu0 %v5536
        %6006 = vmatpush.bf16.msra.mxu0 %v5535
        %6007 = vmatpush.bf16.msra.mxu0 %v5534
        %6008 = vmatpush.bf16.msra.mxu0 %v5533
        %6009 = vmatmul.bf16.gmra.mxu0 %v4946
        %v6010 = vpop.f32.mrf.mxu0
        %v6011 = vadd.f32 %v5922, %v6010
        %v6012 = vpop.f32.mrf.mxu0
        %v6013 = vadd.f32 %v5924, %v6012
        %6014 = vmatmul.bf16.gmra.mxu0 %v4947
        %v6015 = vpop.f32.mrf.mxu0
        %v6016 = vadd.f32 %v5927, %v6015
        %v6017 = vpop.f32.mrf.mxu0
        %v6018 = vadd.f32 %v5929, %v6017
        %6019 = vmatmul.bf16.gmra.mxu0 %v4948
        %v6020 = vpop.f32.mrf.mxu0
        %v6021 = vadd.f32 %v5932, %v6020
        %v6022 = vpop.f32.mrf.mxu0
        %v6023 = vadd.f32 %v5934, %v6022
        %6024 = vmatmul.bf16.gmra.mxu0 %v4949
        %v6025 = vpop.f32.mrf.mxu0
        %v6026 = vadd.f32 %v5937, %v6025
        %v6027 = vpop.f32.mrf.mxu0
        %v6028 = vadd.f32 %v5939, %v6027
        %6029 = vmatmul.bf16.gmra.mxu0 %v4950
        %v6030 = vpop.f32.mrf.mxu0
        %v6031 = vadd.f32 %v5942, %v6030
        %v6032 = vpop.f32.mrf.mxu0
        %v6033 = vadd.f32 %v5944, %v6032
        %6034 = vmatmul.bf16.gmra.mxu0 %v4951
        %v6035 = vpop.f32.mrf.mxu0
        %v6036 = vadd.f32 %v5947, %v6035
        %v6037 = vpop.f32.mrf.mxu0
        %v6038 = vadd.f32 %v5949, %v6037
        %6039 = vmatmul.bf16.gmra.mxu0 %v4952
        %v6040 = vpop.f32.mrf.mxu0
        %v6041 = vadd.f32 %v5952, %v6040
        %v6042 = vpop.f32.mrf.mxu0
        %v6043 = vadd.f32 %v5954, %v6042
        %6044 = vmatmul.bf16.gmra.mxu0 %v4953
        %v6045 = vpop.f32.mrf.mxu0
        %v6046 = vadd.f32 %v5957, %v6045
        %v6047 = vpop.f32.mrf.mxu0
        %v6048 = vadd.f32 %v5959, %v6047
        %6049 = vmatmul.bf16.gmra.mxu0 %v4954
        %v6050 = vpop.f32.mrf.mxu0
        %v6051 = vadd.f32 %v5962, %v6050
        %v6052 = vpop.f32.mrf.mxu0
        %v6053 = vadd.f32 %v5964, %v6052
        %6054 = vmatmul.bf16.gmra.mxu0 %v4955
        %v6055 = vpop.f32.mrf.mxu0
        %v6056 = vadd.f32 %v5967, %v6055
        %v6057 = vpop.f32.mrf.mxu0
        %v6058 = vadd.f32 %v5969, %v6057
        %6059 = vmatmul.bf16.gmra.mxu0 %v4956
        %v6060 = vpop.f32.mrf.mxu0
        %v6061 = vadd.f32 %v5972, %v6060
        %v6062 = vpop.f32.mrf.mxu0
        %v6063 = vadd.f32 %v5974, %v6062
        %6064 = vmatmul.bf16.gmra.mxu0 %v4957
        %v6065 = vpop.f32.mrf.mxu0
        %v6066 = vadd.f32 %v5977, %v6065
        %v6067 = vpop.f32.mrf.mxu0
        %v6068 = vadd.f32 %v5979, %v6067
        %6069 = vmatmul.bf16.gmra.mxu0 %v4958
        %v6070 = vpop.f32.mrf.mxu0
        %v6071 = vadd.f32 %v5982, %v6070
        %v6072 = vpop.f32.mrf.mxu0
        %v6073 = vadd.f32 %v5984, %v6072
        %6074 = vmatmul.bf16.gmra.mxu0 %v4959
        %v6075 = vpop.f32.mrf.mxu0
        %v6076 = vadd.f32 %v5987, %v6075
        %v6077 = vpop.f32.mrf.mxu0
        %v6078 = vadd.f32 %v5989, %v6077
        %6079 = vmatmul.bf16.gmra.mxu0 %v4960
        %v6080 = vpop.f32.mrf.mxu0
        %v6081 = vadd.f32 %v5992, %v6080
        %v6082 = vpop.f32.mrf.mxu0
        %v6083 = vadd.f32 %v5994, %v6082
        %6084 = vmatmul.bf16.gmra.mxu0 %v5047
        %v6085 = vpop.f32.mrf.mxu0
        %v6086 = vadd.f32 %v5997, %v6085
        %v6087 = vpop.f32.mrf.mxu0
        %v6088 = vadd.f32 %v5999, %v6087
        %6089 = vdwg.mxu0
        %6090 = vmatpush.bf16.msra.mxu0 %v5548
        %6091 = vmatpush.bf16.msra.mxu0 %v5547
        %6092 = vmatpush.bf16.msra.mxu0 %v5546
        %6093 = vmatpush.bf16.msra.mxu0 %v5545
        %6094 = vmatpush.bf16.msra.mxu0 %v5544
        %6095 = vmatpush.bf16.msra.mxu0 %v5543
        %6096 = vmatpush.bf16.msra.mxu0 %v5542
        %6097 = vmatpush.bf16.msra.mxu0 %v5541
        %6098 = vmatmul.bf16.gmra.mxu0 %v5010
        %v6099 = vpop.f32.mrf.mxu0
        %v6100 = vadd.f32 %v6011, %v6099
        %v6101 = vpop.f32.mrf.mxu0
        %v6102 = vadd.f32 %v6013, %v6101
        %6103 = vmatmul.bf16.gmra.mxu0 %v5011
        %v6104 = vpop.f32.mrf.mxu0
        %v6105 = vadd.f32 %v6016, %v6104
        %v6106 = vpop.f32.mrf.mxu0
        %v6107 = vadd.f32 %v6018, %v6106
        %6108 = vmatmul.bf16.gmra.mxu0 %v5012
        %v6109 = vpop.f32.mrf.mxu0
        %v6110 = vadd.f32 %v6021, %v6109
        %v6111 = vpop.f32.mrf.mxu0
        %v6112 = vadd.f32 %v6023, %v6111
        %6113 = vmatmul.bf16.gmra.mxu0 %v5013
        %v6114 = vpop.f32.mrf.mxu0
        %v6115 = vadd.f32 %v6026, %v6114
        %v6116 = vpop.f32.mrf.mxu0
        %v6117 = vadd.f32 %v6028, %v6116
        %6118 = vmatmul.bf16.gmra.mxu0 %v5014
        %v6119 = vpop.f32.mrf.mxu0
        %v6120 = vadd.f32 %v6031, %v6119
        %v6121 = vpop.f32.mrf.mxu0
        %v6122 = vadd.f32 %v6033, %v6121
        %6123 = vmatmul.bf16.gmra.mxu0 %v5015
        %v6124 = vpop.f32.mrf.mxu0
        %v6125 = vadd.f32 %v6036, %v6124
        %v6126 = vpop.f32.mrf.mxu0
        %v6127 = vadd.f32 %v6038, %v6126
        %6128 = vmatmul.bf16.gmra.mxu0 %v5016
        %v6129 = vpop.f32.mrf.mxu0
        %v6130 = vadd.f32 %v6041, %v6129
        %v6131 = vpop.f32.mrf.mxu0
        %v6132 = vadd.f32 %v6043, %v6131
        %6133 = vmatmul.bf16.gmra.mxu0 %v5017
        %v6134 = vpop.f32.mrf.mxu0
        %v6135 = vadd.f32 %v6046, %v6134
        %v6136 = vpop.f32.mrf.mxu0
        %v6137 = vadd.f32 %v6048, %v6136
        %6138 = vmatmul.bf16.gmra.mxu0 %v5018
        %v6139 = vpop.f32.mrf.mxu0
        %v6140 = vadd.f32 %v6051, %v6139
        %v6141 = vpop.f32.mrf.mxu0
        %v6142 = vadd.f32 %v6053, %v6141
        %6143 = vmatmul.bf16.gmra.mxu0 %v5019
        %v6144 = vpop.f32.mrf.mxu0
        %v6145 = vadd.f32 %v6056, %v6144
        %v6146 = vpop.f32.mrf.mxu0
        %v6147 = vadd.f32 %v6058, %v6146
        %6148 = vmatmul.bf16.gmra.mxu0 %v5020
        %v6149 = vpop.f32.mrf.mxu0
        %v6150 = vadd.f32 %v6061, %v6149
        %v6151 = vpop.f32.mrf.mxu0
        %v6152 = vadd.f32 %v6063, %v6151
        %6153 = vmatmul.bf16.gmra.mxu0 %v5021
        %v6154 = vpop.f32.mrf.mxu0
        %v6155 = vadd.f32 %v6066, %v6154
        %v6156 = vpop.f32.mrf.mxu0
        %v6157 = vadd.f32 %v6068, %v6156
        %6158 = vmatmul.bf16.gmra.mxu0 %v5022
        %v6159 = vpop.f32.mrf.mxu0
        %v6160 = vadd.f32 %v6071, %v6159
        %v6161 = vpop.f32.mrf.mxu0
        %v6162 = vadd.f32 %v6073, %v6161
        %6163 = vmatmul.bf16.gmra.mxu0 %v5023
        %v6164 = vpop.f32.mrf.mxu0
        %v6165 = vadd.f32 %v6076, %v6164
        %v6166 = vpop.f32.mrf.mxu0
        %v6167 = vadd.f32 %v6078, %v6166
        %6168 = vmatmul.bf16.gmra.mxu0 %v5024
        %v6169 = vpop.f32.mrf.mxu0
        %v6170 = vadd.f32 %v6081, %v6169
        %v6171 = vpop.f32.mrf.mxu0
        %v6172 = vadd.f32 %v6083, %v6171
        %6173 = vmatmul.bf16.gmra.mxu0 %v5051
        %v6174 = vpop.f32.mrf.mxu0
        %v6175 = vadd.f32 %v6086, %v6174
        %v6176 = vpop.f32.mrf.mxu0
        %v6177 = vadd.f32 %v6088, %v6176
        %6178 = vdwg.mxu0
        %6179 = vmatpush.bf16.msra.mxu0 %v5556
        %6180 = vmatpush.bf16.msra.mxu0 %v5555
        %6181 = vmatpush.bf16.msra.mxu0 %v5554
        %6182 = vmatpush.bf16.msra.mxu0 %v5553
        %6183 = vmatpush.bf16.msra.mxu0 %v5552
        %6184 = vmatpush.bf16.msra.mxu0 %v5551
        %6185 = vmatpush.bf16.msra.mxu0 %v5550
        %6186 = vmatpush.bf16.msra.mxu0 %v5549
        %6187 = vmatmul.bf16.gmra.mxu0 %v4883
        %v6188 = vpop.f32.mrf.mxu0
        %v6189 = vadd.f32 %v6100, %v6188
        %v6190 = vpop.f32.mrf.mxu0
        %v6191 = vadd.f32 %v6102, %v6190
        %6192 = vmatmul.bf16.gmra.mxu0 %v4884
        %v6193 = vpop.f32.mrf.mxu0
        %v6194 = vadd.f32 %v6105, %v6193
        %v6195 = vpop.f32.mrf.mxu0
        %v6196 = vadd.f32 %v6107, %v6195
        %6197 = vmatmul.bf16.gmra.mxu0 %v4885
        %v6198 = vpop.f32.mrf.mxu0
        %v6199 = vadd.f32 %v6110, %v6198
        %v6200 = vpop.f32.mrf.mxu0
        %v6201 = vadd.f32 %v6112, %v6200
        %6202 = vmatmul.bf16.gmra.mxu0 %v4886
        %v6203 = vpop.f32.mrf.mxu0
        %v6204 = vadd.f32 %v6115, %v6203
        %v6205 = vpop.f32.mrf.mxu0
        %v6206 = vadd.f32 %v6117, %v6205
        %6207 = vmatmul.bf16.gmra.mxu0 %v4887
        %v6208 = vpop.f32.mrf.mxu0
        %v6209 = vadd.f32 %v6120, %v6208
        %v6210 = vpop.f32.mrf.mxu0
        %v6211 = vadd.f32 %v6122, %v6210
        %6212 = vmatmul.bf16.gmra.mxu0 %v4888
        %v6213 = vpop.f32.mrf.mxu0
        %v6214 = vadd.f32 %v6125, %v6213
        %v6215 = vpop.f32.mrf.mxu0
        %v6216 = vadd.f32 %v6127, %v6215
        %6217 = vmatmul.bf16.gmra.mxu0 %v4889
        %v6218 = vpop.f32.mrf.mxu0
        %v6219 = vadd.f32 %v6130, %v6218
        %v6220 = vpop.f32.mrf.mxu0
        %v6221 = vadd.f32 %v6132, %v6220
        %6222 = vmatmul.bf16.gmra.mxu0 %v4890
        %v6223 = vpop.f32.mrf.mxu0
        %v6224 = vadd.f32 %v6135, %v6223
        %v6225 = vpop.f32.mrf.mxu0
        %v6226 = vadd.f32 %v6137, %v6225
        %6227 = vmatmul.bf16.gmra.mxu0 %v4891
        %v6228 = vpop.f32.mrf.mxu0
        %v6229 = vadd.f32 %v6140, %v6228
        %v6230 = vpop.f32.mrf.mxu0
        %v6231 = vadd.f32 %v6142, %v6230
        %6232 = vmatmul.bf16.gmra.mxu0 %v4892
        %v6233 = vpop.f32.mrf.mxu0
        %v6234 = vadd.f32 %v6145, %v6233
        %v6235 = vpop.f32.mrf.mxu0
        %v6236 = vadd.f32 %v6147, %v6235
        %6237 = vmatmul.bf16.gmra.mxu0 %v4893
        %v6238 = vpop.f32.mrf.mxu0
        %v6239 = vadd.f32 %v6150, %v6238
        %v6240 = vpop.f32.mrf.mxu0
        %v6241 = vadd.f32 %v6152, %v6240
        %6242 = vmatmul.bf16.gmra.mxu0 %v4894
        %v6243 = vpop.f32.mrf.mxu0
        %v6244 = vadd.f32 %v6155, %v6243
        %v6245 = vpop.f32.mrf.mxu0
        %v6246 = vadd.f32 %v6157, %v6245
        %6247 = vmatmul.bf16.gmra.mxu0 %v4895
        %v6248 = vpop.f32.mrf.mxu0
        %v6249 = vadd.f32 %v6160, %v6248
        %v6250 = vpop.f32.mrf.mxu0
        %v6251 = vadd.f32 %v6162, %v6250
        %6252 = vmatmul.bf16.gmra.mxu0 %v4896
        %v6253 = vpop.f32.mrf.mxu0
        %v6254 = vadd.f32 %v6165, %v6253
        %v6255 = vpop.f32.mrf.mxu0
        %v6256 = vadd.f32 %v6167, %v6255
        %6257 = vmatmul.bf16.gmra.mxu0 %v5043
        %v6258 = vpop.f32.mrf.mxu0
        %v6259 = vadd.f32 %v6170, %v6258
        %v6260 = vpop.f32.mrf.mxu0
        %v6261 = vadd.f32 %v6172, %v6260
        %6262 = vmatmul.bf16.gmra.mxu0 %v5055
        %v6263 = vpop.f32.mrf.mxu0
        %v6264 = vadd.f32 %v6175, %v6263
        %v6265 = vpop.f32.mrf.mxu0
        %v6266 = vadd.f32 %v6177, %v6265
        %6267 = vdwg.mxu0
        %6268 = vmatpush.bf16.msra.mxu0 %v5564
        %6269 = vmatpush.bf16.msra.mxu0 %v5563
        %6270 = vmatpush.bf16.msra.mxu0 %v5562
        %6271 = vmatpush.bf16.msra.mxu0 %v5561
        %6272 = vmatpush.bf16.msra.mxu0 %v5560
        %6273 = vmatpush.bf16.msra.mxu0 %v5559
        %6274 = vmatpush.bf16.msra.mxu0 %v5558
        %6275 = vmatpush.bf16.msra.mxu0 %v5557
        %6276 = vmatmul.bf16.gmra.mxu0 %v4947
        %v6277 = vpop.f32.mrf.mxu0
        %v6278 = vadd.f32 %v6189, %v6277
        %v6279 = vpop.f32.mrf.mxu0
        %v6280 = vadd.f32 %v6191, %v6279
        %6281 = vmatmul.bf16.gmra.mxu0 %v4948
        %v6282 = vpop.f32.mrf.mxu0
        %v6283 = vadd.f32 %v6194, %v6282
        %v6284 = vpop.f32.mrf.mxu0
        %v6285 = vadd.f32 %v6196, %v6284
        %6286 = vmatmul.bf16.gmra.mxu0 %v4949
        %v6287 = vpop.f32.mrf.mxu0
        %v6288 = vadd.f32 %v6199, %v6287
        %v6289 = vpop.f32.mrf.mxu0
        %v6290 = vadd.f32 %v6201, %v6289
        %6291 = vmatmul.bf16.gmra.mxu0 %v4950
        %v6292 = vpop.f32.mrf.mxu0
        %v6293 = vadd.f32 %v6204, %v6292
        %v6294 = vpop.f32.mrf.mxu0
        %v6295 = vadd.f32 %v6206, %v6294
        %6296 = vmatmul.bf16.gmra.mxu0 %v4951
        %v6297 = vpop.f32.mrf.mxu0
        %v6298 = vadd.f32 %v6209, %v6297
        %v6299 = vpop.f32.mrf.mxu0
        %v6300 = vadd.f32 %v6211, %v6299
        %6301 = vmatmul.bf16.gmra.mxu0 %v4952
        %v6302 = vpop.f32.mrf.mxu0
        %v6303 = vadd.f32 %v6214, %v6302
        %v6304 = vpop.f32.mrf.mxu0
        %v6305 = vadd.f32 %v6216, %v6304
        %6306 = vmatmul.bf16.gmra.mxu0 %v4953
        %v6307 = vpop.f32.mrf.mxu0
        %v6308 = vadd.f32 %v6219, %v6307
        %v6309 = vpop.f32.mrf.mxu0
        %v6310 = vadd.f32 %v6221, %v6309
        %6311 = vmatmul.bf16.gmra.mxu0 %v4954
        %v6312 = vpop.f32.mrf.mxu0
        %v6313 = vadd.f32 %v6224, %v6312
        %v6314 = vpop.f32.mrf.mxu0
        %v6315 = vadd.f32 %v6226, %v6314
        %6316 = vmatmul.bf16.gmra.mxu0 %v4955
        %v6317 = vpop.f32.mrf.mxu0
        %v6318 = vadd.f32 %v6229, %v6317
        %v6319 = vpop.f32.mrf.mxu0
        %v6320 = vadd.f32 %v6231, %v6319
        %6321 = vmatmul.bf16.gmra.mxu0 %v4956
        %v6322 = vpop.f32.mrf.mxu0
        %v6323 = vadd.f32 %v6234, %v6322
        %v6324 = vpop.f32.mrf.mxu0
        %v6325 = vadd.f32 %v6236, %v6324
        %6326 = vmatmul.bf16.gmra.mxu0 %v4957
        %v6327 = vpop.f32.mrf.mxu0
        %v6328 = vadd.f32 %v6239, %v6327
        %v6329 = vpop.f32.mrf.mxu0
        %v6330 = vadd.f32 %v6241, %v6329
        %6331 = vmatmul.bf16.gmra.mxu0 %v4958
        %v6332 = vpop.f32.mrf.mxu0
        %v6333 = vadd.f32 %v6244, %v6332
        %v6334 = vpop.f32.mrf.mxu0
        %v6335 = vadd.f32 %v6246, %v6334
        %6336 = vmatmul.bf16.gmra.mxu0 %v4959
        %v6337 = vpop.f32.mrf.mxu0
        %v6338 = vadd.f32 %v6249, %v6337
        %v6339 = vpop.f32.mrf.mxu0
        %v6340 = vadd.f32 %v6251, %v6339
        %6341 = vmatmul.bf16.gmra.mxu0 %v4960
        %v6342 = vpop.f32.mrf.mxu0
        %v6343 = vadd.f32 %v6254, %v6342
        %v6344 = vpop.f32.mrf.mxu0
        %v6345 = vadd.f32 %v6256, %v6344
        %6346 = vmatmul.bf16.gmra.mxu0 %v5047
        %v6347 = vpop.f32.mrf.mxu0
        %v6348 = vadd.f32 %v6259, %v6347
        %v6349 = vpop.f32.mrf.mxu0
        %v6350 = vadd.f32 %v6261, %v6349
        %6351 = vmatmul.bf16.gmra.mxu0 %v5059
        %v6352 = vpop.f32.mrf.mxu0
        %v6353 = vadd.f32 %v6264, %v6352
        %v6354 = vpop.f32.mrf.mxu0
        %v6355 = vadd.f32 %v6266, %v6354
        %6356 = vdwg.mxu0
        %6357 = vmatpush.bf16.msra.mxu0 %v5572
        %6358 = vmatpush.bf16.msra.mxu0 %v5571
        %6359 = vmatpush.bf16.msra.mxu0 %v5570
        %6360 = vmatpush.bf16.msra.mxu0 %v5569
        %6361 = vmatpush.bf16.msra.mxu0 %v5568
        %6362 = vmatpush.bf16.msra.mxu0 %v5567
        %6363 = vmatpush.bf16.msra.mxu0 %v5566
        %6364 = vmatpush.bf16.msra.mxu0 %v5565
        %6365 = vmatmul.bf16.gmra.mxu0 %v5011
        %v6366 = vpop.f32.mrf.mxu0
        %v6367 = vadd.f32 %v6278, %v6366
        %v6368 = vpop.f32.mrf.mxu0
        %v6369 = vadd.f32 %v6280, %v6368
        %6370 = vmatmul.bf16.gmra.mxu0 %v5012
        %v6371 = vpop.f32.mrf.mxu0
        %v6372 = vadd.f32 %v6283, %v6371
        %v6373 = vpop.f32.mrf.mxu0
        %v6374 = vadd.f32 %v6285, %v6373
        %6375 = vmatmul.bf16.gmra.mxu0 %v5013
        %v6376 = vpop.f32.mrf.mxu0
        %v6377 = vadd.f32 %v6288, %v6376
        %v6378 = vpop.f32.mrf.mxu0
        %v6379 = vadd.f32 %v6290, %v6378
        %6380 = vmatmul.bf16.gmra.mxu0 %v5014
        %v6381 = vpop.f32.mrf.mxu0
        %v6382 = vadd.f32 %v6293, %v6381
        %v6383 = vpop.f32.mrf.mxu0
        %v6384 = vadd.f32 %v6295, %v6383
        %6385 = vmatmul.bf16.gmra.mxu0 %v5015
        %v6386 = vpop.f32.mrf.mxu0
        %v6387 = vadd.f32 %v6298, %v6386
        %v6388 = vpop.f32.mrf.mxu0
        %v6389 = vadd.f32 %v6300, %v6388
        %6390 = vmatmul.bf16.gmra.mxu0 %v5016
        %v6391 = vpop.f32.mrf.mxu0
        %v6392 = vadd.f32 %v6303, %v6391
        %v6393 = vpop.f32.mrf.mxu0
        %v6394 = vadd.f32 %v6305, %v6393
        %6395 = vmatmul.bf16.gmra.mxu0 %v5017
        %v6396 = vpop.f32.mrf.mxu0
        %v6397 = vadd.f32 %v6308, %v6396
        %v6398 = vpop.f32.mrf.mxu0
        %v6399 = vadd.f32 %v6310, %v6398
        %6400 = vmatmul.bf16.gmra.mxu0 %v5018
        %v6401 = vpop.f32.mrf.mxu0
        %v6402 = vadd.f32 %v6313, %v6401
        %v6403 = vpop.f32.mrf.mxu0
        %v6404 = vadd.f32 %v6315, %v6403
        %6405 = vmatmul.bf16.gmra.mxu0 %v5019
        %v6406 = vpop.f32.mrf.mxu0
        %v6407 = vadd.f32 %v6318, %v6406
        %v6408 = vpop.f32.mrf.mxu0
        %v6409 = vadd.f32 %v6320, %v6408
        %6410 = vmatmul.bf16.gmra.mxu0 %v5020
        %v6411 = vpop.f32.mrf.mxu0
        %v6412 = vadd.f32 %v6323, %v6411
        %v6413 = vpop.f32.mrf.mxu0
        %v6414 = vadd.f32 %v6325, %v6413
        %6415 = vmatmul.bf16.gmra.mxu0 %v5021
        %v6416 = vpop.f32.mrf.mxu0
        %v6417 = vadd.f32 %v6328, %v6416
        %v6418 = vpop.f32.mrf.mxu0
        %v6419 = vadd.f32 %v6330, %v6418
        %6420 = vmatmul.bf16.gmra.mxu0 %v5022
        %v6421 = vpop.f32.mrf.mxu0
        %v6422 = vadd.f32 %v6333, %v6421
        %v6423 = vpop.f32.mrf.mxu0
        %v6424 = vadd.f32 %v6335, %v6423
        %6425 = vmatmul.bf16.gmra.mxu0 %v5023
        %v6426 = vpop.f32.mrf.mxu0
        %v6427 = vadd.f32 %v6338, %v6426
        %v6428 = vpop.f32.mrf.mxu0
        %v6429 = vadd.f32 %v6340, %v6428
        %6430 = vmatmul.bf16.gmra.mxu0 %v5024
        %v6431 = vpop.f32.mrf.mxu0
        %v6432 = vadd.f32 %v6343, %v6431
        %v6433 = vpop.f32.mrf.mxu0
        %v6434 = vadd.f32 %v6345, %v6433
        %6435 = vmatmul.bf16.gmra.mxu0 %v5051
        %v6436 = vpop.f32.mrf.mxu0
        %v6437 = vadd.f32 %v6348, %v6436
        %v6438 = vpop.f32.mrf.mxu0
        %v6439 = vadd.f32 %v6350, %v6438
        %6440 = vmatmul.bf16.gmra.mxu0 %v5063
        %v6441 = vpop.f32.mrf.mxu0
        %v6442 = vadd.f32 %v6353, %v6441
        %v6443 = vpop.f32.mrf.mxu0
        %v6444 = vadd.f32 %v6355, %v6443
        %6445 = vdwg.mxu0
        %v6447 = vshrl.u32 %v361, 16
        %v6449 = vrot.slane %v6447, 4
        %v6450 = vshll.u32 %v361, 16
        %v6452 = vrot.slane %v6450, 5
        %v6453 = vor.u32 %v6449, %v6452
        %v6454 = vrot.slane %v6453, 4
        %v6456 = vshll.u32 %v362, 16
        %v6458 = vrot.slane %v6456, 5
        %v6459 = vsel %vm679, %v6454, %v6458
        %v6460 = vshrl.u32 %v362, 16
        %v6462 = vrot.slane %v6460, 4
        %v6463 = vor.u32 %v6462, %v6458
        %v6464 = vrot.slane %v6463, 4
        %v6466 = vshll.u32 %v363, 16
        %v6468 = vrot.slane %v6466, 5
        %v6469 = vsel %vm679, %v6464, %v6468
        %v6471 = vshrl.u32 %v365, 16
        %v6473 = vrot.slane %v6471, 4
        %v6474 = vshll.u32 %v365, 16
        %v6476 = vrot.slane %v6474, 5
        %v6477 = vor.u32 %v6473, %v6476
        %v6478 = vrot.slane %v6477, 4
        %v6480 = vshll.u32 %v366, 16
        %v6482 = vrot.slane %v6480, 5
        %v6483 = vsel %vm679, %v6478, %v6482
        %v6484 = vshrl.u32 %v366, 16
        %v6486 = vrot.slane %v6484, 4
        %v6487 = vor.u32 %v6486, %v6482
        %v6488 = vrot.slane %v6487, 4
        %v6490 = vshll.u32 %v367, 16
        %v6492 = vrot.slane %v6490, 5
        %v6493 = vsel %vm679, %v6488, %v6492
        %v6495 = vshrl.u32 %v369, 16
        %v6497 = vrot.slane %v6495, 4
        %v6498 = vshll.u32 %v369, 16
        %v6500 = vrot.slane %v6498, 5
        %v6501 = vor.u32 %v6497, %v6500
        %v6502 = vrot.slane %v6501, 4
        %v6504 = vshll.u32 %v370, 16
        %v6506 = vrot.slane %v6504, 5
        %v6507 = vsel %vm679, %v6502, %v6506
        %v6508 = vshrl.u32 %v370, 16
        %v6510 = vrot.slane %v6508, 4
        %v6511 = vor.u32 %v6510, %v6506
        %v6512 = vrot.slane %v6511, 4
        %v6514 = vshll.u32 %v371, 16
        %v6516 = vrot.slane %v6514, 5
        %v6517 = vsel %vm679, %v6512, %v6516
        %v6519 = vshrl.u32 %v373, 16
        %v6521 = vrot.slane %v6519, 4
        %v6522 = vshll.u32 %v373, 16
        %v6524 = vrot.slane %v6522, 5
        %v6525 = vor.u32 %v6521, %v6524
        %v6526 = vrot.slane %v6525, 4
        %v6528 = vshll.u32 %v374, 16
        %v6530 = vrot.slane %v6528, 5
        %v6531 = vsel %vm679, %v6526, %v6530
        %v6532 = vshrl.u32 %v374, 16
        %v6534 = vrot.slane %v6532, 4
        %v6535 = vor.u32 %v6534, %v6530
        %v6536 = vrot.slane %v6535, 4
        %v6538 = vshll.u32 %v375, 16
        %v6540 = vrot.slane %v6538, 5
        %v6541 = vsel %vm679, %v6536, %v6540
        %v6543 = vshrl.u32 %v377, 16
        %v6545 = vrot.slane %v6543, 4
        %v6546 = vshll.u32 %v377, 16
        %v6548 = vrot.slane %v6546, 5
        %v6549 = vor.u32 %v6545, %v6548
        %v6550 = vrot.slane %v6549, 4
        %v6552 = vshll.u32 %v378, 16
        %v6554 = vrot.slane %v6552, 5
        %v6555 = vsel %vm679, %v6550, %v6554
        %v6556 = vshrl.u32 %v378, 16
        %v6558 = vrot.slane %v6556, 4
        %v6559 = vor.u32 %v6558, %v6554
        %v6560 = vrot.slane %v6559, 4
        %v6562 = vshll.u32 %v379, 16
        %v6564 = vrot.slane %v6562, 5
        %v6565 = vsel %vm679, %v6560, %v6564
        %v6567 = vshrl.u32 %v381, 16
        %v6569 = vrot.slane %v6567, 4
        %v6570 = vshll.u32 %v381, 16
        %v6572 = vrot.slane %v6570, 5
        %v6573 = vor.u32 %v6569, %v6572
        %v6574 = vrot.slane %v6573, 4
        %v6576 = vshll.u32 %v382, 16
        %v6578 = vrot.slane %v6576, 5
        %v6579 = vsel %vm679, %v6574, %v6578
        %v6580 = vshrl.u32 %v382, 16
        %v6582 = vrot.slane %v6580, 4
        %v6583 = vor.u32 %v6582, %v6578
        %v6584 = vrot.slane %v6583, 4
        %v6586 = vshll.u32 %v383, 16
        %v6588 = vrot.slane %v6586, 5
        %v6589 = vsel %vm679, %v6584, %v6588
        %v6591 = vshrl.u32 %v385, 16
        %v6593 = vrot.slane %v6591, 4
        %v6594 = vshll.u32 %v385, 16
        %v6596 = vrot.slane %v6594, 5
        %v6597 = vor.u32 %v6593, %v6596
        %v6598 = vrot.slane %v6597, 4
        %v6600 = vshll.u32 %v386, 16
        %v6602 = vrot.slane %v6600, 5
        %v6603 = vsel %vm679, %v6598, %v6602
        %v6604 = vshrl.u32 %v386, 16
        %v6606 = vrot.slane %v6604, 4
        %v6607 = vor.u32 %v6606, %v6602
        %v6608 = vrot.slane %v6607, 4
        %v6610 = vshll.u32 %v387, 16
        %v6612 = vrot.slane %v6610, 5
        %v6613 = vsel %vm679, %v6608, %v6612
        %v6615 = vshrl.u32 %v389, 16
        %v6617 = vrot.slane %v6615, 4
        %v6618 = vshll.u32 %v389, 16
        %v6620 = vrot.slane %v6618, 5
        %v6621 = vor.u32 %v6617, %v6620
        %v6622 = vrot.slane %v6621, 4
        %v6624 = vshll.u32 %v390, 16
        %v6626 = vrot.slane %v6624, 5
        %v6627 = vsel %vm679, %v6622, %v6626
        %v6628 = vshrl.u32 %v390, 16
        %v6630 = vrot.slane %v6628, 4
        %v6631 = vor.u32 %v6630, %v6626
        %v6632 = vrot.slane %v6631, 4
        %v6634 = vshll.u32 %v391, 16
        %v6636 = vrot.slane %v6634, 5
        %v6637 = vsel %vm679, %v6632, %v6636
        %v6639 = vshrl.u32 %v393, 16
        %v6641 = vrot.slane %v6639, 4
        %v6642 = vshll.u32 %v393, 16
        %v6644 = vrot.slane %v6642, 5
        %v6645 = vor.u32 %v6641, %v6644
        %v6646 = vrot.slane %v6645, 4
        %v6648 = vshll.u32 %v394, 16
        %v6650 = vrot.slane %v6648, 5
        %v6651 = vsel %vm679, %v6646, %v6650
        %v6652 = vshrl.u32 %v394, 16
        %v6654 = vrot.slane %v6652, 4
        %v6655 = vor.u32 %v6654, %v6650
        %v6656 = vrot.slane %v6655, 4
        %v6658 = vshll.u32 %v395, 16
        %v6660 = vrot.slane %v6658, 5
        %v6661 = vsel %vm679, %v6656, %v6660
        %v6663 = vshrl.u32 %v397, 16
        %v6665 = vrot.slane %v6663, 4
        %v6666 = vshll.u32 %v397, 16
        %v6668 = vrot.slane %v6666, 5
        %v6669 = vor.u32 %v6665, %v6668
        %v6670 = vrot.slane %v6669, 4
        %v6672 = vshll.u32 %v398, 16
        %v6674 = vrot.slane %v6672, 5
        %v6675 = vsel %vm679, %v6670, %v6674
        %v6676 = vshrl.u32 %v398, 16
        %v6678 = vrot.slane %v6676, 4
        %v6679 = vor.u32 %v6678, %v6674
        %v6680 = vrot.slane %v6679, 4
        %v6682 = vshll.u32 %v399, 16
        %v6684 = vrot.slane %v6682, 5
        %v6685 = vsel %vm679, %v6680, %v6684
        %v6687 = vshrl.u32 %v401, 16
        %v6689 = vrot.slane %v6687, 4
        %v6690 = vshll.u32 %v401, 16
        %v6692 = vrot.slane %v6690, 5
        %v6693 = vor.u32 %v6689, %v6692
        %v6694 = vrot.slane %v6693, 4
        %v6696 = vshll.u32 %v402, 16
        %v6698 = vrot.slane %v6696, 5
        %v6699 = vsel %vm679, %v6694, %v6698
        %v6700 = vshrl.u32 %v402, 16
        %v6702 = vrot.slane %v6700, 4
        %v6703 = vor.u32 %v6702, %v6698
        %v6704 = vrot.slane %v6703, 4
        %v6706 = vshll.u32 %v403, 16
        %v6708 = vrot.slane %v6706, 5
        %v6709 = vsel %vm679, %v6704, %v6708
        %v6711 = vshrl.u32 %v405, 16
        %v6713 = vrot.slane %v6711, 4
        %v6714 = vshll.u32 %v405, 16
        %v6716 = vrot.slane %v6714, 5
        %v6717 = vor.u32 %v6713, %v6716
        %v6718 = vrot.slane %v6717, 4
        %v6720 = vshll.u32 %v406, 16
        %v6722 = vrot.slane %v6720, 5
        %v6723 = vsel %vm679, %v6718, %v6722
        %v6724 = vshrl.u32 %v406, 16
        %v6726 = vrot.slane %v6724, 4
        %v6727 = vor.u32 %v6726, %v6722
        %v6728 = vrot.slane %v6727, 4
        %v6730 = vshll.u32 %v407, 16
        %v6732 = vrot.slane %v6730, 5
        %v6733 = vsel %vm679, %v6728, %v6732
        %v6735 = vshrl.u32 %v409, 16
        %v6737 = vrot.slane %v6735, 4
        %v6738 = vshll.u32 %v409, 16
        %v6740 = vrot.slane %v6738, 5
        %v6741 = vor.u32 %v6737, %v6740
        %v6742 = vrot.slane %v6741, 4
        %v6744 = vshll.u32 %v410, 16
        %v6746 = vrot.slane %v6744, 5
        %v6747 = vsel %vm679, %v6742, %v6746
        %v6748 = vshrl.u32 %v410, 16
        %v6750 = vrot.slane %v6748, 4
        %v6751 = vor.u32 %v6750, %v6746
        %v6752 = vrot.slane %v6751, 4
        %v6754 = vshll.u32 %v411, 16
        %v6756 = vrot.slane %v6754, 5
        %v6757 = vsel %vm679, %v6752, %v6756
        %v6759 = vshrl.u32 %v413, 16
        %v6761 = vrot.slane %v6759, 4
        %v6762 = vshll.u32 %v413, 16
        %v6764 = vrot.slane %v6762, 5
        %v6765 = vor.u32 %v6761, %v6764
        %v6766 = vrot.slane %v6765, 4
        %v6768 = vshll.u32 %v414, 16
        %v6770 = vrot.slane %v6768, 5
        %v6771 = vsel %vm679, %v6766, %v6770
        %v6772 = vshrl.u32 %v414, 16
        %v6774 = vrot.slane %v6772, 4
        %v6775 = vor.u32 %v6774, %v6770
        %v6776 = vrot.slane %v6775, 4
        %v6778 = vshll.u32 %v415, 16
        %v6780 = vrot.slane %v6778, 5
        %v6781 = vsel %vm679, %v6776, %v6780
        %v6783 = vshrl.u32 %v417, 16
        %v6785 = vrot.slane %v6783, 4
        %v6786 = vshll.u32 %v417, 16
        %v6788 = vrot.slane %v6786, 5
        %v6789 = vor.u32 %v6785, %v6788
        %v6790 = vrot.slane %v6789, 4
        %v6792 = vshll.u32 %v418, 16
        %v6794 = vrot.slane %v6792, 5
        %v6795 = vsel %vm679, %v6790, %v6794
        %v6796 = vshrl.u32 %v418, 16
        %v6798 = vrot.slane %v6796, 4
        %v6799 = vor.u32 %v6798, %v6794
        %v6800 = vrot.slane %v6799, 4
        %v6802 = vshll.u32 %v419, 16
        %v6804 = vrot.slane %v6802, 5
        %v6805 = vsel %vm679, %v6800, %v6804
        %v6807 = vshrl.u32 %v421, 16
        %v6809 = vrot.slane %v6807, 4
        %v6810 = vshll.u32 %v421, 16
        %v6812 = vrot.slane %v6810, 5
        %v6813 = vor.u32 %v6809, %v6812
        %v6814 = vrot.slane %v6813, 4
        %v6816 = vshll.u32 %v422, 16
        %v6818 = vrot.slane %v6816, 5
        %v6819 = vsel %vm679, %v6814, %v6818
        %v6820 = vshrl.u32 %v422, 16
        %v6822 = vrot.slane %v6820, 4
        %v6823 = vor.u32 %v6822, %v6818
        %v6824 = vrot.slane %v6823, 4
        %v6826 = vshll.u32 %v423, 16
        %v6828 = vrot.slane %v6826, 5
        %v6829 = vsel %vm679, %v6824, %v6828
        %v6878 = vrot.slane %v361, 5
        %v6879 = vrot.slane %v6878, 4
        %v6880 = vrot.slane %v362, 5
        %v6881 = vsel %vm1366, %v6879, %v6880
        %v6882 = vrot.slane %v6880, 4
        %v6883 = vrot.slane %v363, 5
        %v6884 = vsel %vm1366, %v6882, %v6883
        %v6885 = vrot.slane %v365, 5
        %v6886 = vrot.slane %v6885, 4
        %v6887 = vrot.slane %v366, 5
        %v6888 = vsel %vm1366, %v6886, %v6887
        %v6889 = vrot.slane %v6887, 4
        %v6890 = vrot.slane %v367, 5
        %v6891 = vsel %vm1366, %v6889, %v6890
        %v6892 = vrot.slane %v369, 5
        %v6893 = vrot.slane %v6892, 4
        %v6894 = vrot.slane %v370, 5
        %v6895 = vsel %vm1366, %v6893, %v6894
        %v6896 = vrot.slane %v6894, 4
        %v6897 = vrot.slane %v371, 5
        %v6898 = vsel %vm1366, %v6896, %v6897
        %v6899 = vrot.slane %v373, 5
        %v6900 = vrot.slane %v6899, 4
        %v6901 = vrot.slane %v374, 5
        %v6902 = vsel %vm1366, %v6900, %v6901
        %v6903 = vrot.slane %v6901, 4
        %v6904 = vrot.slane %v375, 5
        %v6905 = vsel %vm1366, %v6903, %v6904
        %v6906 = vrot.slane %v377, 5
        %v6907 = vrot.slane %v6906, 4
        %v6908 = vrot.slane %v378, 5
        %v6909 = vsel %vm1366, %v6907, %v6908
        %v6910 = vrot.slane %v6908, 4
        %v6911 = vrot.slane %v379, 5
        %v6912 = vsel %vm1366, %v6910, %v6911
        %v6913 = vrot.slane %v381, 5
        %v6914 = vrot.slane %v6913, 4
        %v6915 = vrot.slane %v382, 5
        %v6916 = vsel %vm1366, %v6914, %v6915
        %v6917 = vrot.slane %v6915, 4
        %v6918 = vrot.slane %v383, 5
        %v6919 = vsel %vm1366, %v6917, %v6918
        %v6920 = vrot.slane %v385, 5
        %v6921 = vrot.slane %v6920, 4
        %v6922 = vrot.slane %v386, 5
        %v6923 = vsel %vm1366, %v6921, %v6922
        %v6924 = vrot.slane %v6922, 4
        %v6925 = vrot.slane %v387, 5
        %v6926 = vsel %vm1366, %v6924, %v6925
        %v6927 = vrot.slane %v389, 5
        %v6928 = vrot.slane %v6927, 4
        %v6929 = vrot.slane %v390, 5
        %v6930 = vsel %vm1366, %v6928, %v6929
        %v6931 = vrot.slane %v6929, 4
        %v6932 = vrot.slane %v391, 5
        %v6933 = vsel %vm1366, %v6931, %v6932
        %v6934 = vrot.slane %v393, 5
        %v6935 = vrot.slane %v6934, 4
        %v6936 = vrot.slane %v394, 5
        %v6937 = vsel %vm1366, %v6935, %v6936
        %v6938 = vrot.slane %v6936, 4
        %v6939 = vrot.slane %v395, 5
        %v6940 = vsel %vm1366, %v6938, %v6939
        %v6941 = vrot.slane %v397, 5
        %v6942 = vrot.slane %v6941, 4
        %v6943 = vrot.slane %v398, 5
        %v6944 = vsel %vm1366, %v6942, %v6943
        %v6945 = vrot.slane %v6943, 4
        %v6946 = vrot.slane %v399, 5
        %v6947 = vsel %vm1366, %v6945, %v6946
        %v6948 = vrot.slane %v401, 5
        %v6949 = vrot.slane %v6948, 4
        %v6950 = vrot.slane %v402, 5
        %v6951 = vsel %vm1366, %v6949, %v6950
        %v6952 = vrot.slane %v6950, 4
        %v6953 = vrot.slane %v403, 5
        %v6954 = vsel %vm1366, %v6952, %v6953
        %v6955 = vrot.slane %v405, 5
        %v6956 = vrot.slane %v6955, 4
        %v6957 = vrot.slane %v406, 5
        %v6958 = vsel %vm1366, %v6956, %v6957
        %v6959 = vrot.slane %v6957, 4
        %v6960 = vrot.slane %v407, 5
        %v6961 = vsel %vm1366, %v6959, %v6960
        %v6962 = vrot.slane %v409, 5
        %v6963 = vrot.slane %v6962, 4
        %v6964 = vrot.slane %v410, 5
        %v6965 = vsel %vm1366, %v6963, %v6964
        %v6966 = vrot.slane %v6964, 4
        %v6967 = vrot.slane %v411, 5
        %v6968 = vsel %vm1366, %v6966, %v6967
        %v6969 = vrot.slane %v413, 5
        %v6970 = vrot.slane %v6969, 4
        %v6971 = vrot.slane %v414, 5
        %v6972 = vsel %vm1366, %v6970, %v6971
        %v6973 = vrot.slane %v6971, 4
        %v6974 = vrot.slane %v415, 5
        %v6975 = vsel %vm1366, %v6973, %v6974
        %v6976 = vrot.slane %v417, 5
        %v6977 = vrot.slane %v6976, 4
        %v6978 = vrot.slane %v418, 5
        %v6979 = vsel %vm1366, %v6977, %v6978
        %v6980 = vrot.slane %v6978, 4
        %v6981 = vrot.slane %v419, 5
        %v6982 = vsel %vm1366, %v6980, %v6981
        %v6983 = vrot.slane %v421, 5
        %v6984 = vrot.slane %v6983, 4
        %v6985 = vrot.slane %v422, 5
        %v6986 = vsel %vm1366, %v6984, %v6985
        %v6987 = vrot.slane %v6985, 4
        %v6988 = vrot.slane %v423, 5
        %v6989 = vsel %vm1366, %v6987, %v6988
        %vm6990 = vsmask.f32 2304
        %vm6991 = vsmask.f32 6416
        %vm6992 = vmor %vm6990, %vm6991
        %v6993 = vrot.slane %v6447, 5
        %v6994 = vrot.slane %v6450, 6
        %v6995 = vor.u32 %v6993, %v6994
        %v6996 = vrot.slane %v6995, 4
        %v6997 = vrot.slane %v6460, 5
        %v6998 = vrot.slane %v6456, 6
        %v6999 = vor.u32 %v6997, %v6998
        %v7000 = vsel %vm6992, %v6996, %v6999
        %v7001 = vrot.slane %v6999, 4
        %v7002 = vshrl.u32 %v363, 16
        %v7004 = vrot.slane %v7002, 5
        %v7005 = vrot.slane %v6466, 6
        %v7006 = vor.u32 %v7004, %v7005
        %v7007 = vsel %vm6992, %v7001, %v7006
        %v7008 = vrot.slane %v6471, 5
        %v7009 = vrot.slane %v6474, 6
        %v7010 = vor.u32 %v7008, %v7009
        %v7011 = vrot.slane %v7010, 4
        %v7012 = vrot.slane %v6484, 5
        %v7013 = vrot.slane %v6480, 6
        %v7014 = vor.u32 %v7012, %v7013
        %v7015 = vsel %vm6992, %v7011, %v7014
        %v7016 = vrot.slane %v7014, 4
        %v7017 = vshrl.u32 %v367, 16
        %v7019 = vrot.slane %v7017, 5
        %v7020 = vrot.slane %v6490, 6
        %v7021 = vor.u32 %v7019, %v7020
        %v7022 = vsel %vm6992, %v7016, %v7021
        %v7023 = vrot.slane %v6495, 5
        %v7024 = vrot.slane %v6498, 6
        %v7025 = vor.u32 %v7023, %v7024
        %v7026 = vrot.slane %v7025, 4
        %v7027 = vrot.slane %v6508, 5
        %v7028 = vrot.slane %v6504, 6
        %v7029 = vor.u32 %v7027, %v7028
        %v7030 = vsel %vm6992, %v7026, %v7029
        %v7031 = vrot.slane %v7029, 4
        %v7032 = vshrl.u32 %v371, 16
        %v7034 = vrot.slane %v7032, 5
        %v7035 = vrot.slane %v6514, 6
        %v7036 = vor.u32 %v7034, %v7035
        %v7037 = vsel %vm6992, %v7031, %v7036
        %v7038 = vrot.slane %v6519, 5
        %v7039 = vrot.slane %v6522, 6
        %v7040 = vor.u32 %v7038, %v7039
        %v7041 = vrot.slane %v7040, 4
        %v7042 = vrot.slane %v6532, 5
        %v7043 = vrot.slane %v6528, 6
        %v7044 = vor.u32 %v7042, %v7043
        %v7045 = vsel %vm6992, %v7041, %v7044
        %v7046 = vrot.slane %v7044, 4
        %v7047 = vshrl.u32 %v375, 16
        %v7049 = vrot.slane %v7047, 5
        %v7050 = vrot.slane %v6538, 6
        %v7051 = vor.u32 %v7049, %v7050
        %v7052 = vsel %vm6992, %v7046, %v7051
        %v7053 = vrot.slane %v6543, 5
        %v7054 = vrot.slane %v6546, 6
        %v7055 = vor.u32 %v7053, %v7054
        %v7056 = vrot.slane %v7055, 4
        %v7057 = vrot.slane %v6556, 5
        %v7058 = vrot.slane %v6552, 6
        %v7059 = vor.u32 %v7057, %v7058
        %v7060 = vsel %vm6992, %v7056, %v7059
        %v7061 = vrot.slane %v7059, 4
        %v7062 = vshrl.u32 %v379, 16
        %v7064 = vrot.slane %v7062, 5
        %v7065 = vrot.slane %v6562, 6
        %v7066 = vor.u32 %v7064, %v7065
        %v7067 = vsel %vm6992, %v7061, %v7066
        %v7068 = vrot.slane %v6567, 5
        %v7069 = vrot.slane %v6570, 6
        %v7070 = vor.u32 %v7068, %v7069
        %v7071 = vrot.slane %v7070, 4
        %v7072 = vrot.slane %v6580, 5
        %v7073 = vrot.slane %v6576, 6
        %v7074 = vor.u32 %v7072, %v7073
        %v7075 = vsel %vm6992, %v7071, %v7074
        %v7076 = vrot.slane %v7074, 4
        %v7077 = vshrl.u32 %v383, 16
        %v7079 = vrot.slane %v7077, 5
        %v7080 = vrot.slane %v6586, 6
        %v7081 = vor.u32 %v7079, %v7080
        %v7082 = vsel %vm6992, %v7076, %v7081
        %v7083 = vrot.slane %v6591, 5
        %v7084 = vrot.slane %v6594, 6
        %v7085 = vor.u32 %v7083, %v7084
        %v7086 = vrot.slane %v7085, 4
        %v7087 = vrot.slane %v6604, 5
        %v7088 = vrot.slane %v6600, 6
        %v7089 = vor.u32 %v7087, %v7088
        %v7090 = vsel %vm6992, %v7086, %v7089
        %v7091 = vrot.slane %v7089, 4
        %v7092 = vshrl.u32 %v387, 16
        %v7094 = vrot.slane %v7092, 5
        %v7095 = vrot.slane %v6610, 6
        %v7096 = vor.u32 %v7094, %v7095
        %v7097 = vsel %vm6992, %v7091, %v7096
        %v7098 = vrot.slane %v6615, 5
        %v7099 = vrot.slane %v6618, 6
        %v7100 = vor.u32 %v7098, %v7099
        %v7101 = vrot.slane %v7100, 4
        %v7102 = vrot.slane %v6628, 5
        %v7103 = vrot.slane %v6624, 6
        %v7104 = vor.u32 %v7102, %v7103
        %v7105 = vsel %vm6992, %v7101, %v7104
        %v7106 = vrot.slane %v7104, 4
        %v7107 = vshrl.u32 %v391, 16
        %v7109 = vrot.slane %v7107, 5
        %v7110 = vrot.slane %v6634, 6
        %v7111 = vor.u32 %v7109, %v7110
        %v7112 = vsel %vm6992, %v7106, %v7111
        %v7113 = vrot.slane %v6639, 5
        %v7114 = vrot.slane %v6642, 6
        %v7115 = vor.u32 %v7113, %v7114
        %v7116 = vrot.slane %v7115, 4
        %v7117 = vrot.slane %v6652, 5
        %v7118 = vrot.slane %v6648, 6
        %v7119 = vor.u32 %v7117, %v7118
        %v7120 = vsel %vm6992, %v7116, %v7119
        %v7121 = vrot.slane %v7119, 4
        %v7122 = vshrl.u32 %v395, 16
        %v7124 = vrot.slane %v7122, 5
        %v7125 = vrot.slane %v6658, 6
        %v7126 = vor.u32 %v7124, %v7125
        %v7127 = vsel %vm6992, %v7121, %v7126
        %v7128 = vrot.slane %v6663, 5
        %v7129 = vrot.slane %v6666, 6
        %v7130 = vor.u32 %v7128, %v7129
        %v7131 = vrot.slane %v7130, 4
        %v7132 = vrot.slane %v6676, 5
        %v7133 = vrot.slane %v6672, 6
        %v7134 = vor.u32 %v7132, %v7133
        %v7135 = vsel %vm6992, %v7131, %v7134
        %v7136 = vrot.slane %v7134, 4
        %v7137 = vshrl.u32 %v399, 16
        %v7139 = vrot.slane %v7137, 5
        %v7140 = vrot.slane %v6682, 6
        %v7141 = vor.u32 %v7139, %v7140
        %v7142 = vsel %vm6992, %v7136, %v7141
        %v7143 = vrot.slane %v6687, 5
        %v7144 = vrot.slane %v6690, 6
        %v7145 = vor.u32 %v7143, %v7144
        %v7146 = vrot.slane %v7145, 4
        %v7147 = vrot.slane %v6700, 5
        %v7148 = vrot.slane %v6696, 6
        %v7149 = vor.u32 %v7147, %v7148
        %v7150 = vsel %vm6992, %v7146, %v7149
        %v7151 = vrot.slane %v7149, 4
        %v7152 = vshrl.u32 %v403, 16
        %v7154 = vrot.slane %v7152, 5
        %v7155 = vrot.slane %v6706, 6
        %v7156 = vor.u32 %v7154, %v7155
        %v7157 = vsel %vm6992, %v7151, %v7156
        %v7158 = vrot.slane %v6711, 5
        %v7159 = vrot.slane %v6714, 6
        %v7160 = vor.u32 %v7158, %v7159
        %v7161 = vrot.slane %v7160, 4
        %v7162 = vrot.slane %v6724, 5
        %v7163 = vrot.slane %v6720, 6
        %v7164 = vor.u32 %v7162, %v7163
        %v7165 = vsel %vm6992, %v7161, %v7164
        %v7166 = vrot.slane %v7164, 4
        %v7167 = vshrl.u32 %v407, 16
        %v7169 = vrot.slane %v7167, 5
        %v7170 = vrot.slane %v6730, 6
        %v7171 = vor.u32 %v7169, %v7170
        %v7172 = vsel %vm6992, %v7166, %v7171
        %v7173 = vrot.slane %v6735, 5
        %v7174 = vrot.slane %v6738, 6
        %v7175 = vor.u32 %v7173, %v7174
        %v7176 = vrot.slane %v7175, 4
        %v7177 = vrot.slane %v6748, 5
        %v7178 = vrot.slane %v6744, 6
        %v7179 = vor.u32 %v7177, %v7178
        %v7180 = vsel %vm6992, %v7176, %v7179
        %v7181 = vrot.slane %v7179, 4
        %v7182 = vshrl.u32 %v411, 16
        %v7184 = vrot.slane %v7182, 5
        %v7185 = vrot.slane %v6754, 6
        %v7186 = vor.u32 %v7184, %v7185
        %v7187 = vsel %vm6992, %v7181, %v7186
        %v7188 = vrot.slane %v6759, 5
        %v7189 = vrot.slane %v6762, 6
        %v7190 = vor.u32 %v7188, %v7189
        %v7191 = vrot.slane %v7190, 4
        %v7192 = vrot.slane %v6772, 5
        %v7193 = vrot.slane %v6768, 6
        %v7194 = vor.u32 %v7192, %v7193
        %v7195 = vsel %vm6992, %v7191, %v7194
        %v7196 = vrot.slane %v7194, 4
        %v7197 = vshrl.u32 %v415, 16
        %v7199 = vrot.slane %v7197, 5
        %v7200 = vrot.slane %v6778, 6
        %v7201 = vor.u32 %v7199, %v7200
        %v7202 = vsel %vm6992, %v7196, %v7201
        %v7203 = vrot.slane %v6783, 5
        %v7204 = vrot.slane %v6786, 6
        %v7205 = vor.u32 %v7203, %v7204
        %v7206 = vrot.slane %v7205, 4
        %v7207 = vrot.slane %v6796, 5
        %v7208 = vrot.slane %v6792, 6
        %v7209 = vor.u32 %v7207, %v7208
        %v7210 = vsel %vm6992, %v7206, %v7209
        %v7211 = vrot.slane %v7209, 4
        %v7212 = vshrl.u32 %v419, 16
        %v7214 = vrot.slane %v7212, 5
        %v7215 = vrot.slane %v6802, 6
        %v7216 = vor.u32 %v7214, %v7215
        %v7217 = vsel %vm6992, %v7211, %v7216
        %v7218 = vrot.slane %v6807, 5
        %v7219 = vrot.slane %v6810, 6
        %v7220 = vor.u32 %v7218, %v7219
        %v7221 = vrot.slane %v7220, 4
        %v7222 = vrot.slane %v6820, 5
        %v7223 = vrot.slane %v6816, 6
        %v7224 = vor.u32 %v7222, %v7223
        %v7225 = vsel %vm6992, %v7221, %v7224
        %v7226 = vrot.slane %v7224, 4
        %v7227 = vshrl.u32 %v423, 16
        %v7229 = vrot.slane %v7227, 5
        %v7230 = vrot.slane %v6826, 6
        %v7231 = vor.u32 %v7229, %v7230
        %v7232 = vsel %vm6992, %v7226, %v7231
        %v7234 = vshrl.u32 %v425, 16
        %v7236 = vrot.slane %v7234, 4
        %v7237 = vshll.u32 %v425, 16
        %v7239 = vrot.slane %v7237, 5
        %v7240 = vor.u32 %v7236, %v7239
        %v7241 = vrot.slane %v7240, 4
        %v7243 = vshll.u32 %v426, 16
        %v7245 = vrot.slane %v7243, 5
        %v7246 = vsel %vm679, %v7241, %v7245
        %v7247 = vshrl.u32 %v426, 16
        %v7249 = vrot.slane %v7247, 4
        %v7250 = vor.u32 %v7249, %v7245
        %v7251 = vrot.slane %v7250, 4
        %v7253 = vshll.u32 %v427, 16
        %v7255 = vrot.slane %v7253, 5
        %v7256 = vsel %vm679, %v7251, %v7255
        %v7260 = vrot.slane %v425, 5
        %v7261 = vrot.slane %v7260, 4
        %v7262 = vrot.slane %v426, 5
        %v7263 = vsel %vm1366, %v7261, %v7262
        %v7264 = vrot.slane %v7262, 4
        %v7265 = vrot.slane %v427, 5
        %v7266 = vsel %vm1366, %v7264, %v7265
        %v7267 = vrot.slane %v7234, 5
        %v7268 = vrot.slane %v7237, 6
        %v7269 = vor.u32 %v7267, %v7268
        %v7270 = vrot.slane %v7269, 4
        %v7271 = vrot.slane %v7247, 5
        %v7272 = vrot.slane %v7243, 6
        %v7273 = vor.u32 %v7271, %v7272
        %v7274 = vsel %vm6992, %v7270, %v7273
        %v7275 = vrot.slane %v7273, 4
        %v7276 = vshrl.u32 %v427, 16
        %v7278 = vrot.slane %v7276, 5
        %v7279 = vrot.slane %v7253, 6
        %v7280 = vor.u32 %v7278, %v7279
        %v7281 = vsel %vm6992, %v7275, %v7280
        %v7283 = vshrl.u32 %v429, 16
        %v7285 = vrot.slane %v7283, 4
        %v7286 = vshll.u32 %v429, 16
        %v7288 = vrot.slane %v7286, 5
        %v7289 = vor.u32 %v7285, %v7288
        %v7290 = vrot.slane %v7289, 4
        %v7292 = vshll.u32 %v430, 16
        %v7294 = vrot.slane %v7292, 5
        %v7295 = vsel %vm679, %v7290, %v7294
        %v7296 = vshrl.u32 %v430, 16
        %v7298 = vrot.slane %v7296, 4
        %v7299 = vor.u32 %v7298, %v7294
        %v7300 = vrot.slane %v7299, 4
        %v7302 = vshll.u32 %v431, 16
        %v7304 = vrot.slane %v7302, 5
        %v7305 = vsel %vm679, %v7300, %v7304
        %v7309 = vrot.slane %v429, 5
        %v7310 = vrot.slane %v7309, 4
        %v7311 = vrot.slane %v430, 5
        %v7312 = vsel %vm1366, %v7310, %v7311
        %v7313 = vrot.slane %v7311, 4
        %v7314 = vrot.slane %v431, 5
        %v7315 = vsel %vm1366, %v7313, %v7314
        %v7316 = vrot.slane %v7283, 5
        %v7317 = vrot.slane %v7286, 6
        %v7318 = vor.u32 %v7316, %v7317
        %v7319 = vrot.slane %v7318, 4
        %v7320 = vrot.slane %v7296, 5
        %v7321 = vrot.slane %v7292, 6
        %v7322 = vor.u32 %v7320, %v7321
        %v7323 = vsel %vm6992, %v7319, %v7322
        %v7324 = vrot.slane %v7322, 4
        %v7325 = vshrl.u32 %v431, 16
        %v7327 = vrot.slane %v7325, 5
        %v7328 = vrot.slane %v7302, 6
        %v7329 = vor.u32 %v7327, %v7328
        %v7330 = vsel %vm6992, %v7324, %v7329
        %v7331 = vunpack.c.l.b16 %v6459
        %v7332 = vunpack.c.l.b16 %v6469
        %v7333 = vunpack.c.l.b16 %v6483
        %v7334 = vunpack.c.l.b16 %v6493
        %v7335 = vunpack.c.l.b16 %v6507
        %v7336 = vunpack.c.l.b16 %v6517
        %v7337 = vunpack.c.l.b16 %v6531
        %v7338 = vunpack.c.l.b16 %v6541
        %v7339 = vunpack.c.l.b16 %v6555
        %v7340 = vunpack.c.l.b16 %v6565
        %v7341 = vunpack.c.l.b16 %v6579
        %v7342 = vunpack.c.l.b16 %v6589
        %v7343 = vunpack.c.l.b16 %v6603
        %v7344 = vunpack.c.l.b16 %v6613
        %v7345 = vunpack.c.l.b16 %v6627
        %v7346 = vunpack.c.l.b16 %v6637
        %v7347 = vunpack.c.l.b16 %v6651
        %v7348 = vunpack.c.l.b16 %v6661
        %v7349 = vunpack.c.l.b16 %v6675
        %v7350 = vunpack.c.l.b16 %v6685
        %v7351 = vunpack.c.l.b16 %v6699
        %v7352 = vunpack.c.l.b16 %v6709
        %v7353 = vunpack.c.l.b16 %v6723
        %v7354 = vunpack.c.l.b16 %v6733
        %v7355 = vunpack.c.l.b16 %v6747
        %v7356 = vunpack.c.l.b16 %v6757
        %v7357 = vunpack.c.l.b16 %v6771
        %v7358 = vunpack.c.l.b16 %v6781
        %v7359 = vunpack.c.l.b16 %v6795
        %v7360 = vunpack.c.l.b16 %v6805
        %v7361 = vunpack.c.l.b16 %v6819
        %v7362 = vunpack.c.l.b16 %v6829
        %v7363 = vpack.c.b16 %v7332, %v7331
        %v7364 = vpack.c.b16 %v7334, %v7333
        %v7365 = vpack.c.b16 %v7336, %v7335
        %v7366 = vpack.c.b16 %v7338, %v7337
        %v7367 = vpack.c.b16 %v7340, %v7339
        %v7368 = vpack.c.b16 %v7342, %v7341
        %v7369 = vpack.c.b16 %v7344, %v7343
        %v7370 = vpack.c.b16 %v7346, %v7345
        %v7371 = vpack.c.b16 %v7348, %v7347
        %v7372 = vpack.c.b16 %v7350, %v7349
        %v7373 = vpack.c.b16 %v7352, %v7351
        %v7374 = vpack.c.b16 %v7354, %v7353
        %v7375 = vpack.c.b16 %v7356, %v7355
        %v7376 = vpack.c.b16 %v7358, %v7357
        %v7377 = vpack.c.b16 %v7360, %v7359
        %v7378 = vpack.c.b16 %v7362, %v7361
        %v7395 = vunpack.c.l.b16 %v6881
        %v7396 = vunpack.c.l.b16 %v6884
        %v7397 = vunpack.c.l.b16 %v6888
        %v7398 = vunpack.c.l.b16 %v6891
        %v7399 = vunpack.c.l.b16 %v6895
        %v7400 = vunpack.c.l.b16 %v6898
        %v7401 = vunpack.c.l.b16 %v6902
        %v7402 = vunpack.c.l.b16 %v6905
        %v7403 = vunpack.c.l.b16 %v6909
        %v7404 = vunpack.c.l.b16 %v6912
        %v7405 = vunpack.c.l.b16 %v6916
        %v7406 = vunpack.c.l.b16 %v6919
        %v7407 = vunpack.c.l.b16 %v6923
        %v7408 = vunpack.c.l.b16 %v6926
        %v7409 = vunpack.c.l.b16 %v6930
        %v7410 = vunpack.c.l.b16 %v6933
        %v7411 = vunpack.c.l.b16 %v6937
        %v7412 = vunpack.c.l.b16 %v6940
        %v7413 = vunpack.c.l.b16 %v6944
        %v7414 = vunpack.c.l.b16 %v6947
        %v7415 = vunpack.c.l.b16 %v6951
        %v7416 = vunpack.c.l.b16 %v6954
        %v7417 = vunpack.c.l.b16 %v6958
        %v7418 = vunpack.c.l.b16 %v6961
        %v7419 = vunpack.c.l.b16 %v6965
        %v7420 = vunpack.c.l.b16 %v6968
        %v7421 = vunpack.c.l.b16 %v6972
        %v7422 = vunpack.c.l.b16 %v6975
        %v7423 = vunpack.c.l.b16 %v6979
        %v7424 = vunpack.c.l.b16 %v6982
        %v7425 = vunpack.c.l.b16 %v6986
        %v7426 = vunpack.c.l.b16 %v6989
        %v7427 = vpack.c.b16 %v7396, %v7395
        %v7428 = vpack.c.b16 %v7398, %v7397
        %v7429 = vpack.c.b16 %v7400, %v7399
        %v7430 = vpack.c.b16 %v7402, %v7401
        %v7431 = vpack.c.b16 %v7404, %v7403
        %v7432 = vpack.c.b16 %v7406, %v7405
        %v7433 = vpack.c.b16 %v7408, %v7407
        %v7434 = vpack.c.b16 %v7410, %v7409
        %v7435 = vpack.c.b16 %v7412, %v7411
        %v7436 = vpack.c.b16 %v7414, %v7413
        %v7437 = vpack.c.b16 %v7416, %v7415
        %v7438 = vpack.c.b16 %v7418, %v7417
        %v7439 = vpack.c.b16 %v7420, %v7419
        %v7440 = vpack.c.b16 %v7422, %v7421
        %v7441 = vpack.c.b16 %v7424, %v7423
        %v7442 = vpack.c.b16 %v7426, %v7425
        %v7459 = vunpack.c.l.b16 %v7000
        %v7460 = vunpack.c.l.b16 %v7007
        %v7461 = vunpack.c.l.b16 %v7015
        %v7462 = vunpack.c.l.b16 %v7022
        %v7463 = vunpack.c.l.b16 %v7030
        %v7464 = vunpack.c.l.b16 %v7037
        %v7465 = vunpack.c.l.b16 %v7045
        %v7466 = vunpack.c.l.b16 %v7052
        %v7467 = vunpack.c.l.b16 %v7060
        %v7468 = vunpack.c.l.b16 %v7067
        %v7469 = vunpack.c.l.b16 %v7075
        %v7470 = vunpack.c.l.b16 %v7082
        %v7471 = vunpack.c.l.b16 %v7090
        %v7472 = vunpack.c.l.b16 %v7097
        %v7473 = vunpack.c.l.b16 %v7105
        %v7474 = vunpack.c.l.b16 %v7112
        %v7475 = vunpack.c.l.b16 %v7120
        %v7476 = vunpack.c.l.b16 %v7127
        %v7477 = vunpack.c.l.b16 %v7135
        %v7478 = vunpack.c.l.b16 %v7142
        %v7479 = vunpack.c.l.b16 %v7150
        %v7480 = vunpack.c.l.b16 %v7157
        %v7481 = vunpack.c.l.b16 %v7165
        %v7482 = vunpack.c.l.b16 %v7172
        %v7483 = vunpack.c.l.b16 %v7180
        %v7484 = vunpack.c.l.b16 %v7187
        %v7485 = vunpack.c.l.b16 %v7195
        %v7486 = vunpack.c.l.b16 %v7202
        %v7487 = vunpack.c.l.b16 %v7210
        %v7488 = vunpack.c.l.b16 %v7217
        %v7489 = vunpack.c.l.b16 %v7225
        %v7490 = vunpack.c.l.b16 %v7232
        %v7491 = vpack.c.b16 %v7460, %v7459
        %v7492 = vpack.c.b16 %v7462, %v7461
        %v7493 = vpack.c.b16 %v7464, %v7463
        %v7494 = vpack.c.b16 %v7466, %v7465
        %v7495 = vpack.c.b16 %v7468, %v7467
        %v7496 = vpack.c.b16 %v7470, %v7469
        %v7497 = vpack.c.b16 %v7472, %v7471
        %v7498 = vpack.c.b16 %v7474, %v7473
        %v7499 = vpack.c.b16 %v7476, %v7475
        %v7500 = vpack.c.b16 %v7478, %v7477
        %v7501 = vpack.c.b16 %v7480, %v7479
        %v7502 = vpack.c.b16 %v7482, %v7481
        %v7503 = vpack.c.b16 %v7484, %v7483
        %v7504 = vpack.c.b16 %v7486, %v7485
        %v7505 = vpack.c.b16 %v7488, %v7487
        %v7506 = vpack.c.b16 %v7490, %v7489
        %v7523 = vunpack.c.l.b16 %v7246
        %v7524 = vunpack.c.l.b16 %v7256
        %v7525 = vpack.c.b16 %v7524, %v7523
        %v7527 = vunpack.c.l.b16 %v7263
        %v7528 = vunpack.c.l.b16 %v7266
        %v7529 = vpack.c.b16 %v7528, %v7527
        %v7531 = vunpack.c.l.b16 %v7274
        %v7532 = vunpack.c.l.b16 %v7281
        %v7533 = vpack.c.b16 %v7532, %v7531
        %v7535 = vunpack.c.l.b16 %v7295
        %v7536 = vunpack.c.l.b16 %v7305
        %v7537 = vpack.c.b16 %v7536, %v7535
        %v7539 = vunpack.c.l.b16 %v7312
        %v7540 = vunpack.c.l.b16 %v7315
        %v7541 = vpack.c.b16 %v7540, %v7539
        %v7543 = vunpack.c.l.b16 %v7323
        %v7544 = vunpack.c.l.b16 %v7330
        %v7545 = vpack.c.b16 %v7544, %v7543
        %v7547 = vld [vmem:[%s5] sm:$0xf]
        %v7548 = vld [vmem:[%s5 + $0x4] sm:$0xf]
        %v7549 = vld [vmem:[%s5 + $0x8] sm:$0xf]
        %v7550 = vld [vmem:[%s5 + $0xc] sm:$0xf]
        %v7551 = vld [vmem:[%s5 + $0x10] sm:$0xf]
        %v7552 = vld [vmem:[%s5 + $0x14] sm:$0xf]
        %v7553 = vld [vmem:[%s5 + $0x18] sm:$0xf]
        %v7554 = vld [vmem:[%s5 + $0x1c] sm:$0xf]
        %v7555 = vld [vmem:[%s5 + $0x20] sm:$0xf]
        %v7556 = vld [vmem:[%s5 + $0x24] sm:$0xf]
        %v7557 = vld [vmem:[%s5 + $0x28] sm:$0xf]
        %v7558 = vld [vmem:[%s5 + $0x2c] sm:$0xf]
        %v7559 = vld [vmem:[%s5 + $0x30] sm:$0xf]
        %v7560 = vld [vmem:[%s5 + $0x34] sm:$0xf]
        %v7561 = vld [vmem:[%s5 + $0x38] sm:$0xf]
        %v7562 = vld [vmem:[%s5 + $0x3c] sm:$0xf]
        %v7563 = vld [vmem:[%s5 + $0x40] sm:$0xf]
        %v7564 = vld [vmem:[%s5 + $0x44] sm:$0xf]
        %v7565 = vld [vmem:[%s5 + $0x48] sm:$0xf]
        %v7566 = vld [vmem:[%s5 + $0x4c] sm:$0xf]
        %v7567 = vld [vmem:[%s5 + $0x50] sm:$0xf]
        %v7568 = vld [vmem:[%s5 + $0x54] sm:$0xf]
        %v7569 = vld [vmem:[%s5 + $0x58] sm:$0xf]
        %v7570 = vld [vmem:[%s5 + $0x5c] sm:$0xf]
        %v7571 = vld [vmem:[%s5 + $0x60] sm:$0xf]
        %v7572 = vld [vmem:[%s5 + $0x64] sm:$0xf]
        %v7573 = vld [vmem:[%s5 + $0x68] sm:$0xf]
        %v7574 = vld [vmem:[%s5 + $0x6c] sm:$0xf]
        %v7575 = vld [vmem:[%s5 + $0x70] sm:$0xf]
        %v7576 = vld [vmem:[%s5 + $0x74] sm:$0xf]
        %v7577 = vld [vmem:[%s5 + $0x78] sm:$0xf]
        %v7578 = vld [vmem:[%s5 + $0x7c] sm:$0xf]
        %v7579 = vld [vmem:[%s5 + $0x80] sm:$0xf]
        %v7580 = vld [vmem:[%s5 + $0x84] sm:$0xf]
        %v7581 = vld [vmem:[%s5 + $0x88] sm:$0xf]
        %v7582 = vld [vmem:[%s5 + $0x8c] sm:$0xf]
        %v7583 = vld [vmem:[%s5 + $0x90] sm:$0xf]
        %v7584 = vld [vmem:[%s5 + $0x94] sm:$0xf]
        %v7585 = vld [vmem:[%s5 + $0x98] sm:$0xf]
        %v7586 = vld [vmem:[%s5 + $0x9c] sm:$0xf]
        %v7587 = vld [vmem:[%s5 + $0xa0] sm:$0xf]
        %v7588 = vld [vmem:[%s5 + $0xa4] sm:$0xf]
        %v7589 = vld [vmem:[%s5 + $0xa8] sm:$0xf]
        %v7590 = vld [vmem:[%s5 + $0xac] sm:$0xf]
        %v7591 = vld [vmem:[%s5 + $0xb0] sm:$0xf]
        %v7592 = vld [vmem:[%s5 + $0xb4] sm:$0xf]
        %v7593 = vld [vmem:[%s5 + $0xb8] sm:$0xf]
        %v7594 = vld [vmem:[%s5 + $0xbc] sm:$0xf]
        %v7595 = vld [vmem:[%s5 + $0xc0] sm:$0xf]
        %v7596 = vld [vmem:[%s5 + $0xc4] sm:$0xf]
        %v7597 = vld [vmem:[%s5 + $0xc8] sm:$0xf]
        %v7598 = vld [vmem:[%s5 + $0xcc] sm:$0xf]
        %v7599 = vld [vmem:[%s5 + $0xd0] sm:$0xf]
        %v7600 = vld [vmem:[%s5 + $0xd4] sm:$0xf]
        %v7601 = vld [vmem:[%s5 + $0xd8] sm:$0xf]
        %v7602 = vld [vmem:[%s5 + $0xdc] sm:$0xf]
        %v7603 = vld [vmem:[%s5 + $0xe0] sm:$0xf]
        %v7604 = vld [vmem:[%s5 + $0xe4] sm:$0xf]
        %v7605 = vld [vmem:[%s5 + $0xe8] sm:$0xf]
        %v7606 = vld [vmem:[%s5 + $0xec] sm:$0xf]
        %v7607 = vld [vmem:[%s5 + $0xf0] sm:$0xf]
        %v7608 = vld [vmem:[%s5 + $0xf4] sm:$0xf]
        %v7609 = vld [vmem:[%s5 + $0xf8] sm:$0xf]
        %v7610 = vld [vmem:[%s5 + $0xfc] sm:$0xf]
        %v7611 = vld [vmem:[%s5 + $0x100] sm:$0xf]
        %v7612 = vld [vmem:[%s5 + $0x104] sm:$0xf]
        %v7613 = vld [vmem:[%s5 + $0x108] sm:$0xf]
        %v7614 = vld [vmem:[%s5 + $0x10c] sm:$0xf]
        %v7615 = vld [vmem:[%s5 + $0x110] sm:$0xf]
        %v7616 = vld [vmem:[%s5 + $0x114] sm:$0xf]
        %v7617 = vld [vmem:[%s5 + $0x118] sm:$0xf]
        %v7618 = vld [vmem:[%s5 + $0x11c] sm:$0xf]
        %v7619 = vld [vmem:[%s5 + $0x120] sm:$0xf]
        %v7620 = vld [vmem:[%s5 + $0x124] sm:$0xf]
        %v7621 = vld [vmem:[%s5 + $0x128] sm:$0xf]
        %v7622 = vld [vmem:[%s5 + $0x12c] sm:$0xf]
        %v7623 = vld [vmem:[%s5 + $0x130] sm:$0xf]
        %v7624 = vld [vmem:[%s5 + $0x134] sm:$0xf]
        %v7625 = vld [vmem:[%s5 + $0x138] sm:$0xf]
        %v7626 = vld [vmem:[%s5 + $0x13c] sm:$0xf]
        %v7627 = vld [vmem:[%s5 + $0x140] sm:$0xf]
        %v7628 = vld [vmem:[%s5 + $0x144] sm:$0xf]
        %v7629 = vld [vmem:[%s5 + $0x148] sm:$0xf]
        %v7630 = vld [vmem:[%s5 + $0x14c] sm:$0xf]
        %v7631 = vld [vmem:[%s5 + $0x150] sm:$0xf]
        %v7632 = vld [vmem:[%s5 + $0x154] sm:$0xf]
        %v7633 = vld [vmem:[%s5 + $0x158] sm:$0xf]
        %v7634 = vld [vmem:[%s5 + $0x15c] sm:$0xf]
        %v7635 = vld [vmem:[%s5 + $0x160] sm:$0xf]
        %v7636 = vld [vmem:[%s5 + $0x164] sm:$0xf]
        %v7637 = vld [vmem:[%s5 + $0x168] sm:$0xf]
        %v7638 = vld [vmem:[%s5 + $0x16c] sm:$0xf]
        %v7639 = vld [vmem:[%s5 + $0x170] sm:$0xf]
        %v7640 = vld [vmem:[%s5 + $0x174] sm:$0xf]
        %v7641 = vld [vmem:[%s5 + $0x178] sm:$0xf]
        %v7642 = vld [vmem:[%s5 + $0x17c] sm:$0xf]
        %v7643 = vld [vmem:[%s5 + $0x180] sm:$0xf]
        %v7644 = vld [vmem:[%s5 + $0x184] sm:$0xf]
        %v7645 = vld [vmem:[%s5 + $0x188] sm:$0xf]
        %v7646 = vld [vmem:[%s5 + $0x18c] sm:$0xf]
        %v7647 = vld [vmem:[%s5 + $0x190] sm:$0xf]
        %v7648 = vld [vmem:[%s5 + $0x194] sm:$0xf]
        %v7649 = vld [vmem:[%s5 + $0x198] sm:$0xf]
        %v7650 = vld [vmem:[%s5 + $0x19c] sm:$0xf]
        %v7651 = vld [vmem:[%s5 + $0x1a0] sm:$0xf]
        %v7652 = vld [vmem:[%s5 + $0x1a4] sm:$0xf]
        %v7653 = vld [vmem:[%s5 + $0x1a8] sm:$0xf]
        %v7654 = vld [vmem:[%s5 + $0x1ac] sm:$0xf]
        %v7655 = vld [vmem:[%s5 + $0x1b0] sm:$0xf]
        %v7656 = vld [vmem:[%s5 + $0x1b4] sm:$0xf]
        %v7657 = vld [vmem:[%s5 + $0x1b8] sm:$0xf]
        %v7658 = vld [vmem:[%s5 + $0x1bc] sm:$0xf]
        %v7659 = vld [vmem:[%s5 + $0x1c0] sm:$0xf]
        %v7660 = vld [vmem:[%s5 + $0x1c4] sm:$0xf]
        %v7661 = vld [vmem:[%s5 + $0x1c8] sm:$0xf]
        %v7662 = vld [vmem:[%s5 + $0x1cc] sm:$0xf]
        %v7663 = vld [vmem:[%s5 + $0x1d0] sm:$0xf]
        %v7664 = vld [vmem:[%s5 + $0x1d4] sm:$0xf]
        %v7665 = vld [vmem:[%s5 + $0x1d8] sm:$0xf]
        %v7666 = vld [vmem:[%s5 + $0x1dc] sm:$0xf]
        %v7667 = vld [vmem:[%s5 + $0x1e0] sm:$0xf]
        %v7668 = vld [vmem:[%s5 + $0x1e4] sm:$0xf]
        %v7669 = vld [vmem:[%s5 + $0x1e8] sm:$0xf]
        %v7670 = vld [vmem:[%s5 + $0x1ec] sm:$0xf]
        %v7671 = vld [vmem:[%s5 + $0x1f0] sm:$0xf]
        %v7672 = vld [vmem:[%s5 + $0x1f4] sm:$0xf]
        %v7673 = vld [vmem:[%s5 + $0x1f8] sm:$0xf]
        %v7674 = vld [vmem:[%s5 + $0x1fc] sm:$0xf]
        %v7675 = vld [vmem:[%s5 + $0x200] sm:$0xf]
        %v7676 = vld [vmem:[%s5 + $0x204] sm:$0xf]
        %v7677 = vld [vmem:[%s5 + $0x208] sm:$0xf]
        %v7678 = vld [vmem:[%s5 + $0x20c] sm:$0xf]
        %v7679 = vld [vmem:[%s5 + $0x210] sm:$0xf]
        %v7680 = vld [vmem:[%s5 + $0x214] sm:$0xf]
        %v7681 = vld [vmem:[%s5 + $0x218] sm:$0xf]
        %v7682 = vld [vmem:[%s5 + $0x21c] sm:$0xf]
        %v7683 = vld [vmem:[%s5 + $0x220] sm:$0xf]
        %v7684 = vld [vmem:[%s5 + $0x224] sm:$0xf]
        %v7685 = vld [vmem:[%s5 + $0x228] sm:$0xf]
        %v7686 = vld [vmem:[%s5 + $0x22c] sm:$0xf]
        %v7687 = vld [vmem:[%s5 + $0x230] sm:$0xf]
        %v7688 = vld [vmem:[%s5 + $0x234] sm:$0xf]
        %v7689 = vld [vmem:[%s5 + $0x238] sm:$0xf]
        %v7690 = vld [vmem:[%s5 + $0x23c] sm:$0xf]
        %v7691 = vld [vmem:[%s6] sm:$0x1]
        %v7693 = vperm.slane %v7691, 0
        %v7839 = vunpack.c.l.b16 %v7547
        %v7840 = vunpack.c.l.b16 %v7548
        %v7841 = vunpack.c.l.b16 %v7549
        %v7842 = vunpack.c.l.b16 %v7550
        %v7843 = vunpack.c.l.b16 %v7551
        %v7844 = vunpack.c.l.b16 %v7552
        %v7845 = vunpack.c.l.b16 %v7553
        %v7846 = vunpack.c.l.b16 %v7554
        %v7847 = vunpack.c.l.b16 %v7555
        %v7848 = vunpack.c.l.b16 %v7556
        %v7849 = vunpack.c.l.b16 %v7557
        %v7850 = vunpack.c.l.b16 %v7558
        %v7851 = vunpack.c.l.b16 %v7559
        %v7852 = vunpack.c.l.b16 %v7560
        %v7853 = vunpack.c.l.b16 %v7561
        %v7854 = vunpack.c.l.b16 %v7562
        %v7855 = vunpack.c.l.b16 %v7563
        %v7856 = vunpack.c.l.b16 %v7564
        %v7857 = vunpack.c.l.b16 %v7565
        %v7858 = vunpack.c.l.b16 %v7566
        %v7859 = vunpack.c.l.b16 %v7567
        %v7860 = vunpack.c.l.b16 %v7568
        %v7861 = vunpack.c.l.b16 %v7569
        %v7862 = vunpack.c.l.b16 %v7570
        %v7863 = vunpack.c.l.b16 %v7571
        %v7864 = vunpack.c.l.b16 %v7572
        %v7865 = vunpack.c.l.b16 %v7573
        %v7866 = vunpack.c.l.b16 %v7574
        %v7867 = vunpack.c.l.b16 %v7575
        %v7868 = vunpack.c.l.b16 %v7576
        %v7869 = vunpack.c.l.b16 %v7577
        %v7870 = vunpack.c.l.b16 %v7578
        %v7871 = vunpack.c.l.b16 %v7579
        %v7872 = vunpack.c.l.b16 %v7580
        %v7873 = vunpack.c.l.b16 %v7581
        %v7874 = vunpack.c.l.b16 %v7582
        %v7875 = vunpack.c.l.b16 %v7583
        %v7876 = vunpack.c.l.b16 %v7584
        %v7877 = vunpack.c.l.b16 %v7585
        %v7878 = vunpack.c.l.b16 %v7586
        %v7879 = vunpack.c.l.b16 %v7587
        %v7880 = vunpack.c.l.b16 %v7588
        %v7881 = vunpack.c.l.b16 %v7589
        %v7882 = vunpack.c.l.b16 %v7590
        %v7883 = vunpack.c.l.b16 %v7591
        %v7884 = vunpack.c.l.b16 %v7592
        %v7885 = vunpack.c.l.b16 %v7593
        %v7886 = vunpack.c.l.b16 %v7594
        %v7887 = vunpack.c.l.b16 %v7595
        %v7888 = vunpack.c.l.b16 %v7596
        %v7889 = vunpack.c.l.b16 %v7597
        %v7890 = vunpack.c.l.b16 %v7598
        %v7891 = vunpack.c.l.b16 %v7599
        %v7892 = vunpack.c.l.b16 %v7600
        %v7893 = vunpack.c.l.b16 %v7601
        %v7894 = vunpack.c.l.b16 %v7602
        %v7895 = vunpack.c.l.b16 %v7603
        %v7896 = vunpack.c.l.b16 %v7604
        %v7897 = vunpack.c.l.b16 %v7605
        %v7898 = vunpack.c.l.b16 %v7606
        %v7899 = vunpack.c.l.b16 %v7607
        %v7900 = vunpack.c.l.b16 %v7608
        %v7901 = vunpack.c.l.b16 %v7609
        %v7902 = vunpack.c.l.b16 %v7610
        %v7903 = vunpack.c.l.b16 %v7611
        %v7904 = vunpack.c.l.b16 %v7612
        %v7905 = vunpack.c.l.b16 %v7613
        %v7906 = vunpack.c.l.b16 %v7614
        %v7907 = vunpack.c.l.b16 %v7615
        %v7908 = vunpack.c.l.b16 %v7616
        %v7909 = vunpack.c.l.b16 %v7617
        %v7910 = vunpack.c.l.b16 %v7618
        %v7911 = vunpack.c.l.b16 %v7619
        %v7912 = vunpack.c.l.b16 %v7620
        %v7913 = vunpack.c.l.b16 %v7621
        %v7914 = vunpack.c.l.b16 %v7622
        %v7915 = vunpack.c.l.b16 %v7623
        %v7916 = vunpack.c.l.b16 %v7624
        %v7917 = vunpack.c.l.b16 %v7625
        %v7918 = vunpack.c.l.b16 %v7626
        %v7919 = vunpack.c.l.b16 %v7627
        %v7920 = vunpack.c.l.b16 %v7628
        %v7921 = vunpack.c.l.b16 %v7629
        %v7922 = vunpack.c.l.b16 %v7630
        %v7923 = vunpack.c.l.b16 %v7631
        %v7924 = vunpack.c.l.b16 %v7632
        %v7925 = vunpack.c.l.b16 %v7633
        %v7926 = vunpack.c.l.b16 %v7634
        %v7927 = vunpack.c.l.b16 %v7635
        %v7928 = vunpack.c.l.b16 %v7636
        %v7929 = vunpack.c.l.b16 %v7637
        %v7930 = vunpack.c.l.b16 %v7638
        %v7931 = vunpack.c.l.b16 %v7639
        %v7932 = vunpack.c.l.b16 %v7640
        %v7933 = vunpack.c.l.b16 %v7641
        %v7934 = vunpack.c.l.b16 %v7642
        %v7935 = vunpack.c.l.b16 %v7643
        %v7936 = vunpack.c.l.b16 %v7644
        %v7937 = vunpack.c.l.b16 %v7645
        %v7938 = vunpack.c.l.b16 %v7646
        %v7939 = vunpack.c.l.b16 %v7647
        %v7940 = vunpack.c.l.b16 %v7648
        %v7941 = vunpack.c.l.b16 %v7649
        %v7942 = vunpack.c.l.b16 %v7650
        %v7943 = vunpack.c.l.b16 %v7651
        %v7944 = vunpack.c.l.b16 %v7652
        %v7945 = vunpack.c.l.b16 %v7653
        %v7946 = vunpack.c.l.b16 %v7654
        %v7947 = vunpack.c.l.b16 %v7655
        %v7948 = vunpack.c.l.b16 %v7656
        %v7949 = vunpack.c.l.b16 %v7657
        %v7950 = vunpack.c.l.b16 %v7658
        %v7951 = vunpack.c.l.b16 %v7659
        %v7952 = vunpack.c.l.b16 %v7660
        %v7953 = vunpack.c.l.b16 %v7661
        %v7954 = vunpack.c.l.b16 %v7662
        %v7955 = vunpack.c.l.b16 %v7663
        %v7956 = vunpack.c.l.b16 %v7664
        %v7957 = vunpack.c.l.b16 %v7665
        %v7958 = vunpack.c.l.b16 %v7666
        %v7959 = vunpack.c.l.b16 %v7667
        %v7960 = vunpack.c.l.b16 %v7668
        %v7961 = vunpack.c.l.b16 %v7669
        %v7962 = vunpack.c.l.b16 %v7670
        %v7963 = vunpack.c.l.b16 %v7671
        %v7964 = vunpack.c.l.b16 %v7672
        %v7965 = vunpack.c.l.b16 %v7673
        %v7966 = vunpack.c.l.b16 %v7674
        %v7967 = vunpack.c.l.b16 %v7675
        %v7968 = vunpack.c.l.b16 %v7676
        %v7969 = vunpack.c.l.b16 %v7677
        %v7970 = vunpack.c.l.b16 %v7678
        %v7971 = vunpack.c.l.b16 %v7679
        %v7972 = vunpack.c.l.b16 %v7680
        %v7973 = vunpack.c.l.b16 %v7681
        %v7974 = vunpack.c.l.b16 %v7682
        %v7975 = vunpack.c.l.b16 %v7683
        %v7976 = vunpack.c.l.b16 %v7684
        %v7977 = vunpack.c.l.b16 %v7685
        %v7978 = vunpack.c.l.b16 %v7686
        %v7979 = vunpack.c.l.b16 %v7687
        %v7980 = vunpack.c.l.b16 %v7688
        %v7981 = vunpack.c.l.b16 %v7689
        %v7982 = vunpack.c.l.b16 %v7690
        %v7983 = vpack.c.b16 %v7840, %v7839
        %v7984 = vpack.c.b16 %v7842, %v7841
        %v7985 = vpack.c.b16 %v7844, %v7843
        %v7986 = vpack.c.b16 %v7846, %v7845
        %v7987 = vpack.c.b16 %v7848, %v7847
        %v7988 = vpack.c.b16 %v7850, %v7849
        %v7989 = vpack.c.b16 %v7852, %v7851
        %v7990 = vpack.c.b16 %v7854, %v7853
        %v7991 = vpack.c.b16 %v7856, %v7855
        %v7992 = vpack.c.b16 %v7858, %v7857
        %v7993 = vpack.c.b16 %v7860, %v7859
        %v7994 = vpack.c.b16 %v7862, %v7861
        %v7995 = vpack.c.b16 %v7864, %v7863
        %v7996 = vpack.c.b16 %v7866, %v7865
        %v7997 = vpack.c.b16 %v7868, %v7867
        %v7998 = vpack.c.b16 %v7870, %v7869
        %v7999 = vpack.c.b16 %v7872, %v7871
        %v8000 = vpack.c.b16 %v7874, %v7873
        %v8001 = vpack.c.b16 %v7876, %v7875
        %v8002 = vpack.c.b16 %v7878, %v7877
        %v8003 = vpack.c.b16 %v7880, %v7879
        %v8004 = vpack.c.b16 %v7882, %v7881
        %v8005 = vpack.c.b16 %v7884, %v7883
        %v8006 = vpack.c.b16 %v7886, %v7885
        %v8007 = vpack.c.b16 %v7888, %v7887
        %v8008 = vpack.c.b16 %v7890, %v7889
        %v8009 = vpack.c.b16 %v7892, %v7891
        %v8010 = vpack.c.b16 %v7894, %v7893
        %v8011 = vpack.c.b16 %v7896, %v7895
        %v8012 = vpack.c.b16 %v7898, %v7897
        %v8013 = vpack.c.b16 %v7900, %v7899
        %v8014 = vpack.c.b16 %v7902, %v7901
        %v8015 = vpack.c.b16 %v7904, %v7903
        %v8016 = vpack.c.b16 %v7906, %v7905
        %v8017 = vpack.c.b16 %v7908, %v7907
        %v8018 = vpack.c.b16 %v7910, %v7909
        %v8019 = vpack.c.b16 %v7912, %v7911
        %v8020 = vpack.c.b16 %v7914, %v7913
        %v8021 = vpack.c.b16 %v7916, %v7915
        %v8022 = vpack.c.b16 %v7918, %v7917
        %v8023 = vpack.c.b16 %v7920, %v7919
        %v8024 = vpack.c.b16 %v7922, %v7921
        %v8025 = vpack.c.b16 %v7924, %v7923
        %v8026 = vpack.c.b16 %v7926, %v7925
        %v8027 = vpack.c.b16 %v7928, %v7927
        %v8028 = vpack.c.b16 %v7930, %v7929
        %v8029 = vpack.c.b16 %v7932, %v7931
        %v8030 = vpack.c.b16 %v7934, %v7933
        %v8031 = vpack.c.b16 %v7936, %v7935
        %v8032 = vpack.c.b16 %v7938, %v7937
        %v8033 = vpack.c.b16 %v7940, %v7939
        %v8034 = vpack.c.b16 %v7942, %v7941
        %v8035 = vpack.c.b16 %v7944, %v7943
        %v8036 = vpack.c.b16 %v7946, %v7945
        %v8037 = vpack.c.b16 %v7948, %v7947
        %v8038 = vpack.c.b16 %v7950, %v7949
        %v8039 = vpack.c.b16 %v7952, %v7951
        %v8040 = vpack.c.b16 %v7954, %v7953
        %v8041 = vpack.c.b16 %v7956, %v7955
        %v8042 = vpack.c.b16 %v7958, %v7957
        %v8043 = vpack.c.b16 %v7960, %v7959
        %v8044 = vpack.c.b16 %v7962, %v7961
        %v8045 = vpack.c.b16 %v7964, %v7963
        %v8046 = vpack.c.b16 %v7966, %v7965
        %v8047 = vpack.c.b16 %v7968, %v7967
        %v8048 = vpack.c.b16 %v7970, %v7969
        %v8049 = vpack.c.b16 %v7972, %v7971
        %v8050 = vpack.c.b16 %v7974, %v7973
        %v8051 = vpack.c.b16 %v7976, %v7975
        %v8052 = vpack.c.b16 %v7978, %v7977
        %v8053 = vpack.c.b16 %v7980, %v7979
        %v8054 = vpack.c.b16 %v7982, %v7981
        %8127 = vmatpush.bf16.msra.mxu0 %v7990
        %8128 = vmatpush.bf16.msra.mxu0 %v7989
        %8129 = vmatpush.bf16.msra.mxu0 %v7988
        %8130 = vmatpush.bf16.msra.mxu0 %v7987
        %8131 = vmatpush.bf16.msra.mxu0 %v7986
        %8132 = vmatpush.bf16.msra.mxu0 %v7985
        %8133 = vmatpush.bf16.msra.mxu0 %v7984
        %8134 = vmatpush.bf16.msra.mxu0 %v7983
        %8135 = vmatmul.bf16.gmra.mxu0 %v7363
        %v8136 = vpop.f32.mrf.mxu0
        %v8137 = vadd.f32 %v7693, %v8136
        %v8138 = vpop.f32.mrf.mxu0
        %v8139 = vadd.f32 %v7693, %v8138
        %8140 = vmatmul.bf16.gmra.mxu0 %v7364
        %v8141 = vpop.f32.mrf.mxu0
        %v8142 = vadd.f32 %v7693, %v8141
        %v8143 = vpop.f32.mrf.mxu0
        %v8144 = vadd.f32 %v7693, %v8143
        %8145 = vmatmul.bf16.gmra.mxu0 %v7365
        %v8146 = vpop.f32.mrf.mxu0
        %v8147 = vadd.f32 %v7693, %v8146
        %v8148 = vpop.f32.mrf.mxu0
        %v8149 = vadd.f32 %v7693, %v8148
        %8150 = vmatmul.bf16.gmra.mxu0 %v7366
        %v8151 = vpop.f32.mrf.mxu0
        %v8152 = vadd.f32 %v7693, %v8151
        %v8153 = vpop.f32.mrf.mxu0
        %v8154 = vadd.f32 %v7693, %v8153
        %8155 = vmatmul.bf16.gmra.mxu0 %v7367
        %v8156 = vpop.f32.mrf.mxu0
        %v8157 = vadd.f32 %v7693, %v8156
        %v8158 = vpop.f32.mrf.mxu0
        %v8159 = vadd.f32 %v7693, %v8158
        %8160 = vmatmul.bf16.gmra.mxu0 %v7368
        %v8161 = vpop.f32.mrf.mxu0
        %v8162 = vadd.f32 %v7693, %v8161
        %v8163 = vpop.f32.mrf.mxu0
        %v8164 = vadd.f32 %v7693, %v8163
        %8165 = vmatmul.bf16.gmra.mxu0 %v7369
        %v8166 = vpop.f32.mrf.mxu0
        %v8167 = vadd.f32 %v7693, %v8166
        %v8168 = vpop.f32.mrf.mxu0
        %v8169 = vadd.f32 %v7693, %v8168
        %8170 = vmatmul.bf16.gmra.mxu0 %v7370
        %v8171 = vpop.f32.mrf.mxu0
        %v8172 = vadd.f32 %v7693, %v8171
        %v8173 = vpop.f32.mrf.mxu0
        %v8174 = vadd.f32 %v7693, %v8173
        %8175 = vmatmul.bf16.gmra.mxu0 %v7371
        %v8176 = vpop.f32.mrf.mxu0
        %v8177 = vadd.f32 %v7693, %v8176
        %v8178 = vpop.f32.mrf.mxu0
        %v8179 = vadd.f32 %v7693, %v8178
        %8180 = vmatmul.bf16.gmra.mxu0 %v7372
        %v8181 = vpop.f32.mrf.mxu0
        %v8182 = vadd.f32 %v7693, %v8181
        %v8183 = vpop.f32.mrf.mxu0
        %v8184 = vadd.f32 %v7693, %v8183
        %8185 = vmatmul.bf16.gmra.mxu0 %v7373
        %v8186 = vpop.f32.mrf.mxu0
        %v8187 = vadd.f32 %v7693, %v8186
        %v8188 = vpop.f32.mrf.mxu0
        %v8189 = vadd.f32 %v7693, %v8188
        %8190 = vmatmul.bf16.gmra.mxu0 %v7374
        %v8191 = vpop.f32.mrf.mxu0
        %v8192 = vadd.f32 %v7693, %v8191
        %v8193 = vpop.f32.mrf.mxu0
        %v8194 = vadd.f32 %v7693, %v8193
        %8195 = vmatmul.bf16.gmra.mxu0 %v7375
        %v8196 = vpop.f32.mrf.mxu0
        %v8197 = vadd.f32 %v7693, %v8196
        %v8198 = vpop.f32.mrf.mxu0
        %v8199 = vadd.f32 %v7693, %v8198
        %8200 = vmatmul.bf16.gmra.mxu0 %v7376
        %v8201 = vpop.f32.mrf.mxu0
        %v8202 = vadd.f32 %v7693, %v8201
        %v8203 = vpop.f32.mrf.mxu0
        %v8204 = vadd.f32 %v7693, %v8203
        %8205 = vmatmul.bf16.gmra.mxu0 %v7377
        %v8206 = vpop.f32.mrf.mxu0
        %v8207 = vadd.f32 %v7693, %v8206
        %v8208 = vpop.f32.mrf.mxu0
        %v8209 = vadd.f32 %v7693, %v8208
        %8210 = vmatmul.bf16.gmra.mxu0 %v7378
        %v8211 = vpop.f32.mrf.mxu0
        %v8212 = vadd.f32 %v7693, %v8211
        %v8213 = vpop.f32.mrf.mxu0
        %v8214 = vadd.f32 %v7693, %v8213
        %8215 = vdwg.mxu0
        %8216 = vmatpush.bf16.msra.mxu0 %v7998
        %8217 = vmatpush.bf16.msra.mxu0 %v7997
        %8218 = vmatpush.bf16.msra.mxu0 %v7996
        %8219 = vmatpush.bf16.msra.mxu0 %v7995
        %8220 = vmatpush.bf16.msra.mxu0 %v7994
        %8221 = vmatpush.bf16.msra.mxu0 %v7993
        %8222 = vmatpush.bf16.msra.mxu0 %v7992
        %8223 = vmatpush.bf16.msra.mxu0 %v7991
        %8224 = vmatmul.bf16.gmra.mxu0 %v7427
        %v8225 = vpop.f32.mrf.mxu0
        %v8226 = vadd.f32 %v8137, %v8225
        %v8227 = vpop.f32.mrf.mxu0
        %v8228 = vadd.f32 %v8139, %v8227
        %8229 = vmatmul.bf16.gmra.mxu0 %v7428
        %v8230 = vpop.f32.mrf.mxu0
        %v8231 = vadd.f32 %v8142, %v8230
        %v8232 = vpop.f32.mrf.mxu0
        %v8233 = vadd.f32 %v8144, %v8232
        %8234 = vmatmul.bf16.gmra.mxu0 %v7429
        %v8235 = vpop.f32.mrf.mxu0
        %v8236 = vadd.f32 %v8147, %v8235
        %v8237 = vpop.f32.mrf.mxu0
        %v8238 = vadd.f32 %v8149, %v8237
        %8239 = vmatmul.bf16.gmra.mxu0 %v7430
        %v8240 = vpop.f32.mrf.mxu0
        %v8241 = vadd.f32 %v8152, %v8240
        %v8242 = vpop.f32.mrf.mxu0
        %v8243 = vadd.f32 %v8154, %v8242
        %8244 = vmatmul.bf16.gmra.mxu0 %v7431
        %v8245 = vpop.f32.mrf.mxu0
        %v8246 = vadd.f32 %v8157, %v8245
        %v8247 = vpop.f32.mrf.mxu0
        %v8248 = vadd.f32 %v8159, %v8247
        %8249 = vmatmul.bf16.gmra.mxu0 %v7432
        %v8250 = vpop.f32.mrf.mxu0
        %v8251 = vadd.f32 %v8162, %v8250
        %v8252 = vpop.f32.mrf.mxu0
        %v8253 = vadd.f32 %v8164, %v8252
        %8254 = vmatmul.bf16.gmra.mxu0 %v7433
        %v8255 = vpop.f32.mrf.mxu0
        %v8256 = vadd.f32 %v8167, %v8255
        %v8257 = vpop.f32.mrf.mxu0
        %v8258 = vadd.f32 %v8169, %v8257
        %8259 = vmatmul.bf16.gmra.mxu0 %v7434
        %v8260 = vpop.f32.mrf.mxu0
        %v8261 = vadd.f32 %v8172, %v8260
        %v8262 = vpop.f32.mrf.mxu0
        %v8263 = vadd.f32 %v8174, %v8262
        %8264 = vmatmul.bf16.gmra.mxu0 %v7435
        %v8265 = vpop.f32.mrf.mxu0
        %v8266 = vadd.f32 %v8177, %v8265
        %v8267 = vpop.f32.mrf.mxu0
        %v8268 = vadd.f32 %v8179, %v8267
        %8269 = vmatmul.bf16.gmra.mxu0 %v7436
        %v8270 = vpop.f32.mrf.mxu0
        %v8271 = vadd.f32 %v8182, %v8270
        %v8272 = vpop.f32.mrf.mxu0
        %v8273 = vadd.f32 %v8184, %v8272
        %8274 = vmatmul.bf16.gmra.mxu0 %v7437
        %v8275 = vpop.f32.mrf.mxu0
        %v8276 = vadd.f32 %v8187, %v8275
        %v8277 = vpop.f32.mrf.mxu0
        %v8278 = vadd.f32 %v8189, %v8277
        %8279 = vmatmul.bf16.gmra.mxu0 %v7438
        %v8280 = vpop.f32.mrf.mxu0
        %v8281 = vadd.f32 %v8192, %v8280
        %v8282 = vpop.f32.mrf.mxu0
        %v8283 = vadd.f32 %v8194, %v8282
        %8284 = vmatmul.bf16.gmra.mxu0 %v7439
        %v8285 = vpop.f32.mrf.mxu0
        %v8286 = vadd.f32 %v8197, %v8285
        %v8287 = vpop.f32.mrf.mxu0
        %v8288 = vadd.f32 %v8199, %v8287
        %8289 = vmatmul.bf16.gmra.mxu0 %v7440
        %v8290 = vpop.f32.mrf.mxu0
        %v8291 = vadd.f32 %v8202, %v8290
        %v8292 = vpop.f32.mrf.mxu0
        %v8293 = vadd.f32 %v8204, %v8292
        %8294 = vmatmul.bf16.gmra.mxu0 %v7441
        %v8295 = vpop.f32.mrf.mxu0
        %v8296 = vadd.f32 %v8207, %v8295
        %v8297 = vpop.f32.mrf.mxu0
        %v8298 = vadd.f32 %v8209, %v8297
        %8299 = vmatmul.bf16.gmra.mxu0 %v7442
        %v8300 = vpop.f32.mrf.mxu0
        %v8301 = vadd.f32 %v8212, %v8300
        %v8302 = vpop.f32.mrf.mxu0
        %v8303 = vadd.f32 %v8214, %v8302
        %8304 = vdwg.mxu0
        %8305 = vmatpush.bf16.msra.mxu0 %v8006
        %8306 = vmatpush.bf16.msra.mxu0 %v8005
        %8307 = vmatpush.bf16.msra.mxu0 %v8004
        %8308 = vmatpush.bf16.msra.mxu0 %v8003
        %8309 = vmatpush.bf16.msra.mxu0 %v8002
        %8310 = vmatpush.bf16.msra.mxu0 %v8001
        %8311 = vmatpush.bf16.msra.mxu0 %v8000
        %8312 = vmatpush.bf16.msra.mxu0 %v7999
        %8313 = vmatmul.bf16.gmra.mxu0 %v7491
        %v8314 = vpop.f32.mrf.mxu0
        %v8315 = vadd.f32 %v8226, %v8314
        %v8316 = vpop.f32.mrf.mxu0
        %v8317 = vadd.f32 %v8228, %v8316
        %8318 = vmatmul.bf16.gmra.mxu0 %v7492
        %v8319 = vpop.f32.mrf.mxu0
        %v8320 = vadd.f32 %v8231, %v8319
        %v8321 = vpop.f32.mrf.mxu0
        %v8322 = vadd.f32 %v8233, %v8321
        %8323 = vmatmul.bf16.gmra.mxu0 %v7493
        %v8324 = vpop.f32.mrf.mxu0
        %v8325 = vadd.f32 %v8236, %v8324
        %v8326 = vpop.f32.mrf.mxu0
        %v8327 = vadd.f32 %v8238, %v8326
        %8328 = vmatmul.bf16.gmra.mxu0 %v7494
        %v8329 = vpop.f32.mrf.mxu0
        %v8330 = vadd.f32 %v8241, %v8329
        %v8331 = vpop.f32.mrf.mxu0
        %v8332 = vadd.f32 %v8243, %v8331
        %8333 = vmatmul.bf16.gmra.mxu0 %v7495
        %v8334 = vpop.f32.mrf.mxu0
        %v8335 = vadd.f32 %v8246, %v8334
        %v8336 = vpop.f32.mrf.mxu0
        %v8337 = vadd.f32 %v8248, %v8336
        %8338 = vmatmul.bf16.gmra.mxu0 %v7496
        %v8339 = vpop.f32.mrf.mxu0
        %v8340 = vadd.f32 %v8251, %v8339
        %v8341 = vpop.f32.mrf.mxu0
        %v8342 = vadd.f32 %v8253, %v8341
        %8343 = vmatmul.bf16.gmra.mxu0 %v7497
        %v8344 = vpop.f32.mrf.mxu0
        %v8345 = vadd.f32 %v8256, %v8344
        %v8346 = vpop.f32.mrf.mxu0
        %v8347 = vadd.f32 %v8258, %v8346
        %8348 = vmatmul.bf16.gmra.mxu0 %v7498
        %v8349 = vpop.f32.mrf.mxu0
        %v8350 = vadd.f32 %v8261, %v8349
        %v8351 = vpop.f32.mrf.mxu0
        %v8352 = vadd.f32 %v8263, %v8351
        %8353 = vmatmul.bf16.gmra.mxu0 %v7499
        %v8354 = vpop.f32.mrf.mxu0
        %v8355 = vadd.f32 %v8266, %v8354
        %v8356 = vpop.f32.mrf.mxu0
        %v8357 = vadd.f32 %v8268, %v8356
        %8358 = vmatmul.bf16.gmra.mxu0 %v7500
        %v8359 = vpop.f32.mrf.mxu0
        %v8360 = vadd.f32 %v8271, %v8359
        %v8361 = vpop.f32.mrf.mxu0
        %v8362 = vadd.f32 %v8273, %v8361
        %8363 = vmatmul.bf16.gmra.mxu0 %v7501
        %v8364 = vpop.f32.mrf.mxu0
        %v8365 = vadd.f32 %v8276, %v8364
        %v8366 = vpop.f32.mrf.mxu0
        %v8367 = vadd.f32 %v8278, %v8366
        %8368 = vmatmul.bf16.gmra.mxu0 %v7502
        %v8369 = vpop.f32.mrf.mxu0
        %v8370 = vadd.f32 %v8281, %v8369
        %v8371 = vpop.f32.mrf.mxu0
        %v8372 = vadd.f32 %v8283, %v8371
        %8373 = vmatmul.bf16.gmra.mxu0 %v7503
        %v8374 = vpop.f32.mrf.mxu0
        %v8375 = vadd.f32 %v8286, %v8374
        %v8376 = vpop.f32.mrf.mxu0
        %v8377 = vadd.f32 %v8288, %v8376
        %8378 = vmatmul.bf16.gmra.mxu0 %v7504
        %v8379 = vpop.f32.mrf.mxu0
        %v8380 = vadd.f32 %v8291, %v8379
        %v8381 = vpop.f32.mrf.mxu0
        %v8382 = vadd.f32 %v8293, %v8381
        %8383 = vmatmul.bf16.gmra.mxu0 %v7505
        %v8384 = vpop.f32.mrf.mxu0
        %v8385 = vadd.f32 %v8296, %v8384
        %v8386 = vpop.f32.mrf.mxu0
        %v8387 = vadd.f32 %v8298, %v8386
        %8388 = vmatmul.bf16.gmra.mxu0 %v7506
        %v8389 = vpop.f32.mrf.mxu0
        %v8390 = vadd.f32 %v8301, %v8389
        %v8391 = vpop.f32.mrf.mxu0
        %v8392 = vadd.f32 %v8303, %v8391
        %8393 = vdwg.mxu0
        %8394 = vmatpush.bf16.msra.mxu0 %v8014
        %8395 = vmatpush.bf16.msra.mxu0 %v8013
        %8396 = vmatpush.bf16.msra.mxu0 %v8012
        %8397 = vmatpush.bf16.msra.mxu0 %v8011
        %8398 = vmatpush.bf16.msra.mxu0 %v8010
        %8399 = vmatpush.bf16.msra.mxu0 %v8009
        %8400 = vmatpush.bf16.msra.mxu0 %v8008
        %8401 = vmatpush.bf16.msra.mxu0 %v8007
        %8402 = vmatmul.bf16.gmra.mxu0 %v7364
        %v8403 = vpop.f32.mrf.mxu0
        %v8404 = vadd.f32 %v8315, %v8403
        %v8405 = vpop.f32.mrf.mxu0
        %v8406 = vadd.f32 %v8317, %v8405
        %8407 = vmatmul.bf16.gmra.mxu0 %v7365
        %v8408 = vpop.f32.mrf.mxu0
        %v8409 = vadd.f32 %v8320, %v8408
        %v8410 = vpop.f32.mrf.mxu0
        %v8411 = vadd.f32 %v8322, %v8410
        %8412 = vmatmul.bf16.gmra.mxu0 %v7366
        %v8413 = vpop.f32.mrf.mxu0
        %v8414 = vadd.f32 %v8325, %v8413
        %v8415 = vpop.f32.mrf.mxu0
        %v8416 = vadd.f32 %v8327, %v8415
        %8417 = vmatmul.bf16.gmra.mxu0 %v7367
        %v8418 = vpop.f32.mrf.mxu0
        %v8419 = vadd.f32 %v8330, %v8418
        %v8420 = vpop.f32.mrf.mxu0
        %v8421 = vadd.f32 %v8332, %v8420
        %8422 = vmatmul.bf16.gmra.mxu0 %v7368
        %v8423 = vpop.f32.mrf.mxu0
        %v8424 = vadd.f32 %v8335, %v8423
        %v8425 = vpop.f32.mrf.mxu0
        %v8426 = vadd.f32 %v8337, %v8425
        %8427 = vmatmul.bf16.gmra.mxu0 %v7369
        %v8428 = vpop.f32.mrf.mxu0
        %v8429 = vadd.f32 %v8340, %v8428
        %v8430 = vpop.f32.mrf.mxu0
        %v8431 = vadd.f32 %v8342, %v8430
        %8432 = vmatmul.bf16.gmra.mxu0 %v7370
        %v8433 = vpop.f32.mrf.mxu0
        %v8434 = vadd.f32 %v8345, %v8433
        %v8435 = vpop.f32.mrf.mxu0
        %v8436 = vadd.f32 %v8347, %v8435
        %8437 = vmatmul.bf16.gmra.mxu0 %v7371
        %v8438 = vpop.f32.mrf.mxu0
        %v8439 = vadd.f32 %v8350, %v8438
        %v8440 = vpop.f32.mrf.mxu0
        %v8441 = vadd.f32 %v8352, %v8440
        %8442 = vmatmul.bf16.gmra.mxu0 %v7372
        %v8443 = vpop.f32.mrf.mxu0
        %v8444 = vadd.f32 %v8355, %v8443
        %v8445 = vpop.f32.mrf.mxu0
        %v8446 = vadd.f32 %v8357, %v8445
        %8447 = vmatmul.bf16.gmra.mxu0 %v7373
        %v8448 = vpop.f32.mrf.mxu0
        %v8449 = vadd.f32 %v8360, %v8448
        %v8450 = vpop.f32.mrf.mxu0
        %v8451 = vadd.f32 %v8362, %v8450
        %8452 = vmatmul.bf16.gmra.mxu0 %v7374
        %v8453 = vpop.f32.mrf.mxu0
        %v8454 = vadd.f32 %v8365, %v8453
        %v8455 = vpop.f32.mrf.mxu0
        %v8456 = vadd.f32 %v8367, %v8455
        %8457 = vmatmul.bf16.gmra.mxu0 %v7375
        %v8458 = vpop.f32.mrf.mxu0
        %v8459 = vadd.f32 %v8370, %v8458
        %v8460 = vpop.f32.mrf.mxu0
        %v8461 = vadd.f32 %v8372, %v8460
        %8462 = vmatmul.bf16.gmra.mxu0 %v7376
        %v8463 = vpop.f32.mrf.mxu0
        %v8464 = vadd.f32 %v8375, %v8463
        %v8465 = vpop.f32.mrf.mxu0
        %v8466 = vadd.f32 %v8377, %v8465
        %8467 = vmatmul.bf16.gmra.mxu0 %v7377
        %v8468 = vpop.f32.mrf.mxu0
        %v8469 = vadd.f32 %v8380, %v8468
        %v8470 = vpop.f32.mrf.mxu0
        %v8471 = vadd.f32 %v8382, %v8470
        %8472 = vmatmul.bf16.gmra.mxu0 %v7378
        %v8473 = vpop.f32.mrf.mxu0
        %v8474 = vadd.f32 %v8385, %v8473
        %v8475 = vpop.f32.mrf.mxu0
        %v8476 = vadd.f32 %v8387, %v8475
        %8477 = vmatmul.bf16.gmra.mxu0 %v7525
        %v8478 = vpop.f32.mrf.mxu0
        %v8479 = vadd.f32 %v8390, %v8478
        %v8480 = vpop.f32.mrf.mxu0
        %v8481 = vadd.f32 %v8392, %v8480
        %8482 = vdwg.mxu0
        %8483 = vmatpush.bf16.msra.mxu0 %v8022
        %8484 = vmatpush.bf16.msra.mxu0 %v8021
        %8485 = vmatpush.bf16.msra.mxu0 %v8020
        %8486 = vmatpush.bf16.msra.mxu0 %v8019
        %8487 = vmatpush.bf16.msra.mxu0 %v8018
        %8488 = vmatpush.bf16.msra.mxu0 %v8017
        %8489 = vmatpush.bf16.msra.mxu0 %v8016
        %8490 = vmatpush.bf16.msra.mxu0 %v8015
        %8491 = vmatmul.bf16.gmra.mxu0 %v7428
        %v8492 = vpop.f32.mrf.mxu0
        %v8493 = vadd.f32 %v8404, %v8492
        %v8494 = vpop.f32.mrf.mxu0
        %v8495 = vadd.f32 %v8406, %v8494
        %8496 = vmatmul.bf16.gmra.mxu0 %v7429
        %v8497 = vpop.f32.mrf.mxu0
        %v8498 = vadd.f32 %v8409, %v8497
        %v8499 = vpop.f32.mrf.mxu0
        %v8500 = vadd.f32 %v8411, %v8499
        %8501 = vmatmul.bf16.gmra.mxu0 %v7430
        %v8502 = vpop.f32.mrf.mxu0
        %v8503 = vadd.f32 %v8414, %v8502
        %v8504 = vpop.f32.mrf.mxu0
        %v8505 = vadd.f32 %v8416, %v8504
        %8506 = vmatmul.bf16.gmra.mxu0 %v7431
        %v8507 = vpop.f32.mrf.mxu0
        %v8508 = vadd.f32 %v8419, %v8507
        %v8509 = vpop.f32.mrf.mxu0
        %v8510 = vadd.f32 %v8421, %v8509
        %8511 = vmatmul.bf16.gmra.mxu0 %v7432
        %v8512 = vpop.f32.mrf.mxu0
        %v8513 = vadd.f32 %v8424, %v8512
        %v8514 = vpop.f32.mrf.mxu0
        %v8515 = vadd.f32 %v8426, %v8514
        %8516 = vmatmul.bf16.gmra.mxu0 %v7433
        %v8517 = vpop.f32.mrf.mxu0
        %v8518 = vadd.f32 %v8429, %v8517
        %v8519 = vpop.f32.mrf.mxu0
        %v8520 = vadd.f32 %v8431, %v8519
        %8521 = vmatmul.bf16.gmra.mxu0 %v7434
        %v8522 = vpop.f32.mrf.mxu0
        %v8523 = vadd.f32 %v8434, %v8522
        %v8524 = vpop.f32.mrf.mxu0
        %v8525 = vadd.f32 %v8436, %v8524
        %8526 = vmatmul.bf16.gmra.mxu0 %v7435
        %v8527 = vpop.f32.mrf.mxu0
        %v8528 = vadd.f32 %v8439, %v8527
        %v8529 = vpop.f32.mrf.mxu0
        %v8530 = vadd.f32 %v8441, %v8529
        %8531 = vmatmul.bf16.gmra.mxu0 %v7436
        %v8532 = vpop.f32.mrf.mxu0
        %v8533 = vadd.f32 %v8444, %v8532
        %v8534 = vpop.f32.mrf.mxu0
        %v8535 = vadd.f32 %v8446, %v8534
        %8536 = vmatmul.bf16.gmra.mxu0 %v7437
        %v8537 = vpop.f32.mrf.mxu0
        %v8538 = vadd.f32 %v8449, %v8537
        %v8539 = vpop.f32.mrf.mxu0
        %v8540 = vadd.f32 %v8451, %v8539
        %8541 = vmatmul.bf16.gmra.mxu0 %v7438
        %v8542 = vpop.f32.mrf.mxu0
        %v8543 = vadd.f32 %v8454, %v8542
        %v8544 = vpop.f32.mrf.mxu0
        %v8545 = vadd.f32 %v8456, %v8544
        %8546 = vmatmul.bf16.gmra.mxu0 %v7439
        %v8547 = vpop.f32.mrf.mxu0
        %v8548 = vadd.f32 %v8459, %v8547
        %v8549 = vpop.f32.mrf.mxu0
        %v8550 = vadd.f32 %v8461, %v8549
        %8551 = vmatmul.bf16.gmra.mxu0 %v7440
        %v8552 = vpop.f32.mrf.mxu0
        %v8553 = vadd.f32 %v8464, %v8552
        %v8554 = vpop.f32.mrf.mxu0
        %v8555 = vadd.f32 %v8466, %v8554
        %8556 = vmatmul.bf16.gmra.mxu0 %v7441
        %v8557 = vpop.f32.mrf.mxu0
        %v8558 = vadd.f32 %v8469, %v8557
        %v8559 = vpop.f32.mrf.mxu0
        %v8560 = vadd.f32 %v8471, %v8559
        %8561 = vmatmul.bf16.gmra.mxu0 %v7442
        %v8562 = vpop.f32.mrf.mxu0
        %v8563 = vadd.f32 %v8474, %v8562
        %v8564 = vpop.f32.mrf.mxu0
        %v8565 = vadd.f32 %v8476, %v8564
        %8566 = vmatmul.bf16.gmra.mxu0 %v7529
        %v8567 = vpop.f32.mrf.mxu0
        %v8568 = vadd.f32 %v8479, %v8567
        %v8569 = vpop.f32.mrf.mxu0
        %v8570 = vadd.f32 %v8481, %v8569
        %8571 = vdwg.mxu0
        %8572 = vmatpush.bf16.msra.mxu0 %v8030
        %8573 = vmatpush.bf16.msra.mxu0 %v8029
        %8574 = vmatpush.bf16.msra.mxu0 %v8028
        %8575 = vmatpush.bf16.msra.mxu0 %v8027
        %8576 = vmatpush.bf16.msra.mxu0 %v8026
        %8577 = vmatpush.bf16.msra.mxu0 %v8025
        %8578 = vmatpush.bf16.msra.mxu0 %v8024
        %8579 = vmatpush.bf16.msra.mxu0 %v8023
        %8580 = vmatmul.bf16.gmra.mxu0 %v7492
        %v8581 = vpop.f32.mrf.mxu0
        %v8582 = vadd.f32 %v8493, %v8581
        %v8583 = vpop.f32.mrf.mxu0
        %v8584 = vadd.f32 %v8495, %v8583
        %8585 = vmatmul.bf16.gmra.mxu0 %v7493
        %v8586 = vpop.f32.mrf.mxu0
        %v8587 = vadd.f32 %v8498, %v8586
        %v8588 = vpop.f32.mrf.mxu0
        %v8589 = vadd.f32 %v8500, %v8588
        %8590 = vmatmul.bf16.gmra.mxu0 %v7494
        %v8591 = vpop.f32.mrf.mxu0
        %v8592 = vadd.f32 %v8503, %v8591
        %v8593 = vpop.f32.mrf.mxu0
        %v8594 = vadd.f32 %v8505, %v8593
        %8595 = vmatmul.bf16.gmra.mxu0 %v7495
        %v8596 = vpop.f32.mrf.mxu0
        %v8597 = vadd.f32 %v8508, %v8596
        %v8598 = vpop.f32.mrf.mxu0
        %v8599 = vadd.f32 %v8510, %v8598
        %8600 = vmatmul.bf16.gmra.mxu0 %v7496
        %v8601 = vpop.f32.mrf.mxu0
        %v8602 = vadd.f32 %v8513, %v8601
        %v8603 = vpop.f32.mrf.mxu0
        %v8604 = vadd.f32 %v8515, %v8603
        %8605 = vmatmul.bf16.gmra.mxu0 %v7497
        %v8606 = vpop.f32.mrf.mxu0
        %v8607 = vadd.f32 %v8518, %v8606
        %v8608 = vpop.f32.mrf.mxu0
        %v8609 = vadd.f32 %v8520, %v8608
        %8610 = vmatmul.bf16.gmra.mxu0 %v7498
        %v8611 = vpop.f32.mrf.mxu0
        %v8612 = vadd.f32 %v8523, %v8611
        %v8613 = vpop.f32.mrf.mxu0
        %v8614 = vadd.f32 %v8525, %v8613
        %8615 = vmatmul.bf16.gmra.mxu0 %v7499
        %v8616 = vpop.f32.mrf.mxu0
        %v8617 = vadd.f32 %v8528, %v8616
        %v8618 = vpop.f32.mrf.mxu0
        %v8619 = vadd.f32 %v8530, %v8618
        %8620 = vmatmul.bf16.gmra.mxu0 %v7500
        %v8621 = vpop.f32.mrf.mxu0
        %v8622 = vadd.f32 %v8533, %v8621
        %v8623 = vpop.f32.mrf.mxu0
        %v8624 = vadd.f32 %v8535, %v8623
        %8625 = vmatmul.bf16.gmra.mxu0 %v7501
        %v8626 = vpop.f32.mrf.mxu0
        %v8627 = vadd.f32 %v8538, %v8626
        %v8628 = vpop.f32.mrf.mxu0
        %v8629 = vadd.f32 %v8540, %v8628
        %8630 = vmatmul.bf16.gmra.mxu0 %v7502
        %v8631 = vpop.f32.mrf.mxu0
        %v8632 = vadd.f32 %v8543, %v8631
        %v8633 = vpop.f32.mrf.mxu0
        %v8634 = vadd.f32 %v8545, %v8633
        %8635 = vmatmul.bf16.gmra.mxu0 %v7503
        %v8636 = vpop.f32.mrf.mxu0
        %v8637 = vadd.f32 %v8548, %v8636
        %v8638 = vpop.f32.mrf.mxu0
        %v8639 = vadd.f32 %v8550, %v8638
        %8640 = vmatmul.bf16.gmra.mxu0 %v7504
        %v8641 = vpop.f32.mrf.mxu0
        %v8642 = vadd.f32 %v8553, %v8641
        %v8643 = vpop.f32.mrf.mxu0
        %v8644 = vadd.f32 %v8555, %v8643
        %8645 = vmatmul.bf16.gmra.mxu0 %v7505
        %v8646 = vpop.f32.mrf.mxu0
        %v8647 = vadd.f32 %v8558, %v8646
        %v8648 = vpop.f32.mrf.mxu0
        %v8649 = vadd.f32 %v8560, %v8648
        %8650 = vmatmul.bf16.gmra.mxu0 %v7506
        %v8651 = vpop.f32.mrf.mxu0
        %v8652 = vadd.f32 %v8563, %v8651
        %v8653 = vpop.f32.mrf.mxu0
        %v8654 = vadd.f32 %v8565, %v8653
        %8655 = vmatmul.bf16.gmra.mxu0 %v7533
        %v8656 = vpop.f32.mrf.mxu0
        %v8657 = vadd.f32 %v8568, %v8656
        %v8658 = vpop.f32.mrf.mxu0
        %v8659 = vadd.f32 %v8570, %v8658
        %8660 = vdwg.mxu0
        %8661 = vmatpush.bf16.msra.mxu0 %v8038
        %8662 = vmatpush.bf16.msra.mxu0 %v8037
        %8663 = vmatpush.bf16.msra.mxu0 %v8036
        %8664 = vmatpush.bf16.msra.mxu0 %v8035
        %8665 = vmatpush.bf16.msra.mxu0 %v8034
        %8666 = vmatpush.bf16.msra.mxu0 %v8033
        %8667 = vmatpush.bf16.msra.mxu0 %v8032
        %8668 = vmatpush.bf16.msra.mxu0 %v8031
        %8669 = vmatmul.bf16.gmra.mxu0 %v7365
        %v8670 = vpop.f32.mrf.mxu0
        %v8671 = vadd.f32 %v8582, %v8670
        %v8672 = vpop.f32.mrf.mxu0
        %v8673 = vadd.f32 %v8584, %v8672
        %8674 = vmatmul.bf16.gmra.mxu0 %v7366
        %v8675 = vpop.f32.mrf.mxu0
        %v8676 = vadd.f32 %v8587, %v8675
        %v8677 = vpop.f32.mrf.mxu0
        %v8678 = vadd.f32 %v8589, %v8677
        %8679 = vmatmul.bf16.gmra.mxu0 %v7367
        %v8680 = vpop.f32.mrf.mxu0
        %v8681 = vadd.f32 %v8592, %v8680
        %v8682 = vpop.f32.mrf.mxu0
        %v8683 = vadd.f32 %v8594, %v8682
        %8684 = vmatmul.bf16.gmra.mxu0 %v7368
        %v8685 = vpop.f32.mrf.mxu0
        %v8686 = vadd.f32 %v8597, %v8685
        %v8687 = vpop.f32.mrf.mxu0
        %v8688 = vadd.f32 %v8599, %v8687
        %8689 = vmatmul.bf16.gmra.mxu0 %v7369
        %v8690 = vpop.f32.mrf.mxu0
        %v8691 = vadd.f32 %v8602, %v8690
        %v8692 = vpop.f32.mrf.mxu0
        %v8693 = vadd.f32 %v8604, %v8692
        %8694 = vmatmul.bf16.gmra.mxu0 %v7370
        %v8695 = vpop.f32.mrf.mxu0
        %v8696 = vadd.f32 %v8607, %v8695
        %v8697 = vpop.f32.mrf.mxu0
        %v8698 = vadd.f32 %v8609, %v8697
        %8699 = vmatmul.bf16.gmra.mxu0 %v7371
        %v8700 = vpop.f32.mrf.mxu0
        %v8701 = vadd.f32 %v8612, %v8700
        %v8702 = vpop.f32.mrf.mxu0
        %v8703 = vadd.f32 %v8614, %v8702
        %8704 = vmatmul.bf16.gmra.mxu0 %v7372
        %v8705 = vpop.f32.mrf.mxu0
        %v8706 = vadd.f32 %v8617, %v8705
        %v8707 = vpop.f32.mrf.mxu0
        %v8708 = vadd.f32 %v8619, %v8707
        %8709 = vmatmul.bf16.gmra.mxu0 %v7373
        %v8710 = vpop.f32.mrf.mxu0
        %v8711 = vadd.f32 %v8622, %v8710
        %v8712 = vpop.f32.mrf.mxu0
        %v8713 = vadd.f32 %v8624, %v8712
        %8714 = vmatmul.bf16.gmra.mxu0 %v7374
        %v8715 = vpop.f32.mrf.mxu0
        %v8716 = vadd.f32 %v8627, %v8715
        %v8717 = vpop.f32.mrf.mxu0
        %v8718 = vadd.f32 %v8629, %v8717
        %8719 = vmatmul.bf16.gmra.mxu0 %v7375
        %v8720 = vpop.f32.mrf.mxu0
        %v8721 = vadd.f32 %v8632, %v8720
        %v8722 = vpop.f32.mrf.mxu0
        %v8723 = vadd.f32 %v8634, %v8722
        %8724 = vmatmul.bf16.gmra.mxu0 %v7376
        %v8725 = vpop.f32.mrf.mxu0
        %v8726 = vadd.f32 %v8637, %v8725
        %v8727 = vpop.f32.mrf.mxu0
        %v8728 = vadd.f32 %v8639, %v8727
        %8729 = vmatmul.bf16.gmra.mxu0 %v7377
        %v8730 = vpop.f32.mrf.mxu0
        %v8731 = vadd.f32 %v8642, %v8730
        %v8732 = vpop.f32.mrf.mxu0
        %v8733 = vadd.f32 %v8644, %v8732
        %8734 = vmatmul.bf16.gmra.mxu0 %v7378
        %v8735 = vpop.f32.mrf.mxu0
        %v8736 = vadd.f32 %v8647, %v8735
        %v8737 = vpop.f32.mrf.mxu0
        %v8738 = vadd.f32 %v8649, %v8737
        %8739 = vmatmul.bf16.gmra.mxu0 %v7525
        %v8740 = vpop.f32.mrf.mxu0
        %v8741 = vadd.f32 %v8652, %v8740
        %v8742 = vpop.f32.mrf.mxu0
        %v8743 = vadd.f32 %v8654, %v8742
        %8744 = vmatmul.bf16.gmra.mxu0 %v7537
        %v8745 = vpop.f32.mrf.mxu0
        %v8746 = vadd.f32 %v8657, %v8745
        %v8747 = vpop.f32.mrf.mxu0
        %v8748 = vadd.f32 %v8659, %v8747
        %8749 = vdwg.mxu0
        %8750 = vmatpush.bf16.msra.mxu0 %v8046
        %8751 = vmatpush.bf16.msra.mxu0 %v8045
        %8752 = vmatpush.bf16.msra.mxu0 %v8044
        %8753 = vmatpush.bf16.msra.mxu0 %v8043
        %8754 = vmatpush.bf16.msra.mxu0 %v8042
        %8755 = vmatpush.bf16.msra.mxu0 %v8041
        %8756 = vmatpush.bf16.msra.mxu0 %v8040
        %8757 = vmatpush.bf16.msra.mxu0 %v8039
        %8758 = vmatmul.bf16.gmra.mxu0 %v7429
        %v8759 = vpop.f32.mrf.mxu0
        %v8760 = vadd.f32 %v8671, %v8759
        %v8761 = vpop.f32.mrf.mxu0
        %v8762 = vadd.f32 %v8673, %v8761
        %8763 = vmatmul.bf16.gmra.mxu0 %v7430
        %v8764 = vpop.f32.mrf.mxu0
        %v8765 = vadd.f32 %v8676, %v8764
        %v8766 = vpop.f32.mrf.mxu0
        %v8767 = vadd.f32 %v8678, %v8766
        %8768 = vmatmul.bf16.gmra.mxu0 %v7431
        %v8769 = vpop.f32.mrf.mxu0
        %v8770 = vadd.f32 %v8681, %v8769
        %v8771 = vpop.f32.mrf.mxu0
        %v8772 = vadd.f32 %v8683, %v8771
        %8773 = vmatmul.bf16.gmra.mxu0 %v7432
        %v8774 = vpop.f32.mrf.mxu0
        %v8775 = vadd.f32 %v8686, %v8774
        %v8776 = vpop.f32.mrf.mxu0
        %v8777 = vadd.f32 %v8688, %v8776
        %8778 = vmatmul.bf16.gmra.mxu0 %v7433
        %v8779 = vpop.f32.mrf.mxu0
        %v8780 = vadd.f32 %v8691, %v8779
        %v8781 = vpop.f32.mrf.mxu0
        %v8782 = vadd.f32 %v8693, %v8781
        %8783 = vmatmul.bf16.gmra.mxu0 %v7434
        %v8784 = vpop.f32.mrf.mxu0
        %v8785 = vadd.f32 %v8696, %v8784
        %v8786 = vpop.f32.mrf.mxu0
        %v8787 = vadd.f32 %v8698, %v8786
        %8788 = vmatmul.bf16.gmra.mxu0 %v7435
        %v8789 = vpop.f32.mrf.mxu0
        %v8790 = vadd.f32 %v8701, %v8789
        %v8791 = vpop.f32.mrf.mxu0
        %v8792 = vadd.f32 %v8703, %v8791
        %8793 = vmatmul.bf16.gmra.mxu0 %v7436
        %v8794 = vpop.f32.mrf.mxu0
        %v8795 = vadd.f32 %v8706, %v8794
        %v8796 = vpop.f32.mrf.mxu0
        %v8797 = vadd.f32 %v8708, %v8796
        %8798 = vmatmul.bf16.gmra.mxu0 %v7437
        %v8799 = vpop.f32.mrf.mxu0
        %v8800 = vadd.f32 %v8711, %v8799
        %v8801 = vpop.f32.mrf.mxu0
        %v8802 = vadd.f32 %v8713, %v8801
        %8803 = vmatmul.bf16.gmra.mxu0 %v7438
        %v8804 = vpop.f32.mrf.mxu0
        %v8805 = vadd.f32 %v8716, %v8804
        %v8806 = vpop.f32.mrf.mxu0
        %v8807 = vadd.f32 %v8718, %v8806
        %8808 = vmatmul.bf16.gmra.mxu0 %v7439
        %v8809 = vpop.f32.mrf.mxu0
        %v8810 = vadd.f32 %v8721, %v8809
        %v8811 = vpop.f32.mrf.mxu0
        %v8812 = vadd.f32 %v8723, %v8811
        %8813 = vmatmul.bf16.gmra.mxu0 %v7440
        %v8814 = vpop.f32.mrf.mxu0
        %v8815 = vadd.f32 %v8726, %v8814
        %v8816 = vpop.f32.mrf.mxu0
        %v8817 = vadd.f32 %v8728, %v8816
        %8818 = vmatmul.bf16.gmra.mxu0 %v7441
        %v8819 = vpop.f32.mrf.mxu0
        %v8820 = vadd.f32 %v8731, %v8819
        %v8821 = vpop.f32.mrf.mxu0
        %v8822 = vadd.f32 %v8733, %v8821
        %8823 = vmatmul.bf16.gmra.mxu0 %v7442
        %v8824 = vpop.f32.mrf.mxu0
        %v8825 = vadd.f32 %v8736, %v8824
        %v8826 = vpop.f32.mrf.mxu0
        %v8827 = vadd.f32 %v8738, %v8826
        %8828 = vmatmul.bf16.gmra.mxu0 %v7529
        %v8829 = vpop.f32.mrf.mxu0
        %v8830 = vadd.f32 %v8741, %v8829
        %v8831 = vpop.f32.mrf.mxu0
        %v8832 = vadd.f32 %v8743, %v8831
        %8833 = vmatmul.bf16.gmra.mxu0 %v7541
        %v8834 = vpop.f32.mrf.mxu0
        %v8835 = vadd.f32 %v8746, %v8834
        %v8836 = vpop.f32.mrf.mxu0
        %v8837 = vadd.f32 %v8748, %v8836
        %8838 = vdwg.mxu0
        %8839 = vmatpush.bf16.msra.mxu0 %v8054
        %8840 = vmatpush.bf16.msra.mxu0 %v8053
        %8841 = vmatpush.bf16.msra.mxu0 %v8052
        %8842 = vmatpush.bf16.msra.mxu0 %v8051
        %8843 = vmatpush.bf16.msra.mxu0 %v8050
        %8844 = vmatpush.bf16.msra.mxu0 %v8049
        %8845 = vmatpush.bf16.msra.mxu0 %v8048
        %8846 = vmatpush.bf16.msra.mxu0 %v8047
        %8847 = vmatmul.bf16.gmra.mxu0 %v7493
        %v8848 = vpop.f32.mrf.mxu0
        %v8849 = vadd.f32 %v8760, %v8848
        %v8850 = vpop.f32.mrf.mxu0
        %v8851 = vadd.f32 %v8762, %v8850
        %8852 = vmatmul.bf16.gmra.mxu0 %v7494
        %v8853 = vpop.f32.mrf.mxu0
        %v8854 = vadd.f32 %v8765, %v8853
        %v8855 = vpop.f32.mrf.mxu0
        %v8856 = vadd.f32 %v8767, %v8855
        %8857 = vmatmul.bf16.gmra.mxu0 %v7495
        %v8858 = vpop.f32.mrf.mxu0
        %v8859 = vadd.f32 %v8770, %v8858
        %v8860 = vpop.f32.mrf.mxu0
        %v8861 = vadd.f32 %v8772, %v8860
        %8862 = vmatmul.bf16.gmra.mxu0 %v7496
        %v8863 = vpop.f32.mrf.mxu0
        %v8864 = vadd.f32 %v8775, %v8863
        %v8865 = vpop.f32.mrf.mxu0
        %v8866 = vadd.f32 %v8777, %v8865
        %8867 = vmatmul.bf16.gmra.mxu0 %v7497
        %v8868 = vpop.f32.mrf.mxu0
        %v8869 = vadd.f32 %v8780, %v8868
        %v8870 = vpop.f32.mrf.mxu0
        %v8871 = vadd.f32 %v8782, %v8870
        %8872 = vmatmul.bf16.gmra.mxu0 %v7498
        %v8873 = vpop.f32.mrf.mxu0
        %v8874 = vadd.f32 %v8785, %v8873
        %v8875 = vpop.f32.mrf.mxu0
        %v8876 = vadd.f32 %v8787, %v8875
        %8877 = vmatmul.bf16.gmra.mxu0 %v7499
        %v8878 = vpop.f32.mrf.mxu0
        %v8879 = vadd.f32 %v8790, %v8878
        %v8880 = vpop.f32.mrf.mxu0
        %v8881 = vadd.f32 %v8792, %v8880
        %8882 = vmatmul.bf16.gmra.mxu0 %v7500
        %v8883 = vpop.f32.mrf.mxu0
        %v8884 = vadd.f32 %v8795, %v8883
        %v8885 = vpop.f32.mrf.mxu0
        %v8886 = vadd.f32 %v8797, %v8885
        %8887 = vmatmul.bf16.gmra.mxu0 %v7501
        %v8888 = vpop.f32.mrf.mxu0
        %v8889 = vadd.f32 %v8800, %v8888
        %v8890 = vpop.f32.mrf.mxu0
        %v8891 = vadd.f32 %v8802, %v8890
        %8892 = vmatmul.bf16.gmra.mxu0 %v7502
        %v8893 = vpop.f32.mrf.mxu0
        %v8894 = vadd.f32 %v8805, %v8893
        %v8895 = vpop.f32.mrf.mxu0
        %v8896 = vadd.f32 %v8807, %v8895
        %8897 = vmatmul.bf16.gmra.mxu0 %v7503
        %v8898 = vpop.f32.mrf.mxu0
        %v8899 = vadd.f32 %v8810, %v8898
        %v8900 = vpop.f32.mrf.mxu0
        %v8901 = vadd.f32 %v8812, %v8900
        %8902 = vmatmul.bf16.gmra.mxu0 %v7504
        %v8903 = vpop.f32.mrf.mxu0
        %v8904 = vadd.f32 %v8815, %v8903
        %v8905 = vpop.f32.mrf.mxu0
        %v8906 = vadd.f32 %v8817, %v8905
        %8907 = vmatmul.bf16.gmra.mxu0 %v7505
        %v8908 = vpop.f32.mrf.mxu0
        %v8909 = vadd.f32 %v8820, %v8908
        %v8910 = vpop.f32.mrf.mxu0
        %v8911 = vadd.f32 %v8822, %v8910
        %8912 = vmatmul.bf16.gmra.mxu0 %v7506
        %v8913 = vpop.f32.mrf.mxu0
        %v8914 = vadd.f32 %v8825, %v8913
        %v8915 = vpop.f32.mrf.mxu0
        %v8916 = vadd.f32 %v8827, %v8915
        %8917 = vmatmul.bf16.gmra.mxu0 %v7533
        %v8918 = vpop.f32.mrf.mxu0
        %v8919 = vadd.f32 %v8830, %v8918
        %v8920 = vpop.f32.mrf.mxu0
        %v8921 = vadd.f32 %v8832, %v8920
        %8922 = vmatmul.bf16.gmra.mxu0 %v7545
        %v8923 = vpop.f32.mrf.mxu0
        %v8924 = vadd.f32 %v8835, %v8923
        %v8925 = vpop.f32.mrf.mxu0
        %v8926 = vadd.f32 %v8837, %v8925
        %8927 = vdwg.mxu0
        %v8928 = vadd.f32 %v8849, %v6367
        %v8929 = vadd.f32 %v8851, %v6369
        %v8930 = vadd.f32 %v8854, %v6372
        %v8931 = vadd.f32 %v8856, %v6374
        %v8932 = vadd.f32 %v8859, %v6377
        %v8933 = vadd.f32 %v8861, %v6379
        %v8934 = vadd.f32 %v8864, %v6382
        %v8935 = vadd.f32 %v8866, %v6384
        %v8936 = vadd.f32 %v8869, %v6387
        %v8937 = vadd.f32 %v8871, %v6389
        %v8938 = vadd.f32 %v8874, %v6392
        %v8939 = vadd.f32 %v8876, %v6394
        %v8940 = vadd.f32 %v8879, %v6397
        %v8941 = vadd.f32 %v8881, %v6399
        %v8942 = vadd.f32 %v8884, %v6402
        %v8943 = vadd.f32 %v8886, %v6404
        %v8944 = vadd.f32 %v8889, %v6407
        %v8945 = vadd.f32 %v8891, %v6409
        %v8946 = vadd.f32 %v8894, %v6412
        %v8947 = vadd.f32 %v8896, %v6414
        %v8948 = vadd.f32 %v8899, %v6417
        %v8949 = vadd.f32 %v8901, %v6419
        %v8950 = vadd.f32 %v8904, %v6422
        %v8951 = vadd.f32 %v8906, %v6424
        %v8952 = vadd.f32 %v8909, %v6427
        %v8953 = vadd.f32 %v8911, %v6429
        %v8954 = vadd.f32 %v8914, %v6432
        %v8955 = vadd.f32 %v8916, %v6434
        %v8956 = vadd.f32 %v8919, %v6437
        %v8957 = vadd.f32 %v8921, %v6439
        %v8958 = vadd.f32 %v8924, %v6442
        %v8959 = vadd.f32 %v8926, %v6444
        %8960 = vst [vmem:[%s271] sm:$0xff] %v8928
        %8961 = vst [vmem:[%s271 + $0x8] sm:$0xff] %v8929
        %8962 = vst [vmem:[%s271 + $0x10] sm:$0xff] %v8930
        %8963 = vst [vmem:[%s271 + $0x18] sm:$0xff] %v8931
        %8964 = vst [vmem:[%s271 + $0x20] sm:$0xff] %v8932
        %8965 = vst [vmem:[%s271 + $0x28] sm:$0xff] %v8933
        %8966 = vst [vmem:[%s271 + $0x30] sm:$0xff] %v8934
        %8967 = vst [vmem:[%s271 + $0x38] sm:$0xff] %v8935
        %8968 = vst [vmem:[%s271 + $0x40] sm:$0xff] %v8936
        %8969 = vst [vmem:[%s271 + $0x48] sm:$0xff] %v8937
        %8970 = vst [vmem:[%s271 + $0x50] sm:$0xff] %v8938
        %8971 = vst [vmem:[%s271 + $0x58] sm:$0xff] %v8939
        %8972 = vst [vmem:[%s271 + $0x60] sm:$0xff] %v8940
        %8973 = vst [vmem:[%s271 + $0x68] sm:$0xff] %v8941
        %8974 = vst [vmem:[%s271 + $0x70] sm:$0xff] %v8942
        %8975 = vst [vmem:[%s271 + $0x78] sm:$0xff] %v8943
        %8976 = vst [vmem:[%s271 + $0x80] sm:$0xff] %v8944
        %8977 = vst [vmem:[%s271 + $0x88] sm:$0xff] %v8945
        %8978 = vst [vmem:[%s271 + $0x90] sm:$0xff] %v8946
        %8979 = vst [vmem:[%s271 + $0x98] sm:$0xff] %v8947
        %8980 = vst [vmem:[%s271 + $0xa0] sm:$0xff] %v8948
        %8981 = vst [vmem:[%s271 + $0xa8] sm:$0xff] %v8949
        %8982 = vst [vmem:[%s271 + $0xb0] sm:$0xff] %v8950
        %8983 = vst [vmem:[%s271 + $0xb8] sm:$0xff] %v8951
        %8984 = vst [vmem:[%s271 + $0xc0] sm:$0xff] %v8952
        %8985 = vst [vmem:[%s271 + $0xc8] sm:$0xff] %v8953
        %8986 = vst [vmem:[%s271 + $0xd0] sm:$0xff] %v8954
        %8987 = vst [vmem:[%s271 + $0xd8] sm:$0xff] %v8955
        %8988 = vst [vmem:[%s271 + $0xe0] sm:$0xff] %v8956
        %8989 = vst [vmem:[%s271 + $0xe8] sm:$0xff] %v8957
        %8990 = vst [vmem:[%s271 + $0xf0] sm:$0xff] %v8958
        %8991 = vst [vmem:[%s271 + $0xf8] sm:$0xff] %v8959
        %s8992 = sand.u32 %s181, 1
        %s8993 = scalar_lea.sflag [#allocation3], %s8992
        %s8994 = sand.u32 %s181, 1
        %s8995 = smul.addr %s8994, 256
        %s8996 = scalar_lea.vmem [#allocation2], %s8995
        // Predicated region
        $region49: #{tpu_custom_call.1} parent=47 // pred_check
          %p8997 = pneg %p191
        $region50: #{tpu_custom_call.1} parent=47 // pred_check_branch
          %8999 = sbr.rel (%p8997) target = $region52
        $region51: #{tpu_custom_call.1} parent=47 // pred_region
          %9001 = vsyncadd %s8993, 0
          %s9002 = smul.addr %s21, 32
          %s9003 = smul.addr %s9002, 8
          %s9004 = scalar_lea.hbm %s7, %s9003
          %s9005 = sshll.u32 %s8996, 4
          %s9006 = int_to_ptr.vmem [resolvable:$true] %s9005
          %s9007 = sshll.u32 %s9004, 4
          %s9008 = int_to_ptr.hbm [resolvable:$true] %s9007
          %9013 = dma.vmem_to_hbm [thread:$0]  %s9006, 4096, %s9008, %s8993, 128, 128, 8
        $region52: #{tpu_custom_call.1} parent=47 // pred_fallthru
          _
      $region48: #{tpu_custom_call.1} parent=5 // pred_fallthru
        _
      %p9014 = scmp.le.s32.totalorder 2, %s16
      // Predicated region
      $region53: #{tpu_custom_call.1} parent=5 // pred_check
        %p9015 = pneg %p9014
      $region54: #{tpu_custom_call.1} parent=5 // pred_check_branch
        %9017 = sbr.rel (%p9015) target = $region56
      $region55: #{tpu_custom_call.1} parent=5 // pred_region
        %s9018 = ssub.s32 %s16, 2
        // Predicated region
        $region57: #{tpu_custom_call.1} parent=55 // pred_check
          %p9019 = pneg %p197
        $region58: #{tpu_custom_call.1} parent=55 // pred_check_branch
          %9021 = sbr.rel (%p9019) target = $region60
        $region59: #{tpu_custom_call.1} parent=55 // pred_region
          %s9022 = sand.u32 %s182, 1
          %s9023 = scalar_lea.sflag [#allocation3], %s9022
          %s9024 = sand.u32 %s182, 1
          %s9025 = smul.addr %s9024, 256
          %s9026 = scalar_lea.vmem [#allocation2], %s9025
          %9028 = dma.done %s9023, 4096
        $region60: #{tpu_custom_call.1} parent=55 // pred_fallthru
          _
      $region56: #{tpu_custom_call.1} parent=5 // pred_fallthru
        _
    $region6: #{tpu_custom_call.1} parent=1 // loop_footer
      %s20 = sadd.s32 1, %s16
    $region7: #{tpu_custom_call.1} parent=1 // loop_footer_branch
      %15 = sbr.rel target = $region3
    $region8: #{tpu_custom_call.1} parent=1 // loop_exit
      _
    %9029 = vsyncpa [#allocation3], 1
    %s9030 = scalar_lea.sflag [#allocation3], 1
    %9031 = vsyncpa %s9030, 1

</llo_original>
